<compile_context>
chip_gen: v7x
topology: tpu7x:2x2x1
jax: 0.10.0
libtpu: 0.0.40
codegen_flags: <defaults>
</compile_context>

<pallas_src>
import jax
import jax.numpy as jnp
import numpy as np
from jax.experimental import pallas as pl
from jax.experimental.pallas import tpu as pltpu

# ----------------------------------------------------------------------------
# Hyper-parameters (shrunk from the module globals: input_size 500 -> 16,
# hidden_size=32, num_layers=2, num_classes=30).  The architecture is only
# shape-consistent when the pooled conv length equals the LSTM input size,
# i.e. seq length L == 2 * input_size (original: L = 1000).
# ----------------------------------------------------------------------------
INPUT_SIZE = 16            # Conv1d in-channels == LSTM input_size
HIDDEN = 32                # Conv1d out-channels == LSTM hidden_size
NUM_LAYERS = 2
NUM_CLASSES = 30
SEQ_LEN = 2 * INPUT_SIZE   # Conv1d / MaxPool1d length axis
BATCH = 2


# ----------------------------------------------------------------------------
# Fused kernel: Conv1d(3, pad=1) + ReLU + MaxPool(2,2) + 2-layer LSTM (last
# step) + Linear + Softmax, all intermediates in VMEM.
# ----------------------------------------------------------------------------
def _fused_kernel(x_ref, cw_ref, cb_ref, gih0_ref, wcat_ref, b0_ref,
                  b1_ref, fcw_ref, fcb_ref, o_ref, xpad_ref):
    # x_ref    : (B, D, L)    f32  raw input (PyTorch NCL layout)
    # cw_ref   : (3, D, H)    bf16 conv weight, one (D, H) matrix per tap
    # cb_ref   : (1, H)       f32
    # gih0_ref : (D, 4H)      bf16 layer-0 input->gates weight (wih0^T)
    # wcat_ref : (2H, 8H)     bf16 [[whh0^T | wih1^T], [0 | whh1^T]]
    # b0_ref   : (1, 4H)      f32  bih0 + bhh0
    # b1_ref   : (1, 4H)      f32  bih1 + bhh1
    # fcw_ref  : (H, C)       f32  fc weight^T
    # fcb_ref  : (1, C)       f32
    # o_ref    : (B, C)       f32  softmax probabilities
    # xpad_ref : (B, L+2, D)  f32  scratch: length-padded, length-major input
    B, D, L = x_ref.shape
    H = cw_ref.shape[2]
    T = H                    # LSTM "time" axis == conv output channels
    Din = L // 2             # LSTM feature size == pooled length
    G = 4 * H

    # ---- Conv1d(k=3, padding=1) + ReLU + MaxPool1d(2, 2), batch-vectorized ----
    xpad_ref[...] = jnp.zeros_like(xpad_ref)
    for bb in range(B):                       # B = 2: two cheap 2-D transposes
        xpad_ref[bb, 1:L + 1, :] = jnp.transpose(x_ref[bb])        # (L, D)

    acc = jnp.zeros((B * L, H), jnp.float32)
    for k in range(3):                        # 3 taps -> 3 MXU matmuls (whole batch)
        tap = xpad_ref[:, k:k + L, :].reshape(B * L, D).astype(jnp.bfloat16)
        acc = acc + jnp.dot(tap, cw_ref[k], preferred_element_type=jnp.float32)
    acc = jnp.maximum(acc + cb_ref[...], 0.0)                      # bias + ReLU
    pooled = jnp.max(acc.reshape(B * Din, 2, H), axis=1)           # (B*Din, H)

    # ---- hoisted layer-0 input projection: ONE (B*T, Din) @ (Din, 4H) GEMM ----
    xs = jnp.concatenate(
        [jnp.transpose(pooled[bb * Din:(bb + 1) * Din, :]) for bb in range(B)],
        axis=0).astype(jnp.bfloat16)                               # (B*T, Din)
    gin_all = jnp.dot(xs, gih0_ref[...],
                      preferred_element_type=jnp.float32)          # (B*T, 4H)

    wcat = wcat_ref[...]                      # (2H, 8H) fused recurrent weight
    b0 = b0_ref[...]
    b1 = b1_ref[...]

    def lstm_update(gates, c):
        # PyTorch gate order [i, f, g, o]; sigmoid on the full vreg (1 EUP pass)
        sig = jax.nn.sigmoid(gates)
        i = sig[:, 0 * H:1 * H]
        f = sig[:, 1 * H:2 * H]
        o = sig[:, 3 * H:4 * H]
        g = jnp.tanh(gates[:, 2 * H:3 * H])
        c_new = f * c + i * g
        h_new = o * jnp.tanh(c_new)
        return h_new, c_new

    h0rec = jnp.zeros((B, G), jnp.float32)    # h0_{t-1} @ whh0^T (zero at t=0)
    c0 = jnp.zeros((B, H), jnp.float32)
    h1 = jnp.zeros((B, H), jnp.float32)
    c1 = jnp.zeros((B, H), jnp.float32)

    # Fully unrolled static time loop: ONE MXU push per step.
    #   [h0_t | h1_{t-1}] @ [[whh0^T | wih1^T], [0 | whh1^T]] yields the
    #   layer-0 recurrent term for t+1 (cols :G) and layer-1 gates for t (cols G:).
    for t in range(T):
        x_g = jnp.concatenate(
            [gin_all[bb * T + t: bb * T + t + 1, :] for bb in range(B)], axis=0)
        h0, c0 = lstm_update(x_g + h0rec + b0, c0)
        hcat = jnp.concatenate([h0, h1], axis=1).astype(jnp.bfloat16)   # (B, 2H)
        hp = jnp.dot(hcat, wcat, preferred_element_type=jnp.float32)    # (B, 8H)
        h1, c1 = lstm_update(hp[:, G:] + b1, c1)
        h0rec = hp[:, :G]                     # recurrent term for next step

    # ---- Dropout (identity at inference) -> Linear -> Softmax ----
    logits = (jnp.dot(h1, fcw_ref[...], preferred_element_type=jnp.float32)
              + fcb_ref[...])
    m = jnp.max(logits, axis=1, keepdims=True)
    e = jnp.exp(logits - m)
    denom = jnp.sum(e, axis=1, keepdims=True)
    o_ref[...] = e * pl.reciprocal(denom, approx=True)


# ----------------------------------------------------------------------------
# One-time parameter re-layout (outside the per-forward graph)
# ----------------------------------------------------------------------------
def prepare_params(p):
    whh0t = jnp.transpose(p["whh0"])                                     # (H, 4H)
    wih1t = jnp.transpose(p["wih1"])                                     # (H, 4H)
    whh1t = jnp.transpose(p["whh1"])                                     # (H, 4H)
    wcat = jnp.concatenate(
        [jnp.concatenate([whh0t, wih1t], axis=1),
         jnp.concatenate([jnp.zeros_like(whh1t), whh1t], axis=1)],
        axis=0).astype(jnp.bfloat16)                                     # (2H, 8H)
    return {
        "conv_w3": jnp.transpose(p["conv_w"], (2, 1, 0)).astype(jnp.bfloat16),  # (3, D, H)
        "conv_b": p["conv_b"].reshape(1, -1).astype(jnp.float32),
        "gih0": jnp.transpose(p["wih0"]).astype(jnp.bfloat16),                  # (D, 4H)
        "wcat": wcat,
        "b0": (p["bih0"] + p["bhh0"]).reshape(1, -1).astype(jnp.float32),
        "b1": (p["bih1"] + p["bhh1"]).reshape(1, -1).astype(jnp.float32),
        "fc_wt": jnp.transpose(p["fc_w"]).astype(jnp.float32),                  # (H, C)
        "fc_b": p["fc_b"].reshape(1, -1).astype(jnp.float32),
    }


def forward(prep, x):
    x = x.astype(jnp.float32)
    B, D, L = x.shape
    C = prep["fc_wt"].shape[1]
    return pl.pallas_call(
        _fused_kernel,
        out_shape=jax.ShapeDtypeStruct((B, C), jnp.float32),
        in_specs=[pl.BlockSpec(memory_space=pltpu.MemorySpace.VMEM)] * 9,
        out_specs=pl.BlockSpec(memory_space=pltpu.MemorySpace.VMEM),
        scratch_shapes=[pltpu.VMEM((B, L + 2, D), jnp.float32)],
    )(x, prep["conv_w3"], prep["conv_b"], prep["gih0"], prep["wcat"],
      prep["b0"], prep["b1"], prep["fc_wt"], prep["fc_b"])


# ----------------------------------------------------------------------------
# Pure-JAX (f32) reference for correctness
# ----------------------------------------------------------------------------
def reference_forward(params, x):
    B, D, L = x.shape
    H = HIDDEN
    xp = jnp.pad(x, ((0, 0), (0, 0), (1, 1)))
    conv = jnp.zeros((B, H, L), jnp.float32)
    for k in range(3):
        conv = conv + jnp.einsum("hd,bdl->bhl",
                                 params["conv_w"][:, :, k], xp[:, :, k:k + L])
    conv = jax.nn.relu(conv + params["conv_b"][None, :, None])
    seq = jnp.max(conv.reshape(B, H, L // 2, 2), axis=-1)   # (B, T=H, Din)

    def run_layer(seq_in, wih, whh, bih, bhh):
        Bsz, T, _ = seq_in.shape
        Hh = whh.shape[1]
        h = jnp.zeros((Bsz, Hh), jnp.float32)
        c = jnp.zeros((Bsz, Hh), jnp.float32)
        outs = []
        for t in range(T):
            g = seq_in[:, t, :] @ wih.T + h @ whh.T + bih + bhh
            i, f, gg, o = jnp.split(g, 4, axis=1)
            i, f, o = jax.nn.sigmoid(i), jax.nn.sigmoid(f), jax.nn.sigmoid(o)
            gg = jnp.tanh(gg)
            c = f * c + i * gg
            h = o * jnp.tanh(c)
            outs.append(h)
        return jnp.stack(outs, axis=1)

    seq = run_layer(seq, params["wih0"], params["whh0"], params["bih0"], params["bhh0"])
    seq = run_layer(seq, params["wih1"], params["whh1"], params["bih1"], params["bhh1"])
    logits = seq[:, -1, :] @ params["fc_w"].T + params["fc_b"]
    return jax.nn.softmax(logits, axis=1)


# ----------------------------------------------------------------------------
# Deterministic parameter init (PyTorch-style uniform bounds)
# ----------------------------------------------------------------------------
def init_params(key):
    D, H, C = INPUT_SIZE, HIDDEN, NUM_CLASSES
    ks = jax.random.split(key, 12)

    def u(k, shape, bound):
        return jax.random.uniform(k, shape, jnp.float32, -bound, bound)

    cb = 1.0 / np.sqrt(D * 3)
    lb = 1.0 / np.sqrt(H)
    return {
        "conv_w": u(ks[0], (H, D, 3), cb),
        "conv_b": u(ks[1], (H,), cb),
        "wih0": u(ks[2], (4 * H, D), lb),   # LSTM layer 0 (input_size = D)
        "whh0": u(ks[3], (4 * H, H), lb),
        "bih0": u(ks[4], (4 * H,), lb),
        "bhh0": u(ks[5], (4 * H,), lb),
        "wih1": u(ks[6], (4 * H, H), lb),   # LSTM layer 1
        "whh1": u(ks[7], (4 * H, H), lb),
        "bih1": u(ks[8], (4 * H,), lb),
        "bhh1": u(ks[9], (4 * H,), lb),
        "fc_w": u(ks[10], (C, H), lb),
        "fc_b": u(ks[11], (C,), lb),
    }


if __name__ == "__main__":
    key = jax.random.PRNGKey(0)
    pkey, xkey = jax.random.split(key)
    params = init_params(pkey)
    prep = prepare_params(params)       # one-time weight re-layout
    # x in PyTorch Conv1d layout (B, C=input_size, L)
    x = jax.random.normal(xkey, (BATCH, INPUT_SIZE, SEQ_LEN), jnp.float32)

    out = jax.jit(forward)(prep, x)
    out = jax.block_until_ready(out)

    ref = reference_forward(params, x)
    assert out.shape == (BATCH, NUM_CLASSES)
    np.testing.assert_allclose(np.asarray(out), np.asarray(ref),
                               rtol=2e-2, atol=5e-3)
    print("KERNEL_OK")
</pallas_src>

<mosaic_0001>
module attributes {stable_mosaic.version = 11 : i64} {
  func.func @_fused_kernel(%arg0: memref<2x16x32xf32, #tpu.memory_space<vmem>>, %arg1: memref<3x16x32xbf16, #tpu.memory_space<vmem>>, %arg2: memref<1x32xf32, #tpu.memory_space<vmem>>, %arg3: memref<16x128xbf16, #tpu.memory_space<vmem>>, %arg4: memref<64x256xbf16, #tpu.memory_space<vmem>>, %arg5: memref<1x128xf32, #tpu.memory_space<vmem>>, %arg6: memref<1x128xf32, #tpu.memory_space<vmem>>, %arg7: memref<32x30xf32, #tpu.memory_space<vmem>>, %arg8: memref<1x30xf32, #tpu.memory_space<vmem>>, %arg9: memref<2x30xf32, #tpu.memory_space<vmem>>, %arg10: memref<2x34x16xf32, #tpu.memory_space<vmem>>) attributes {dimension_semantics = [], scalar_prefetch = 0 : i64, scratch_operands = 1 : i64, tpu.core_type = #tpu.core_type<tc>} {
    %cst = arith.constant 0.000000e+00 : f32
    %0 = vector.broadcast %cst : f32 to vector<2x34x16xf32>
    %c0 = arith.constant 0 : index
    %c0_0 = arith.constant 0 : index
    %c0_1 = arith.constant 0 : index
    %1 = vector.load %arg10[%c0, %c0_0, %c0_1] : memref<2x34x16xf32, #tpu.memory_space<vmem>>, vector<2x34x16xf32>
    tpu.vector_store %arg10[%c0, %c0_0, %c0_1], %0 {strides = array<i32>} : memref<2x34x16xf32, #tpu.memory_space<vmem>>, vector<2x34x16xf32>,
    %c0_2 = arith.constant 0 : index
    %c0_3 = arith.constant 0 : index
    %c0_4 = arith.constant 0 : index
    %2 = vector.load %arg0[%c0_2, %c0_3, %c0_4] : memref<2x16x32xf32, #tpu.memory_space<vmem>>, vector<1x16x32xf32>
    %3 = vector.shape_cast %2 : vector<1x16x32xf32> to vector<16x32xf32>
    %4 = tpu.transpose %3, [1, 0] : vector<16x32xf32> -> vector<32x16xf32>
    %c0_5 = arith.constant 0 : index
    %c1 = arith.constant 1 : index
    %c0_6 = arith.constant 0 : index
    %5 = vector.load %arg10[%c0_5, %c1, %c0_6] : memref<2x34x16xf32, #tpu.memory_space<vmem>>, vector<1x32x16xf32>
    %6 = vector.shape_cast %5 : vector<1x32x16xf32> to vector<32x16xf32>
    %7 = vector.shape_cast %4 : vector<32x16xf32> to vector<1x32x16xf32>
    tpu.vector_store %arg10[%c0_5, %c1, %c0_6], %7 {strides = array<i32>} : memref<2x34x16xf32, #tpu.memory_space<vmem>>, vector<1x32x16xf32>,
    %c1_7 = arith.constant 1 : index
    %c0_8 = arith.constant 0 : index
    %c0_9 = arith.constant 0 : index
    %8 = vector.load %arg0[%c1_7, %c0_8, %c0_9] : memref<2x16x32xf32, #tpu.memory_space<vmem>>, vector<1x16x32xf32>
    %9 = vector.shape_cast %8 : vector<1x16x32xf32> to vector<16x32xf32>
    %10 = tpu.transpose %9, [1, 0] : vector<16x32xf32> -> vector<32x16xf32>
    %c1_10 = arith.constant 1 : index
    %c1_11 = arith.constant 1 : index
    %c0_12 = arith.constant 0 : index
    %11 = vector.load %arg10[%c1_10, %c1_11, %c0_12] : memref<2x34x16xf32, #tpu.memory_space<vmem>>, vector<1x32x16xf32>
    %12 = vector.shape_cast %11 : vector<1x32x16xf32> to vector<32x16xf32>
    %13 = vector.shape_cast %10 : vector<32x16xf32> to vector<1x32x16xf32>
    tpu.vector_store %arg10[%c1_10, %c1_11, %c0_12], %13 {strides = array<i32>} : memref<2x34x16xf32, #tpu.memory_space<vmem>>, vector<1x32x16xf32>,
    %cst_13 = arith.constant 0.000000e+00 : f32
    %14 = vector.broadcast %cst_13 : f32 to vector<64x32xf32>
    %c0_14 = arith.constant 0 : index
    %c0_15 = arith.constant 0 : index
    %c0_16 = arith.constant 0 : index
    %15 = vector.load %arg10[%c0_14, %c0_15, %c0_16] : memref<2x34x16xf32, #tpu.memory_space<vmem>>, vector<2x32x16xf32>
    %16 = vector.shape_cast %15 : vector<2x32x16xf32> to vector<64x16xf32>
    %17 = arith.truncf %16 : vector<64x16xf32> to vector<64x16xbf16>
    %c0_17 = arith.constant 0 : index
    %c0_18 = arith.constant 0 : index
    %c0_19 = arith.constant 0 : index
    %18 = vector.load %arg1[%c0_17, %c0_18, %c0_19] : memref<3x16x32xbf16, #tpu.memory_space<vmem>>, vector<1x16x32xbf16>
    %19 = vector.shape_cast %18 : vector<1x16x32xbf16> to vector<16x32xbf16>
    %cst_20 = arith.constant dense<0.000000e+00> : vector<64x32xf32>
    %20 = tpu.matmul %17, %19, %cst_20 {dimension_numbers = #tpu.dot_dimension_numbers<[1], [0], [0], [1], [0, 0, 1, 1], [], []>} : vector<64x16xbf16>, vector<16x32xbf16>, vector<64x32xf32> -> vector<64x32xf32>
    %21 = arith.addf %14, %20 : vector<64x32xf32>
    %c0_21 = arith.constant 0 : index
    %c1_22 = arith.constant 1 : index
    %c0_23 = arith.constant 0 : index
    %22 = vector.load %arg10[%c0_21, %c1_22, %c0_23] : memref<2x34x16xf32, #tpu.memory_space<vmem>>, vector<2x32x16xf32>
    %23 = vector.shape_cast %22 : vector<2x32x16xf32> to vector<64x16xf32>
    %24 = arith.truncf %23 : vector<64x16xf32> to vector<64x16xbf16>
    %c1_24 = arith.constant 1 : index
    %c0_25 = arith.constant 0 : index
    %c0_26 = arith.constant 0 : index
    %25 = vector.load %arg1[%c1_24, %c0_25, %c0_26] : memref<3x16x32xbf16, #tpu.memory_space<vmem>>, vector<1x16x32xbf16>
    %26 = vector.shape_cast %25 : vector<1x16x32xbf16> to vector<16x32xbf16>
    %cst_27 = arith.constant dense<0.000000e+00> : vector<64x32xf32>
    %27 = tpu.matmul %24, %26, %cst_27 {dimension_numbers = #tpu.dot_dimension_numbers<[1], [0], [0], [1], [0, 0, 1, 1], [], []>} : vector<64x16xbf16>, vector<16x32xbf16>, vector<64x32xf32> -> vector<64x32xf32>
    %28 = arith.addf %21, %27 : vector<64x32xf32>
    %c0_28 = arith.constant 0 : index
    %c2 = arith.constant 2 : index
    %c0_29 = arith.constant 0 : index
    %29 = vector.load %arg10[%c0_28, %c2, %c0_29] : memref<2x34x16xf32, #tpu.memory_space<vmem>>, vector<2x32x16xf32>
    %30 = vector.shape_cast %29 : vector<2x32x16xf32> to vector<64x16xf32>
    %31 = arith.truncf %30 : vector<64x16xf32> to vector<64x16xbf16>
    %c2_30 = arith.constant 2 : index
    %c0_31 = arith.constant 0 : index
    %c0_32 = arith.constant 0 : index
    %32 = vector.load %arg1[%c2_30, %c0_31, %c0_32] : memref<3x16x32xbf16, #tpu.memory_space<vmem>>, vector<1x16x32xbf16>
    %33 = vector.shape_cast %32 : vector<1x16x32xbf16> to vector<16x32xbf16>
    %cst_33 = arith.constant dense<0.000000e+00> : vector<64x32xf32>
    %34 = tpu.matmul %31, %33, %cst_33 {dimension_numbers = #tpu.dot_dimension_numbers<[1], [0], [0], [1], [0, 0, 1, 1], [], []>} : vector<64x16xbf16>, vector<16x32xbf16>, vector<64x32xf32> -> vector<64x32xf32>
    %35 = arith.addf %28, %34 : vector<64x32xf32>
    %c0_34 = arith.constant 0 : index
    %c0_35 = arith.constant 0 : index
    %36 = vector.load %arg2[%c0_34, %c0_35] : memref<1x32xf32, #tpu.memory_space<vmem>>, vector<1x32xf32>
    %37 = vector.broadcast %36 : vector<1x32xf32> to vector<64x32xf32>
    %38 = arith.addf %35, %37 : vector<64x32xf32>
    %cst_36 = arith.constant 0.000000e+00 : f32
    %39 = vector.broadcast %cst_36 : f32 to vector<64x32xf32>
    %40 = arith.maximumf %38, %39 : vector<64x32xf32>
    %41 = vector.shape_cast %40 : vector<64x32xf32> to vector<32x2x32xf32>
    %cst_37 = arith.constant dense<0xFF800000> : vector<32x32xf32>
    %42 = vector.multi_reduction <maximumf>, %41, %cst_37 [1] : vector<32x2x32xf32> to vector<32x32xf32>
    %43 = vector.extract_strided_slice %42 {offsets = [0, 0], sizes = [16, 32], strides = [1, 1]} : vector<32x32xf32> to vector<16x32xf32>
    %44 = tpu.transpose %43, [1, 0] : vector<16x32xf32> -> vector<32x16xf32>
    %45 = vector.extract_strided_slice %42 {offsets = [16, 0], sizes = [16, 32], strides = [1, 1]} : vector<32x32xf32> to vector<16x32xf32>
    %46 = tpu.transpose %45, [1, 0] : vector<16x32xf32> -> vector<32x16xf32>
    %47 = tpu.concatenate %44, %46 in 0 : vector<32x16xf32>, vector<32x16xf32> -> vector<64x16xf32>
    %48 = arith.truncf %47 : vector<64x16xf32> to vector<64x16xbf16>
    %c0_38 = arith.constant 0 : index
    %c0_39 = arith.constant 0 : index
    %49 = vector.load %arg3[%c0_38, %c0_39] : memref<16x128xbf16, #tpu.memory_space<vmem>>, vector<16x128xbf16>
    %cst_40 = arith.constant dense<0.000000e+00> : vector<64x128xf32>
    %50 = tpu.matmul %48, %49, %cst_40 {dimension_numbers = #tpu.dot_dimension_numbers<[1], [0], [0], [1], [0, 0, 1, 1], [], []>} : vector<64x16xbf16>, vector<16x128xbf16>, vector<64x128xf32> -> vector<64x128xf32>
    %c0_41 = arith.constant 0 : index
    %c0_42 = arith.constant 0 : index
    %51 = vector.load %arg4[%c0_41, %c0_42] : memref<64x256xbf16, #tpu.memory_space<vmem>>, vector<64x256xbf16>
    %c0_43 = arith.constant 0 : index
    %c0_44 = arith.constant 0 : index
    %52 = vector.load %arg5[%c0_43, %c0_44] : memref<1x128xf32, #tpu.memory_space<vmem>>, vector<1x128xf32>
    %c0_45 = arith.constant 0 : index
    %c0_46 = arith.constant 0 : index
    %53 = vector.load %arg6[%c0_45, %c0_46] : memref<1x128xf32, #tpu.memory_space<vmem>>, vector<1x128xf32>
    %cst_47 = arith.constant 0.000000e+00 : f32
    %54 = vector.broadcast %cst_47 : f32 to vector<2x128xf32>
    %cst_48 = arith.constant 0.000000e+00 : f32
    %55 = vector.broadcast %cst_48 : f32 to vector<2x32xf32>
    %cst_49 = arith.constant 0.000000e+00 : f32
    %56 = vector.broadcast %cst_49 : f32 to vector<2x32xf32>
    %cst_50 = arith.constant 0.000000e+00 : f32
    %57 = vector.broadcast %cst_50 : f32 to vector<2x32xf32>
    %58 = vector.extract_strided_slice %50 {offsets = [0, 0], sizes = [1, 128], strides = [1, 1]} : vector<64x128xf32> to vector<1x128xf32>
    %59 = vector.extract_strided_slice %50 {offsets = [32, 0], sizes = [1, 128], strides = [1, 1]} : vector<64x128xf32> to vector<1x128xf32>
    %60 = tpu.concatenate %58, %59 in 0 : vector<1x128xf32>, vector<1x128xf32> -> vector<2x128xf32>
    %61 = arith.addf %60, %54 : vector<2x128xf32>
    %62 = vector.broadcast %52 : vector<1x128xf32> to vector<2x128xf32>
    %63 = arith.addf %61, %62 : vector<2x128xf32>
    %64 = arith.negf %63 : vector<2x128xf32>
    %65 = math.exp %64 : vector<2x128xf32>
    %cst_51 = arith.constant 1.000000e+00 : f32
    %66 = vector.broadcast %cst_51 : f32 to vector<2x128xf32>
    %67 = arith.addf %66, %65 : vector<2x128xf32>
    %68 = arith.divf %66, %67 : vector<2x128xf32>
    %69 = vector.extract_strided_slice %68 {offsets = [0, 0], sizes = [2, 32], strides = [1, 1]} : vector<2x128xf32> to vector<2x32xf32>
    %70 = vector.extract_strided_slice %68 {offsets = [0, 32], sizes = [2, 32], strides = [1, 1]} : vector<2x128xf32> to vector<2x32xf32>
    %71 = vector.extract_strided_slice %68 {offsets = [0, 96], sizes = [2, 32], strides = [1, 1]} : vector<2x128xf32> to vector<2x32xf32>
    %72 = vector.extract_strided_slice %63 {offsets = [0, 64], sizes = [2, 32], strides = [1, 1]} : vector<2x128xf32> to vector<2x32xf32>
    %73 = math.tanh %72 : vector<2x32xf32>
    %74 = arith.mulf %70, %55 : vector<2x32xf32>
    %75 = arith.mulf %69, %73 : vector<2x32xf32>
    %76 = arith.addf %74, %75 : vector<2x32xf32>
    %77 = math.tanh %76 : vector<2x32xf32>
    %78 = arith.mulf %71, %77 : vector<2x32xf32>
    %79 = tpu.concatenate %78, %56 in 1 : vector<2x32xf32>, vector<2x32xf32> -> vector<2x64xf32>
    %80 = arith.truncf %79 : vector<2x64xf32> to vector<2x64xbf16>
    %cst_52 = arith.constant dense<0.000000e+00> : vector<2x256xf32>
    %81 = tpu.matmul %80, %51, %cst_52 {dimension_numbers = #tpu.dot_dimension_numbers<[1], [0], [0], [1], [0, 0, 1, 1], [], []>} : vector<2x64xbf16>, vector<64x256xbf16>, vector<2x256xf32> -> vector<2x256xf32>
    %82 = vector.extract_strided_slice %81 {offsets = [0, 128], sizes = [2, 128], strides = [1, 1]} : vector<2x256xf32> to vector<2x128xf32>
    %83 = vector.broadcast %53 : vector<1x128xf32> to vector<2x128xf32>
    %84 = arith.addf %82, %83 : vector<2x128xf32>
    %85 = arith.negf %84 : vector<2x128xf32>
    %86 = math.exp %85 : vector<2x128xf32>
    %cst_53 = arith.constant 1.000000e+00 : f32
    %87 = vector.broadcast %cst_53 : f32 to vector<2x128xf32>
    %88 = arith.addf %87, %86 : vector<2x128xf32>
    %89 = arith.divf %87, %88 : vector<2x128xf32>
    %90 = vector.extract_strided_slice %89 {offsets = [0, 0], sizes = [2, 32], strides = [1, 1]} : vector<2x128xf32> to vector<2x32xf32>
    %91 = vector.extract_strided_slice %89 {offsets = [0, 32], sizes = [2, 32], strides = [1, 1]} : vector<2x128xf32> to vector<2x32xf32>
    %92 = vector.extract_strided_slice %89 {offsets = [0, 96], sizes = [2, 32], strides = [1, 1]} : vector<2x128xf32> to vector<2x32xf32>
    %93 = vector.extract_strided_slice %84 {offsets = [0, 64], sizes = [2, 32], strides = [1, 1]} : vector<2x128xf32> to vector<2x32xf32>
    %94 = math.tanh %93 : vector<2x32xf32>
    %95 = arith.mulf %91, %57 : vector<2x32xf32>
    %96 = arith.mulf %90, %94 : vector<2x32xf32>
    %97 = arith.addf %95, %96 : vector<2x32xf32>
    %98 = math.tanh %97 : vector<2x32xf32>
    %99 = arith.mulf %92, %98 : vector<2x32xf32>
    %100 = vector.extract_strided_slice %81 {offsets = [0, 0], sizes = [2, 128], strides = [1, 1]} : vector<2x256xf32> to vector<2x128xf32>
    %101 = vector.extract_strided_slice %50 {offsets = [1, 0], sizes = [1, 128], strides = [1, 1]} : vector<64x128xf32> to vector<1x128xf32>
    %102 = vector.extract_strided_slice %50 {offsets = [33, 0], sizes = [1, 128], strides = [1, 1]} : vector<64x128xf32> to vector<1x128xf32>
    %103 = tpu.concatenate %101, %102 in 0 : vector<1x128xf32>, vector<1x128xf32> -> vector<2x128xf32>
    %104 = arith.addf %103, %100 : vector<2x128xf32>
    %105 = vector.broadcast %52 : vector<1x128xf32> to vector<2x128xf32>
    %106 = arith.addf %104, %105 : vector<2x128xf32>
    %107 = arith.negf %106 : vector<2x128xf32>
    %108 = math.exp %107 : vector<2x128xf32>
    %cst_54 = arith.constant 1.000000e+00 : f32
    %109 = vector.broadcast %cst_54 : f32 to vector<2x128xf32>
    %110 = arith.addf %109, %108 : vector<2x128xf32>
    %111 = arith.divf %109, %110 : vector<2x128xf32>
    %112 = vector.extract_strided_slice %111 {offsets = [0, 0], sizes = [2, 32], strides = [1, 1]} : vector<2x128xf32> to vector<2x32xf32>
    %113 = vector.extract_strided_slice %111 {offsets = [0, 32], sizes = [2, 32], strides = [1, 1]} : vector<2x128xf32> to vector<2x32xf32>
    %114 = vector.extract_strided_slice %111 {offsets = [0, 96], sizes = [2, 32], strides = [1, 1]} : vector<2x128xf32> to vector<2x32xf32>
    %115 = vector.extract_strided_slice %106 {offsets = [0, 64], sizes = [2, 32], strides = [1, 1]} : vector<2x128xf32> to vector<2x32xf32>
    %116 = math.tanh %115 : vector<2x32xf32>
    %117 = arith.mulf %113, %76 : vector<2x32xf32>
    %118 = arith.mulf %112, %116 : vector<2x32xf32>
    %119 = arith.addf %117, %118 : vector<2x32xf32>
    %120 = math.tanh %119 : vector<2x32xf32>
    %121 = arith.mulf %114, %120 : vector<2x32xf32>
    %122 = tpu.concatenate %121, %99 in 1 : vector<2x32xf32>, vector<2x32xf32> -> vector<2x64xf32>
    %123 = arith.truncf %122 : vector<2x64xf32> to vector<2x64xbf16>
    %cst_55 = arith.constant dense<0.000000e+00> : vector<2x256xf32>
    %124 = tpu.matmul %123, %51, %cst_55 {dimension_numbers = #tpu.dot_dimension_numbers<[1], [0], [0], [1], [0, 0, 1, 1], [], []>} : vector<2x64xbf16>, vector<64x256xbf16>, vector<2x256xf32> -> vector<2x256xf32>
    %125 = vector.extract_strided_slice %124 {offsets = [0, 128], sizes = [2, 128], strides = [1, 1]} : vector<2x256xf32> to vector<2x128xf32>
    %126 = vector.broadcast %53 : vector<1x128xf32> to vector<2x128xf32>
    %127 = arith.addf %125, %126 : vector<2x128xf32>
    %128 = arith.negf %127 : vector<2x128xf32>
    %129 = math.exp %128 : vector<2x128xf32>
    %cst_56 = arith.constant 1.000000e+00 : f32
    %130 = vector.broadcast %cst_56 : f32 to vector<2x128xf32>
    %131 = arith.addf %130, %129 : vector<2x128xf32>
    %132 = arith.divf %130, %131 : vector<2x128xf32>
    %133 = vector.extract_strided_slice %132 {offsets = [0, 0], sizes = [2, 32], strides = [1, 1]} : vector<2x128xf32> to vector<2x32xf32>
    %134 = vector.extract_strided_slice %132 {offsets = [0, 32], sizes = [2, 32], strides = [1, 1]} : vector<2x128xf32> to vector<2x32xf32>
    %135 = vector.extract_strided_slice %132 {offsets = [0, 96], sizes = [2, 32], strides = [1, 1]} : vector<2x128xf32> to vector<2x32xf32>
    %136 = vector.extract_strided_slice %127 {offsets = [0, 64], sizes = [2, 32], strides = [1, 1]} : vector<2x128xf32> to vector<2x32xf32>
    %137 = math.tanh %136 : vector<2x32xf32>
    %138 = arith.mulf %134, %97 : vector<2x32xf32>
    %139 = arith.mulf %133, %137 : vector<2x32xf32>
    %140 = arith.addf %138, %139 : vector<2x32xf32>
    %141 = math.tanh %140 : vector<2x32xf32>
    %142 = arith.mulf %135, %141 : vector<2x32xf32>
    %143 = vector.extract_strided_slice %124 {offsets = [0, 0], sizes = [2, 128], strides = [1, 1]} : vector<2x256xf32> to vector<2x128xf32>
    %144 = vector.extract_strided_slice %50 {offsets = [2, 0], sizes = [1, 128], strides = [1, 1]} : vector<64x128xf32> to vector<1x128xf32>
    %145 = vector.extract_strided_slice %50 {offsets = [34, 0], sizes = [1, 128], strides = [1, 1]} : vector<64x128xf32> to vector<1x128xf32>
    %146 = tpu.concatenate %144, %145 in 0 : vector<1x128xf32>, vector<1x128xf32> -> vector<2x128xf32>
    %147 = arith.addf %146, %143 : vector<2x128xf32>
    %148 = vector.broadcast %52 : vector<1x128xf32> to vector<2x128xf32>
    %149 = arith.addf %147, %148 : vector<2x128xf32>
    %150 = arith.negf %149 : vector<2x128xf32>
    %151 = math.exp %150 : vector<2x128xf32>
    %cst_57 = arith.constant 1.000000e+00 : f32
    %152 = vector.broadcast %cst_57 : f32 to vector<2x128xf32>
    %153 = arith.addf %152, %151 : vector<2x128xf32>
    %154 = arith.divf %152, %153 : vector<2x128xf32>
    %155 = vector.extract_strided_slice %154 {offsets = [0, 0], sizes = [2, 32], strides = [1, 1]} : vector<2x128xf32> to vector<2x32xf32>
    %156 = vector.extract_strided_slice %154 {offsets = [0, 32], sizes = [2, 32], strides = [1, 1]} : vector<2x128xf32> to vector<2x32xf32>
    %157 = vector.extract_strided_slice %154 {offsets = [0, 96], sizes = [2, 32], strides = [1, 1]} : vector<2x128xf32> to vector<2x32xf32>
    %158 = vector.extract_strided_slice %149 {offsets = [0, 64], sizes = [2, 32], strides = [1, 1]} : vector<2x128xf32> to vector<2x32xf32>
    %159 = math.tanh %158 : vector<2x32xf32>
    %160 = arith.mulf %156, %119 : vector<2x32xf32>
    %161 = arith.mulf %155, %159 : vector<2x32xf32>
    %162 = arith.addf %160, %161 : vector<2x32xf32>
    %163 = math.tanh %162 : vector<2x32xf32>
    %164 = arith.mulf %157, %163 : vector<2x32xf32>
    %165 = tpu.concatenate %164, %142 in 1 : vector<2x32xf32>, vector<2x32xf32> -> vector<2x64xf32>
    %166 = arith.truncf %165 : vector<2x64xf32> to vector<2x64xbf16>
    %cst_58 = arith.constant dense<0.000000e+00> : vector<2x256xf32>
    %167 = tpu.matmul %166, %51, %cst_58 {dimension_numbers = #tpu.dot_dimension_numbers<[1], [0], [0], [1], [0, 0, 1, 1], [], []>} : vector<2x64xbf16>, vector<64x256xbf16>, vector<2x256xf32> -> vector<2x256xf32>
    %168 = vector.extract_strided_slice %167 {offsets = [0, 128], sizes = [2, 128], strides = [1, 1]} : vector<2x256xf32> to vector<2x128xf32>
    %169 = vector.broadcast %53 : vector<1x128xf32> to vector<2x128xf32>
    %170 = arith.addf %168, %169 : vector<2x128xf32>
    %171 = arith.negf %170 : vector<2x128xf32>
    %172 = math.exp %171 : vector<2x128xf32>
    %cst_59 = arith.constant 1.000000e+00 : f32
    %173 = vector.broadcast %cst_59 : f32 to vector<2x128xf32>
    %174 = arith.addf %173, %172 : vector<2x128xf32>
    %175 = arith.divf %173, %174 : vector<2x128xf32>
    %176 = vector.extract_strided_slice %175 {offsets = [0, 0], sizes = [2, 32], strides = [1, 1]} : vector<2x128xf32> to vector<2x32xf32>
    %177 = vector.extract_strided_slice %175 {offsets = [0, 32], sizes = [2, 32], strides = [1, 1]} : vector<2x128xf32> to vector<2x32xf32>
    %178 = vector.extract_strided_slice %175 {offsets = [0, 96], sizes = [2, 32], strides = [1, 1]} : vector<2x128xf32> to vector<2x32xf32>
    %179 = vector.extract_strided_slice %170 {offsets = [0, 64], sizes = [2, 32], strides = [1, 1]} : vector<2x128xf32> to vector<2x32xf32>
    %180 = math.tanh %179 : vector<2x32xf32>
    %181 = arith.mulf %177, %140 : vector<2x32xf32>
    %182 = arith.mulf %176, %180 : vector<2x32xf32>
    %183 = arith.addf %181, %182 : vector<2x32xf32>
    %184 = math.tanh %183 : vector<2x32xf32>
    %185 = arith.mulf %178, %184 : vector<2x32xf32>
    %186 = vector.extract_strided_slice %167 {offsets = [0, 0], sizes = [2, 128], strides = [1, 1]} : vector<2x256xf32> to vector<2x128xf32>
    %187 = vector.extract_strided_slice %50 {offsets = [3, 0], sizes = [1, 128], strides = [1, 1]} : vector<64x128xf32> to vector<1x128xf32>
    %188 = vector.extract_strided_slice %50 {offsets = [35, 0], sizes = [1, 128], strides = [1, 1]} : vector<64x128xf32> to vector<1x128xf32>
    %189 = tpu.concatenate %187, %188 in 0 : vector<1x128xf32>, vector<1x128xf32> -> vector<2x128xf32>
    %190 = arith.addf %189, %186 : vector<2x128xf32>
    %191 = vector.broadcast %52 : vector<1x128xf32> to vector<2x128xf32>
    %192 = arith.addf %190, %191 : vector<2x128xf32>
    %193 = arith.negf %192 : vector<2x128xf32>
    %194 = math.exp %193 : vector<2x128xf32>
    %cst_60 = arith.constant 1.000000e+00 : f32
    %195 = vector.broadcast %cst_60 : f32 to vector<2x128xf32>
    %196 = arith.addf %195, %194 : vector<2x128xf32>
    %197 = arith.divf %195, %196 : vector<2x128xf32>
    %198 = vector.extract_strided_slice %197 {offsets = [0, 0], sizes = [2, 32], strides = [1, 1]} : vector<2x128xf32> to vector<2x32xf32>
    %199 = vector.extract_strided_slice %197 {offsets = [0, 32], sizes = [2, 32], strides = [1, 1]} : vector<2x128xf32> to vector<2x32xf32>
    %200 = vector.extract_strided_slice %197 {offsets = [0, 96], sizes = [2, 32], strides = [1, 1]} : vector<2x128xf32> to vector<2x32xf32>
    %201 = vector.extract_strided_slice %192 {offsets = [0, 64], sizes = [2, 32], strides = [1, 1]} : vector<2x128xf32> to vector<2x32xf32>
    %202 = math.tanh %201 : vector<2x32xf32>
    %203 = arith.mulf %199, %162 : vector<2x32xf32>
    %204 = arith.mulf %198, %202 : vector<2x32xf32>
    %205 = arith.addf %203, %204 : vector<2x32xf32>
    %206 = math.tanh %205 : vector<2x32xf32>
    %207 = arith.mulf %200, %206 : vector<2x32xf32>
    %208 = tpu.concatenate %207, %185 in 1 : vector<2x32xf32>, vector<2x32xf32> -> vector<2x64xf32>
    %209 = arith.truncf %208 : vector<2x64xf32> to vector<2x64xbf16>
    %cst_61 = arith.constant dense<0.000000e+00> : vector<2x256xf32>
    %210 = tpu.matmul %209, %51, %cst_61 {dimension_numbers = #tpu.dot_dimension_numbers<[1], [0], [0], [1], [0, 0, 1, 1], [], []>} : vector<2x64xbf16>, vector<64x256xbf16>, vector<2x256xf32> -> vector<2x256xf32>
    %211 = vector.extract_strided_slice %210 {offsets = [0, 128], sizes = [2, 128], strides = [1, 1]} : vector<2x256xf32> to vector<2x128xf32>
    %212 = vector.broadcast %53 : vector<1x128xf32> to vector<2x128xf32>
    %213 = arith.addf %211, %212 : vector<2x128xf32>
    %214 = arith.negf %213 : vector<2x128xf32>
    %215 = math.exp %214 : vector<2x128xf32>
    %cst_62 = arith.constant 1.000000e+00 : f32
    %216 = vector.broadcast %cst_62 : f32 to vector<2x128xf32>
    %217 = arith.addf %216, %215 : vector<2x128xf32>
    %218 = arith.divf %216, %217 : vector<2x128xf32>
    %219 = vector.extract_strided_slice %218 {offsets = [0, 0], sizes = [2, 32], strides = [1, 1]} : vector<2x128xf32> to vector<2x32xf32>
    %220 = vector.extract_strided_slice %218 {offsets = [0, 32], sizes = [2, 32], strides = [1, 1]} : vector<2x128xf32> to vector<2x32xf32>
    %221 = vector.extract_strided_slice %218 {offsets = [0, 96], sizes = [2, 32], strides = [1, 1]} : vector<2x128xf32> to vector<2x32xf32>
    %222 = vector.extract_strided_slice %213 {offsets = [0, 64], sizes = [2, 32], strides = [1, 1]} : vector<2x128xf32> to vector<2x32xf32>
    %223 = math.tanh %222 : vector<2x32xf32>
    %224 = arith.mulf %220, %183 : vector<2x32xf32>
    %225 = arith.mulf %219, %223 : vector<2x32xf32>
    %226 = arith.addf %224, %225 : vector<2x32xf32>
    %227 = math.tanh %226 : vector<2x32xf32>
    %228 = arith.mulf %221, %227 : vector<2x32xf32>
    %229 = vector.extract_strided_slice %210 {offsets = [0, 0], sizes = [2, 128], strides = [1, 1]} : vector<2x256xf32> to vector<2x128xf32>
    %230 = vector.extract_strided_slice %50 {offsets = [4, 0], sizes = [1, 128], strides = [1, 1]} : vector<64x128xf32> to vector<1x128xf32>
    %231 = vector.extract_strided_slice %50 {offsets = [36, 0], sizes = [1, 128], strides = [1, 1]} : vector<64x128xf32> to vector<1x128xf32>
    %232 = tpu.concatenate %230, %231 in 0 : vector<1x128xf32>, vector<1x128xf32> -> vector<2x128xf32>
    %233 = arith.addf %232, %229 : vector<2x128xf32>
    %234 = vector.broadcast %52 : vector<1x128xf32> to vector<2x128xf32>
    %235 = arith.addf %233, %234 : vector<2x128xf32>
    %236 = arith.negf %235 : vector<2x128xf32>
    %237 = math.exp %236 : vector<2x128xf32>
    %cst_63 = arith.constant 1.000000e+00 : f32
    %238 = vector.broadcast %cst_63 : f32 to vector<2x128xf32>
    %239 = arith.addf %238, %237 : vector<2x128xf32>
    %240 = arith.divf %238, %239 : vector<2x128xf32>
    %241 = vector.extract_strided_slice %240 {offsets = [0, 0], sizes = [2, 32], strides = [1, 1]} : vector<2x128xf32> to vector<2x32xf32>
    %242 = vector.extract_strided_slice %240 {offsets = [0, 32], sizes = [2, 32], strides = [1, 1]} : vector<2x128xf32> to vector<2x32xf32>
    %243 = vector.extract_strided_slice %240 {offsets = [0, 96], sizes = [2, 32], strides = [1, 1]} : vector<2x128xf32> to vector<2x32xf32>
    %244 = vector.extract_strided_slice %235 {offsets = [0, 64], sizes = [2, 32], strides = [1, 1]} : vector<2x128xf32> to vector<2x32xf32>
    %245 = math.tanh %244 : vector<2x32xf32>
    %246 = arith.mulf %242, %205 : vector<2x32xf32>
    %247 = arith.mulf %241, %245 : vector<2x32xf32>
    %248 = arith.addf %246, %247 : vector<2x32xf32>
    %249 = math.tanh %248 : vector<2x32xf32>
    %250 = arith.mulf %243, %249 : vector<2x32xf32>
    %251 = tpu.concatenate %250, %228 in 1 : vector<2x32xf32>, vector<2x32xf32> -> vector<2x64xf32>
    %252 = arith.truncf %251 : vector<2x64xf32> to vector<2x64xbf16>
    %cst_64 = arith.constant dense<0.000000e+00> : vector<2x256xf32>
    %253 = tpu.matmul %252, %51, %cst_64 {dimension_numbers = #tpu.dot_dimension_numbers<[1], [0], [0], [1], [0, 0, 1, 1], [], []>} : vector<2x64xbf16>, vector<64x256xbf16>, vector<2x256xf32> -> vector<2x256xf32>
    %254 = vector.extract_strided_slice %253 {offsets = [0, 128], sizes = [2, 128], strides = [1, 1]} : vector<2x256xf32> to vector<2x128xf32>
    %255 = vector.broadcast %53 : vector<1x128xf32> to vector<2x128xf32>
    %256 = arith.addf %254, %255 : vector<2x128xf32>
    %257 = arith.negf %256 : vector<2x128xf32>
    %258 = math.exp %257 : vector<2x128xf32>
    %cst_65 = arith.constant 1.000000e+00 : f32
    %259 = vector.broadcast %cst_65 : f32 to vector<2x128xf32>
    %260 = arith.addf %259, %258 : vector<2x128xf32>
    %261 = arith.divf %259, %260 : vector<2x128xf32>
    %262 = vector.extract_strided_slice %261 {offsets = [0, 0], sizes = [2, 32], strides = [1, 1]} : vector<2x128xf32> to vector<2x32xf32>
    %263 = vector.extract_strided_slice %261 {offsets = [0, 32], sizes = [2, 32], strides = [1, 1]} : vector<2x128xf32> to vector<2x32xf32>
    %264 = vector.extract_strided_slice %261 {offsets = [0, 96], sizes = [2, 32], strides = [1, 1]} : vector<2x128xf32> to vector<2x32xf32>
    %265 = vector.extract_strided_slice %256 {offsets = [0, 64], sizes = [2, 32], strides = [1, 1]} : vector<2x128xf32> to vector<2x32xf32>
    %266 = math.tanh %265 : vector<2x32xf32>
    %267 = arith.mulf %263, %226 : vector<2x32xf32>
    %268 = arith.mulf %262, %266 : vector<2x32xf32>
    %269 = arith.addf %267, %268 : vector<2x32xf32>
    %270 = math.tanh %269 : vector<2x32xf32>
    %271 = arith.mulf %264, %270 : vector<2x32xf32>
    %272 = vector.extract_strided_slice %253 {offsets = [0, 0], sizes = [2, 128], strides = [1, 1]} : vector<2x256xf32> to vector<2x128xf32>
    %273 = vector.extract_strided_slice %50 {offsets = [5, 0], sizes = [1, 128], strides = [1, 1]} : vector<64x128xf32> to vector<1x128xf32>
    %274 = vector.extract_strided_slice %50 {offsets = [37, 0], sizes = [1, 128], strides = [1, 1]} : vector<64x128xf32> to vector<1x128xf32>
    %275 = tpu.concatenate %273, %274 in 0 : vector<1x128xf32>, vector<1x128xf32> -> vector<2x128xf32>
    %276 = arith.addf %275, %272 : vector<2x128xf32>
    %277 = vector.broadcast %52 : vector<1x128xf32> to vector<2x128xf32>
    %278 = arith.addf %276, %277 : vector<2x128xf32>
    %279 = arith.negf %278 : vector<2x128xf32>
    %280 = math.exp %279 : vector<2x128xf32>
    %cst_66 = arith.constant 1.000000e+00 : f32
    %281 = vector.broadcast %cst_66 : f32 to vector<2x128xf32>
    %282 = arith.addf %281, %280 : vector<2x128xf32>
    %283 = arith.divf %281, %282 : vector<2x128xf32>
    %284 = vector.extract_strided_slice %283 {offsets = [0, 0], sizes = [2, 32], strides = [1, 1]} : vector<2x128xf32> to vector<2x32xf32>
    %285 = vector.extract_strided_slice %283 {offsets = [0, 32], sizes = [2, 32], strides = [1, 1]} : vector<2x128xf32> to vector<2x32xf32>
    %286 = vector.extract_strided_slice %283 {offsets = [0, 96], sizes = [2, 32], strides = [1, 1]} : vector<2x128xf32> to vector<2x32xf32>
    %287 = vector.extract_strided_slice %278 {offsets = [0, 64], sizes = [2, 32], strides = [1, 1]} : vector<2x128xf32> to vector<2x32xf32>
    %288 = math.tanh %287 : vector<2x32xf32>
    %289 = arith.mulf %285, %248 : vector<2x32xf32>
    %290 = arith.mulf %284, %288 : vector<2x32xf32>
    %291 = arith.addf %289, %290 : vector<2x32xf32>
    %292 = math.tanh %291 : vector<2x32xf32>
    %293 = arith.mulf %286, %292 : vector<2x32xf32>
    %294 = tpu.concatenate %293, %271 in 1 : vector<2x32xf32>, vector<2x32xf32> -> vector<2x64xf32>
    %295 = arith.truncf %294 : vector<2x64xf32> to vector<2x64xbf16>
    %cst_67 = arith.constant dense<0.000000e+00> : vector<2x256xf32>
    %296 = tpu.matmul %295, %51, %cst_67 {dimension_numbers = #tpu.dot_dimension_numbers<[1], [0], [0], [1], [0, 0, 1, 1], [], []>} : vector<2x64xbf16>, vector<64x256xbf16>, vector<2x256xf32> -> vector<2x256xf32>
    %297 = vector.extract_strided_slice %296 {offsets = [0, 128], sizes = [2, 128], strides = [1, 1]} : vector<2x256xf32> to vector<2x128xf32>
    %298 = vector.broadcast %53 : vector<1x128xf32> to vector<2x128xf32>
    %299 = arith.addf %297, %298 : vector<2x128xf32>
    %300 = arith.negf %299 : vector<2x128xf32>
    %301 = math.exp %300 : vector<2x128xf32>
    %cst_68 = arith.constant 1.000000e+00 : f32
    %302 = vector.broadcast %cst_68 : f32 to vector<2x128xf32>
    %303 = arith.addf %302, %301 : vector<2x128xf32>
    %304 = arith.divf %302, %303 : vector<2x128xf32>
    %305 = vector.extract_strided_slice %304 {offsets = [0, 0], sizes = [2, 32], strides = [1, 1]} : vector<2x128xf32> to vector<2x32xf32>
    %306 = vector.extract_strided_slice %304 {offsets = [0, 32], sizes = [2, 32], strides = [1, 1]} : vector<2x128xf32> to vector<2x32xf32>
    %307 = vector.extract_strided_slice %304 {offsets = [0, 96], sizes = [2, 32], strides = [1, 1]} : vector<2x128xf32> to vector<2x32xf32>
    %308 = vector.extract_strided_slice %299 {offsets = [0, 64], sizes = [2, 32], strides = [1, 1]} : vector<2x128xf32> to vector<2x32xf32>
    %309 = math.tanh %308 : vector<2x32xf32>
    %310 = arith.mulf %306, %269 : vector<2x32xf32>
    %311 = arith.mulf %305, %309 : vector<2x32xf32>
    %312 = arith.addf %310, %311 : vector<2x32xf32>
    %313 = math.tanh %312 : vector<2x32xf32>
    %314 = arith.mulf %307, %313 : vector<2x32xf32>
    %315 = vector.extract_strided_slice %296 {offsets = [0, 0], sizes = [2, 128], strides = [1, 1]} : vector<2x256xf32> to vector<2x128xf32>
    %316 = vector.extract_strided_slice %50 {offsets = [6, 0], sizes = [1, 128], strides = [1, 1]} : vector<64x128xf32> to vector<1x128xf32>
    %317 = vector.extract_strided_slice %50 {offsets = [38, 0], sizes = [1, 128], strides = [1, 1]} : vector<64x128xf32> to vector<1x128xf32>
    %318 = tpu.concatenate %316, %317 in 0 : vector<1x128xf32>, vector<1x128xf32> -> vector<2x128xf32>
    %319 = arith.addf %318, %315 : vector<2x128xf32>
    %320 = vector.broadcast %52 : vector<1x128xf32> to vector<2x128xf32>
    %321 = arith.addf %319, %320 : vector<2x128xf32>
    %322 = arith.negf %321 : vector<2x128xf32>
    %323 = math.exp %322 : vector<2x128xf32>
    %cst_69 = arith.constant 1.000000e+00 : f32
    %324 = vector.broadcast %cst_69 : f32 to vector<2x128xf32>
    %325 = arith.addf %324, %323 : vector<2x128xf32>
    %326 = arith.divf %324, %325 : vector<2x128xf32>
    %327 = vector.extract_strided_slice %326 {offsets = [0, 0], sizes = [2, 32], strides = [1, 1]} : vector<2x128xf32> to vector<2x32xf32>
    %328 = vector.extract_strided_slice %326 {offsets = [0, 32], sizes = [2, 32], strides = [1, 1]} : vector<2x128xf32> to vector<2x32xf32>
    %329 = vector.extract_strided_slice %326 {offsets = [0, 96], sizes = [2, 32], strides = [1, 1]} : vector<2x128xf32> to vector<2x32xf32>
    %330 = vector.extract_strided_slice %321 {offsets = [0, 64], sizes = [2, 32], strides = [1, 1]} : vector<2x128xf32> to vector<2x32xf32>
    %331 = math.tanh %330 : vector<2x32xf32>
    %332 = arith.mulf %328, %291 : vector<2x32xf32>
    %333 = arith.mulf %327, %331 : vector<2x32xf32>
    %334 = arith.addf %332, %333 : vector<2x32xf32>
    %335 = math.tanh %334 : vector<2x32xf32>
    %336 = arith.mulf %329, %335 : vector<2x32xf32>
    %337 = tpu.concatenate %336, %314 in 1 : vector<2x32xf32>, vector<2x32xf32> -> vector<2x64xf32>
    %338 = arith.truncf %337 : vector<2x64xf32> to vector<2x64xbf16>
    %cst_70 = arith.constant dense<0.000000e+00> : vector<2x256xf32>
    %339 = tpu.matmul %338, %51, %cst_70 {dimension_numbers = #tpu.dot_dimension_numbers<[1], [0], [0], [1], [0, 0, 1, 1], [], []>} : vector<2x64xbf16>, vector<64x256xbf16>, vector<2x256xf32> -> vector<2x256xf32>
    %340 = vector.extract_strided_slice %339 {offsets = [0, 128], sizes = [2, 128], strides = [1, 1]} : vector<2x256xf32> to vector<2x128xf32>
    %341 = vector.broadcast %53 : vector<1x128xf32> to vector<2x128xf32>
    %342 = arith.addf %340, %341 : vector<2x128xf32>
    %343 = arith.negf %342 : vector<2x128xf32>
    %344 = math.exp %343 : vector<2x128xf32>
    %cst_71 = arith.constant 1.000000e+00 : f32
    %345 = vector.broadcast %cst_71 : f32 to vector<2x128xf32>
    %346 = arith.addf %345, %344 : vector<2x128xf32>
    %347 = arith.divf %345, %346 : vector<2x128xf32>
    %348 = vector.extract_strided_slice %347 {offsets = [0, 0], sizes = [2, 32], strides = [1, 1]} : vector<2x128xf32> to vector<2x32xf32>
    %349 = vector.extract_strided_slice %347 {offsets = [0, 32], sizes = [2, 32], strides = [1, 1]} : vector<2x128xf32> to vector<2x32xf32>
    %350 = vector.extract_strided_slice %347 {offsets = [0, 96], sizes = [2, 32], strides = [1, 1]} : vector<2x128xf32> to vector<2x32xf32>
    %351 = vector.extract_strided_slice %342 {offsets = [0, 64], sizes = [2, 32], strides = [1, 1]} : vector<2x128xf32> to vector<2x32xf32>
    %352 = math.tanh %351 : vector<2x32xf32>
    %353 = arith.mulf %349, %312 : vector<2x32xf32>
    %354 = arith.mulf %348, %352 : vector<2x32xf32>
    %355 = arith.addf %353, %354 : vector<2x32xf32>
    %356 = math.tanh %355 : vector<2x32xf32>
    %357 = arith.mulf %350, %356 : vector<2x32xf32>
    %358 = vector.extract_strided_slice %339 {offsets = [0, 0], sizes = [2, 128], strides = [1, 1]} : vector<2x256xf32> to vector<2x128xf32>
    %359 = vector.extract_strided_slice %50 {offsets = [7, 0], sizes = [1, 128], strides = [1, 1]} : vector<64x128xf32> to vector<1x128xf32>
    %360 = vector.extract_strided_slice %50 {offsets = [39, 0], sizes = [1, 128], strides = [1, 1]} : vector<64x128xf32> to vector<1x128xf32>
    %361 = tpu.concatenate %359, %360 in 0 : vector<1x128xf32>, vector<1x128xf32> -> vector<2x128xf32>
    %362 = arith.addf %361, %358 : vector<2x128xf32>
    %363 = vector.broadcast %52 : vector<1x128xf32> to vector<2x128xf32>
    %364 = arith.addf %362, %363 : vector<2x128xf32>
    %365 = arith.negf %364 : vector<2x128xf32>
    %366 = math.exp %365 : vector<2x128xf32>
    %cst_72 = arith.constant 1.000000e+00 : f32
    %367 = vector.broadcast %cst_72 : f32 to vector<2x128xf32>
    %368 = arith.addf %367, %366 : vector<2x128xf32>
    %369 = arith.divf %367, %368 : vector<2x128xf32>
    %370 = vector.extract_strided_slice %369 {offsets = [0, 0], sizes = [2, 32], strides = [1, 1]} : vector<2x128xf32> to vector<2x32xf32>
    %371 = vector.extract_strided_slice %369 {offsets = [0, 32], sizes = [2, 32], strides = [1, 1]} : vector<2x128xf32> to vector<2x32xf32>
    %372 = vector.extract_strided_slice %369 {offsets = [0, 96], sizes = [2, 32], strides = [1, 1]} : vector<2x128xf32> to vector<2x32xf32>
    %373 = vector.extract_strided_slice %364 {offsets = [0, 64], sizes = [2, 32], strides = [1, 1]} : vector<2x128xf32> to vector<2x32xf32>
    %374 = math.tanh %373 : vector<2x32xf32>
    %375 = arith.mulf %371, %334 : vector<2x32xf32>
    %376 = arith.mulf %370, %374 : vector<2x32xf32>
    %377 = arith.addf %375, %376 : vector<2x32xf32>
    %378 = math.tanh %377 : vector<2x32xf32>
    %379 = arith.mulf %372, %378 : vector<2x32xf32>
    %380 = tpu.concatenate %379, %357 in 1 : vector<2x32xf32>, vector<2x32xf32> -> vector<2x64xf32>
    %381 = arith.truncf %380 : vector<2x64xf32> to vector<2x64xbf16>
    %cst_73 = arith.constant dense<0.000000e+00> : vector<2x256xf32>
    %382 = tpu.matmul %381, %51, %cst_73 {dimension_numbers = #tpu.dot_dimension_numbers<[1], [0], [0], [1], [0, 0, 1, 1], [], []>} : vector<2x64xbf16>, vector<64x256xbf16>, vector<2x256xf32> -> vector<2x256xf32>
    %383 = vector.extract_strided_slice %382 {offsets = [0, 128], sizes = [2, 128], strides = [1, 1]} : vector<2x256xf32> to vector<2x128xf32>
    %384 = vector.broadcast %53 : vector<1x128xf32> to vector<2x128xf32>
    %385 = arith.addf %383, %384 : vector<2x128xf32>
    %386 = arith.negf %385 : vector<2x128xf32>
    %387 = math.exp %386 : vector<2x128xf32>
    %cst_74 = arith.constant 1.000000e+00 : f32
    %388 = vector.broadcast %cst_74 : f32 to vector<2x128xf32>
    %389 = arith.addf %388, %387 : vector<2x128xf32>
    %390 = arith.divf %388, %389 : vector<2x128xf32>
    %391 = vector.extract_strided_slice %390 {offsets = [0, 0], sizes = [2, 32], strides = [1, 1]} : vector<2x128xf32> to vector<2x32xf32>
    %392 = vector.extract_strided_slice %390 {offsets = [0, 32], sizes = [2, 32], strides = [1, 1]} : vector<2x128xf32> to vector<2x32xf32>
    %393 = vector.extract_strided_slice %390 {offsets = [0, 96], sizes = [2, 32], strides = [1, 1]} : vector<2x128xf32> to vector<2x32xf32>
    %394 = vector.extract_strided_slice %385 {offsets = [0, 64], sizes = [2, 32], strides = [1, 1]} : vector<2x128xf32> to vector<2x32xf32>
    %395 = math.tanh %394 : vector<2x32xf32>
    %396 = arith.mulf %392, %355 : vector<2x32xf32>
    %397 = arith.mulf %391, %395 : vector<2x32xf32>
    %398 = arith.addf %396, %397 : vector<2x32xf32>
    %399 = math.tanh %398 : vector<2x32xf32>
    %400 = arith.mulf %393, %399 : vector<2x32xf32>
    %401 = vector.extract_strided_slice %382 {offsets = [0, 0], sizes = [2, 128], strides = [1, 1]} : vector<2x256xf32> to vector<2x128xf32>
    %402 = vector.extract_strided_slice %50 {offsets = [8, 0], sizes = [1, 128], strides = [1, 1]} : vector<64x128xf32> to vector<1x128xf32>
    %403 = vector.extract_strided_slice %50 {offsets = [40, 0], sizes = [1, 128], strides = [1, 1]} : vector<64x128xf32> to vector<1x128xf32>
    %404 = tpu.concatenate %402, %403 in 0 : vector<1x128xf32>, vector<1x128xf32> -> vector<2x128xf32>
    %405 = arith.addf %404, %401 : vector<2x128xf32>
    %406 = vector.broadcast %52 : vector<1x128xf32> to vector<2x128xf32>
    %407 = arith.addf %405, %406 : vector<2x128xf32>
    %408 = arith.negf %407 : vector<2x128xf32>
    %409 = math.exp %408 : vector<2x128xf32>
    %cst_75 = arith.constant 1.000000e+00 : f32
    %410 = vector.broadcast %cst_75 : f32 to vector<2x128xf32>
    %411 = arith.addf %410, %409 : vector<2x128xf32>
    %412 = arith.divf %410, %411 : vector<2x128xf32>
    %413 = vector.extract_strided_slice %412 {offsets = [0, 0], sizes = [2, 32], strides = [1, 1]} : vector<2x128xf32> to vector<2x32xf32>
    %414 = vector.extract_strided_slice %412 {offsets = [0, 32], sizes = [2, 32], strides = [1, 1]} : vector<2x128xf32> to vector<2x32xf32>
    %415 = vector.extract_strided_slice %412 {offsets = [0, 96], sizes = [2, 32], strides = [1, 1]} : vector<2x128xf32> to vector<2x32xf32>
    %416 = vector.extract_strided_slice %407 {offsets = [0, 64], sizes = [2, 32], strides = [1, 1]} : vector<2x128xf32> to vector<2x32xf32>
    %417 = math.tanh %416 : vector<2x32xf32>
    %418 = arith.mulf %414, %377 : vector<2x32xf32>
    %419 = arith.mulf %413, %417 : vector<2x32xf32>
    %420 = arith.addf %418, %419 : vector<2x32xf32>
    %421 = math.tanh %420 : vector<2x32xf32>
    %422 = arith.mulf %415, %421 : vector<2x32xf32>
    %423 = tpu.concatenate %422, %400 in 1 : vector<2x32xf32>, vector<2x32xf32> -> vector<2x64xf32>
    %424 = arith.truncf %423 : vector<2x64xf32> to vector<2x64xbf16>
    %cst_76 = arith.constant dense<0.000000e+00> : vector<2x256xf32>
    %425 = tpu.matmul %424, %51, %cst_76 {dimension_numbers = #tpu.dot_dimension_numbers<[1], [0], [0], [1], [0, 0, 1, 1], [], []>} : vector<2x64xbf16>, vector<64x256xbf16>, vector<2x256xf32> -> vector<2x256xf32>
    %426 = vector.extract_strided_slice %425 {offsets = [0, 128], sizes = [2, 128], strides = [1, 1]} : vector<2x256xf32> to vector<2x128xf32>
    %427 = vector.broadcast %53 : vector<1x128xf32> to vector<2x128xf32>
    %428 = arith.addf %426, %427 : vector<2x128xf32>
    %429 = arith.negf %428 : vector<2x128xf32>
    %430 = math.exp %429 : vector<2x128xf32>
    %cst_77 = arith.constant 1.000000e+00 : f32
    %431 = vector.broadcast %cst_77 : f32 to vector<2x128xf32>
    %432 = arith.addf %431, %430 : vector<2x128xf32>
    %433 = arith.divf %431, %432 : vector<2x128xf32>
    %434 = vector.extract_strided_slice %433 {offsets = [0, 0], sizes = [2, 32], strides = [1, 1]} : vector<2x128xf32> to vector<2x32xf32>
    %435 = vector.extract_strided_slice %433 {offsets = [0, 32], sizes = [2, 32], strides = [1, 1]} : vector<2x128xf32> to vector<2x32xf32>
    %436 = vector.extract_strided_slice %433 {offsets = [0, 96], sizes = [2, 32], strides = [1, 1]} : vector<2x128xf32> to vector<2x32xf32>
    %437 = vector.extract_strided_slice %428 {offsets = [0, 64], sizes = [2, 32], strides = [1, 1]} : vector<2x128xf32> to vector<2x32xf32>
    %438 = math.tanh %437 : vector<2x32xf32>
    %439 = arith.mulf %435, %398 : vector<2x32xf32>
    %440 = arith.mulf %434, %438 : vector<2x32xf32>
    %441 = arith.addf %439, %440 : vector<2x32xf32>
    %442 = math.tanh %441 : vector<2x32xf32>
    %443 = arith.mulf %436, %442 : vector<2x32xf32>
    %444 = vector.extract_strided_slice %425 {offsets = [0, 0], sizes = [2, 128], strides = [1, 1]} : vector<2x256xf32> to vector<2x128xf32>
    %445 = vector.extract_strided_slice %50 {offsets = [9, 0], sizes = [1, 128], strides = [1, 1]} : vector<64x128xf32> to vector<1x128xf32>
    %446 = vector.extract_strided_slice %50 {offsets = [41, 0], sizes = [1, 128], strides = [1, 1]} : vector<64x128xf32> to vector<1x128xf32>
    %447 = tpu.concatenate %445, %446 in 0 : vector<1x128xf32>, vector<1x128xf32> -> vector<2x128xf32>
    %448 = arith.addf %447, %444 : vector<2x128xf32>
    %449 = vector.broadcast %52 : vector<1x128xf32> to vector<2x128xf32>
    %450 = arith.addf %448, %449 : vector<2x128xf32>
    %451 = arith.negf %450 : vector<2x128xf32>
    %452 = math.exp %451 : vector<2x128xf32>
    %cst_78 = arith.constant 1.000000e+00 : f32
    %453 = vector.broadcast %cst_78 : f32 to vector<2x128xf32>
    %454 = arith.addf %453, %452 : vector<2x128xf32>
    %455 = arith.divf %453, %454 : vector<2x128xf32>
    %456 = vector.extract_strided_slice %455 {offsets = [0, 0], sizes = [2, 32], strides = [1, 1]} : vector<2x128xf32> to vector<2x32xf32>
    %457 = vector.extract_strided_slice %455 {offsets = [0, 32], sizes = [2, 32], strides = [1, 1]} : vector<2x128xf32> to vector<2x32xf32>
    %458 = vector.extract_strided_slice %455 {offsets = [0, 96], sizes = [2, 32], strides = [1, 1]} : vector<2x128xf32> to vector<2x32xf32>
    %459 = vector.extract_strided_slice %450 {offsets = [0, 64], sizes = [2, 32], strides = [1, 1]} : vector<2x128xf32> to vector<2x32xf32>
    %460 = math.tanh %459 : vector<2x32xf32>
    %461 = arith.mulf %457, %420 : vector<2x32xf32>
    %462 = arith.mulf %456, %460 : vector<2x32xf32>
    %463 = arith.addf %461, %462 : vector<2x32xf32>
    %464 = math.tanh %463 : vector<2x32xf32>
    %465 = arith.mulf %458, %464 : vector<2x32xf32>
    %466 = tpu.concatenate %465, %443 in 1 : vector<2x32xf32>, vector<2x32xf32> -> vector<2x64xf32>
    %467 = arith.truncf %466 : vector<2x64xf32> to vector<2x64xbf16>
    %cst_79 = arith.constant dense<0.000000e+00> : vector<2x256xf32>
    %468 = tpu.matmul %467, %51, %cst_79 {dimension_numbers = #tpu.dot_dimension_numbers<[1], [0], [0], [1], [0, 0, 1, 1], [], []>} : vector<2x64xbf16>, vector<64x256xbf16>, vector<2x256xf32> -> vector<2x256xf32>
    %469 = vector.extract_strided_slice %468 {offsets = [0, 128], sizes = [2, 128], strides = [1, 1]} : vector<2x256xf32> to vector<2x128xf32>
    %470 = vector.broadcast %53 : vector<1x128xf32> to vector<2x128xf32>
    %471 = arith.addf %469, %470 : vector<2x128xf32>
    %472 = arith.negf %471 : vector<2x128xf32>
    %473 = math.exp %472 : vector<2x128xf32>
    %cst_80 = arith.constant 1.000000e+00 : f32
    %474 = vector.broadcast %cst_80 : f32 to vector<2x128xf32>
    %475 = arith.addf %474, %473 : vector<2x128xf32>
    %476 = arith.divf %474, %475 : vector<2x128xf32>
    %477 = vector.extract_strided_slice %476 {offsets = [0, 0], sizes = [2, 32], strides = [1, 1]} : vector<2x128xf32> to vector<2x32xf32>
    %478 = vector.extract_strided_slice %476 {offsets = [0, 32], sizes = [2, 32], strides = [1, 1]} : vector<2x128xf32> to vector<2x32xf32>
    %479 = vector.extract_strided_slice %476 {offsets = [0, 96], sizes = [2, 32], strides = [1, 1]} : vector<2x128xf32> to vector<2x32xf32>
    %480 = vector.extract_strided_slice %471 {offsets = [0, 64], sizes = [2, 32], strides = [1, 1]} : vector<2x128xf32> to vector<2x32xf32>
    %481 = math.tanh %480 : vector<2x32xf32>
    %482 = arith.mulf %478, %441 : vector<2x32xf32>
    %483 = arith.mulf %477, %481 : vector<2x32xf32>
    %484 = arith.addf %482, %483 : vector<2x32xf32>
    %485 = math.tanh %484 : vector<2x32xf32>
    %486 = arith.mulf %479, %485 : vector<2x32xf32>
    %487 = vector.extract_strided_slice %468 {offsets = [0, 0], sizes = [2, 128], strides = [1, 1]} : vector<2x256xf32> to vector<2x128xf32>
    %488 = vector.extract_strided_slice %50 {offsets = [10, 0], sizes = [1, 128], strides = [1, 1]} : vector<64x128xf32> to vector<1x128xf32>
    %489 = vector.extract_strided_slice %50 {offsets = [42, 0], sizes = [1, 128], strides = [1, 1]} : vector<64x128xf32> to vector<1x128xf32>
    %490 = tpu.concatenate %488, %489 in 0 : vector<1x128xf32>, vector<1x128xf32> -> vector<2x128xf32>
    %491 = arith.addf %490, %487 : vector<2x128xf32>
    %492 = vector.broadcast %52 : vector<1x128xf32> to vector<2x128xf32>
    %493 = arith.addf %491, %492 : vector<2x128xf32>
    %494 = arith.negf %493 : vector<2x128xf32>
    %495 = math.exp %494 : vector<2x128xf32>
    %cst_81 = arith.constant 1.000000e+00 : f32
    %496 = vector.broadcast %cst_81 : f32 to vector<2x128xf32>
    %497 = arith.addf %496, %495 : vector<2x128xf32>
    %498 = arith.divf %496, %497 : vector<2x128xf32>
    %499 = vector.extract_strided_slice %498 {offsets = [0, 0], sizes = [2, 32], strides = [1, 1]} : vector<2x128xf32> to vector<2x32xf32>
    %500 = vector.extract_strided_slice %498 {offsets = [0, 32], sizes = [2, 32], strides = [1, 1]} : vector<2x128xf32> to vector<2x32xf32>
    %501 = vector.extract_strided_slice %498 {offsets = [0, 96], sizes = [2, 32], strides = [1, 1]} : vector<2x128xf32> to vector<2x32xf32>
    %502 = vector.extract_strided_slice %493 {offsets = [0, 64], sizes = [2, 32], strides = [1, 1]} : vector<2x128xf32> to vector<2x32xf32>
    %503 = math.tanh %502 : vector<2x32xf32>
    %504 = arith.mulf %500, %463 : vector<2x32xf32>
    %505 = arith.mulf %499, %503 : vector<2x32xf32>
    %506 = arith.addf %504, %505 : vector<2x32xf32>
    %507 = math.tanh %506 : vector<2x32xf32>
    %508 = arith.mulf %501, %507 : vector<2x32xf32>
    %509 = tpu.concatenate %508, %486 in 1 : vector<2x32xf32>, vector<2x32xf32> -> vector<2x64xf32>
    %510 = arith.truncf %509 : vector<2x64xf32> to vector<2x64xbf16>
    %cst_82 = arith.constant dense<0.000000e+00> : vector<2x256xf32>
    %511 = tpu.matmul %510, %51, %cst_82 {dimension_numbers = #tpu.dot_dimension_numbers<[1], [0], [0], [1], [0, 0, 1, 1], [], []>} : vector<2x64xbf16>, vector<64x256xbf16>, vector<2x256xf32> -> vector<2x256xf32>
    %512 = vector.extract_strided_slice %511 {offsets = [0, 128], sizes = [2, 128], strides = [1, 1]} : vector<2x256xf32> to vector<2x128xf32>
    %513 = vector.broadcast %53 : vector<1x128xf32> to vector<2x128xf32>
    %514 = arith.addf %512, %513 : vector<2x128xf32>
    %515 = arith.negf %514 : vector<2x128xf32>
    %516 = math.exp %515 : vector<2x128xf32>
    %cst_83 = arith.constant 1.000000e+00 : f32
    %517 = vector.broadcast %cst_83 : f32 to vector<2x128xf32>
    %518 = arith.addf %517, %516 : vector<2x128xf32>
    %519 = arith.divf %517, %518 : vector<2x128xf32>
    %520 = vector.extract_strided_slice %519 {offsets = [0, 0], sizes = [2, 32], strides = [1, 1]} : vector<2x128xf32> to vector<2x32xf32>
    %521 = vector.extract_strided_slice %519 {offsets = [0, 32], sizes = [2, 32], strides = [1, 1]} : vector<2x128xf32> to vector<2x32xf32>
    %522 = vector.extract_strided_slice %519 {offsets = [0, 96], sizes = [2, 32], strides = [1, 1]} : vector<2x128xf32> to vector<2x32xf32>
    %523 = vector.extract_strided_slice %514 {offsets = [0, 64], sizes = [2, 32], strides = [1, 1]} : vector<2x128xf32> to vector<2x32xf32>
    %524 = math.tanh %523 : vector<2x32xf32>
    %525 = arith.mulf %521, %484 : vector<2x32xf32>
    %526 = arith.mulf %520, %524 : vector<2x32xf32>
    %527 = arith.addf %525, %526 : vector<2x32xf32>
    %528 = math.tanh %527 : vector<2x32xf32>
    %529 = arith.mulf %522, %528 : vector<2x32xf32>
    %530 = vector.extract_strided_slice %511 {offsets = [0, 0], sizes = [2, 128], strides = [1, 1]} : vector<2x256xf32> to vector<2x128xf32>
    %531 = vector.extract_strided_slice %50 {offsets = [11, 0], sizes = [1, 128], strides = [1, 1]} : vector<64x128xf32> to vector<1x128xf32>
    %532 = vector.extract_strided_slice %50 {offsets = [43, 0], sizes = [1, 128], strides = [1, 1]} : vector<64x128xf32> to vector<1x128xf32>
    %533 = tpu.concatenate %531, %532 in 0 : vector<1x128xf32>, vector<1x128xf32> -> vector<2x128xf32>
    %534 = arith.addf %533, %530 : vector<2x128xf32>
    %535 = vector.broadcast %52 : vector<1x128xf32> to vector<2x128xf32>
    %536 = arith.addf %534, %535 : vector<2x128xf32>
    %537 = arith.negf %536 : vector<2x128xf32>
    %538 = math.exp %537 : vector<2x128xf32>
    %cst_84 = arith.constant 1.000000e+00 : f32
    %539 = vector.broadcast %cst_84 : f32 to vector<2x128xf32>
    %540 = arith.addf %539, %538 : vector<2x128xf32>
    %541 = arith.divf %539, %540 : vector<2x128xf32>
    %542 = vector.extract_strided_slice %541 {offsets = [0, 0], sizes = [2, 32], strides = [1, 1]} : vector<2x128xf32> to vector<2x32xf32>
    %543 = vector.extract_strided_slice %541 {offsets = [0, 32], sizes = [2, 32], strides = [1, 1]} : vector<2x128xf32> to vector<2x32xf32>
    %544 = vector.extract_strided_slice %541 {offsets = [0, 96], sizes = [2, 32], strides = [1, 1]} : vector<2x128xf32> to vector<2x32xf32>
    %545 = vector.extract_strided_slice %536 {offsets = [0, 64], sizes = [2, 32], strides = [1, 1]} : vector<2x128xf32> to vector<2x32xf32>
    %546 = math.tanh %545 : vector<2x32xf32>
    %547 = arith.mulf %543, %506 : vector<2x32xf32>
    %548 = arith.mulf %542, %546 : vector<2x32xf32>
    %549 = arith.addf %547, %548 : vector<2x32xf32>
    %550 = math.tanh %549 : vector<2x32xf32>
    %551 = arith.mulf %544, %550 : vector<2x32xf32>
    %552 = tpu.concatenate %551, %529 in 1 : vector<2x32xf32>, vector<2x32xf32> -> vector<2x64xf32>
    %553 = arith.truncf %552 : vector<2x64xf32> to vector<2x64xbf16>
    %cst_85 = arith.constant dense<0.000000e+00> : vector<2x256xf32>
    %554 = tpu.matmul %553, %51, %cst_85 {dimension_numbers = #tpu.dot_dimension_numbers<[1], [0], [0], [1], [0, 0, 1, 1], [], []>} : vector<2x64xbf16>, vector<64x256xbf16>, vector<2x256xf32> -> vector<2x256xf32>
    %555 = vector.extract_strided_slice %554 {offsets = [0, 128], sizes = [2, 128], strides = [1, 1]} : vector<2x256xf32> to vector<2x128xf32>
    %556 = vector.broadcast %53 : vector<1x128xf32> to vector<2x128xf32>
    %557 = arith.addf %555, %556 : vector<2x128xf32>
    %558 = arith.negf %557 : vector<2x128xf32>
    %559 = math.exp %558 : vector<2x128xf32>
    %cst_86 = arith.constant 1.000000e+00 : f32
    %560 = vector.broadcast %cst_86 : f32 to vector<2x128xf32>
    %561 = arith.addf %560, %559 : vector<2x128xf32>
    %562 = arith.divf %560, %561 : vector<2x128xf32>
    %563 = vector.extract_strided_slice %562 {offsets = [0, 0], sizes = [2, 32], strides = [1, 1]} : vector<2x128xf32> to vector<2x32xf32>
    %564 = vector.extract_strided_slice %562 {offsets = [0, 32], sizes = [2, 32], strides = [1, 1]} : vector<2x128xf32> to vector<2x32xf32>
    %565 = vector.extract_strided_slice %562 {offsets = [0, 96], sizes = [2, 32], strides = [1, 1]} : vector<2x128xf32> to vector<2x32xf32>
    %566 = vector.extract_strided_slice %557 {offsets = [0, 64], sizes = [2, 32], strides = [1, 1]} : vector<2x128xf32> to vector<2x32xf32>
    %567 = math.tanh %566 : vector<2x32xf32>
    %568 = arith.mulf %564, %527 : vector<2x32xf32>
    %569 = arith.mulf %563, %567 : vector<2x32xf32>
    %570 = arith.addf %568, %569 : vector<2x32xf32>
    %571 = math.tanh %570 : vector<2x32xf32>
    %572 = arith.mulf %565, %571 : vector<2x32xf32>
    %573 = vector.extract_strided_slice %554 {offsets = [0, 0], sizes = [2, 128], strides = [1, 1]} : vector<2x256xf32> to vector<2x128xf32>
    %574 = vector.extract_strided_slice %50 {offsets = [12, 0], sizes = [1, 128], strides = [1, 1]} : vector<64x128xf32> to vector<1x128xf32>
    %575 = vector.extract_strided_slice %50 {offsets = [44, 0], sizes = [1, 128], strides = [1, 1]} : vector<64x128xf32> to vector<1x128xf32>
    %576 = tpu.concatenate %574, %575 in 0 : vector<1x128xf32>, vector<1x128xf32> -> vector<2x128xf32>
    %577 = arith.addf %576, %573 : vector<2x128xf32>
    %578 = vector.broadcast %52 : vector<1x128xf32> to vector<2x128xf32>
    %579 = arith.addf %577, %578 : vector<2x128xf32>
    %580 = arith.negf %579 : vector<2x128xf32>
    %581 = math.exp %580 : vector<2x128xf32>
    %cst_87 = arith.constant 1.000000e+00 : f32
    %582 = vector.broadcast %cst_87 : f32 to vector<2x128xf32>
    %583 = arith.addf %582, %581 : vector<2x128xf32>
    %584 = arith.divf %582, %583 : vector<2x128xf32>
    %585 = vector.extract_strided_slice %584 {offsets = [0, 0], sizes = [2, 32], strides = [1, 1]} : vector<2x128xf32> to vector<2x32xf32>
    %586 = vector.extract_strided_slice %584 {offsets = [0, 32], sizes = [2, 32], strides = [1, 1]} : vector<2x128xf32> to vector<2x32xf32>
    %587 = vector.extract_strided_slice %584 {offsets = [0, 96], sizes = [2, 32], strides = [1, 1]} : vector<2x128xf32> to vector<2x32xf32>
    %588 = vector.extract_strided_slice %579 {offsets = [0, 64], sizes = [2, 32], strides = [1, 1]} : vector<2x128xf32> to vector<2x32xf32>
    %589 = math.tanh %588 : vector<2x32xf32>
    %590 = arith.mulf %586, %549 : vector<2x32xf32>
    %591 = arith.mulf %585, %589 : vector<2x32xf32>
    %592 = arith.addf %590, %591 : vector<2x32xf32>
    %593 = math.tanh %592 : vector<2x32xf32>
    %594 = arith.mulf %587, %593 : vector<2x32xf32>
    %595 = tpu.concatenate %594, %572 in 1 : vector<2x32xf32>, vector<2x32xf32> -> vector<2x64xf32>
    %596 = arith.truncf %595 : vector<2x64xf32> to vector<2x64xbf16>
    %cst_88 = arith.constant dense<0.000000e+00> : vector<2x256xf32>
    %597 = tpu.matmul %596, %51, %cst_88 {dimension_numbers = #tpu.dot_dimension_numbers<[1], [0], [0], [1], [0, 0, 1, 1], [], []>} : vector<2x64xbf16>, vector<64x256xbf16>, vector<2x256xf32> -> vector<2x256xf32>
    %598 = vector.extract_strided_slice %597 {offsets = [0, 128], sizes = [2, 128], strides = [1, 1]} : vector<2x256xf32> to vector<2x128xf32>
    %599 = vector.broadcast %53 : vector<1x128xf32> to vector<2x128xf32>
    %600 = arith.addf %598, %599 : vector<2x128xf32>
    %601 = arith.negf %600 : vector<2x128xf32>
    %602 = math.exp %601 : vector<2x128xf32>
    %cst_89 = arith.constant 1.000000e+00 : f32
    %603 = vector.broadcast %cst_89 : f32 to vector<2x128xf32>
    %604 = arith.addf %603, %602 : vector<2x128xf32>
    %605 = arith.divf %603, %604 : vector<2x128xf32>
    %606 = vector.extract_strided_slice %605 {offsets = [0, 0], sizes = [2, 32], strides = [1, 1]} : vector<2x128xf32> to vector<2x32xf32>
    %607 = vector.extract_strided_slice %605 {offsets = [0, 32], sizes = [2, 32], strides = [1, 1]} : vector<2x128xf32> to vector<2x32xf32>
    %608 = vector.extract_strided_slice %605 {offsets = [0, 96], sizes = [2, 32], strides = [1, 1]} : vector<2x128xf32> to vector<2x32xf32>
    %609 = vector.extract_strided_slice %600 {offsets = [0, 64], sizes = [2, 32], strides = [1, 1]} : vector<2x128xf32> to vector<2x32xf32>
    %610 = math.tanh %609 : vector<2x32xf32>
    %611 = arith.mulf %607, %570 : vector<2x32xf32>
    %612 = arith.mulf %606, %610 : vector<2x32xf32>
    %613 = arith.addf %611, %612 : vector<2x32xf32>
    %614 = math.tanh %613 : vector<2x32xf32>
    %615 = arith.mulf %608, %614 : vector<2x32xf32>
    %616 = vector.extract_strided_slice %597 {offsets = [0, 0], sizes = [2, 128], strides = [1, 1]} : vector<2x256xf32> to vector<2x128xf32>
    %617 = vector.extract_strided_slice %50 {offsets = [13, 0], sizes = [1, 128], strides = [1, 1]} : vector<64x128xf32> to vector<1x128xf32>
    %618 = vector.extract_strided_slice %50 {offsets = [45, 0], sizes = [1, 128], strides = [1, 1]} : vector<64x128xf32> to vector<1x128xf32>
    %619 = tpu.concatenate %617, %618 in 0 : vector<1x128xf32>, vector<1x128xf32> -> vector<2x128xf32>
    %620 = arith.addf %619, %616 : vector<2x128xf32>
    %621 = vector.broadcast %52 : vector<1x128xf32> to vector<2x128xf32>
    %622 = arith.addf %620, %621 : vector<2x128xf32>
    %623 = arith.negf %622 : vector<2x128xf32>
    %624 = math.exp %623 : vector<2x128xf32>
    %cst_90 = arith.constant 1.000000e+00 : f32
    %625 = vector.broadcast %cst_90 : f32 to vector<2x128xf32>
    %626 = arith.addf %625, %624 : vector<2x128xf32>
    %627 = arith.divf %625, %626 : vector<2x128xf32>
    %628 = vector.extract_strided_slice %627 {offsets = [0, 0], sizes = [2, 32], strides = [1, 1]} : vector<2x128xf32> to vector<2x32xf32>
    %629 = vector.extract_strided_slice %627 {offsets = [0, 32], sizes = [2, 32], strides = [1, 1]} : vector<2x128xf32> to vector<2x32xf32>
    %630 = vector.extract_strided_slice %627 {offsets = [0, 96], sizes = [2, 32], strides = [1, 1]} : vector<2x128xf32> to vector<2x32xf32>
    %631 = vector.extract_strided_slice %622 {offsets = [0, 64], sizes = [2, 32], strides = [1, 1]} : vector<2x128xf32> to vector<2x32xf32>
    %632 = math.tanh %631 : vector<2x32xf32>
    %633 = arith.mulf %629, %592 : vector<2x32xf32>
    %634 = arith.mulf %628, %632 : vector<2x32xf32>
    %635 = arith.addf %633, %634 : vector<2x32xf32>
    %636 = math.tanh %635 : vector<2x32xf32>
    %637 = arith.mulf %630, %636 : vector<2x32xf32>
    %638 = tpu.concatenate %637, %615 in 1 : vector<2x32xf32>, vector<2x32xf32> -> vector<2x64xf32>
    %639 = arith.truncf %638 : vector<2x64xf32> to vector<2x64xbf16>
    %cst_91 = arith.constant dense<0.000000e+00> : vector<2x256xf32>
    %640 = tpu.matmul %639, %51, %cst_91 {dimension_numbers = #tpu.dot_dimension_numbers<[1], [0], [0], [1], [0, 0, 1, 1], [], []>} : vector<2x64xbf16>, vector<64x256xbf16>, vector<2x256xf32> -> vector<2x256xf32>
    %641 = vector.extract_strided_slice %640 {offsets = [0, 128], sizes = [2, 128], strides = [1, 1]} : vector<2x256xf32> to vector<2x128xf32>
    %642 = vector.broadcast %53 : vector<1x128xf32> to vector<2x128xf32>
    %643 = arith.addf %641, %642 : vector<2x128xf32>
    %644 = arith.negf %643 : vector<2x128xf32>
    %645 = math.exp %644 : vector<2x128xf32>
    %cst_92 = arith.constant 1.000000e+00 : f32
    %646 = vector.broadcast %cst_92 : f32 to vector<2x128xf32>
    %647 = arith.addf %646, %645 : vector<2x128xf32>
    %648 = arith.divf %646, %647 : vector<2x128xf32>
    %649 = vector.extract_strided_slice %648 {offsets = [0, 0], sizes = [2, 32], strides = [1, 1]} : vector<2x128xf32> to vector<2x32xf32>
    %650 = vector.extract_strided_slice %648 {offsets = [0, 32], sizes = [2, 32], strides = [1, 1]} : vector<2x128xf32> to vector<2x32xf32>
    %651 = vector.extract_strided_slice %648 {offsets = [0, 96], sizes = [2, 32], strides = [1, 1]} : vector<2x128xf32> to vector<2x32xf32>
    %652 = vector.extract_strided_slice %643 {offsets = [0, 64], sizes = [2, 32], strides = [1, 1]} : vector<2x128xf32> to vector<2x32xf32>
    %653 = math.tanh %652 : vector<2x32xf32>
    %654 = arith.mulf %650, %613 : vector<2x32xf32>
    %655 = arith.mulf %649, %653 : vector<2x32xf32>
    %656 = arith.addf %654, %655 : vector<2x32xf32>
    %657 = math.tanh %656 : vector<2x32xf32>
    %658 = arith.mulf %651, %657 : vector<2x32xf32>
    %659 = vector.extract_strided_slice %640 {offsets = [0, 0], sizes = [2, 128], strides = [1, 1]} : vector<2x256xf32> to vector<2x128xf32>
    %660 = vector.extract_strided_slice %50 {offsets = [14, 0], sizes = [1, 128], strides = [1, 1]} : vector<64x128xf32> to vector<1x128xf32>
    %661 = vector.extract_strided_slice %50 {offsets = [46, 0], sizes = [1, 128], strides = [1, 1]} : vector<64x128xf32> to vector<1x128xf32>
    %662 = tpu.concatenate %660, %661 in 0 : vector<1x128xf32>, vector<1x128xf32> -> vector<2x128xf32>
    %663 = arith.addf %662, %659 : vector<2x128xf32>
    %664 = vector.broadcast %52 : vector<1x128xf32> to vector<2x128xf32>
    %665 = arith.addf %663, %664 : vector<2x128xf32>
    %666 = arith.negf %665 : vector<2x128xf32>
    %667 = math.exp %666 : vector<2x128xf32>
    %cst_93 = arith.constant 1.000000e+00 : f32
    %668 = vector.broadcast %cst_93 : f32 to vector<2x128xf32>
    %669 = arith.addf %668, %667 : vector<2x128xf32>
    %670 = arith.divf %668, %669 : vector<2x128xf32>
    %671 = vector.extract_strided_slice %670 {offsets = [0, 0], sizes = [2, 32], strides = [1, 1]} : vector<2x128xf32> to vector<2x32xf32>
    %672 = vector.extract_strided_slice %670 {offsets = [0, 32], sizes = [2, 32], strides = [1, 1]} : vector<2x128xf32> to vector<2x32xf32>
    %673 = vector.extract_strided_slice %670 {offsets = [0, 96], sizes = [2, 32], strides = [1, 1]} : vector<2x128xf32> to vector<2x32xf32>
    %674 = vector.extract_strided_slice %665 {offsets = [0, 64], sizes = [2, 32], strides = [1, 1]} : vector<2x128xf32> to vector<2x32xf32>
    %675 = math.tanh %674 : vector<2x32xf32>
    %676 = arith.mulf %672, %635 : vector<2x32xf32>
    %677 = arith.mulf %671, %675 : vector<2x32xf32>
    %678 = arith.addf %676, %677 : vector<2x32xf32>
    %679 = math.tanh %678 : vector<2x32xf32>
    %680 = arith.mulf %673, %679 : vector<2x32xf32>
    %681 = tpu.concatenate %680, %658 in 1 : vector<2x32xf32>, vector<2x32xf32> -> vector<2x64xf32>
    %682 = arith.truncf %681 : vector<2x64xf32> to vector<2x64xbf16>
    %cst_94 = arith.constant dense<0.000000e+00> : vector<2x256xf32>
    %683 = tpu.matmul %682, %51, %cst_94 {dimension_numbers = #tpu.dot_dimension_numbers<[1], [0], [0], [1], [0, 0, 1, 1], [], []>} : vector<2x64xbf16>, vector<64x256xbf16>, vector<2x256xf32> -> vector<2x256xf32>
    %684 = vector.extract_strided_slice %683 {offsets = [0, 128], sizes = [2, 128], strides = [1, 1]} : vector<2x256xf32> to vector<2x128xf32>
    %685 = vector.broadcast %53 : vector<1x128xf32> to vector<2x128xf32>
    %686 = arith.addf %684, %685 : vector<2x128xf32>
    %687 = arith.negf %686 : vector<2x128xf32>
    %688 = math.exp %687 : vector<2x128xf32>
    %cst_95 = arith.constant 1.000000e+00 : f32
    %689 = vector.broadcast %cst_95 : f32 to vector<2x128xf32>
    %690 = arith.addf %689, %688 : vector<2x128xf32>
    %691 = arith.divf %689, %690 : vector<2x128xf32>
    %692 = vector.extract_strided_slice %691 {offsets = [0, 0], sizes = [2, 32], strides = [1, 1]} : vector<2x128xf32> to vector<2x32xf32>
    %693 = vector.extract_strided_slice %691 {offsets = [0, 32], sizes = [2, 32], strides = [1, 1]} : vector<2x128xf32> to vector<2x32xf32>
    %694 = vector.extract_strided_slice %691 {offsets = [0, 96], sizes = [2, 32], strides = [1, 1]} : vector<2x128xf32> to vector<2x32xf32>
    %695 = vector.extract_strided_slice %686 {offsets = [0, 64], sizes = [2, 32], strides = [1, 1]} : vector<2x128xf32> to vector<2x32xf32>
    %696 = math.tanh %695 : vector<2x32xf32>
    %697 = arith.mulf %693, %656 : vector<2x32xf32>
    %698 = arith.mulf %692, %696 : vector<2x32xf32>
    %699 = arith.addf %697, %698 : vector<2x32xf32>
    %700 = math.tanh %699 : vector<2x32xf32>
    %701 = arith.mulf %694, %700 : vector<2x32xf32>
    %702 = vector.extract_strided_slice %683 {offsets = [0, 0], sizes = [2, 128], strides = [1, 1]} : vector<2x256xf32> to vector<2x128xf32>
    %703 = vector.extract_strided_slice %50 {offsets = [15, 0], sizes = [1, 128], strides = [1, 1]} : vector<64x128xf32> to vector<1x128xf32>
    %704 = vector.extract_strided_slice %50 {offsets = [47, 0], sizes = [1, 128], strides = [1, 1]} : vector<64x128xf32> to vector<1x128xf32>
    %705 = tpu.concatenate %703, %704 in 0 : vector<1x128xf32>, vector<1x128xf32> -> vector<2x128xf32>
    %706 = arith.addf %705, %702 : vector<2x128xf32>
    %707 = vector.broadcast %52 : vector<1x128xf32> to vector<2x128xf32>
    %708 = arith.addf %706, %707 : vector<2x128xf32>
    %709 = arith.negf %708 : vector<2x128xf32>
    %710 = math.exp %709 : vector<2x128xf32>
    %cst_96 = arith.constant 1.000000e+00 : f32
    %711 = vector.broadcast %cst_96 : f32 to vector<2x128xf32>
    %712 = arith.addf %711, %710 : vector<2x128xf32>
    %713 = arith.divf %711, %712 : vector<2x128xf32>
    %714 = vector.extract_strided_slice %713 {offsets = [0, 0], sizes = [2, 32], strides = [1, 1]} : vector<2x128xf32> to vector<2x32xf32>
    %715 = vector.extract_strided_slice %713 {offsets = [0, 32], sizes = [2, 32], strides = [1, 1]} : vector<2x128xf32> to vector<2x32xf32>
    %716 = vector.extract_strided_slice %713 {offsets = [0, 96], sizes = [2, 32], strides = [1, 1]} : vector<2x128xf32> to vector<2x32xf32>
    %717 = vector.extract_strided_slice %708 {offsets = [0, 64], sizes = [2, 32], strides = [1, 1]} : vector<2x128xf32> to vector<2x32xf32>
    %718 = math.tanh %717 : vector<2x32xf32>
    %719 = arith.mulf %715, %678 : vector<2x32xf32>
    %720 = arith.mulf %714, %718 : vector<2x32xf32>
    %721 = arith.addf %719, %720 : vector<2x32xf32>
    %722 = math.tanh %721 : vector<2x32xf32>
    %723 = arith.mulf %716, %722 : vector<2x32xf32>
    %724 = tpu.concatenate %723, %701 in 1 : vector<2x32xf32>, vector<2x32xf32> -> vector<2x64xf32>
    %725 = arith.truncf %724 : vector<2x64xf32> to vector<2x64xbf16>
    %cst_97 = arith.constant dense<0.000000e+00> : vector<2x256xf32>
    %726 = tpu.matmul %725, %51, %cst_97 {dimension_numbers = #tpu.dot_dimension_numbers<[1], [0], [0], [1], [0, 0, 1, 1], [], []>} : vector<2x64xbf16>, vector<64x256xbf16>, vector<2x256xf32> -> vector<2x256xf32>
    %727 = vector.extract_strided_slice %726 {offsets = [0, 128], sizes = [2, 128], strides = [1, 1]} : vector<2x256xf32> to vector<2x128xf32>
    %728 = vector.broadcast %53 : vector<1x128xf32> to vector<2x128xf32>
    %729 = arith.addf %727, %728 : vector<2x128xf32>
    %730 = arith.negf %729 : vector<2x128xf32>
    %731 = math.exp %730 : vector<2x128xf32>
    %cst_98 = arith.constant 1.000000e+00 : f32
    %732 = vector.broadcast %cst_98 : f32 to vector<2x128xf32>
    %733 = arith.addf %732, %731 : vector<2x128xf32>
    %734 = arith.divf %732, %733 : vector<2x128xf32>
    %735 = vector.extract_strided_slice %734 {offsets = [0, 0], sizes = [2, 32], strides = [1, 1]} : vector<2x128xf32> to vector<2x32xf32>
    %736 = vector.extract_strided_slice %734 {offsets = [0, 32], sizes = [2, 32], strides = [1, 1]} : vector<2x128xf32> to vector<2x32xf32>
    %737 = vector.extract_strided_slice %734 {offsets = [0, 96], sizes = [2, 32], strides = [1, 1]} : vector<2x128xf32> to vector<2x32xf32>
    %738 = vector.extract_strided_slice %729 {offsets = [0, 64], sizes = [2, 32], strides = [1, 1]} : vector<2x128xf32> to vector<2x32xf32>
    %739 = math.tanh %738 : vector<2x32xf32>
    %740 = arith.mulf %736, %699 : vector<2x32xf32>
    %741 = arith.mulf %735, %739 : vector<2x32xf32>
    %742 = arith.addf %740, %741 : vector<2x32xf32>
    %743 = math.tanh %742 : vector<2x32xf32>
    %744 = arith.mulf %737, %743 : vector<2x32xf32>
    %745 = vector.extract_strided_slice %726 {offsets = [0, 0], sizes = [2, 128], strides = [1, 1]} : vector<2x256xf32> to vector<2x128xf32>
    %746 = vector.extract_strided_slice %50 {offsets = [16, 0], sizes = [1, 128], strides = [1, 1]} : vector<64x128xf32> to vector<1x128xf32>
    %747 = vector.extract_strided_slice %50 {offsets = [48, 0], sizes = [1, 128], strides = [1, 1]} : vector<64x128xf32> to vector<1x128xf32>
    %748 = tpu.concatenate %746, %747 in 0 : vector<1x128xf32>, vector<1x128xf32> -> vector<2x128xf32>
    %749 = arith.addf %748, %745 : vector<2x128xf32>
    %750 = vector.broadcast %52 : vector<1x128xf32> to vector<2x128xf32>
    %751 = arith.addf %749, %750 : vector<2x128xf32>
    %752 = arith.negf %751 : vector<2x128xf32>
    %753 = math.exp %752 : vector<2x128xf32>
    %cst_99 = arith.constant 1.000000e+00 : f32
    %754 = vector.broadcast %cst_99 : f32 to vector<2x128xf32>
    %755 = arith.addf %754, %753 : vector<2x128xf32>
    %756 = arith.divf %754, %755 : vector<2x128xf32>
    %757 = vector.extract_strided_slice %756 {offsets = [0, 0], sizes = [2, 32], strides = [1, 1]} : vector<2x128xf32> to vector<2x32xf32>
    %758 = vector.extract_strided_slice %756 {offsets = [0, 32], sizes = [2, 32], strides = [1, 1]} : vector<2x128xf32> to vector<2x32xf32>
    %759 = vector.extract_strided_slice %756 {offsets = [0, 96], sizes = [2, 32], strides = [1, 1]} : vector<2x128xf32> to vector<2x32xf32>
    %760 = vector.extract_strided_slice %751 {offsets = [0, 64], sizes = [2, 32], strides = [1, 1]} : vector<2x128xf32> to vector<2x32xf32>
    %761 = math.tanh %760 : vector<2x32xf32>
    %762 = arith.mulf %758, %721 : vector<2x32xf32>
    %763 = arith.mulf %757, %761 : vector<2x32xf32>
    %764 = arith.addf %762, %763 : vector<2x32xf32>
    %765 = math.tanh %764 : vector<2x32xf32>
    %766 = arith.mulf %759, %765 : vector<2x32xf32>
    %767 = tpu.concatenate %766, %744 in 1 : vector<2x32xf32>, vector<2x32xf32> -> vector<2x64xf32>
    %768 = arith.truncf %767 : vector<2x64xf32> to vector<2x64xbf16>
    %cst_100 = arith.constant dense<0.000000e+00> : vector<2x256xf32>
    %769 = tpu.matmul %768, %51, %cst_100 {dimension_numbers = #tpu.dot_dimension_numbers<[1], [0], [0], [1], [0, 0, 1, 1], [], []>} : vector<2x64xbf16>, vector<64x256xbf16>, vector<2x256xf32> -> vector<2x256xf32>
    %770 = vector.extract_strided_slice %769 {offsets = [0, 128], sizes = [2, 128], strides = [1, 1]} : vector<2x256xf32> to vector<2x128xf32>
    %771 = vector.broadcast %53 : vector<1x128xf32> to vector<2x128xf32>
    %772 = arith.addf %770, %771 : vector<2x128xf32>
    %773 = arith.negf %772 : vector<2x128xf32>
    %774 = math.exp %773 : vector<2x128xf32>
    %cst_101 = arith.constant 1.000000e+00 : f32
    %775 = vector.broadcast %cst_101 : f32 to vector<2x128xf32>
    %776 = arith.addf %775, %774 : vector<2x128xf32>
    %777 = arith.divf %775, %776 : vector<2x128xf32>
    %778 = vector.extract_strided_slice %777 {offsets = [0, 0], sizes = [2, 32], strides = [1, 1]} : vector<2x128xf32> to vector<2x32xf32>
    %779 = vector.extract_strided_slice %777 {offsets = [0, 32], sizes = [2, 32], strides = [1, 1]} : vector<2x128xf32> to vector<2x32xf32>
    %780 = vector.extract_strided_slice %777 {offsets = [0, 96], sizes = [2, 32], strides = [1, 1]} : vector<2x128xf32> to vector<2x32xf32>
    %781 = vector.extract_strided_slice %772 {offsets = [0, 64], sizes = [2, 32], strides = [1, 1]} : vector<2x128xf32> to vector<2x32xf32>
    %782 = math.tanh %781 : vector<2x32xf32>
    %783 = arith.mulf %779, %742 : vector<2x32xf32>
    %784 = arith.mulf %778, %782 : vector<2x32xf32>
    %785 = arith.addf %783, %784 : vector<2x32xf32>
    %786 = math.tanh %785 : vector<2x32xf32>
    %787 = arith.mulf %780, %786 : vector<2x32xf32>
    %788 = vector.extract_strided_slice %769 {offsets = [0, 0], sizes = [2, 128], strides = [1, 1]} : vector<2x256xf32> to vector<2x128xf32>
    %789 = vector.extract_strided_slice %50 {offsets = [17, 0], sizes = [1, 128], strides = [1, 1]} : vector<64x128xf32> to vector<1x128xf32>
    %790 = vector.extract_strided_slice %50 {offsets = [49, 0], sizes = [1, 128], strides = [1, 1]} : vector<64x128xf32> to vector<1x128xf32>
    %791 = tpu.concatenate %789, %790 in 0 : vector<1x128xf32>, vector<1x128xf32> -> vector<2x128xf32>
    %792 = arith.addf %791, %788 : vector<2x128xf32>
    %793 = vector.broadcast %52 : vector<1x128xf32> to vector<2x128xf32>
    %794 = arith.addf %792, %793 : vector<2x128xf32>
    %795 = arith.negf %794 : vector<2x128xf32>
    %796 = math.exp %795 : vector<2x128xf32>
    %cst_102 = arith.constant 1.000000e+00 : f32
    %797 = vector.broadcast %cst_102 : f32 to vector<2x128xf32>
    %798 = arith.addf %797, %796 : vector<2x128xf32>
    %799 = arith.divf %797, %798 : vector<2x128xf32>
    %800 = vector.extract_strided_slice %799 {offsets = [0, 0], sizes = [2, 32], strides = [1, 1]} : vector<2x128xf32> to vector<2x32xf32>
    %801 = vector.extract_strided_slice %799 {offsets = [0, 32], sizes = [2, 32], strides = [1, 1]} : vector<2x128xf32> to vector<2x32xf32>
    %802 = vector.extract_strided_slice %799 {offsets = [0, 96], sizes = [2, 32], strides = [1, 1]} : vector<2x128xf32> to vector<2x32xf32>
    %803 = vector.extract_strided_slice %794 {offsets = [0, 64], sizes = [2, 32], strides = [1, 1]} : vector<2x128xf32> to vector<2x32xf32>
    %804 = math.tanh %803 : vector<2x32xf32>
    %805 = arith.mulf %801, %764 : vector<2x32xf32>
    %806 = arith.mulf %800, %804 : vector<2x32xf32>
    %807 = arith.addf %805, %806 : vector<2x32xf32>
    %808 = math.tanh %807 : vector<2x32xf32>
    %809 = arith.mulf %802, %808 : vector<2x32xf32>
    %810 = tpu.concatenate %809, %787 in 1 : vector<2x32xf32>, vector<2x32xf32> -> vector<2x64xf32>
    %811 = arith.truncf %810 : vector<2x64xf32> to vector<2x64xbf16>
    %cst_103 = arith.constant dense<0.000000e+00> : vector<2x256xf32>
    %812 = tpu.matmul %811, %51, %cst_103 {dimension_numbers = #tpu.dot_dimension_numbers<[1], [0], [0], [1], [0, 0, 1, 1], [], []>} : vector<2x64xbf16>, vector<64x256xbf16>, vector<2x256xf32> -> vector<2x256xf32>
    %813 = vector.extract_strided_slice %812 {offsets = [0, 128], sizes = [2, 128], strides = [1, 1]} : vector<2x256xf32> to vector<2x128xf32>
    %814 = vector.broadcast %53 : vector<1x128xf32> to vector<2x128xf32>
    %815 = arith.addf %813, %814 : vector<2x128xf32>
    %816 = arith.negf %815 : vector<2x128xf32>
    %817 = math.exp %816 : vector<2x128xf32>
    %cst_104 = arith.constant 1.000000e+00 : f32
    %818 = vector.broadcast %cst_104 : f32 to vector<2x128xf32>
    %819 = arith.addf %818, %817 : vector<2x128xf32>
    %820 = arith.divf %818, %819 : vector<2x128xf32>
    %821 = vector.extract_strided_slice %820 {offsets = [0, 0], sizes = [2, 32], strides = [1, 1]} : vector<2x128xf32> to vector<2x32xf32>
    %822 = vector.extract_strided_slice %820 {offsets = [0, 32], sizes = [2, 32], strides = [1, 1]} : vector<2x128xf32> to vector<2x32xf32>
    %823 = vector.extract_strided_slice %820 {offsets = [0, 96], sizes = [2, 32], strides = [1, 1]} : vector<2x128xf32> to vector<2x32xf32>
    %824 = vector.extract_strided_slice %815 {offsets = [0, 64], sizes = [2, 32], strides = [1, 1]} : vector<2x128xf32> to vector<2x32xf32>
    %825 = math.tanh %824 : vector<2x32xf32>
    %826 = arith.mulf %822, %785 : vector<2x32xf32>
    %827 = arith.mulf %821, %825 : vector<2x32xf32>
    %828 = arith.addf %826, %827 : vector<2x32xf32>
    %829 = math.tanh %828 : vector<2x32xf32>
    %830 = arith.mulf %823, %829 : vector<2x32xf32>
    %831 = vector.extract_strided_slice %812 {offsets = [0, 0], sizes = [2, 128], strides = [1, 1]} : vector<2x256xf32> to vector<2x128xf32>
    %832 = vector.extract_strided_slice %50 {offsets = [18, 0], sizes = [1, 128], strides = [1, 1]} : vector<64x128xf32> to vector<1x128xf32>
    %833 = vector.extract_strided_slice %50 {offsets = [50, 0], sizes = [1, 128], strides = [1, 1]} : vector<64x128xf32> to vector<1x128xf32>
    %834 = tpu.concatenate %832, %833 in 0 : vector<1x128xf32>, vector<1x128xf32> -> vector<2x128xf32>
    %835 = arith.addf %834, %831 : vector<2x128xf32>
    %836 = vector.broadcast %52 : vector<1x128xf32> to vector<2x128xf32>
    %837 = arith.addf %835, %836 : vector<2x128xf32>
    %838 = arith.negf %837 : vector<2x128xf32>
    %839 = math.exp %838 : vector<2x128xf32>
    %cst_105 = arith.constant 1.000000e+00 : f32
    %840 = vector.broadcast %cst_105 : f32 to vector<2x128xf32>
    %841 = arith.addf %840, %839 : vector<2x128xf32>
    %842 = arith.divf %840, %841 : vector<2x128xf32>
    %843 = vector.extract_strided_slice %842 {offsets = [0, 0], sizes = [2, 32], strides = [1, 1]} : vector<2x128xf32> to vector<2x32xf32>
    %844 = vector.extract_strided_slice %842 {offsets = [0, 32], sizes = [2, 32], strides = [1, 1]} : vector<2x128xf32> to vector<2x32xf32>
    %845 = vector.extract_strided_slice %842 {offsets = [0, 96], sizes = [2, 32], strides = [1, 1]} : vector<2x128xf32> to vector<2x32xf32>
    %846 = vector.extract_strided_slice %837 {offsets = [0, 64], sizes = [2, 32], strides = [1, 1]} : vector<2x128xf32> to vector<2x32xf32>
    %847 = math.tanh %846 : vector<2x32xf32>
    %848 = arith.mulf %844, %807 : vector<2x32xf32>
    %849 = arith.mulf %843, %847 : vector<2x32xf32>
    %850 = arith.addf %848, %849 : vector<2x32xf32>
    %851 = math.tanh %850 : vector<2x32xf32>
    %852 = arith.mulf %845, %851 : vector<2x32xf32>
    %853 = tpu.concatenate %852, %830 in 1 : vector<2x32xf32>, vector<2x32xf32> -> vector<2x64xf32>
    %854 = arith.truncf %853 : vector<2x64xf32> to vector<2x64xbf16>
    %cst_106 = arith.constant dense<0.000000e+00> : vector<2x256xf32>
    %855 = tpu.matmul %854, %51, %cst_106 {dimension_numbers = #tpu.dot_dimension_numbers<[1], [0], [0], [1], [0, 0, 1, 1], [], []>} : vector<2x64xbf16>, vector<64x256xbf16>, vector<2x256xf32> -> vector<2x256xf32>
    %856 = vector.extract_strided_slice %855 {offsets = [0, 128], sizes = [2, 128], strides = [1, 1]} : vector<2x256xf32> to vector<2x128xf32>
    %857 = vector.broadcast %53 : vector<1x128xf32> to vector<2x128xf32>
    %858 = arith.addf %856, %857 : vector<2x128xf32>
    %859 = arith.negf %858 : vector<2x128xf32>
    %860 = math.exp %859 : vector<2x128xf32>
    %cst_107 = arith.constant 1.000000e+00 : f32
    %861 = vector.broadcast %cst_107 : f32 to vector<2x128xf32>
    %862 = arith.addf %861, %860 : vector<2x128xf32>
    %863 = arith.divf %861, %862 : vector<2x128xf32>
    %864 = vector.extract_strided_slice %863 {offsets = [0, 0], sizes = [2, 32], strides = [1, 1]} : vector<2x128xf32> to vector<2x32xf32>
    %865 = vector.extract_strided_slice %863 {offsets = [0, 32], sizes = [2, 32], strides = [1, 1]} : vector<2x128xf32> to vector<2x32xf32>
    %866 = vector.extract_strided_slice %863 {offsets = [0, 96], sizes = [2, 32], strides = [1, 1]} : vector<2x128xf32> to vector<2x32xf32>
    %867 = vector.extract_strided_slice %858 {offsets = [0, 64], sizes = [2, 32], strides = [1, 1]} : vector<2x128xf32> to vector<2x32xf32>
    %868 = math.tanh %867 : vector<2x32xf32>
    %869 = arith.mulf %865, %828 : vector<2x32xf32>
    %870 = arith.mulf %864, %868 : vector<2x32xf32>
    %871 = arith.addf %869, %870 : vector<2x32xf32>
    %872 = math.tanh %871 : vector<2x32xf32>
    %873 = arith.mulf %866, %872 : vector<2x32xf32>
    %874 = vector.extract_strided_slice %855 {offsets = [0, 0], sizes = [2, 128], strides = [1, 1]} : vector<2x256xf32> to vector<2x128xf32>
    %875 = vector.extract_strided_slice %50 {offsets = [19, 0], sizes = [1, 128], strides = [1, 1]} : vector<64x128xf32> to vector<1x128xf32>
    %876 = vector.extract_strided_slice %50 {offsets = [51, 0], sizes = [1, 128], strides = [1, 1]} : vector<64x128xf32> to vector<1x128xf32>
    %877 = tpu.concatenate %875, %876 in 0 : vector<1x128xf32>, vector<1x128xf32> -> vector<2x128xf32>
    %878 = arith.addf %877, %874 : vector<2x128xf32>
    %879 = vector.broadcast %52 : vector<1x128xf32> to vector<2x128xf32>
    %880 = arith.addf %878, %879 : vector<2x128xf32>
    %881 = arith.negf %880 : vector<2x128xf32>
    %882 = math.exp %881 : vector<2x128xf32>
    %cst_108 = arith.constant 1.000000e+00 : f32
    %883 = vector.broadcast %cst_108 : f32 to vector<2x128xf32>
    %884 = arith.addf %883, %882 : vector<2x128xf32>
    %885 = arith.divf %883, %884 : vector<2x128xf32>
    %886 = vector.extract_strided_slice %885 {offsets = [0, 0], sizes = [2, 32], strides = [1, 1]} : vector<2x128xf32> to vector<2x32xf32>
    %887 = vector.extract_strided_slice %885 {offsets = [0, 32], sizes = [2, 32], strides = [1, 1]} : vector<2x128xf32> to vector<2x32xf32>
    %888 = vector.extract_strided_slice %885 {offsets = [0, 96], sizes = [2, 32], strides = [1, 1]} : vector<2x128xf32> to vector<2x32xf32>
    %889 = vector.extract_strided_slice %880 {offsets = [0, 64], sizes = [2, 32], strides = [1, 1]} : vector<2x128xf32> to vector<2x32xf32>
    %890 = math.tanh %889 : vector<2x32xf32>
    %891 = arith.mulf %887, %850 : vector<2x32xf32>
    %892 = arith.mulf %886, %890 : vector<2x32xf32>
    %893 = arith.addf %891, %892 : vector<2x32xf32>
    %894 = math.tanh %893 : vector<2x32xf32>
    %895 = arith.mulf %888, %894 : vector<2x32xf32>
    %896 = tpu.concatenate %895, %873 in 1 : vector<2x32xf32>, vector<2x32xf32> -> vector<2x64xf32>
    %897 = arith.truncf %896 : vector<2x64xf32> to vector<2x64xbf16>
    %cst_109 = arith.constant dense<0.000000e+00> : vector<2x256xf32>
    %898 = tpu.matmul %897, %51, %cst_109 {dimension_numbers = #tpu.dot_dimension_numbers<[1], [0], [0], [1], [0, 0, 1, 1], [], []>} : vector<2x64xbf16>, vector<64x256xbf16>, vector<2x256xf32> -> vector<2x256xf32>
    %899 = vector.extract_strided_slice %898 {offsets = [0, 128], sizes = [2, 128], strides = [1, 1]} : vector<2x256xf32> to vector<2x128xf32>
    %900 = vector.broadcast %53 : vector<1x128xf32> to vector<2x128xf32>
    %901 = arith.addf %899, %900 : vector<2x128xf32>
    %902 = arith.negf %901 : vector<2x128xf32>
    %903 = math.exp %902 : vector<2x128xf32>
    %cst_110 = arith.constant 1.000000e+00 : f32
    %904 = vector.broadcast %cst_110 : f32 to vector<2x128xf32>
    %905 = arith.addf %904, %903 : vector<2x128xf32>
    %906 = arith.divf %904, %905 : vector<2x128xf32>
    %907 = vector.extract_strided_slice %906 {offsets = [0, 0], sizes = [2, 32], strides = [1, 1]} : vector<2x128xf32> to vector<2x32xf32>
    %908 = vector.extract_strided_slice %906 {offsets = [0, 32], sizes = [2, 32], strides = [1, 1]} : vector<2x128xf32> to vector<2x32xf32>
    %909 = vector.extract_strided_slice %906 {offsets = [0, 96], sizes = [2, 32], strides = [1, 1]} : vector<2x128xf32> to vector<2x32xf32>
    %910 = vector.extract_strided_slice %901 {offsets = [0, 64], sizes = [2, 32], strides = [1, 1]} : vector<2x128xf32> to vector<2x32xf32>
    %911 = math.tanh %910 : vector<2x32xf32>
    %912 = arith.mulf %908, %871 : vector<2x32xf32>
    %913 = arith.mulf %907, %911 : vector<2x32xf32>
    %914 = arith.addf %912, %913 : vector<2x32xf32>
    %915 = math.tanh %914 : vector<2x32xf32>
    %916 = arith.mulf %909, %915 : vector<2x32xf32>
    %917 = vector.extract_strided_slice %898 {offsets = [0, 0], sizes = [2, 128], strides = [1, 1]} : vector<2x256xf32> to vector<2x128xf32>
    %918 = vector.extract_strided_slice %50 {offsets = [20, 0], sizes = [1, 128], strides = [1, 1]} : vector<64x128xf32> to vector<1x128xf32>
    %919 = vector.extract_strided_slice %50 {offsets = [52, 0], sizes = [1, 128], strides = [1, 1]} : vector<64x128xf32> to vector<1x128xf32>
    %920 = tpu.concatenate %918, %919 in 0 : vector<1x128xf32>, vector<1x128xf32> -> vector<2x128xf32>
    %921 = arith.addf %920, %917 : vector<2x128xf32>
    %922 = vector.broadcast %52 : vector<1x128xf32> to vector<2x128xf32>
    %923 = arith.addf %921, %922 : vector<2x128xf32>
    %924 = arith.negf %923 : vector<2x128xf32>
    %925 = math.exp %924 : vector<2x128xf32>
    %cst_111 = arith.constant 1.000000e+00 : f32
    %926 = vector.broadcast %cst_111 : f32 to vector<2x128xf32>
    %927 = arith.addf %926, %925 : vector<2x128xf32>
    %928 = arith.divf %926, %927 : vector<2x128xf32>
    %929 = vector.extract_strided_slice %928 {offsets = [0, 0], sizes = [2, 32], strides = [1, 1]} : vector<2x128xf32> to vector<2x32xf32>
    %930 = vector.extract_strided_slice %928 {offsets = [0, 32], sizes = [2, 32], strides = [1, 1]} : vector<2x128xf32> to vector<2x32xf32>
    %931 = vector.extract_strided_slice %928 {offsets = [0, 96], sizes = [2, 32], strides = [1, 1]} : vector<2x128xf32> to vector<2x32xf32>
    %932 = vector.extract_strided_slice %923 {offsets = [0, 64], sizes = [2, 32], strides = [1, 1]} : vector<2x128xf32> to vector<2x32xf32>
    %933 = math.tanh %932 : vector<2x32xf32>
    %934 = arith.mulf %930, %893 : vector<2x32xf32>
    %935 = arith.mulf %929, %933 : vector<2x32xf32>
    %936 = arith.addf %934, %935 : vector<2x32xf32>
    %937 = math.tanh %936 : vector<2x32xf32>
    %938 = arith.mulf %931, %937 : vector<2x32xf32>
    %939 = tpu.concatenate %938, %916 in 1 : vector<2x32xf32>, vector<2x32xf32> -> vector<2x64xf32>
    %940 = arith.truncf %939 : vector<2x64xf32> to vector<2x64xbf16>
    %cst_112 = arith.constant dense<0.000000e+00> : vector<2x256xf32>
    %941 = tpu.matmul %940, %51, %cst_112 {dimension_numbers = #tpu.dot_dimension_numbers<[1], [0], [0], [1], [0, 0, 1, 1], [], []>} : vector<2x64xbf16>, vector<64x256xbf16>, vector<2x256xf32> -> vector<2x256xf32>
    %942 = vector.extract_strided_slice %941 {offsets = [0, 128], sizes = [2, 128], strides = [1, 1]} : vector<2x256xf32> to vector<2x128xf32>
    %943 = vector.broadcast %53 : vector<1x128xf32> to vector<2x128xf32>
    %944 = arith.addf %942, %943 : vector<2x128xf32>
    %945 = arith.negf %944 : vector<2x128xf32>
    %946 = math.exp %945 : vector<2x128xf32>
    %cst_113 = arith.constant 1.000000e+00 : f32
    %947 = vector.broadcast %cst_113 : f32 to vector<2x128xf32>
    %948 = arith.addf %947, %946 : vector<2x128xf32>
    %949 = arith.divf %947, %948 : vector<2x128xf32>
    %950 = vector.extract_strided_slice %949 {offsets = [0, 0], sizes = [2, 32], strides = [1, 1]} : vector<2x128xf32> to vector<2x32xf32>
    %951 = vector.extract_strided_slice %949 {offsets = [0, 32], sizes = [2, 32], strides = [1, 1]} : vector<2x128xf32> to vector<2x32xf32>
    %952 = vector.extract_strided_slice %949 {offsets = [0, 96], sizes = [2, 32], strides = [1, 1]} : vector<2x128xf32> to vector<2x32xf32>
    %953 = vector.extract_strided_slice %944 {offsets = [0, 64], sizes = [2, 32], strides = [1, 1]} : vector<2x128xf32> to vector<2x32xf32>
    %954 = math.tanh %953 : vector<2x32xf32>
    %955 = arith.mulf %951, %914 : vector<2x32xf32>
    %956 = arith.mulf %950, %954 : vector<2x32xf32>
    %957 = arith.addf %955, %956 : vector<2x32xf32>
    %958 = math.tanh %957 : vector<2x32xf32>
    %959 = arith.mulf %952, %958 : vector<2x32xf32>
    %960 = vector.extract_strided_slice %941 {offsets = [0, 0], sizes = [2, 128], strides = [1, 1]} : vector<2x256xf32> to vector<2x128xf32>
    %961 = vector.extract_strided_slice %50 {offsets = [21, 0], sizes = [1, 128], strides = [1, 1]} : vector<64x128xf32> to vector<1x128xf32>
    %962 = vector.extract_strided_slice %50 {offsets = [53, 0], sizes = [1, 128], strides = [1, 1]} : vector<64x128xf32> to vector<1x128xf32>
    %963 = tpu.concatenate %961, %962 in 0 : vector<1x128xf32>, vector<1x128xf32> -> vector<2x128xf32>
    %964 = arith.addf %963, %960 : vector<2x128xf32>
    %965 = vector.broadcast %52 : vector<1x128xf32> to vector<2x128xf32>
    %966 = arith.addf %964, %965 : vector<2x128xf32>
    %967 = arith.negf %966 : vector<2x128xf32>
    %968 = math.exp %967 : vector<2x128xf32>
    %cst_114 = arith.constant 1.000000e+00 : f32
    %969 = vector.broadcast %cst_114 : f32 to vector<2x128xf32>
    %970 = arith.addf %969, %968 : vector<2x128xf32>
    %971 = arith.divf %969, %970 : vector<2x128xf32>
    %972 = vector.extract_strided_slice %971 {offsets = [0, 0], sizes = [2, 32], strides = [1, 1]} : vector<2x128xf32> to vector<2x32xf32>
    %973 = vector.extract_strided_slice %971 {offsets = [0, 32], sizes = [2, 32], strides = [1, 1]} : vector<2x128xf32> to vector<2x32xf32>
    %974 = vector.extract_strided_slice %971 {offsets = [0, 96], sizes = [2, 32], strides = [1, 1]} : vector<2x128xf32> to vector<2x32xf32>
    %975 = vector.extract_strided_slice %966 {offsets = [0, 64], sizes = [2, 32], strides = [1, 1]} : vector<2x128xf32> to vector<2x32xf32>
    %976 = math.tanh %975 : vector<2x32xf32>
    %977 = arith.mulf %973, %936 : vector<2x32xf32>
    %978 = arith.mulf %972, %976 : vector<2x32xf32>
    %979 = arith.addf %977, %978 : vector<2x32xf32>
    %980 = math.tanh %979 : vector<2x32xf32>
    %981 = arith.mulf %974, %980 : vector<2x32xf32>
    %982 = tpu.concatenate %981, %959 in 1 : vector<2x32xf32>, vector<2x32xf32> -> vector<2x64xf32>
    %983 = arith.truncf %982 : vector<2x64xf32> to vector<2x64xbf16>
    %cst_115 = arith.constant dense<0.000000e+00> : vector<2x256xf32>
    %984 = tpu.matmul %983, %51, %cst_115 {dimension_numbers = #tpu.dot_dimension_numbers<[1], [0], [0], [1], [0, 0, 1, 1], [], []>} : vector<2x64xbf16>, vector<64x256xbf16>, vector<2x256xf32> -> vector<2x256xf32>
    %985 = vector.extract_strided_slice %984 {offsets = [0, 128], sizes = [2, 128], strides = [1, 1]} : vector<2x256xf32> to vector<2x128xf32>
    %986 = vector.broadcast %53 : vector<1x128xf32> to vector<2x128xf32>
    %987 = arith.addf %985, %986 : vector<2x128xf32>
    %988 = arith.negf %987 : vector<2x128xf32>
    %989 = math.exp %988 : vector<2x128xf32>
    %cst_116 = arith.constant 1.000000e+00 : f32
    %990 = vector.broadcast %cst_116 : f32 to vector<2x128xf32>
    %991 = arith.addf %990, %989 : vector<2x128xf32>
    %992 = arith.divf %990, %991 : vector<2x128xf32>
    %993 = vector.extract_strided_slice %992 {offsets = [0, 0], sizes = [2, 32], strides = [1, 1]} : vector<2x128xf32> to vector<2x32xf32>
    %994 = vector.extract_strided_slice %992 {offsets = [0, 32], sizes = [2, 32], strides = [1, 1]} : vector<2x128xf32> to vector<2x32xf32>
    %995 = vector.extract_strided_slice %992 {offsets = [0, 96], sizes = [2, 32], strides = [1, 1]} : vector<2x128xf32> to vector<2x32xf32>
    %996 = vector.extract_strided_slice %987 {offsets = [0, 64], sizes = [2, 32], strides = [1, 1]} : vector<2x128xf32> to vector<2x32xf32>
    %997 = math.tanh %996 : vector<2x32xf32>
    %998 = arith.mulf %994, %957 : vector<2x32xf32>
    %999 = arith.mulf %993, %997 : vector<2x32xf32>
    %1000 = arith.addf %998, %999 : vector<2x32xf32>
    %1001 = math.tanh %1000 : vector<2x32xf32>
    %1002 = arith.mulf %995, %1001 : vector<2x32xf32>
    %1003 = vector.extract_strided_slice %984 {offsets = [0, 0], sizes = [2, 128], strides = [1, 1]} : vector<2x256xf32> to vector<2x128xf32>
    %1004 = vector.extract_strided_slice %50 {offsets = [22, 0], sizes = [1, 128], strides = [1, 1]} : vector<64x128xf32> to vector<1x128xf32>
    %1005 = vector.extract_strided_slice %50 {offsets = [54, 0], sizes = [1, 128], strides = [1, 1]} : vector<64x128xf32> to vector<1x128xf32>
    %1006 = tpu.concatenate %1004, %1005 in 0 : vector<1x128xf32>, vector<1x128xf32> -> vector<2x128xf32>
    %1007 = arith.addf %1006, %1003 : vector<2x128xf32>
    %1008 = vector.broadcast %52 : vector<1x128xf32> to vector<2x128xf32>
    %1009 = arith.addf %1007, %1008 : vector<2x128xf32>
    %1010 = arith.negf %1009 : vector<2x128xf32>
    %1011 = math.exp %1010 : vector<2x128xf32>
    %cst_117 = arith.constant 1.000000e+00 : f32
    %1012 = vector.broadcast %cst_117 : f32 to vector<2x128xf32>
    %1013 = arith.addf %1012, %1011 : vector<2x128xf32>
    %1014 = arith.divf %1012, %1013 : vector<2x128xf32>
    %1015 = vector.extract_strided_slice %1014 {offsets = [0, 0], sizes = [2, 32], strides = [1, 1]} : vector<2x128xf32> to vector<2x32xf32>
    %1016 = vector.extract_strided_slice %1014 {offsets = [0, 32], sizes = [2, 32], strides = [1, 1]} : vector<2x128xf32> to vector<2x32xf32>
    %1017 = vector.extract_strided_slice %1014 {offsets = [0, 96], sizes = [2, 32], strides = [1, 1]} : vector<2x128xf32> to vector<2x32xf32>
    %1018 = vector.extract_strided_slice %1009 {offsets = [0, 64], sizes = [2, 32], strides = [1, 1]} : vector<2x128xf32> to vector<2x32xf32>
    %1019 = math.tanh %1018 : vector<2x32xf32>
    %1020 = arith.mulf %1016, %979 : vector<2x32xf32>
    %1021 = arith.mulf %1015, %1019 : vector<2x32xf32>
    %1022 = arith.addf %1020, %1021 : vector<2x32xf32>
    %1023 = math.tanh %1022 : vector<2x32xf32>
    %1024 = arith.mulf %1017, %1023 : vector<2x32xf32>
    %1025 = tpu.concatenate %1024, %1002 in 1 : vector<2x32xf32>, vector<2x32xf32> -> vector<2x64xf32>
    %1026 = arith.truncf %1025 : vector<2x64xf32> to vector<2x64xbf16>
    %cst_118 = arith.constant dense<0.000000e+00> : vector<2x256xf32>
    %1027 = tpu.matmul %1026, %51, %cst_118 {dimension_numbers = #tpu.dot_dimension_numbers<[1], [0], [0], [1], [0, 0, 1, 1], [], []>} : vector<2x64xbf16>, vector<64x256xbf16>, vector<2x256xf32> -> vector<2x256xf32>
    %1028 = vector.extract_strided_slice %1027 {offsets = [0, 128], sizes = [2, 128], strides = [1, 1]} : vector<2x256xf32> to vector<2x128xf32>
    %1029 = vector.broadcast %53 : vector<1x128xf32> to vector<2x128xf32>
    %1030 = arith.addf %1028, %1029 : vector<2x128xf32>
    %1031 = arith.negf %1030 : vector<2x128xf32>
    %1032 = math.exp %1031 : vector<2x128xf32>
    %cst_119 = arith.constant 1.000000e+00 : f32
    %1033 = vector.broadcast %cst_119 : f32 to vector<2x128xf32>
    %1034 = arith.addf %1033, %1032 : vector<2x128xf32>
    %1035 = arith.divf %1033, %1034 : vector<2x128xf32>
    %1036 = vector.extract_strided_slice %1035 {offsets = [0, 0], sizes = [2, 32], strides = [1, 1]} : vector<2x128xf32> to vector<2x32xf32>
    %1037 = vector.extract_strided_slice %1035 {offsets = [0, 32], sizes = [2, 32], strides = [1, 1]} : vector<2x128xf32> to vector<2x32xf32>
    %1038 = vector.extract_strided_slice %1035 {offsets = [0, 96], sizes = [2, 32], strides = [1, 1]} : vector<2x128xf32> to vector<2x32xf32>
    %1039 = vector.extract_strided_slice %1030 {offsets = [0, 64], sizes = [2, 32], strides = [1, 1]} : vector<2x128xf32> to vector<2x32xf32>
    %1040 = math.tanh %1039 : vector<2x32xf32>
    %1041 = arith.mulf %1037, %1000 : vector<2x32xf32>
    %1042 = arith.mulf %1036, %1040 : vector<2x32xf32>
    %1043 = arith.addf %1041, %1042 : vector<2x32xf32>
    %1044 = math.tanh %1043 : vector<2x32xf32>
    %1045 = arith.mulf %1038, %1044 : vector<2x32xf32>
    %1046 = vector.extract_strided_slice %1027 {offsets = [0, 0], sizes = [2, 128], strides = [1, 1]} : vector<2x256xf32> to vector<2x128xf32>
    %1047 = vector.extract_strided_slice %50 {offsets = [23, 0], sizes = [1, 128], strides = [1, 1]} : vector<64x128xf32> to vector<1x128xf32>
    %1048 = vector.extract_strided_slice %50 {offsets = [55, 0], sizes = [1, 128], strides = [1, 1]} : vector<64x128xf32> to vector<1x128xf32>
    %1049 = tpu.concatenate %1047, %1048 in 0 : vector<1x128xf32>, vector<1x128xf32> -> vector<2x128xf32>
    %1050 = arith.addf %1049, %1046 : vector<2x128xf32>
    %1051 = vector.broadcast %52 : vector<1x128xf32> to vector<2x128xf32>
    %1052 = arith.addf %1050, %1051 : vector<2x128xf32>
    %1053 = arith.negf %1052 : vector<2x128xf32>
    %1054 = math.exp %1053 : vector<2x128xf32>
    %cst_120 = arith.constant 1.000000e+00 : f32
    %1055 = vector.broadcast %cst_120 : f32 to vector<2x128xf32>
    %1056 = arith.addf %1055, %1054 : vector<2x128xf32>
    %1057 = arith.divf %1055, %1056 : vector<2x128xf32>
    %1058 = vector.extract_strided_slice %1057 {offsets = [0, 0], sizes = [2, 32], strides = [1, 1]} : vector<2x128xf32> to vector<2x32xf32>
    %1059 = vector.extract_strided_slice %1057 {offsets = [0, 32], sizes = [2, 32], strides = [1, 1]} : vector<2x128xf32> to vector<2x32xf32>
    %1060 = vector.extract_strided_slice %1057 {offsets = [0, 96], sizes = [2, 32], strides = [1, 1]} : vector<2x128xf32> to vector<2x32xf32>
    %1061 = vector.extract_strided_slice %1052 {offsets = [0, 64], sizes = [2, 32], strides = [1, 1]} : vector<2x128xf32> to vector<2x32xf32>
    %1062 = math.tanh %1061 : vector<2x32xf32>
    %1063 = arith.mulf %1059, %1022 : vector<2x32xf32>
    %1064 = arith.mulf %1058, %1062 : vector<2x32xf32>
    %1065 = arith.addf %1063, %1064 : vector<2x32xf32>
    %1066 = math.tanh %1065 : vector<2x32xf32>
    %1067 = arith.mulf %1060, %1066 : vector<2x32xf32>
    %1068 = tpu.concatenate %1067, %1045 in 1 : vector<2x32xf32>, vector<2x32xf32> -> vector<2x64xf32>
    %1069 = arith.truncf %1068 : vector<2x64xf32> to vector<2x64xbf16>
    %cst_121 = arith.constant dense<0.000000e+00> : vector<2x256xf32>
    %1070 = tpu.matmul %1069, %51, %cst_121 {dimension_numbers = #tpu.dot_dimension_numbers<[1], [0], [0], [1], [0, 0, 1, 1], [], []>} : vector<2x64xbf16>, vector<64x256xbf16>, vector<2x256xf32> -> vector<2x256xf32>
    %1071 = vector.extract_strided_slice %1070 {offsets = [0, 128], sizes = [2, 128], strides = [1, 1]} : vector<2x256xf32> to vector<2x128xf32>
    %1072 = vector.broadcast %53 : vector<1x128xf32> to vector<2x128xf32>
    %1073 = arith.addf %1071, %1072 : vector<2x128xf32>
    %1074 = arith.negf %1073 : vector<2x128xf32>
    %1075 = math.exp %1074 : vector<2x128xf32>
    %cst_122 = arith.constant 1.000000e+00 : f32
    %1076 = vector.broadcast %cst_122 : f32 to vector<2x128xf32>
    %1077 = arith.addf %1076, %1075 : vector<2x128xf32>
    %1078 = arith.divf %1076, %1077 : vector<2x128xf32>
    %1079 = vector.extract_strided_slice %1078 {offsets = [0, 0], sizes = [2, 32], strides = [1, 1]} : vector<2x128xf32> to vector<2x32xf32>
    %1080 = vector.extract_strided_slice %1078 {offsets = [0, 32], sizes = [2, 32], strides = [1, 1]} : vector<2x128xf32> to vector<2x32xf32>
    %1081 = vector.extract_strided_slice %1078 {offsets = [0, 96], sizes = [2, 32], strides = [1, 1]} : vector<2x128xf32> to vector<2x32xf32>
    %1082 = vector.extract_strided_slice %1073 {offsets = [0, 64], sizes = [2, 32], strides = [1, 1]} : vector<2x128xf32> to vector<2x32xf32>
    %1083 = math.tanh %1082 : vector<2x32xf32>
    %1084 = arith.mulf %1080, %1043 : vector<2x32xf32>
    %1085 = arith.mulf %1079, %1083 : vector<2x32xf32>
    %1086 = arith.addf %1084, %1085 : vector<2x32xf32>
    %1087 = math.tanh %1086 : vector<2x32xf32>
    %1088 = arith.mulf %1081, %1087 : vector<2x32xf32>
    %1089 = vector.extract_strided_slice %1070 {offsets = [0, 0], sizes = [2, 128], strides = [1, 1]} : vector<2x256xf32> to vector<2x128xf32>
    %1090 = vector.extract_strided_slice %50 {offsets = [24, 0], sizes = [1, 128], strides = [1, 1]} : vector<64x128xf32> to vector<1x128xf32>
    %1091 = vector.extract_strided_slice %50 {offsets = [56, 0], sizes = [1, 128], strides = [1, 1]} : vector<64x128xf32> to vector<1x128xf32>
    %1092 = tpu.concatenate %1090, %1091 in 0 : vector<1x128xf32>, vector<1x128xf32> -> vector<2x128xf32>
    %1093 = arith.addf %1092, %1089 : vector<2x128xf32>
    %1094 = vector.broadcast %52 : vector<1x128xf32> to vector<2x128xf32>
    %1095 = arith.addf %1093, %1094 : vector<2x128xf32>
    %1096 = arith.negf %1095 : vector<2x128xf32>
    %1097 = math.exp %1096 : vector<2x128xf32>
    %cst_123 = arith.constant 1.000000e+00 : f32
    %1098 = vector.broadcast %cst_123 : f32 to vector<2x128xf32>
    %1099 = arith.addf %1098, %1097 : vector<2x128xf32>
    %1100 = arith.divf %1098, %1099 : vector<2x128xf32>
    %1101 = vector.extract_strided_slice %1100 {offsets = [0, 0], sizes = [2, 32], strides = [1, 1]} : vector<2x128xf32> to vector<2x32xf32>
    %1102 = vector.extract_strided_slice %1100 {offsets = [0, 32], sizes = [2, 32], strides = [1, 1]} : vector<2x128xf32> to vector<2x32xf32>
    %1103 = vector.extract_strided_slice %1100 {offsets = [0, 96], sizes = [2, 32], strides = [1, 1]} : vector<2x128xf32> to vector<2x32xf32>
    %1104 = vector.extract_strided_slice %1095 {offsets = [0, 64], sizes = [2, 32], strides = [1, 1]} : vector<2x128xf32> to vector<2x32xf32>
    %1105 = math.tanh %1104 : vector<2x32xf32>
    %1106 = arith.mulf %1102, %1065 : vector<2x32xf32>
    %1107 = arith.mulf %1101, %1105 : vector<2x32xf32>
    %1108 = arith.addf %1106, %1107 : vector<2x32xf32>
    %1109 = math.tanh %1108 : vector<2x32xf32>
    %1110 = arith.mulf %1103, %1109 : vector<2x32xf32>
    %1111 = tpu.concatenate %1110, %1088 in 1 : vector<2x32xf32>, vector<2x32xf32> -> vector<2x64xf32>
    %1112 = arith.truncf %1111 : vector<2x64xf32> to vector<2x64xbf16>
    %cst_124 = arith.constant dense<0.000000e+00> : vector<2x256xf32>
    %1113 = tpu.matmul %1112, %51, %cst_124 {dimension_numbers = #tpu.dot_dimension_numbers<[1], [0], [0], [1], [0, 0, 1, 1], [], []>} : vector<2x64xbf16>, vector<64x256xbf16>, vector<2x256xf32> -> vector<2x256xf32>
    %1114 = vector.extract_strided_slice %1113 {offsets = [0, 128], sizes = [2, 128], strides = [1, 1]} : vector<2x256xf32> to vector<2x128xf32>
    %1115 = vector.broadcast %53 : vector<1x128xf32> to vector<2x128xf32>
    %1116 = arith.addf %1114, %1115 : vector<2x128xf32>
    %1117 = arith.negf %1116 : vector<2x128xf32>
    %1118 = math.exp %1117 : vector<2x128xf32>
    %cst_125 = arith.constant 1.000000e+00 : f32
    %1119 = vector.broadcast %cst_125 : f32 to vector<2x128xf32>
    %1120 = arith.addf %1119, %1118 : vector<2x128xf32>
    %1121 = arith.divf %1119, %1120 : vector<2x128xf32>
    %1122 = vector.extract_strided_slice %1121 {offsets = [0, 0], sizes = [2, 32], strides = [1, 1]} : vector<2x128xf32> to vector<2x32xf32>
    %1123 = vector.extract_strided_slice %1121 {offsets = [0, 32], sizes = [2, 32], strides = [1, 1]} : vector<2x128xf32> to vector<2x32xf32>
    %1124 = vector.extract_strided_slice %1121 {offsets = [0, 96], sizes = [2, 32], strides = [1, 1]} : vector<2x128xf32> to vector<2x32xf32>
    %1125 = vector.extract_strided_slice %1116 {offsets = [0, 64], sizes = [2, 32], strides = [1, 1]} : vector<2x128xf32> to vector<2x32xf32>
    %1126 = math.tanh %1125 : vector<2x32xf32>
    %1127 = arith.mulf %1123, %1086 : vector<2x32xf32>
    %1128 = arith.mulf %1122, %1126 : vector<2x32xf32>
    %1129 = arith.addf %1127, %1128 : vector<2x32xf32>
    %1130 = math.tanh %1129 : vector<2x32xf32>
    %1131 = arith.mulf %1124, %1130 : vector<2x32xf32>
    %1132 = vector.extract_strided_slice %1113 {offsets = [0, 0], sizes = [2, 128], strides = [1, 1]} : vector<2x256xf32> to vector<2x128xf32>
    %1133 = vector.extract_strided_slice %50 {offsets = [25, 0], sizes = [1, 128], strides = [1, 1]} : vector<64x128xf32> to vector<1x128xf32>
    %1134 = vector.extract_strided_slice %50 {offsets = [57, 0], sizes = [1, 128], strides = [1, 1]} : vector<64x128xf32> to vector<1x128xf32>
    %1135 = tpu.concatenate %1133, %1134 in 0 : vector<1x128xf32>, vector<1x128xf32> -> vector<2x128xf32>
    %1136 = arith.addf %1135, %1132 : vector<2x128xf32>
    %1137 = vector.broadcast %52 : vector<1x128xf32> to vector<2x128xf32>
    %1138 = arith.addf %1136, %1137 : vector<2x128xf32>
    %1139 = arith.negf %1138 : vector<2x128xf32>
    %1140 = math.exp %1139 : vector<2x128xf32>
    %cst_126 = arith.constant 1.000000e+00 : f32
    %1141 = vector.broadcast %cst_126 : f32 to vector<2x128xf32>
    %1142 = arith.addf %1141, %1140 : vector<2x128xf32>
    %1143 = arith.divf %1141, %1142 : vector<2x128xf32>
    %1144 = vector.extract_strided_slice %1143 {offsets = [0, 0], sizes = [2, 32], strides = [1, 1]} : vector<2x128xf32> to vector<2x32xf32>
    %1145 = vector.extract_strided_slice %1143 {offsets = [0, 32], sizes = [2, 32], strides = [1, 1]} : vector<2x128xf32> to vector<2x32xf32>
    %1146 = vector.extract_strided_slice %1143 {offsets = [0, 96], sizes = [2, 32], strides = [1, 1]} : vector<2x128xf32> to vector<2x32xf32>
    %1147 = vector.extract_strided_slice %1138 {offsets = [0, 64], sizes = [2, 32], strides = [1, 1]} : vector<2x128xf32> to vector<2x32xf32>
    %1148 = math.tanh %1147 : vector<2x32xf32>
    %1149 = arith.mulf %1145, %1108 : vector<2x32xf32>
    %1150 = arith.mulf %1144, %1148 : vector<2x32xf32>
    %1151 = arith.addf %1149, %1150 : vector<2x32xf32>
    %1152 = math.tanh %1151 : vector<2x32xf32>
    %1153 = arith.mulf %1146, %1152 : vector<2x32xf32>
    %1154 = tpu.concatenate %1153, %1131 in 1 : vector<2x32xf32>, vector<2x32xf32> -> vector<2x64xf32>
    %1155 = arith.truncf %1154 : vector<2x64xf32> to vector<2x64xbf16>
    %cst_127 = arith.constant dense<0.000000e+00> : vector<2x256xf32>
    %1156 = tpu.matmul %1155, %51, %cst_127 {dimension_numbers = #tpu.dot_dimension_numbers<[1], [0], [0], [1], [0, 0, 1, 1], [], []>} : vector<2x64xbf16>, vector<64x256xbf16>, vector<2x256xf32> -> vector<2x256xf32>
    %1157 = vector.extract_strided_slice %1156 {offsets = [0, 128], sizes = [2, 128], strides = [1, 1]} : vector<2x256xf32> to vector<2x128xf32>
    %1158 = vector.broadcast %53 : vector<1x128xf32> to vector<2x128xf32>
    %1159 = arith.addf %1157, %1158 : vector<2x128xf32>
    %1160 = arith.negf %1159 : vector<2x128xf32>
    %1161 = math.exp %1160 : vector<2x128xf32>
    %cst_128 = arith.constant 1.000000e+00 : f32
    %1162 = vector.broadcast %cst_128 : f32 to vector<2x128xf32>
    %1163 = arith.addf %1162, %1161 : vector<2x128xf32>
    %1164 = arith.divf %1162, %1163 : vector<2x128xf32>
    %1165 = vector.extract_strided_slice %1164 {offsets = [0, 0], sizes = [2, 32], strides = [1, 1]} : vector<2x128xf32> to vector<2x32xf32>
    %1166 = vector.extract_strided_slice %1164 {offsets = [0, 32], sizes = [2, 32], strides = [1, 1]} : vector<2x128xf32> to vector<2x32xf32>
    %1167 = vector.extract_strided_slice %1164 {offsets = [0, 96], sizes = [2, 32], strides = [1, 1]} : vector<2x128xf32> to vector<2x32xf32>
    %1168 = vector.extract_strided_slice %1159 {offsets = [0, 64], sizes = [2, 32], strides = [1, 1]} : vector<2x128xf32> to vector<2x32xf32>
    %1169 = math.tanh %1168 : vector<2x32xf32>
    %1170 = arith.mulf %1166, %1129 : vector<2x32xf32>
    %1171 = arith.mulf %1165, %1169 : vector<2x32xf32>
    %1172 = arith.addf %1170, %1171 : vector<2x32xf32>
    %1173 = math.tanh %1172 : vector<2x32xf32>
    %1174 = arith.mulf %1167, %1173 : vector<2x32xf32>
    %1175 = vector.extract_strided_slice %1156 {offsets = [0, 0], sizes = [2, 128], strides = [1, 1]} : vector<2x256xf32> to vector<2x128xf32>
    %1176 = vector.extract_strided_slice %50 {offsets = [26, 0], sizes = [1, 128], strides = [1, 1]} : vector<64x128xf32> to vector<1x128xf32>
    %1177 = vector.extract_strided_slice %50 {offsets = [58, 0], sizes = [1, 128], strides = [1, 1]} : vector<64x128xf32> to vector<1x128xf32>
    %1178 = tpu.concatenate %1176, %1177 in 0 : vector<1x128xf32>, vector<1x128xf32> -> vector<2x128xf32>
    %1179 = arith.addf %1178, %1175 : vector<2x128xf32>
    %1180 = vector.broadcast %52 : vector<1x128xf32> to vector<2x128xf32>
    %1181 = arith.addf %1179, %1180 : vector<2x128xf32>
    %1182 = arith.negf %1181 : vector<2x128xf32>
    %1183 = math.exp %1182 : vector<2x128xf32>
    %cst_129 = arith.constant 1.000000e+00 : f32
    %1184 = vector.broadcast %cst_129 : f32 to vector<2x128xf32>
    %1185 = arith.addf %1184, %1183 : vector<2x128xf32>
    %1186 = arith.divf %1184, %1185 : vector<2x128xf32>
    %1187 = vector.extract_strided_slice %1186 {offsets = [0, 0], sizes = [2, 32], strides = [1, 1]} : vector<2x128xf32> to vector<2x32xf32>
    %1188 = vector.extract_strided_slice %1186 {offsets = [0, 32], sizes = [2, 32], strides = [1, 1]} : vector<2x128xf32> to vector<2x32xf32>
    %1189 = vector.extract_strided_slice %1186 {offsets = [0, 96], sizes = [2, 32], strides = [1, 1]} : vector<2x128xf32> to vector<2x32xf32>
    %1190 = vector.extract_strided_slice %1181 {offsets = [0, 64], sizes = [2, 32], strides = [1, 1]} : vector<2x128xf32> to vector<2x32xf32>
    %1191 = math.tanh %1190 : vector<2x32xf32>
    %1192 = arith.mulf %1188, %1151 : vector<2x32xf32>
    %1193 = arith.mulf %1187, %1191 : vector<2x32xf32>
    %1194 = arith.addf %1192, %1193 : vector<2x32xf32>
    %1195 = math.tanh %1194 : vector<2x32xf32>
    %1196 = arith.mulf %1189, %1195 : vector<2x32xf32>
    %1197 = tpu.concatenate %1196, %1174 in 1 : vector<2x32xf32>, vector<2x32xf32> -> vector<2x64xf32>
    %1198 = arith.truncf %1197 : vector<2x64xf32> to vector<2x64xbf16>
    %cst_130 = arith.constant dense<0.000000e+00> : vector<2x256xf32>
    %1199 = tpu.matmul %1198, %51, %cst_130 {dimension_numbers = #tpu.dot_dimension_numbers<[1], [0], [0], [1], [0, 0, 1, 1], [], []>} : vector<2x64xbf16>, vector<64x256xbf16>, vector<2x256xf32> -> vector<2x256xf32>
    %1200 = vector.extract_strided_slice %1199 {offsets = [0, 128], sizes = [2, 128], strides = [1, 1]} : vector<2x256xf32> to vector<2x128xf32>
    %1201 = vector.broadcast %53 : vector<1x128xf32> to vector<2x128xf32>
    %1202 = arith.addf %1200, %1201 : vector<2x128xf32>
    %1203 = arith.negf %1202 : vector<2x128xf32>
    %1204 = math.exp %1203 : vector<2x128xf32>
    %cst_131 = arith.constant 1.000000e+00 : f32
    %1205 = vector.broadcast %cst_131 : f32 to vector<2x128xf32>
    %1206 = arith.addf %1205, %1204 : vector<2x128xf32>
    %1207 = arith.divf %1205, %1206 : vector<2x128xf32>
    %1208 = vector.extract_strided_slice %1207 {offsets = [0, 0], sizes = [2, 32], strides = [1, 1]} : vector<2x128xf32> to vector<2x32xf32>
    %1209 = vector.extract_strided_slice %1207 {offsets = [0, 32], sizes = [2, 32], strides = [1, 1]} : vector<2x128xf32> to vector<2x32xf32>
    %1210 = vector.extract_strided_slice %1207 {offsets = [0, 96], sizes = [2, 32], strides = [1, 1]} : vector<2x128xf32> to vector<2x32xf32>
    %1211 = vector.extract_strided_slice %1202 {offsets = [0, 64], sizes = [2, 32], strides = [1, 1]} : vector<2x128xf32> to vector<2x32xf32>
    %1212 = math.tanh %1211 : vector<2x32xf32>
    %1213 = arith.mulf %1209, %1172 : vector<2x32xf32>
    %1214 = arith.mulf %1208, %1212 : vector<2x32xf32>
    %1215 = arith.addf %1213, %1214 : vector<2x32xf32>
    %1216 = math.tanh %1215 : vector<2x32xf32>
    %1217 = arith.mulf %1210, %1216 : vector<2x32xf32>
    %1218 = vector.extract_strided_slice %1199 {offsets = [0, 0], sizes = [2, 128], strides = [1, 1]} : vector<2x256xf32> to vector<2x128xf32>
    %1219 = vector.extract_strided_slice %50 {offsets = [27, 0], sizes = [1, 128], strides = [1, 1]} : vector<64x128xf32> to vector<1x128xf32>
    %1220 = vector.extract_strided_slice %50 {offsets = [59, 0], sizes = [1, 128], strides = [1, 1]} : vector<64x128xf32> to vector<1x128xf32>
    %1221 = tpu.concatenate %1219, %1220 in 0 : vector<1x128xf32>, vector<1x128xf32> -> vector<2x128xf32>
    %1222 = arith.addf %1221, %1218 : vector<2x128xf32>
    %1223 = vector.broadcast %52 : vector<1x128xf32> to vector<2x128xf32>
    %1224 = arith.addf %1222, %1223 : vector<2x128xf32>
    %1225 = arith.negf %1224 : vector<2x128xf32>
    %1226 = math.exp %1225 : vector<2x128xf32>
    %cst_132 = arith.constant 1.000000e+00 : f32
    %1227 = vector.broadcast %cst_132 : f32 to vector<2x128xf32>
    %1228 = arith.addf %1227, %1226 : vector<2x128xf32>
    %1229 = arith.divf %1227, %1228 : vector<2x128xf32>
    %1230 = vector.extract_strided_slice %1229 {offsets = [0, 0], sizes = [2, 32], strides = [1, 1]} : vector<2x128xf32> to vector<2x32xf32>
    %1231 = vector.extract_strided_slice %1229 {offsets = [0, 32], sizes = [2, 32], strides = [1, 1]} : vector<2x128xf32> to vector<2x32xf32>
    %1232 = vector.extract_strided_slice %1229 {offsets = [0, 96], sizes = [2, 32], strides = [1, 1]} : vector<2x128xf32> to vector<2x32xf32>
    %1233 = vector.extract_strided_slice %1224 {offsets = [0, 64], sizes = [2, 32], strides = [1, 1]} : vector<2x128xf32> to vector<2x32xf32>
    %1234 = math.tanh %1233 : vector<2x32xf32>
    %1235 = arith.mulf %1231, %1194 : vector<2x32xf32>
    %1236 = arith.mulf %1230, %1234 : vector<2x32xf32>
    %1237 = arith.addf %1235, %1236 : vector<2x32xf32>
    %1238 = math.tanh %1237 : vector<2x32xf32>
    %1239 = arith.mulf %1232, %1238 : vector<2x32xf32>
    %1240 = tpu.concatenate %1239, %1217 in 1 : vector<2x32xf32>, vector<2x32xf32> -> vector<2x64xf32>
    %1241 = arith.truncf %1240 : vector<2x64xf32> to vector<2x64xbf16>
    %cst_133 = arith.constant dense<0.000000e+00> : vector<2x256xf32>
    %1242 = tpu.matmul %1241, %51, %cst_133 {dimension_numbers = #tpu.dot_dimension_numbers<[1], [0], [0], [1], [0, 0, 1, 1], [], []>} : vector<2x64xbf16>, vector<64x256xbf16>, vector<2x256xf32> -> vector<2x256xf32>
    %1243 = vector.extract_strided_slice %1242 {offsets = [0, 128], sizes = [2, 128], strides = [1, 1]} : vector<2x256xf32> to vector<2x128xf32>
    %1244 = vector.broadcast %53 : vector<1x128xf32> to vector<2x128xf32>
    %1245 = arith.addf %1243, %1244 : vector<2x128xf32>
    %1246 = arith.negf %1245 : vector<2x128xf32>
    %1247 = math.exp %1246 : vector<2x128xf32>
    %cst_134 = arith.constant 1.000000e+00 : f32
    %1248 = vector.broadcast %cst_134 : f32 to vector<2x128xf32>
    %1249 = arith.addf %1248, %1247 : vector<2x128xf32>
    %1250 = arith.divf %1248, %1249 : vector<2x128xf32>
    %1251 = vector.extract_strided_slice %1250 {offsets = [0, 0], sizes = [2, 32], strides = [1, 1]} : vector<2x128xf32> to vector<2x32xf32>
    %1252 = vector.extract_strided_slice %1250 {offsets = [0, 32], sizes = [2, 32], strides = [1, 1]} : vector<2x128xf32> to vector<2x32xf32>
    %1253 = vector.extract_strided_slice %1250 {offsets = [0, 96], sizes = [2, 32], strides = [1, 1]} : vector<2x128xf32> to vector<2x32xf32>
    %1254 = vector.extract_strided_slice %1245 {offsets = [0, 64], sizes = [2, 32], strides = [1, 1]} : vector<2x128xf32> to vector<2x32xf32>
    %1255 = math.tanh %1254 : vector<2x32xf32>
    %1256 = arith.mulf %1252, %1215 : vector<2x32xf32>
    %1257 = arith.mulf %1251, %1255 : vector<2x32xf32>
    %1258 = arith.addf %1256, %1257 : vector<2x32xf32>
    %1259 = math.tanh %1258 : vector<2x32xf32>
    %1260 = arith.mulf %1253, %1259 : vector<2x32xf32>
    %1261 = vector.extract_strided_slice %1242 {offsets = [0, 0], sizes = [2, 128], strides = [1, 1]} : vector<2x256xf32> to vector<2x128xf32>
    %1262 = vector.extract_strided_slice %50 {offsets = [28, 0], sizes = [1, 128], strides = [1, 1]} : vector<64x128xf32> to vector<1x128xf32>
    %1263 = vector.extract_strided_slice %50 {offsets = [60, 0], sizes = [1, 128], strides = [1, 1]} : vector<64x128xf32> to vector<1x128xf32>
    %1264 = tpu.concatenate %1262, %1263 in 0 : vector<1x128xf32>, vector<1x128xf32> -> vector<2x128xf32>
    %1265 = arith.addf %1264, %1261 : vector<2x128xf32>
    %1266 = vector.broadcast %52 : vector<1x128xf32> to vector<2x128xf32>
    %1267 = arith.addf %1265, %1266 : vector<2x128xf32>
    %1268 = arith.negf %1267 : vector<2x128xf32>
    %1269 = math.exp %1268 : vector<2x128xf32>
    %cst_135 = arith.constant 1.000000e+00 : f32
    %1270 = vector.broadcast %cst_135 : f32 to vector<2x128xf32>
    %1271 = arith.addf %1270, %1269 : vector<2x128xf32>
    %1272 = arith.divf %1270, %1271 : vector<2x128xf32>
    %1273 = vector.extract_strided_slice %1272 {offsets = [0, 0], sizes = [2, 32], strides = [1, 1]} : vector<2x128xf32> to vector<2x32xf32>
    %1274 = vector.extract_strided_slice %1272 {offsets = [0, 32], sizes = [2, 32], strides = [1, 1]} : vector<2x128xf32> to vector<2x32xf32>
    %1275 = vector.extract_strided_slice %1272 {offsets = [0, 96], sizes = [2, 32], strides = [1, 1]} : vector<2x128xf32> to vector<2x32xf32>
    %1276 = vector.extract_strided_slice %1267 {offsets = [0, 64], sizes = [2, 32], strides = [1, 1]} : vector<2x128xf32> to vector<2x32xf32>
    %1277 = math.tanh %1276 : vector<2x32xf32>
    %1278 = arith.mulf %1274, %1237 : vector<2x32xf32>
    %1279 = arith.mulf %1273, %1277 : vector<2x32xf32>
    %1280 = arith.addf %1278, %1279 : vector<2x32xf32>
    %1281 = math.tanh %1280 : vector<2x32xf32>
    %1282 = arith.mulf %1275, %1281 : vector<2x32xf32>
    %1283 = tpu.concatenate %1282, %1260 in 1 : vector<2x32xf32>, vector<2x32xf32> -> vector<2x64xf32>
    %1284 = arith.truncf %1283 : vector<2x64xf32> to vector<2x64xbf16>
    %cst_136 = arith.constant dense<0.000000e+00> : vector<2x256xf32>
    %1285 = tpu.matmul %1284, %51, %cst_136 {dimension_numbers = #tpu.dot_dimension_numbers<[1], [0], [0], [1], [0, 0, 1, 1], [], []>} : vector<2x64xbf16>, vector<64x256xbf16>, vector<2x256xf32> -> vector<2x256xf32>
    %1286 = vector.extract_strided_slice %1285 {offsets = [0, 128], sizes = [2, 128], strides = [1, 1]} : vector<2x256xf32> to vector<2x128xf32>
    %1287 = vector.broadcast %53 : vector<1x128xf32> to vector<2x128xf32>
    %1288 = arith.addf %1286, %1287 : vector<2x128xf32>
    %1289 = arith.negf %1288 : vector<2x128xf32>
    %1290 = math.exp %1289 : vector<2x128xf32>
    %cst_137 = arith.constant 1.000000e+00 : f32
    %1291 = vector.broadcast %cst_137 : f32 to vector<2x128xf32>
    %1292 = arith.addf %1291, %1290 : vector<2x128xf32>
    %1293 = arith.divf %1291, %1292 : vector<2x128xf32>
    %1294 = vector.extract_strided_slice %1293 {offsets = [0, 0], sizes = [2, 32], strides = [1, 1]} : vector<2x128xf32> to vector<2x32xf32>
    %1295 = vector.extract_strided_slice %1293 {offsets = [0, 32], sizes = [2, 32], strides = [1, 1]} : vector<2x128xf32> to vector<2x32xf32>
    %1296 = vector.extract_strided_slice %1293 {offsets = [0, 96], sizes = [2, 32], strides = [1, 1]} : vector<2x128xf32> to vector<2x32xf32>
    %1297 = vector.extract_strided_slice %1288 {offsets = [0, 64], sizes = [2, 32], strides = [1, 1]} : vector<2x128xf32> to vector<2x32xf32>
    %1298 = math.tanh %1297 : vector<2x32xf32>
    %1299 = arith.mulf %1295, %1258 : vector<2x32xf32>
    %1300 = arith.mulf %1294, %1298 : vector<2x32xf32>
    %1301 = arith.addf %1299, %1300 : vector<2x32xf32>
    %1302 = math.tanh %1301 : vector<2x32xf32>
    %1303 = arith.mulf %1296, %1302 : vector<2x32xf32>
    %1304 = vector.extract_strided_slice %1285 {offsets = [0, 0], sizes = [2, 128], strides = [1, 1]} : vector<2x256xf32> to vector<2x128xf32>
    %1305 = vector.extract_strided_slice %50 {offsets = [29, 0], sizes = [1, 128], strides = [1, 1]} : vector<64x128xf32> to vector<1x128xf32>
    %1306 = vector.extract_strided_slice %50 {offsets = [61, 0], sizes = [1, 128], strides = [1, 1]} : vector<64x128xf32> to vector<1x128xf32>
    %1307 = tpu.concatenate %1305, %1306 in 0 : vector<1x128xf32>, vector<1x128xf32> -> vector<2x128xf32>
    %1308 = arith.addf %1307, %1304 : vector<2x128xf32>
    %1309 = vector.broadcast %52 : vector<1x128xf32> to vector<2x128xf32>
    %1310 = arith.addf %1308, %1309 : vector<2x128xf32>
    %1311 = arith.negf %1310 : vector<2x128xf32>
    %1312 = math.exp %1311 : vector<2x128xf32>
    %cst_138 = arith.constant 1.000000e+00 : f32
    %1313 = vector.broadcast %cst_138 : f32 to vector<2x128xf32>
    %1314 = arith.addf %1313, %1312 : vector<2x128xf32>
    %1315 = arith.divf %1313, %1314 : vector<2x128xf32>
    %1316 = vector.extract_strided_slice %1315 {offsets = [0, 0], sizes = [2, 32], strides = [1, 1]} : vector<2x128xf32> to vector<2x32xf32>
    %1317 = vector.extract_strided_slice %1315 {offsets = [0, 32], sizes = [2, 32], strides = [1, 1]} : vector<2x128xf32> to vector<2x32xf32>
    %1318 = vector.extract_strided_slice %1315 {offsets = [0, 96], sizes = [2, 32], strides = [1, 1]} : vector<2x128xf32> to vector<2x32xf32>
    %1319 = vector.extract_strided_slice %1310 {offsets = [0, 64], sizes = [2, 32], strides = [1, 1]} : vector<2x128xf32> to vector<2x32xf32>
    %1320 = math.tanh %1319 : vector<2x32xf32>
    %1321 = arith.mulf %1317, %1280 : vector<2x32xf32>
    %1322 = arith.mulf %1316, %1320 : vector<2x32xf32>
    %1323 = arith.addf %1321, %1322 : vector<2x32xf32>
    %1324 = math.tanh %1323 : vector<2x32xf32>
    %1325 = arith.mulf %1318, %1324 : vector<2x32xf32>
    %1326 = tpu.concatenate %1325, %1303 in 1 : vector<2x32xf32>, vector<2x32xf32> -> vector<2x64xf32>
    %1327 = arith.truncf %1326 : vector<2x64xf32> to vector<2x64xbf16>
    %cst_139 = arith.constant dense<0.000000e+00> : vector<2x256xf32>
    %1328 = tpu.matmul %1327, %51, %cst_139 {dimension_numbers = #tpu.dot_dimension_numbers<[1], [0], [0], [1], [0, 0, 1, 1], [], []>} : vector<2x64xbf16>, vector<64x256xbf16>, vector<2x256xf32> -> vector<2x256xf32>
    %1329 = vector.extract_strided_slice %1328 {offsets = [0, 128], sizes = [2, 128], strides = [1, 1]} : vector<2x256xf32> to vector<2x128xf32>
    %1330 = vector.broadcast %53 : vector<1x128xf32> to vector<2x128xf32>
    %1331 = arith.addf %1329, %1330 : vector<2x128xf32>
    %1332 = arith.negf %1331 : vector<2x128xf32>
    %1333 = math.exp %1332 : vector<2x128xf32>
    %cst_140 = arith.constant 1.000000e+00 : f32
    %1334 = vector.broadcast %cst_140 : f32 to vector<2x128xf32>
    %1335 = arith.addf %1334, %1333 : vector<2x128xf32>
    %1336 = arith.divf %1334, %1335 : vector<2x128xf32>
    %1337 = vector.extract_strided_slice %1336 {offsets = [0, 0], sizes = [2, 32], strides = [1, 1]} : vector<2x128xf32> to vector<2x32xf32>
    %1338 = vector.extract_strided_slice %1336 {offsets = [0, 32], sizes = [2, 32], strides = [1, 1]} : vector<2x128xf32> to vector<2x32xf32>
    %1339 = vector.extract_strided_slice %1336 {offsets = [0, 96], sizes = [2, 32], strides = [1, 1]} : vector<2x128xf32> to vector<2x32xf32>
    %1340 = vector.extract_strided_slice %1331 {offsets = [0, 64], sizes = [2, 32], strides = [1, 1]} : vector<2x128xf32> to vector<2x32xf32>
    %1341 = math.tanh %1340 : vector<2x32xf32>
    %1342 = arith.mulf %1338, %1301 : vector<2x32xf32>
    %1343 = arith.mulf %1337, %1341 : vector<2x32xf32>
    %1344 = arith.addf %1342, %1343 : vector<2x32xf32>
    %1345 = math.tanh %1344 : vector<2x32xf32>
    %1346 = arith.mulf %1339, %1345 : vector<2x32xf32>
    %1347 = vector.extract_strided_slice %1328 {offsets = [0, 0], sizes = [2, 128], strides = [1, 1]} : vector<2x256xf32> to vector<2x128xf32>
    %1348 = vector.extract_strided_slice %50 {offsets = [30, 0], sizes = [1, 128], strides = [1, 1]} : vector<64x128xf32> to vector<1x128xf32>
    %1349 = vector.extract_strided_slice %50 {offsets = [62, 0], sizes = [1, 128], strides = [1, 1]} : vector<64x128xf32> to vector<1x128xf32>
    %1350 = tpu.concatenate %1348, %1349 in 0 : vector<1x128xf32>, vector<1x128xf32> -> vector<2x128xf32>
    %1351 = arith.addf %1350, %1347 : vector<2x128xf32>
    %1352 = vector.broadcast %52 : vector<1x128xf32> to vector<2x128xf32>
    %1353 = arith.addf %1351, %1352 : vector<2x128xf32>
    %1354 = arith.negf %1353 : vector<2x128xf32>
    %1355 = math.exp %1354 : vector<2x128xf32>
    %cst_141 = arith.constant 1.000000e+00 : f32
    %1356 = vector.broadcast %cst_141 : f32 to vector<2x128xf32>
    %1357 = arith.addf %1356, %1355 : vector<2x128xf32>
    %1358 = arith.divf %1356, %1357 : vector<2x128xf32>
    %1359 = vector.extract_strided_slice %1358 {offsets = [0, 0], sizes = [2, 32], strides = [1, 1]} : vector<2x128xf32> to vector<2x32xf32>
    %1360 = vector.extract_strided_slice %1358 {offsets = [0, 32], sizes = [2, 32], strides = [1, 1]} : vector<2x128xf32> to vector<2x32xf32>
    %1361 = vector.extract_strided_slice %1358 {offsets = [0, 96], sizes = [2, 32], strides = [1, 1]} : vector<2x128xf32> to vector<2x32xf32>
    %1362 = vector.extract_strided_slice %1353 {offsets = [0, 64], sizes = [2, 32], strides = [1, 1]} : vector<2x128xf32> to vector<2x32xf32>
    %1363 = math.tanh %1362 : vector<2x32xf32>
    %1364 = arith.mulf %1360, %1323 : vector<2x32xf32>
    %1365 = arith.mulf %1359, %1363 : vector<2x32xf32>
    %1366 = arith.addf %1364, %1365 : vector<2x32xf32>
    %1367 = math.tanh %1366 : vector<2x32xf32>
    %1368 = arith.mulf %1361, %1367 : vector<2x32xf32>
    %1369 = tpu.concatenate %1368, %1346 in 1 : vector<2x32xf32>, vector<2x32xf32> -> vector<2x64xf32>
    %1370 = arith.truncf %1369 : vector<2x64xf32> to vector<2x64xbf16>
    %cst_142 = arith.constant dense<0.000000e+00> : vector<2x256xf32>
    %1371 = tpu.matmul %1370, %51, %cst_142 {dimension_numbers = #tpu.dot_dimension_numbers<[1], [0], [0], [1], [0, 0, 1, 1], [], []>} : vector<2x64xbf16>, vector<64x256xbf16>, vector<2x256xf32> -> vector<2x256xf32>
    %1372 = vector.extract_strided_slice %1371 {offsets = [0, 128], sizes = [2, 128], strides = [1, 1]} : vector<2x256xf32> to vector<2x128xf32>
    %1373 = vector.broadcast %53 : vector<1x128xf32> to vector<2x128xf32>
    %1374 = arith.addf %1372, %1373 : vector<2x128xf32>
    %1375 = arith.negf %1374 : vector<2x128xf32>
    %1376 = math.exp %1375 : vector<2x128xf32>
    %cst_143 = arith.constant 1.000000e+00 : f32
    %1377 = vector.broadcast %cst_143 : f32 to vector<2x128xf32>
    %1378 = arith.addf %1377, %1376 : vector<2x128xf32>
    %1379 = arith.divf %1377, %1378 : vector<2x128xf32>
    %1380 = vector.extract_strided_slice %1379 {offsets = [0, 0], sizes = [2, 32], strides = [1, 1]} : vector<2x128xf32> to vector<2x32xf32>
    %1381 = vector.extract_strided_slice %1379 {offsets = [0, 32], sizes = [2, 32], strides = [1, 1]} : vector<2x128xf32> to vector<2x32xf32>
    %1382 = vector.extract_strided_slice %1379 {offsets = [0, 96], sizes = [2, 32], strides = [1, 1]} : vector<2x128xf32> to vector<2x32xf32>
    %1383 = vector.extract_strided_slice %1374 {offsets = [0, 64], sizes = [2, 32], strides = [1, 1]} : vector<2x128xf32> to vector<2x32xf32>
    %1384 = math.tanh %1383 : vector<2x32xf32>
    %1385 = arith.mulf %1381, %1344 : vector<2x32xf32>
    %1386 = arith.mulf %1380, %1384 : vector<2x32xf32>
    %1387 = arith.addf %1385, %1386 : vector<2x32xf32>
    %1388 = math.tanh %1387 : vector<2x32xf32>
    %1389 = arith.mulf %1382, %1388 : vector<2x32xf32>
    %1390 = vector.extract_strided_slice %1371 {offsets = [0, 0], sizes = [2, 128], strides = [1, 1]} : vector<2x256xf32> to vector<2x128xf32>
    %1391 = vector.extract_strided_slice %50 {offsets = [31, 0], sizes = [1, 128], strides = [1, 1]} : vector<64x128xf32> to vector<1x128xf32>
    %1392 = vector.extract_strided_slice %50 {offsets = [63, 0], sizes = [1, 128], strides = [1, 1]} : vector<64x128xf32> to vector<1x128xf32>
    %1393 = tpu.concatenate %1391, %1392 in 0 : vector<1x128xf32>, vector<1x128xf32> -> vector<2x128xf32>
    %1394 = arith.addf %1393, %1390 : vector<2x128xf32>
    %1395 = vector.broadcast %52 : vector<1x128xf32> to vector<2x128xf32>
    %1396 = arith.addf %1394, %1395 : vector<2x128xf32>
    %1397 = arith.negf %1396 : vector<2x128xf32>
    %1398 = math.exp %1397 : vector<2x128xf32>
    %cst_144 = arith.constant 1.000000e+00 : f32
    %1399 = vector.broadcast %cst_144 : f32 to vector<2x128xf32>
    %1400 = arith.addf %1399, %1398 : vector<2x128xf32>
    %1401 = arith.divf %1399, %1400 : vector<2x128xf32>
    %1402 = vector.extract_strided_slice %1401 {offsets = [0, 0], sizes = [2, 32], strides = [1, 1]} : vector<2x128xf32> to vector<2x32xf32>
    %1403 = vector.extract_strided_slice %1401 {offsets = [0, 32], sizes = [2, 32], strides = [1, 1]} : vector<2x128xf32> to vector<2x32xf32>
    %1404 = vector.extract_strided_slice %1401 {offsets = [0, 96], sizes = [2, 32], strides = [1, 1]} : vector<2x128xf32> to vector<2x32xf32>
    %1405 = vector.extract_strided_slice %1396 {offsets = [0, 64], sizes = [2, 32], strides = [1, 1]} : vector<2x128xf32> to vector<2x32xf32>
    %1406 = math.tanh %1405 : vector<2x32xf32>
    %1407 = arith.mulf %1403, %1366 : vector<2x32xf32>
    %1408 = arith.mulf %1402, %1406 : vector<2x32xf32>
    %1409 = arith.addf %1407, %1408 : vector<2x32xf32>
    %1410 = math.tanh %1409 : vector<2x32xf32>
    %1411 = arith.mulf %1404, %1410 : vector<2x32xf32>
    %1412 = tpu.concatenate %1411, %1389 in 1 : vector<2x32xf32>, vector<2x32xf32> -> vector<2x64xf32>
    %1413 = arith.truncf %1412 : vector<2x64xf32> to vector<2x64xbf16>
    %cst_145 = arith.constant dense<0.000000e+00> : vector<2x256xf32>
    %1414 = tpu.matmul %1413, %51, %cst_145 {dimension_numbers = #tpu.dot_dimension_numbers<[1], [0], [0], [1], [0, 0, 1, 1], [], []>} : vector<2x64xbf16>, vector<64x256xbf16>, vector<2x256xf32> -> vector<2x256xf32>
    %1415 = vector.extract_strided_slice %1414 {offsets = [0, 128], sizes = [2, 128], strides = [1, 1]} : vector<2x256xf32> to vector<2x128xf32>
    %1416 = vector.broadcast %53 : vector<1x128xf32> to vector<2x128xf32>
    %1417 = arith.addf %1415, %1416 : vector<2x128xf32>
    %1418 = arith.negf %1417 : vector<2x128xf32>
    %1419 = math.exp %1418 : vector<2x128xf32>
    %cst_146 = arith.constant 1.000000e+00 : f32
    %1420 = vector.broadcast %cst_146 : f32 to vector<2x128xf32>
    %1421 = arith.addf %1420, %1419 : vector<2x128xf32>
    %1422 = arith.divf %1420, %1421 : vector<2x128xf32>
    %1423 = vector.extract_strided_slice %1422 {offsets = [0, 0], sizes = [2, 32], strides = [1, 1]} : vector<2x128xf32> to vector<2x32xf32>
    %1424 = vector.extract_strided_slice %1422 {offsets = [0, 32], sizes = [2, 32], strides = [1, 1]} : vector<2x128xf32> to vector<2x32xf32>
    %1425 = vector.extract_strided_slice %1422 {offsets = [0, 96], sizes = [2, 32], strides = [1, 1]} : vector<2x128xf32> to vector<2x32xf32>
    %1426 = vector.extract_strided_slice %1417 {offsets = [0, 64], sizes = [2, 32], strides = [1, 1]} : vector<2x128xf32> to vector<2x32xf32>
    %1427 = math.tanh %1426 : vector<2x32xf32>
    %1428 = arith.mulf %1424, %1387 : vector<2x32xf32>
    %1429 = arith.mulf %1423, %1427 : vector<2x32xf32>
    %1430 = arith.addf %1428, %1429 : vector<2x32xf32>
    %1431 = math.tanh %1430 : vector<2x32xf32>
    %1432 = arith.mulf %1425, %1431 : vector<2x32xf32>
    %c0_147 = arith.constant 0 : index
    %c0_148 = arith.constant 0 : index
    %1433 = vector.load %arg7[%c0_147, %c0_148] : memref<32x30xf32, #tpu.memory_space<vmem>>, vector<32x30xf32>
    %cst_149 = arith.constant dense<0.000000e+00> : vector<2x30xf32>
    %1434 = tpu.matmul %1432, %1433, %cst_149 {dimension_numbers = #tpu.dot_dimension_numbers<[1], [0], [0], [1], [0, 0, 1, 1], [], []>} : vector<2x32xf32>, vector<32x30xf32>, vector<2x30xf32> -> vector<2x30xf32>
    %c0_150 = arith.constant 0 : index
    %c0_151 = arith.constant 0 : index
    %1435 = vector.load %arg8[%c0_150, %c0_151] : memref<1x30xf32, #tpu.memory_space<vmem>>, vector<1x30xf32>
    %1436 = vector.broadcast %1435 : vector<1x30xf32> to vector<2x30xf32>
    %1437 = arith.addf %1434, %1436 : vector<2x30xf32>
    %cst_152 = arith.constant dense<0xFF800000> : vector<2xf32>
    %1438 = vector.multi_reduction <maximumf>, %1437, %cst_152 [1] : vector<2x30xf32> to vector<2xf32>
    %1439 = vector.shape_cast %1438 : vector<2xf32> to vector<2x1xf32>
    %1440 = vector.broadcast %1439 : vector<2x1xf32> to vector<2x30xf32>
    %1441 = arith.subf %1437, %1440 : vector<2x30xf32>
    %1442 = math.exp %1441 : vector<2x30xf32>
    %cst_153 = arith.constant dense<0.000000e+00> : vector<2xf32>
    %1443 = vector.multi_reduction <add>, %1442, %cst_153 [1] : vector<2x30xf32> to vector<2xf32>
    %1444 = vector.shape_cast %1443 : vector<2xf32> to vector<2x1xf32>
    %1445 = tpu.reciprocal %1444 {approx = true} : vector<2x1xf32> -> vector<2x1xf32>
    %1446 = vector.broadcast %1445 : vector<2x1xf32> to vector<2x30xf32>
    %1447 = arith.mulf %1442, %1446 : vector<2x30xf32>
    %c0_154 = arith.constant 0 : index
    %c0_155 = arith.constant 0 : index
    %1448 = vector.load %arg9[%c0_154, %c0_155] : memref<2x30xf32, #tpu.memory_space<vmem>>, vector<2x30xf32>
    tpu.vector_store %arg9[%c0_154, %c0_155], %1447 {strides = array<i32>} : memref<2x30xf32, #tpu.memory_space<vmem>>, vector<2x30xf32>,
    return
  }
}

</mosaic_0001>

<llo_original>
// kernel: forward.1
$region0: #{forward.1}
  #allocation0 [shape = 'u32[]', space=smem, size = 0x4, offset = 0x4, fixed_abs, tag = 'smem constant byte address 0x4 - core index']
  #allocation1 [shape = 'u32[144,128]{1,0:T(1,128)}', space=vmem, size = 0x12000, scoped, tag = 'internal scratch']
  #allocation2 [shape = 'f32[2,34,16]{2,1,0:T(8,128)}', space=vmem, size = 0xa000, scoped, tag = 'scratch operand']
  %s0 = inlined_call_operand.hbm [shape: f32[2,16,32], index: 0, kind: input, shape index: {}]
  %s1 = inlined_call_operand.hbm [shape: bf16[3,16,32], index: 1, kind: input, shape index: {}]
  %s2 = inlined_call_operand.vmem [shape: f32[1,32], index: 2, kind: input, shape index: {}]
  %s3 = inlined_call_operand.vmem [shape: bf16[16,128], index: 3, kind: input, shape index: {}]
  %s4 = inlined_call_operand.hbm [shape: bf16[64,256], index: 4, kind: input, shape index: {}]
  %s5 = inlined_call_operand.hbm [shape: f32[1,128], index: 5, kind: input, shape index: {}]
  %s6 = inlined_call_operand.vmem [shape: f32[1,128], index: 6, kind: input, shape index: {}]
  %s7 = inlined_call_operand.hbm [shape: f32[32,30], index: 7, kind: input, shape index: {}]
  %s8 = inlined_call_operand.vmem [shape: f32[1,30], index: 8, kind: input, shape index: {}]
  %s9 = inlined_call_operand.hbm [shape: f32[2,30], index: 9, kind: output, shape index: {}]
  %s10 = sld [smem:[#allocation0]]
  $region66: #{forward.1} parent=0
    _
  %s12 = ssub.s32 1, %s10
  %s13 = scalar_select 0, %s12, %s10
  $region1: #{forward.1} parent=0
    #allocation3 [shape = 'u8[16384]{0}', space=vmem, size = 0x4000, scoped, tag = 'input window, operand 0, single buffered']
    #allocation4 [shape = 's32[1]{0}', space=sflag, size = 0x4, scoped, tag = 'scoped memory for forward.1']
    #allocation5 [shape = 's32[1]{0}', space=sflag, size = 0x4, scoped, tag = 'scoped memory for forward.1']
    #allocation6 [shape = 'u8[12288]{0}', space=vmem, size = 0x3000, scoped, tag = 'input window, operand 1, single buffered']
    #allocation7 [shape = 's32[1]{0}', space=sflag, size = 0x4, scoped, tag = 'scoped memory for forward.1']
    #allocation8 [shape = 'u8[32768]{0}', space=vmem, size = 0x8000, scoped, tag = 'input window, operand 4, single buffered']
    #allocation9 [shape = 'u8[512]{0}', space=vmem, size = 0x400, scoped, tag = 'input window, operand 5, single buffered']
    #allocation10 [shape = 's32[1]{0}', space=sflag, size = 0x4, scoped, tag = 'scoped memory for forward.1']
    #allocation11 [shape = 'u8[16384]{0}', space=vmem, size = 0x4000, scoped, tag = 'input window, operand 7, single buffered']
    #allocation12 [shape = 'u8[1024]{0}', space=vmem, size = 0x400, scoped, tag = 'output window, operand 0, single buffered']
    %14 = vsyncpa [#allocation4], 0
    %15 = vsyncpa [#allocation7], 0
    %16 = vsyncpa [#allocation10], 0
    %17 = vsyncpa [#allocation5], 0
    // Predicated region
    $region2: #{forward.1} parent=1 // pred_check
      _
    $region3: #{forward.1} parent=1 // pred_check_branch
      %19 = sbr.rel (0) target = $region5
    $region4: #{forward.1} parent=1 // pred_region
      %s21 = ssub.s32 512, 512
      %22 = vsyncadd [#allocation4], %s21
      %s23 = sshll.u32 [#allocation3], 4
      %s24 = int_to_ptr.vmem [resolvable:$true] %s23
      %29 = dma.hbm_to_vmem [thread:$0]  %s0, 512, %s24, [#allocation4], 128, 128, 8
    $region5: #{forward.1} parent=1 // pred_fallthru
      _
    // Predicated region
    $region6: #{forward.1} parent=1 // pred_check
      _
    $region7: #{forward.1} parent=1 // pred_check_branch
      %31 = sbr.rel (0) target = $region9
    $region8: #{forward.1} parent=1 // pred_region
      %s33 = ssub.s32 384, 384
      %34 = vsyncadd [#allocation7], %s33
      %s35 = sshll.u32 [#allocation6], 4
      %s36 = int_to_ptr.vmem [resolvable:$true] %s35
      %41 = dma.hbm_to_vmem [thread:$0]  %s1, 384, %s36, [#allocation7], 64, 64, 4
    $region9: #{forward.1} parent=1 // pred_fallthru
      _
    // Predicated region
    $region10: #{forward.1} parent=1 // pred_check
      _
    $region11: #{forward.1} parent=1 // pred_check_branch
      %43 = sbr.rel (0) target = $region13
    $region12: #{forward.1} parent=1 // pred_region
      _
    $region13: #{forward.1} parent=1 // pred_fallthru
      _
    // Predicated region
    $region14: #{forward.1} parent=1 // pred_check
      _
    $region15: #{forward.1} parent=1 // pred_check_branch
      %45 = sbr.rel (0) target = $region17
    $region16: #{forward.1} parent=1 // pred_region
      _
    $region17: #{forward.1} parent=1 // pred_fallthru
      _
    // Predicated region
    $region18: #{forward.1} parent=1 // pred_check
      _
    $region19: #{forward.1} parent=1 // pred_check_branch
      %47 = sbr.rel (0) target = $region21
    $region20: #{forward.1} parent=1 // pred_region
      %s49 = ssub.s32 1024, 1024
      %50 = vsyncadd [#allocation7], %s49
      %s51 = sshll.u32 [#allocation8], 4
      %s52 = int_to_ptr.vmem [resolvable:$true] %s51
      %57 = dma.hbm_to_vmem [thread:$0]  %s4, 1024, %s52, [#allocation7], 128, 128, 8
    $region21: #{forward.1} parent=1 // pred_fallthru
      _
    // Predicated region
    $region22: #{forward.1} parent=1 // pred_check
      _
    $region23: #{forward.1} parent=1 // pred_check_branch
      %59 = sbr.rel (0) target = $region25
    $region24: #{forward.1} parent=1 // pred_region
      %s61 = ssub.s32 16, 16
      %62 = vsyncadd [#allocation10], %s61
      %s64 = sshll.u32 [#allocation9], 4
      %s65 = int_to_ptr.vmem [resolvable:$true] %s64
      %67 = dma.hbm_to_vmem [thread:$0]  %s5, 16, %s65, [#allocation10]
    $region25: #{forward.1} parent=1 // pred_fallthru
      _
    // Predicated region
    $region26: #{forward.1} parent=1 // pred_check
      _
    $region27: #{forward.1} parent=1 // pred_check_branch
      %69 = sbr.rel (0) target = $region29
    $region28: #{forward.1} parent=1 // pred_region
      _
    $region29: #{forward.1} parent=1 // pred_fallthru
      _
    // Predicated region
    $region30: #{forward.1} parent=1 // pred_check
      _
    $region31: #{forward.1} parent=1 // pred_check_branch
      %71 = sbr.rel (0) target = $region33
    $region32: #{forward.1} parent=1 // pred_region
      %s73 = ssub.s32 512, 512
      %74 = vsyncadd [#allocation10], %s73
      %s75 = sshll.u32 [#allocation11], 4
      %s76 = int_to_ptr.vmem [resolvable:$true] %s75
      %81 = dma.hbm_to_vmem [thread:$0]  %s7, 512, %s76, [#allocation10], 128, 128, 8
    $region33: #{forward.1} parent=1 // pred_fallthru
      _
    // Predicated region
    $region34: #{forward.1} parent=1 // pred_check
      _
    $region35: #{forward.1} parent=1 // pred_check_branch
      %83 = sbr.rel (0) target = $region37
    $region36: #{forward.1} parent=1 // pred_region
      _
    $region37: #{forward.1} parent=1 // pred_fallthru
      _
    // Predicated region
    $region38: #{forward.1} parent=1 // pred_check
      _
    $region39: #{forward.1} parent=1 // pred_check_branch
      %85 = sbr.rel (0) target = $region41
    $region40: #{forward.1} parent=1 // pred_region
      %86 = dma.done [#allocation4], 512
    $region41: #{forward.1} parent=1 // pred_fallthru
      _
    // Predicated region
    $region42: #{forward.1} parent=1 // pred_check
      _
    $region43: #{forward.1} parent=1 // pred_check_branch
      %88 = sbr.rel (0) target = $region45
    $region44: #{forward.1} parent=1 // pred_region
      %89 = dma.done [#allocation7], 384
    $region45: #{forward.1} parent=1 // pred_fallthru
      _
    // Predicated region
    $region46: #{forward.1} parent=1 // pred_check
      _
    $region47: #{forward.1} parent=1 // pred_check_branch
      %91 = sbr.rel (0) target = $region49
    $region48: #{forward.1} parent=1 // pred_region
      %92 = dma.done [#allocation7], 1024
    $region49: #{forward.1} parent=1 // pred_fallthru
      _
    // Predicated region
    $region50: #{forward.1} parent=1 // pred_check
      _
    $region51: #{forward.1} parent=1 // pred_check_branch
      %94 = sbr.rel (0) target = $region53
    $region52: #{forward.1} parent=1 // pred_region
      %95 = dma.done [#allocation10], 16
    $region53: #{forward.1} parent=1 // pred_fallthru
      _
    // Predicated region
    $region54: #{forward.1} parent=1 // pred_check
      _
    $region55: #{forward.1} parent=1 // pred_check_branch
      %97 = sbr.rel (0) target = $region57
    $region56: #{forward.1} parent=1 // pred_region
      %98 = dma.done [#allocation10], 512
    $region57: #{forward.1} parent=1 // pred_fallthru
      _
    %vm100 = vcmask 130048
    %101 = vst.msk [vmem:[#allocation2] sm:$0xff] %vm100, 0.0
    %102 = vst.msk [vmem:[#allocation2 + $0x8] sm:$0xff] %vm100, 0.0
    %103 = vst.msk [vmem:[#allocation2 + $0x10] sm:$0xff] %vm100, 0.0
    %104 = vst.msk [vmem:[#allocation2 + $0x18] sm:$0xff] %vm100, 0.0
    %vm105 = vcmask 123904
    %106 = vst.msk [vmem:[#allocation2 + $0x20] sm:$0x3] %vm105, 0.0
    %107 = vst.msk [vmem:[#allocation2 + $0x28] sm:$0xff] %vm100, 0.0
    %108 = vst.msk [vmem:[#allocation2 + $0x30] sm:$0xff] %vm100, 0.0
    %109 = vst.msk [vmem:[#allocation2 + $0x38] sm:$0xff] %vm100, 0.0
    %110 = vst.msk [vmem:[#allocation2 + $0x40] sm:$0xff] %vm100, 0.0
    %111 = vst.msk [vmem:[#allocation2 + $0x48] sm:$0x3] %vm105, 0.0
    %v112 = vld [vmem:[#allocation3] sm:$0xff]
    %v113 = vld [vmem:[#allocation3 + $0x8] sm:$0xff]
    %114 = vxpose.xlu0.b32.start [1/16] %v112, 128
    %115 = vxpose.xlu0.b32.cont [2/16] %v113, 128
    %116 = vxpose.xlu0.b32.cont [3/16] 0.0, 128
    %117 = vxpose.xlu0.b32.cont [4/16] 0.0, 128
    %118 = vxpose.xlu0.b32.cont [5/16] 0.0, 128
    %119 = vxpose.xlu0.b32.cont [6/16] 0.0, 128
    %120 = vxpose.xlu0.b32.cont [7/16] 0.0, 128
    %121 = vxpose.xlu0.b32.cont [8/16] 0.0, 128
    %122 = vxpose.xlu0.b32.cont [9/16] 0.0, 128
    %123 = vxpose.xlu0.b32.cont [10/16] 0.0, 128
    %124 = vxpose.xlu0.b32.cont [11/16] 0.0, 128
    %125 = vxpose.xlu0.b32.cont [12/16] 0.0, 128
    %126 = vxpose.xlu0.b32.cont [13/16] 0.0, 128
    %127 = vxpose.xlu0.b32.cont [14/16] 0.0, 128
    %128 = vxpose.xlu0.b32.cont [15/16] 0.0, 128
    %129 = vxpose.xlu0.b32.end [16/16] 0.0, 128
    %v130 = vpop.trf.xlu0
    %v131 = vpop.trf.xlu0
    %v132 = vpop.trf.xlu0
    %v133 = vpop.trf.xlu0
    %v134 = vpop.trf.xlu0
    %v135 = vpop.trf.xlu0
    %v136 = vpop.trf.xlu0
    %v137 = vpop.trf.xlu0
    %v138 = vpop.trf.xlu0
    %v139 = vpop.trf.xlu0
    %v140 = vpop.trf.xlu0
    %v141 = vpop.trf.xlu0
    %v142 = vpop.trf.xlu0
    %v143 = vpop.trf.xlu0
    %v144 = vpop.trf.xlu0
    %v145 = vpop.trf.xlu0
    %146 = vst.msk [vmem:[#allocation2 + $0x1] sm:$0xff] %vm100, %v130
    %147 = vst.msk [vmem:[#allocation2 + $0x9] sm:$0xff] %vm100, %v131
    %148 = vst.msk [vmem:[#allocation2 + $0x11] sm:$0xff] %vm100, %v132
    %149 = vst.msk [vmem:[#allocation2 + $0x19] sm:$0xff] %vm100, %v133
    %s150 = scalar_lea.vmem [#allocation3], 16
    %v151 = vld [vmem:[%s150] sm:$0xff]
    %v152 = vld [vmem:[%s150 + $0x8] sm:$0xff]
    %153 = vxpose.xlu0.b32.start [1/16] %v151, 128
    %154 = vxpose.xlu0.b32.cont [2/16] %v152, 128
    %155 = vxpose.xlu0.b32.cont [3/16] 0.0, 128
    %156 = vxpose.xlu0.b32.cont [4/16] 0.0, 128
    %157 = vxpose.xlu0.b32.cont [5/16] 0.0, 128
    %158 = vxpose.xlu0.b32.cont [6/16] 0.0, 128
    %159 = vxpose.xlu0.b32.cont [7/16] 0.0, 128
    %160 = vxpose.xlu0.b32.cont [8/16] 0.0, 128
    %161 = vxpose.xlu0.b32.cont [9/16] 0.0, 128
    %162 = vxpose.xlu0.b32.cont [10/16] 0.0, 128
    %163 = vxpose.xlu0.b32.cont [11/16] 0.0, 128
    %164 = vxpose.xlu0.b32.cont [12/16] 0.0, 128
    %165 = vxpose.xlu0.b32.cont [13/16] 0.0, 128
    %166 = vxpose.xlu0.b32.cont [14/16] 0.0, 128
    %167 = vxpose.xlu0.b32.cont [15/16] 0.0, 128
    %168 = vxpose.xlu0.b32.end [16/16] 0.0, 128
    %v169 = vpop.trf.xlu0
    %v170 = vpop.trf.xlu0
    %v171 = vpop.trf.xlu0
    %v172 = vpop.trf.xlu0
    %v173 = vpop.trf.xlu0
    %v174 = vpop.trf.xlu0
    %v175 = vpop.trf.xlu0
    %v176 = vpop.trf.xlu0
    %v177 = vpop.trf.xlu0
    %v178 = vpop.trf.xlu0
    %v179 = vpop.trf.xlu0
    %v180 = vpop.trf.xlu0
    %v181 = vpop.trf.xlu0
    %v182 = vpop.trf.xlu0
    %v183 = vpop.trf.xlu0
    %v184 = vpop.trf.xlu0
    %s185 = scalar_lea.vmem [#allocation2], 40
    %186 = vst.msk [vmem:[%s185 + $0x1] sm:$0xff] %vm100, %v169
    %187 = vst.msk [vmem:[%s185 + $0x9] sm:$0xff] %vm100, %v170
    %188 = vst.msk [vmem:[%s185 + $0x11] sm:$0xff] %vm100, %v171
    %189 = vst.msk [vmem:[%s185 + $0x19] sm:$0xff] %vm100, %v172
    %v190 = vld [vmem:[#allocation2] sm:$0xff]
    %v191 = vld [vmem:[#allocation2 + $0x8] sm:$0xff]
    %v192 = vld [vmem:[#allocation2 + $0x10] sm:$0xff]
    %v193 = vld [vmem:[#allocation2 + $0x18] sm:$0xff]
    %v194 = vld [vmem:[#allocation2 + $0x28] sm:$0xff]
    %v195 = vld [vmem:[#allocation2 + $0x30] sm:$0xff]
    %v196 = vld [vmem:[#allocation2 + $0x38] sm:$0xff]
    %v197 = vld [vmem:[#allocation2 + $0x40] sm:$0xff]
    %v198 = vpack.c.bf16 %v191, %v190
    %v199 = vpack.c.bf16 %v193, %v192
    %v200 = vpack.c.bf16 %v195, %v194
    %v201 = vpack.c.bf16 %v197, %v196
    %v202 = vld [vmem:[#allocation6] sm:$0xf]
    %v203 = vld [vmem:[#allocation6 + $0x4] sm:$0xf]
    %v204 = vld [vmem:[#allocation2 + $0x1] sm:$0xff]
    %v205 = vld [vmem:[#allocation2 + $0x9] sm:$0xff]
    %v206 = vld [vmem:[#allocation2 + $0x11] sm:$0xff]
    %v207 = vld [vmem:[#allocation2 + $0x19] sm:$0xff]
    %v208 = vld [vmem:[#allocation2 + $0x29] sm:$0xff]
    %v209 = vld [vmem:[#allocation2 + $0x31] sm:$0xff]
    %v210 = vld [vmem:[#allocation2 + $0x39] sm:$0xff]
    %v211 = vld [vmem:[#allocation2 + $0x41] sm:$0xff]
    %v212 = vpack.c.bf16 %v205, %v204
    %v213 = vpack.c.bf16 %v207, %v206
    %v214 = vpack.c.bf16 %v209, %v208
    %v215 = vpack.c.bf16 %v211, %v210
    %s216 = scalar_lea.vmem [#allocation6], 8
    %v217 = vld [vmem:[%s216] sm:$0xf]
    %v218 = vld [vmem:[%s216 + $0x4] sm:$0xf]
    %v221 = vunpack.c.l.b16 %v217
    %v222 = vunpack.c.l.b16 %v218
    %v223 = vpack.c.b16 %v222, %v221
    %v226 = vsel %vm100, %v212, 0
    %v229 = vsel %vm100, %v213, 0
    %v232 = vsel %vm100, %v214, 0
    %v235 = vsel %vm100, %v215, 0
    %237 = vmatprep.subr.bf16.mxu0 0
    %238 = vmatpush1.bf16.msra.mxu0 %v223
    %239 = vmatprep.subr.bf16.mxu0 0
    %240 = vmatpush1.bf16.msra.mxu0 0
    %241 = vmatprep.subr.bf16.mxu0 0
    %242 = vmatpush1.bf16.msra.mxu0 0
    %243 = vmatprep.subr.bf16.mxu0 0
    %244 = vmatpush1.bf16.msra.mxu0 0
    %245 = vmatprep.subr.bf16.mxu0 0
    %246 = vmatpush1.bf16.msra.mxu0 0
    %247 = vmatprep.subr.bf16.mxu0 0
    %248 = vmatpush1.bf16.msra.mxu0 0
    %249 = vmatprep.subr.bf16.mxu0 0
    %250 = vmatpush1.bf16.msra.mxu0 0
    %251 = vmatprep.subr.bf16.mxu0 0
    %252 = vmatpush1.bf16.msra.mxu0 0
    %253 = vmatprep.subr.bf16.mxu0 0
    %254 = vmatpush1.bf16.msra.mxu0 0
    %255 = vmatprep.subr.bf16.mxu0 0
    %256 = vmatpush1.bf16.msra.mxu0 0
    %257 = vmatprep.subr.bf16.mxu0 0
    %258 = vmatpush1.bf16.msra.mxu0 0
    %259 = vmatprep.subr.bf16.mxu0 0
    %260 = vmatpush1.bf16.msra.mxu0 0
    %261 = vmatprep.subr.bf16.mxu0 0
    %262 = vmatpush1.bf16.msra.mxu0 0
    %263 = vmatprep.subr.bf16.mxu0 0
    %264 = vmatpush1.bf16.msra.mxu0 0
    %265 = vmatprep.subr.bf16.mxu0 0
    %266 = vmatpush1.bf16.msra.mxu0 0
    %267 = vmatprep.subr.bf16.mxu0 0
    %268 = vmatpush1.bf16.msra.mxu0 0
    %269 = vmatprep.mubr.bf16.mxu0 0
    %270 = vmatmul.mubr.bf16.gmra.mrb[0].mxu0 %v226
    %v271 = vpop.f32.mrb[0].mxu0
    %v272 = vadd.f32 0.0, %v271
    %v273 = vpop.f32.mrb[0].mxu0
    %v274 = vpop.f32.mrb[0].mxu0
    %v275 = vadd.f32 0.0, %v274
    %v276 = vpop.f32.mrb[0].mxu0
    %277 = vmatprep.mubr.bf16.mxu0 0
    %278 = vmatmul.mubr.bf16.gmra.mrb[0].mxu0 %v229
    %v279 = vpop.f32.mrb[0].mxu0
    %v280 = vadd.f32 0.0, %v279
    %v281 = vpop.f32.mrb[0].mxu0
    %v282 = vpop.f32.mrb[0].mxu0
    %v283 = vadd.f32 0.0, %v282
    %v284 = vpop.f32.mrb[0].mxu0
    %285 = vmatprep.mubr.bf16.mxu0 0
    %286 = vmatmul.mubr.bf16.gmra.mrb[0].mxu0 %v232
    %v287 = vpop.f32.mrb[0].mxu0
    %v288 = vadd.f32 0.0, %v287
    %v289 = vpop.f32.mrb[0].mxu0
    %v290 = vpop.f32.mrb[0].mxu0
    %v291 = vadd.f32 0.0, %v290
    %v292 = vpop.f32.mrb[0].mxu0
    %293 = vmatprep.mubr.bf16.mxu0 0
    %294 = vmatmul.mubr.bf16.gmra.mrb[0].mxu0 %v235
    %v295 = vpop.f32.mrb[0].mxu0
    %v296 = vadd.f32 0.0, %v295
    %v297 = vpop.f32.mrb[0].mxu0
    %v298 = vpop.f32.mrb[0].mxu0
    %v299 = vadd.f32 0.0, %v298
    %v300 = vpop.f32.mrb[0].mxu0
    %301 = vdwg.mxu0
    %v304 = vunpack.c.l.b16 %v202
    %v305 = vunpack.c.l.b16 %v203
    %v306 = vpack.c.b16 %v305, %v304
    %v309 = vsel %vm100, %v198, 0
    %v312 = vsel %vm100, %v199, 0
    %v315 = vsel %vm100, %v200, 0
    %v318 = vsel %vm100, %v201, 0
    %320 = vmatprep.subr.bf16.mxu0 0
    %321 = vmatpush1.bf16.msra.mxu0 %v306
    %322 = vmatprep.subr.bf16.mxu0 0
    %323 = vmatpush1.bf16.msra.mxu0 0
    %324 = vmatprep.subr.bf16.mxu0 0
    %325 = vmatpush1.bf16.msra.mxu0 0
    %326 = vmatprep.subr.bf16.mxu0 0
    %327 = vmatpush1.bf16.msra.mxu0 0
    %328 = vmatprep.subr.bf16.mxu0 0
    %329 = vmatpush1.bf16.msra.mxu0 0
    %330 = vmatprep.subr.bf16.mxu0 0
    %331 = vmatpush1.bf16.msra.mxu0 0
    %332 = vmatprep.subr.bf16.mxu0 0
    %333 = vmatpush1.bf16.msra.mxu0 0
    %334 = vmatprep.subr.bf16.mxu0 0
    %335 = vmatpush1.bf16.msra.mxu0 0
    %336 = vmatprep.subr.bf16.mxu0 0
    %337 = vmatpush1.bf16.msra.mxu0 0
    %338 = vmatprep.subr.bf16.mxu0 0
    %339 = vmatpush1.bf16.msra.mxu0 0
    %340 = vmatprep.subr.bf16.mxu0 0
    %341 = vmatpush1.bf16.msra.mxu0 0
    %342 = vmatprep.subr.bf16.mxu0 0
    %343 = vmatpush1.bf16.msra.mxu0 0
    %344 = vmatprep.subr.bf16.mxu0 0
    %345 = vmatpush1.bf16.msra.mxu0 0
    %346 = vmatprep.subr.bf16.mxu0 0
    %347 = vmatpush1.bf16.msra.mxu0 0
    %348 = vmatprep.subr.bf16.mxu0 0
    %349 = vmatpush1.bf16.msra.mxu0 0
    %350 = vmatprep.subr.bf16.mxu0 0
    %351 = vmatpush1.bf16.msra.mxu0 0
    %352 = vmatprep.mubr.bf16.mxu0 0
    %353 = vmatmul.mubr.bf16.gmra.mrb[0].mxu0 %v309
    %v354 = vpop.f32.mrb[0].mxu0
    %v355 = vadd.f32 %v272, %v354
    %v356 = vpop.f32.mrb[0].mxu0
    %v357 = vpop.f32.mrb[0].mxu0
    %v358 = vadd.f32 %v275, %v357
    %v359 = vpop.f32.mrb[0].mxu0
    %360 = vmatprep.mubr.bf16.mxu0 0
    %361 = vmatmul.mubr.bf16.gmra.mrb[0].mxu0 %v312
    %v362 = vpop.f32.mrb[0].mxu0
    %v363 = vadd.f32 %v280, %v362
    %v364 = vpop.f32.mrb[0].mxu0
    %v365 = vpop.f32.mrb[0].mxu0
    %v366 = vadd.f32 %v283, %v365
    %v367 = vpop.f32.mrb[0].mxu0
    %368 = vmatprep.mubr.bf16.mxu0 0
    %369 = vmatmul.mubr.bf16.gmra.mrb[0].mxu0 %v315
    %v370 = vpop.f32.mrb[0].mxu0
    %v371 = vadd.f32 %v288, %v370
    %v372 = vpop.f32.mrb[0].mxu0
    %v373 = vpop.f32.mrb[0].mxu0
    %v374 = vadd.f32 %v291, %v373
    %v375 = vpop.f32.mrb[0].mxu0
    %376 = vmatprep.mubr.bf16.mxu0 0
    %377 = vmatmul.mubr.bf16.gmra.mrb[0].mxu0 %v318
    %v378 = vpop.f32.mrb[0].mxu0
    %v379 = vadd.f32 %v296, %v378
    %v380 = vpop.f32.mrb[0].mxu0
    %v381 = vpop.f32.mrb[0].mxu0
    %v382 = vadd.f32 %v299, %v381
    %v383 = vpop.f32.mrb[0].mxu0
    %384 = vdwg.mxu0
    %v385 = vld [vmem:[#allocation2 + $0x2] sm:$0xff]
    %v386 = vld [vmem:[#allocation2 + $0xa] sm:$0xff]
    %v387 = vld [vmem:[#allocation2 + $0x12] sm:$0xff]
    %v388 = vld [vmem:[#allocation2 + $0x1a] sm:$0xff]
    %v389 = vld [vmem:[#allocation2 + $0x2a] sm:$0xff]
    %v390 = vld [vmem:[#allocation2 + $0x32] sm:$0xff]
    %v391 = vld [vmem:[#allocation2 + $0x3a] sm:$0xff]
    %v392 = vld [vmem:[#allocation2 + $0x42] sm:$0xff]
    %v393 = vpack.c.bf16 %v386, %v385
    %v394 = vpack.c.bf16 %v388, %v387
    %v395 = vpack.c.bf16 %v390, %v389
    %v396 = vpack.c.bf16 %v392, %v391
    %s397 = scalar_lea.vmem [#allocation6], 16
    %v398 = vld [vmem:[%s397] sm:$0xf]
    %v399 = vld [vmem:[%s397 + $0x4] sm:$0xf]
    %v402 = vunpack.c.l.b16 %v398
    %v403 = vunpack.c.l.b16 %v399
    %v404 = vpack.c.b16 %v403, %v402
    %v407 = vsel %vm100, %v393, 0
    %v410 = vsel %vm100, %v394, 0
    %v413 = vsel %vm100, %v395, 0
    %v416 = vsel %vm100, %v396, 0
    %418 = vmatprep.subr.bf16.mxu0 0
    %419 = vmatpush1.bf16.msra.mxu0 %v404
    %420 = vmatprep.subr.bf16.mxu0 0
    %421 = vmatpush1.bf16.msra.mxu0 0
    %422 = vmatprep.subr.bf16.mxu0 0
    %423 = vmatpush1.bf16.msra.mxu0 0
    %424 = vmatprep.subr.bf16.mxu0 0
    %425 = vmatpush1.bf16.msra.mxu0 0
    %426 = vmatprep.subr.bf16.mxu0 0
    %427 = vmatpush1.bf16.msra.mxu0 0
    %428 = vmatprep.subr.bf16.mxu0 0
    %429 = vmatpush1.bf16.msra.mxu0 0
    %430 = vmatprep.subr.bf16.mxu0 0
    %431 = vmatpush1.bf16.msra.mxu0 0
    %432 = vmatprep.subr.bf16.mxu0 0
    %433 = vmatpush1.bf16.msra.mxu0 0
    %434 = vmatprep.subr.bf16.mxu0 0
    %435 = vmatpush1.bf16.msra.mxu0 0
    %436 = vmatprep.subr.bf16.mxu0 0
    %437 = vmatpush1.bf16.msra.mxu0 0
    %438 = vmatprep.subr.bf16.mxu0 0
    %439 = vmatpush1.bf16.msra.mxu0 0
    %440 = vmatprep.subr.bf16.mxu0 0
    %441 = vmatpush1.bf16.msra.mxu0 0
    %442 = vmatprep.subr.bf16.mxu0 0
    %443 = vmatpush1.bf16.msra.mxu0 0
    %444 = vmatprep.subr.bf16.mxu0 0
    %445 = vmatpush1.bf16.msra.mxu0 0
    %446 = vmatprep.subr.bf16.mxu0 0
    %447 = vmatpush1.bf16.msra.mxu0 0
    %448 = vmatprep.subr.bf16.mxu0 0
    %449 = vmatpush1.bf16.msra.mxu0 0
    %450 = vmatprep.mubr.bf16.mxu0 0
    %451 = vmatmul.mubr.bf16.gmra.mrb[0].mxu0 %v407
    %v452 = vpop.f32.mrb[0].mxu0
    %v453 = vadd.f32 0.0, %v452
    %v454 = vpop.f32.mrb[0].mxu0
    %v455 = vpop.f32.mrb[0].mxu0
    %v456 = vadd.f32 0.0, %v455
    %v457 = vpop.f32.mrb[0].mxu0
    %458 = vmatprep.mubr.bf16.mxu0 0
    %459 = vmatmul.mubr.bf16.gmra.mrb[0].mxu0 %v410
    %v460 = vpop.f32.mrb[0].mxu0
    %v461 = vadd.f32 0.0, %v460
    %v462 = vpop.f32.mrb[0].mxu0
    %v463 = vpop.f32.mrb[0].mxu0
    %v464 = vadd.f32 0.0, %v463
    %v465 = vpop.f32.mrb[0].mxu0
    %466 = vmatprep.mubr.bf16.mxu0 0
    %467 = vmatmul.mubr.bf16.gmra.mrb[0].mxu0 %v413
    %v468 = vpop.f32.mrb[0].mxu0
    %v469 = vadd.f32 0.0, %v468
    %v470 = vpop.f32.mrb[0].mxu0
    %v471 = vpop.f32.mrb[0].mxu0
    %v472 = vadd.f32 0.0, %v471
    %v473 = vpop.f32.mrb[0].mxu0
    %474 = vmatprep.mubr.bf16.mxu0 0
    %475 = vmatmul.mubr.bf16.gmra.mrb[0].mxu0 %v416
    %v476 = vpop.f32.mrb[0].mxu0
    %v477 = vadd.f32 0.0, %v476
    %v478 = vpop.f32.mrb[0].mxu0
    %v479 = vpop.f32.mrb[0].mxu0
    %v480 = vadd.f32 0.0, %v479
    %v481 = vpop.f32.mrb[0].mxu0
    %482 = vdwg.mxu0
    %v483 = vadd.f32 %v355, %v453
    %v484 = vadd.f32 %v358, %v456
    %v485 = vadd.f32 %v363, %v461
    %v486 = vadd.f32 %v366, %v464
    %v487 = vadd.f32 %v371, %v469
    %v488 = vadd.f32 %v374, %v472
    %v489 = vadd.f32 %v379, %v477
    %v490 = vadd.f32 %v382, %v480
    %v491 = vld [vmem:[%s2] sm:$0x1]
    %v493 = vlaneseq
    %v494 = vshrl.u32 %v493, 7
    %v495 = vsub.s32 0, %v494
    %v496 = vrot.slane %v491, %v495
    %v498 = vadd.f32 %v483, %v496
    %v499 = vadd.f32 %v484, %v496
    %v500 = vadd.f32 %v485, %v496
    %v501 = vadd.f32 %v486, %v496
    %v502 = vadd.f32 %v487, %v496
    %v503 = vadd.f32 %v488, %v496
    %v504 = vadd.f32 %v489, %v496
    %v505 = vadd.f32 %v490, %v496
    %v506 = vmax.f32 %v498, 0.0
    %v507 = vmax.f32 %v499, 0.0
    %v508 = vmax.f32 %v500, 0.0
    %v509 = vmax.f32 %v501, 0.0
    %v510 = vmax.f32 %v502, 0.0
    %v511 = vmax.f32 %v503, 0.0
    %v512 = vmax.f32 %v504, 0.0
    %v513 = vmax.f32 %v505, 0.0
    %v522 = vcombine.high %v506, %v506
    %v524 = vunpack.c.l.s4 1983009808
    %v525 = vunpack.c.0.s8 %v524
    %v526 = vlaneseq
    %v527 = vshrl.u32 %v526, 7
    %v528 = vsub.s32 %v525, %v527
    %v529 = vrot.slane %v506, %v528
    %v531 = vunpack.c.l.s4 1983009808
    %v532 = vunpack.c.0.s8 %v531
    %v533 = vlaneseq
    %v534 = vshrl.u32 %v533, 7
    %v535 = vsub.s32 %v532, %v534
    %v536 = vrot.slane %v522, %v535
    %v537 = vcombine.high %v529, %v529
    %v538 = vcombine.high %v536, %v536
    %v539 = vcombine.high %v507, %v507
    %v541 = vunpack.c.l.s4 1983009808
    %v542 = vunpack.c.0.s8 %v541
    %v543 = vlaneseq
    %v544 = vshrl.u32 %v543, 7
    %v545 = vsub.s32 %v542, %v544
    %v546 = vrot.slane %v507, %v545
    %v548 = vunpack.c.l.s4 1983009808
    %v549 = vunpack.c.0.s8 %v548
    %v550 = vlaneseq
    %v551 = vshrl.u32 %v550, 7
    %v552 = vsub.s32 %v549, %v551
    %v553 = vrot.slane %v539, %v552
    %v554 = vcombine.high %v546, %v546
    %v555 = vcombine.high %v553, %v553
    %v556 = vcombine.high %v508, %v508
    %v558 = vunpack.c.l.s4 1983009808
    %v559 = vunpack.c.0.s8 %v558
    %v560 = vlaneseq
    %v561 = vshrl.u32 %v560, 7
    %v562 = vsub.s32 %v559, %v561
    %v563 = vrot.slane %v508, %v562
    %v565 = vunpack.c.l.s4 1983009808
    %v566 = vunpack.c.0.s8 %v565
    %v567 = vlaneseq
    %v568 = vshrl.u32 %v567, 7
    %v569 = vsub.s32 %v566, %v568
    %v570 = vrot.slane %v556, %v569
    %v571 = vcombine.high %v563, %v563
    %v572 = vcombine.high %v570, %v570
    %v573 = vcombine.high %v509, %v509
    %v575 = vunpack.c.l.s4 1983009808
    %v576 = vunpack.c.0.s8 %v575
    %v577 = vlaneseq
    %v578 = vshrl.u32 %v577, 7
    %v579 = vsub.s32 %v576, %v578
    %v580 = vrot.slane %v509, %v579
    %v582 = vunpack.c.l.s4 1983009808
    %v583 = vunpack.c.0.s8 %v582
    %v584 = vlaneseq
    %v585 = vshrl.u32 %v584, 7
    %v586 = vsub.s32 %v583, %v585
    %v587 = vrot.slane %v573, %v586
    %v588 = vcombine.high %v580, %v580
    %v589 = vcombine.high %v587, %v587
    %v590 = vcombine.high %v510, %v510
    %v592 = vunpack.c.l.s4 1983009808
    %v593 = vunpack.c.0.s8 %v592
    %v594 = vlaneseq
    %v595 = vshrl.u32 %v594, 7
    %v596 = vsub.s32 %v593, %v595
    %v597 = vrot.slane %v510, %v596
    %v599 = vunpack.c.l.s4 1983009808
    %v600 = vunpack.c.0.s8 %v599
    %v601 = vlaneseq
    %v602 = vshrl.u32 %v601, 7
    %v603 = vsub.s32 %v600, %v602
    %v604 = vrot.slane %v590, %v603
    %v605 = vcombine.high %v597, %v597
    %v606 = vcombine.high %v604, %v604
    %v607 = vcombine.high %v511, %v511
    %v609 = vunpack.c.l.s4 1983009808
    %v610 = vunpack.c.0.s8 %v609
    %v611 = vlaneseq
    %v612 = vshrl.u32 %v611, 7
    %v613 = vsub.s32 %v610, %v612
    %v614 = vrot.slane %v511, %v613
    %v616 = vunpack.c.l.s4 1983009808
    %v617 = vunpack.c.0.s8 %v616
    %v618 = vlaneseq
    %v619 = vshrl.u32 %v618, 7
    %v620 = vsub.s32 %v617, %v619
    %v621 = vrot.slane %v607, %v620
    %v622 = vcombine.high %v614, %v614
    %v623 = vcombine.high %v621, %v621
    %v624 = vcombine.high %v512, %v512
    %v626 = vunpack.c.l.s4 1983009808
    %v627 = vunpack.c.0.s8 %v626
    %v628 = vlaneseq
    %v629 = vshrl.u32 %v628, 7
    %v630 = vsub.s32 %v627, %v629
    %v631 = vrot.slane %v512, %v630
    %v633 = vunpack.c.l.s4 1983009808
    %v634 = vunpack.c.0.s8 %v633
    %v635 = vlaneseq
    %v636 = vshrl.u32 %v635, 7
    %v637 = vsub.s32 %v634, %v636
    %v638 = vrot.slane %v624, %v637
    %v639 = vcombine.high %v631, %v631
    %v640 = vcombine.high %v638, %v638
    %v641 = vcombine.high %v513, %v513
    %v643 = vunpack.c.l.s4 1983009808
    %v644 = vunpack.c.0.s8 %v643
    %v645 = vlaneseq
    %v646 = vshrl.u32 %v645, 7
    %v647 = vsub.s32 %v644, %v646
    %v648 = vrot.slane %v513, %v647
    %v650 = vunpack.c.l.s4 1983009808
    %v651 = vunpack.c.0.s8 %v650
    %v652 = vlaneseq
    %v653 = vshrl.u32 %v652, 7
    %v654 = vsub.s32 %v651, %v653
    %v655 = vrot.slane %v641, %v654
    %v656 = vcombine.high %v648, %v648
    %v657 = vcombine.high %v655, %v655
    %vm690 = vcmask 254976
    %v691 = vsel %vm690, %v529, -inf
    %v692 = vrot.slane %v691, 4
    %v693 = vmax.f32 %v691, %v692
    %v694 = vrot.slane %v693, 2
    %v695 = vmax.f32 %v693, %v694
    %v696 = vrot.slane %v695, 1
    %v697 = vmax.f32 %v695, %v696
    %v698 = vsel %vm690, %v537, -inf
    %v699 = vrot.slane %v698, 4
    %v700 = vmax.f32 %v698, %v699
    %v701 = vrot.slane %v700, 2
    %v702 = vmax.f32 %v700, %v701
    %v703 = vrot.slane %v702, 1
    %v704 = vmax.f32 %v702, %v703
    %v705 = vsel %vm690, %v536, -inf
    %v706 = vrot.slane %v705, 4
    %v707 = vmax.f32 %v705, %v706
    %v708 = vrot.slane %v707, 2
    %v709 = vmax.f32 %v707, %v708
    %v710 = vrot.slane %v709, 1
    %v711 = vmax.f32 %v709, %v710
    %v712 = vsel %vm690, %v538, -inf
    %v713 = vrot.slane %v712, 4
    %v714 = vmax.f32 %v712, %v713
    %v715 = vrot.slane %v714, 2
    %v716 = vmax.f32 %v714, %v715
    %v717 = vrot.slane %v716, 1
    %v718 = vmax.f32 %v716, %v717
    %v719 = vsel %vm690, %v546, -inf
    %v720 = vrot.slane %v719, 4
    %v721 = vmax.f32 %v719, %v720
    %v722 = vrot.slane %v721, 2
    %v723 = vmax.f32 %v721, %v722
    %v724 = vrot.slane %v723, 1
    %v725 = vmax.f32 %v723, %v724
    %v726 = vsel %vm690, %v554, -inf
    %v727 = vrot.slane %v726, 4
    %v728 = vmax.f32 %v726, %v727
    %v729 = vrot.slane %v728, 2
    %v730 = vmax.f32 %v728, %v729
    %v731 = vrot.slane %v730, 1
    %v732 = vmax.f32 %v730, %v731
    %v733 = vsel %vm690, %v553, -inf
    %v734 = vrot.slane %v733, 4
    %v735 = vmax.f32 %v733, %v734
    %v736 = vrot.slane %v735, 2
    %v737 = vmax.f32 %v735, %v736
    %v738 = vrot.slane %v737, 1
    %v739 = vmax.f32 %v737, %v738
    %v740 = vsel %vm690, %v555, -inf
    %v741 = vrot.slane %v740, 4
    %v742 = vmax.f32 %v740, %v741
    %v743 = vrot.slane %v742, 2
    %v744 = vmax.f32 %v742, %v743
    %v745 = vrot.slane %v744, 1
    %v746 = vmax.f32 %v744, %v745
    %v747 = vsel %vm690, %v563, -inf
    %v748 = vrot.slane %v747, 4
    %v749 = vmax.f32 %v747, %v748
    %v750 = vrot.slane %v749, 2
    %v751 = vmax.f32 %v749, %v750
    %v752 = vrot.slane %v751, 1
    %v753 = vmax.f32 %v751, %v752
    %v754 = vsel %vm690, %v571, -inf
    %v755 = vrot.slane %v754, 4
    %v756 = vmax.f32 %v754, %v755
    %v757 = vrot.slane %v756, 2
    %v758 = vmax.f32 %v756, %v757
    %v759 = vrot.slane %v758, 1
    %v760 = vmax.f32 %v758, %v759
    %v761 = vsel %vm690, %v570, -inf
    %v762 = vrot.slane %v761, 4
    %v763 = vmax.f32 %v761, %v762
    %v764 = vrot.slane %v763, 2
    %v765 = vmax.f32 %v763, %v764
    %v766 = vrot.slane %v765, 1
    %v767 = vmax.f32 %v765, %v766
    %v768 = vsel %vm690, %v572, -inf
    %v769 = vrot.slane %v768, 4
    %v770 = vmax.f32 %v768, %v769
    %v771 = vrot.slane %v770, 2
    %v772 = vmax.f32 %v770, %v771
    %v773 = vrot.slane %v772, 1
    %v774 = vmax.f32 %v772, %v773
    %v775 = vsel %vm690, %v580, -inf
    %v776 = vrot.slane %v775, 4
    %v777 = vmax.f32 %v775, %v776
    %v778 = vrot.slane %v777, 2
    %v779 = vmax.f32 %v777, %v778
    %v780 = vrot.slane %v779, 1
    %v781 = vmax.f32 %v779, %v780
    %v782 = vsel %vm690, %v588, -inf
    %v783 = vrot.slane %v782, 4
    %v784 = vmax.f32 %v782, %v783
    %v785 = vrot.slane %v784, 2
    %v786 = vmax.f32 %v784, %v785
    %v787 = vrot.slane %v786, 1
    %v788 = vmax.f32 %v786, %v787
    %v789 = vsel %vm690, %v587, -inf
    %v790 = vrot.slane %v789, 4
    %v791 = vmax.f32 %v789, %v790
    %v792 = vrot.slane %v791, 2
    %v793 = vmax.f32 %v791, %v792
    %v794 = vrot.slane %v793, 1
    %v795 = vmax.f32 %v793, %v794
    %v796 = vsel %vm690, %v589, -inf
    %v797 = vrot.slane %v796, 4
    %v798 = vmax.f32 %v796, %v797
    %v799 = vrot.slane %v798, 2
    %v800 = vmax.f32 %v798, %v799
    %v801 = vrot.slane %v800, 1
    %v802 = vmax.f32 %v800, %v801
    %v803 = vsel %vm690, %v597, -inf
    %v804 = vrot.slane %v803, 4
    %v805 = vmax.f32 %v803, %v804
    %v806 = vrot.slane %v805, 2
    %v807 = vmax.f32 %v805, %v806
    %v808 = vrot.slane %v807, 1
    %v809 = vmax.f32 %v807, %v808
    %v810 = vsel %vm690, %v605, -inf
    %v811 = vrot.slane %v810, 4
    %v812 = vmax.f32 %v810, %v811
    %v813 = vrot.slane %v812, 2
    %v814 = vmax.f32 %v812, %v813
    %v815 = vrot.slane %v814, 1
    %v816 = vmax.f32 %v814, %v815
    %v817 = vsel %vm690, %v604, -inf
    %v818 = vrot.slane %v817, 4
    %v819 = vmax.f32 %v817, %v818
    %v820 = vrot.slane %v819, 2
    %v821 = vmax.f32 %v819, %v820
    %v822 = vrot.slane %v821, 1
    %v823 = vmax.f32 %v821, %v822
    %v824 = vsel %vm690, %v606, -inf
    %v825 = vrot.slane %v824, 4
    %v826 = vmax.f32 %v824, %v825
    %v827 = vrot.slane %v826, 2
    %v828 = vmax.f32 %v826, %v827
    %v829 = vrot.slane %v828, 1
    %v830 = vmax.f32 %v828, %v829
    %v831 = vsel %vm690, %v614, -inf
    %v832 = vrot.slane %v831, 4
    %v833 = vmax.f32 %v831, %v832
    %v834 = vrot.slane %v833, 2
    %v835 = vmax.f32 %v833, %v834
    %v836 = vrot.slane %v835, 1
    %v837 = vmax.f32 %v835, %v836
    %v838 = vsel %vm690, %v622, -inf
    %v839 = vrot.slane %v838, 4
    %v840 = vmax.f32 %v838, %v839
    %v841 = vrot.slane %v840, 2
    %v842 = vmax.f32 %v840, %v841
    %v843 = vrot.slane %v842, 1
    %v844 = vmax.f32 %v842, %v843
    %v845 = vsel %vm690, %v621, -inf
    %v846 = vrot.slane %v845, 4
    %v847 = vmax.f32 %v845, %v846
    %v848 = vrot.slane %v847, 2
    %v849 = vmax.f32 %v847, %v848
    %v850 = vrot.slane %v849, 1
    %v851 = vmax.f32 %v849, %v850
    %v852 = vsel %vm690, %v623, -inf
    %v853 = vrot.slane %v852, 4
    %v854 = vmax.f32 %v852, %v853
    %v855 = vrot.slane %v854, 2
    %v856 = vmax.f32 %v854, %v855
    %v857 = vrot.slane %v856, 1
    %v858 = vmax.f32 %v856, %v857
    %v859 = vsel %vm690, %v631, -inf
    %v860 = vrot.slane %v859, 4
    %v861 = vmax.f32 %v859, %v860
    %v862 = vrot.slane %v861, 2
    %v863 = vmax.f32 %v861, %v862
    %v864 = vrot.slane %v863, 1
    %v865 = vmax.f32 %v863, %v864
    %v866 = vsel %vm690, %v639, -inf
    %v867 = vrot.slane %v866, 4
    %v868 = vmax.f32 %v866, %v867
    %v869 = vrot.slane %v868, 2
    %v870 = vmax.f32 %v868, %v869
    %v871 = vrot.slane %v870, 1
    %v872 = vmax.f32 %v870, %v871
    %v873 = vsel %vm690, %v638, -inf
    %v874 = vrot.slane %v873, 4
    %v875 = vmax.f32 %v873, %v874
    %v876 = vrot.slane %v875, 2
    %v877 = vmax.f32 %v875, %v876
    %v878 = vrot.slane %v877, 1
    %v879 = vmax.f32 %v877, %v878
    %v880 = vsel %vm690, %v640, -inf
    %v881 = vrot.slane %v880, 4
    %v882 = vmax.f32 %v880, %v881
    %v883 = vrot.slane %v882, 2
    %v884 = vmax.f32 %v882, %v883
    %v885 = vrot.slane %v884, 1
    %v886 = vmax.f32 %v884, %v885
    %v887 = vsel %vm690, %v648, -inf
    %v888 = vrot.slane %v887, 4
    %v889 = vmax.f32 %v887, %v888
    %v890 = vrot.slane %v889, 2
    %v891 = vmax.f32 %v889, %v890
    %v892 = vrot.slane %v891, 1
    %v893 = vmax.f32 %v891, %v892
    %v894 = vsel %vm690, %v656, -inf
    %v895 = vrot.slane %v894, 4
    %v896 = vmax.f32 %v894, %v895
    %v897 = vrot.slane %v896, 2
    %v898 = vmax.f32 %v896, %v897
    %v899 = vrot.slane %v898, 1
    %v900 = vmax.f32 %v898, %v899
    %v901 = vsel %vm690, %v655, -inf
    %v902 = vrot.slane %v901, 4
    %v903 = vmax.f32 %v901, %v902
    %v904 = vrot.slane %v903, 2
    %v905 = vmax.f32 %v903, %v904
    %v906 = vrot.slane %v905, 1
    %v907 = vmax.f32 %v905, %v906
    %v908 = vsel %vm690, %v657, -inf
    %v909 = vrot.slane %v908, 4
    %v910 = vmax.f32 %v908, %v909
    %v911 = vrot.slane %v910, 2
    %v912 = vmax.f32 %v910, %v911
    %v913 = vrot.slane %v912, 1
    %v914 = vmax.f32 %v912, %v913
    %vm931 = vcmask 1041409
    %v932 = vsel %vm931, %v704, %v697
    %vm933 = vcmask 1042434
    %v934 = vsel %vm933, %v711, %v932
    %vm935 = vcmask 1043459
    %v936 = vsel %vm935, %v718, %v934
    %vm937 = vcmask 1044484
    %v938 = vsel %vm937, %v725, %v936
    %vm939 = vcmask 1045509
    %v940 = vsel %vm939, %v732, %v938
    %vm941 = vcmask 1046534
    %v942 = vsel %vm941, %v739, %v940
    %vm943 = vcmask 1047559
    %v944 = vsel %vm943, %v746, %v942
    %v945 = vsel %vm931, %v760, %v753
    %v946 = vsel %vm933, %v767, %v945
    %v947 = vsel %vm935, %v774, %v946
    %v948 = vsel %vm937, %v781, %v947
    %v949 = vsel %vm939, %v788, %v948
    %v950 = vsel %vm941, %v795, %v949
    %v951 = vsel %vm943, %v802, %v950
    %954 = vxpose.xlu0.b32.start [1/16] %v944, 128
    %955 = vxpose.xlu0.b32.cont [2/16] %v951, 128
    %956 = vxpose.xlu0.b32.cont [3/16] 0.0, 128
    %957 = vxpose.xlu0.b32.cont [4/16] 0.0, 128
    %958 = vxpose.xlu0.b32.cont [5/16] 0.0, 128
    %959 = vxpose.xlu0.b32.cont [6/16] 0.0, 128
    %960 = vxpose.xlu0.b32.cont [7/16] 0.0, 128
    %961 = vxpose.xlu0.b32.cont [8/16] 0.0, 128
    %962 = vxpose.xlu0.b32.cont [9/16] 0.0, 128
    %963 = vxpose.xlu0.b32.cont [10/16] 0.0, 128
    %964 = vxpose.xlu0.b32.cont [11/16] 0.0, 128
    %965 = vxpose.xlu0.b32.cont [12/16] 0.0, 128
    %966 = vxpose.xlu0.b32.cont [13/16] 0.0, 128
    %967 = vxpose.xlu0.b32.cont [14/16] 0.0, 128
    %968 = vxpose.xlu0.b32.cont [15/16] 0.0, 128
    %969 = vxpose.xlu0.b32.end [16/16] 0.0, 128
    %v970 = vpop.trf.xlu0
    %v971 = vpop.trf.xlu0
    %v972 = vpop.trf.xlu0
    %v973 = vpop.trf.xlu0
    %v974 = vpop.trf.xlu0
    %v975 = vpop.trf.xlu0
    %v976 = vpop.trf.xlu0
    %v977 = vpop.trf.xlu0
    %v978 = vpop.trf.xlu0
    %v979 = vpop.trf.xlu0
    %v980 = vpop.trf.xlu0
    %v981 = vpop.trf.xlu0
    %v982 = vpop.trf.xlu0
    %v983 = vpop.trf.xlu0
    %v984 = vpop.trf.xlu0
    %v985 = vpop.trf.xlu0
    %v1002 = vsel %vm931, %v816, %v809
    %v1003 = vsel %vm933, %v823, %v1002
    %v1004 = vsel %vm935, %v830, %v1003
    %v1005 = vsel %vm937, %v837, %v1004
    %v1006 = vsel %vm939, %v844, %v1005
    %v1007 = vsel %vm941, %v851, %v1006
    %v1008 = vsel %vm943, %v858, %v1007
    %v1009 = vsel %vm931, %v872, %v865
    %v1010 = vsel %vm933, %v879, %v1009
    %v1011 = vsel %vm935, %v886, %v1010
    %v1012 = vsel %vm937, %v893, %v1011
    %v1013 = vsel %vm939, %v900, %v1012
    %v1014 = vsel %vm941, %v907, %v1013
    %v1015 = vsel %vm943, %v914, %v1014
    %1018 = vxpose.xlu0.b32.start [1/16] %v1008, 128
    %1019 = vxpose.xlu0.b32.cont [2/16] %v1015, 128
    %1020 = vxpose.xlu0.b32.cont [3/16] 0.0, 128
    %1021 = vxpose.xlu0.b32.cont [4/16] 0.0, 128
    %1022 = vxpose.xlu0.b32.cont [5/16] 0.0, 128
    %1023 = vxpose.xlu0.b32.cont [6/16] 0.0, 128
    %1024 = vxpose.xlu0.b32.cont [7/16] 0.0, 128
    %1025 = vxpose.xlu0.b32.cont [8/16] 0.0, 128
    %1026 = vxpose.xlu0.b32.cont [9/16] 0.0, 128
    %1027 = vxpose.xlu0.b32.cont [10/16] 0.0, 128
    %1028 = vxpose.xlu0.b32.cont [11/16] 0.0, 128
    %1029 = vxpose.xlu0.b32.cont [12/16] 0.0, 128
    %1030 = vxpose.xlu0.b32.cont [13/16] 0.0, 128
    %1031 = vxpose.xlu0.b32.cont [14/16] 0.0, 128
    %1032 = vxpose.xlu0.b32.cont [15/16] 0.0, 128
    %1033 = vxpose.xlu0.b32.end [16/16] 0.0, 128
    %v1034 = vpop.trf.xlu0
    %v1035 = vpop.trf.xlu0
    %v1036 = vpop.trf.xlu0
    %v1037 = vpop.trf.xlu0
    %v1038 = vpop.trf.xlu0
    %v1039 = vpop.trf.xlu0
    %v1040 = vpop.trf.xlu0
    %v1041 = vpop.trf.xlu0
    %v1042 = vpop.trf.xlu0
    %v1043 = vpop.trf.xlu0
    %v1044 = vpop.trf.xlu0
    %v1045 = vpop.trf.xlu0
    %v1046 = vpop.trf.xlu0
    %v1047 = vpop.trf.xlu0
    %v1048 = vpop.trf.xlu0
    %v1049 = vpop.trf.xlu0
    %v1050 = vpack.c.bf16 %v971, %v970
    %v1051 = vpack.c.bf16 %v973, %v972
    %v1052 = vpack.c.bf16 %v1035, %v1034
    %v1053 = vpack.c.bf16 %v1037, %v1036
    %v1054 = vld [vmem:[%s3] sm:$0xf]
    %v1055 = vld [vmem:[%s3 + $0x4] sm:$0xf]
    %v1058 = vunpack.c.l.b16 %v1054
    %v1059 = vunpack.c.l.b16 %v1055
    %v1060 = vpack.c.b16 %v1059, %v1058
    %v1063 = vsel %vm100, %v1050, 0
    %v1066 = vsel %vm100, %v1051, 0
    %v1069 = vsel %vm100, %v1052, 0
    %v1072 = vsel %vm100, %v1053, 0
    %1074 = vmatprep.subr.bf16.mxu0 0
    %1075 = vmatpush1.bf16.msra.mxu0 %v1060
    %1076 = vmatprep.subr.bf16.mxu0 0
    %1077 = vmatpush1.bf16.msra.mxu0 0
    %1078 = vmatprep.subr.bf16.mxu0 0
    %1079 = vmatpush1.bf16.msra.mxu0 0
    %1080 = vmatprep.subr.bf16.mxu0 0
    %1081 = vmatpush1.bf16.msra.mxu0 0
    %1082 = vmatprep.subr.bf16.mxu0 0
    %1083 = vmatpush1.bf16.msra.mxu0 0
    %1084 = vmatprep.subr.bf16.mxu0 0
    %1085 = vmatpush1.bf16.msra.mxu0 0
    %1086 = vmatprep.subr.bf16.mxu0 0
    %1087 = vmatpush1.bf16.msra.mxu0 0
    %1088 = vmatprep.subr.bf16.mxu0 0
    %1089 = vmatpush1.bf16.msra.mxu0 0
    %1090 = vmatprep.subr.bf16.mxu0 0
    %1091 = vmatpush1.bf16.msra.mxu0 0
    %1092 = vmatprep.subr.bf16.mxu0 0
    %1093 = vmatpush1.bf16.msra.mxu0 0
    %1094 = vmatprep.subr.bf16.mxu0 0
    %1095 = vmatpush1.bf16.msra.mxu0 0
    %1096 = vmatprep.subr.bf16.mxu0 0
    %1097 = vmatpush1.bf16.msra.mxu0 0
    %1098 = vmatprep.subr.bf16.mxu0 0
    %1099 = vmatpush1.bf16.msra.mxu0 0
    %1100 = vmatprep.subr.bf16.mxu0 0
    %1101 = vmatpush1.bf16.msra.mxu0 0
    %1102 = vmatprep.subr.bf16.mxu0 0
    %1103 = vmatpush1.bf16.msra.mxu0 0
    %1104 = vmatprep.subr.bf16.mxu0 0
    %1105 = vmatpush1.bf16.msra.mxu0 0
    %1106 = vmatprep.mubr.bf16.mxu0 0
    %1107 = vmatmul.mubr.bf16.gmra.mrb[0].mxu0 %v1063
    %v1108 = vpop.f32.mrb[0].mxu0
    %v1109 = vadd.f32 0.0, %v1108
    %v1110 = vpop.f32.mrb[0].mxu0
    %v1111 = vpop.f32.mrb[0].mxu0
    %v1112 = vadd.f32 0.0, %v1111
    %v1113 = vpop.f32.mrb[0].mxu0
    %1114 = vmatprep.mubr.bf16.mxu0 0
    %1115 = vmatmul.mubr.bf16.gmra.mrb[0].mxu0 %v1066
    %v1116 = vpop.f32.mrb[0].mxu0
    %v1117 = vadd.f32 0.0, %v1116
    %v1118 = vpop.f32.mrb[0].mxu0
    %v1119 = vpop.f32.mrb[0].mxu0
    %v1120 = vadd.f32 0.0, %v1119
    %v1121 = vpop.f32.mrb[0].mxu0
    %1122 = vmatprep.mubr.bf16.mxu0 0
    %1123 = vmatmul.mubr.bf16.gmra.mrb[0].mxu0 %v1069
    %v1124 = vpop.f32.mrb[0].mxu0
    %v1125 = vadd.f32 0.0, %v1124
    %v1126 = vpop.f32.mrb[0].mxu0
    %v1127 = vpop.f32.mrb[0].mxu0
    %v1128 = vadd.f32 0.0, %v1127
    %v1129 = vpop.f32.mrb[0].mxu0
    %1130 = vmatprep.mubr.bf16.mxu0 0
    %1131 = vmatmul.mubr.bf16.gmra.mrb[0].mxu0 %v1072
    %v1132 = vpop.f32.mrb[0].mxu0
    %v1133 = vadd.f32 0.0, %v1132
    %v1134 = vpop.f32.mrb[0].mxu0
    %v1135 = vpop.f32.mrb[0].mxu0
    %v1136 = vadd.f32 0.0, %v1135
    %v1137 = vpop.f32.mrb[0].mxu0
    %1138 = vdwg.mxu0
    %v1139 = vld [vmem:[#allocation8] sm:$0xff]
    %v1140 = vld [vmem:[#allocation8 + $0x8] sm:$0xff]
    %v1141 = vld [vmem:[#allocation8 + $0x10] sm:$0xff]
    %v1142 = vld [vmem:[#allocation8 + $0x18] sm:$0xff]
    %v1143 = vld [vmem:[#allocation8 + $0x20] sm:$0xff]
    %v1144 = vld [vmem:[#allocation8 + $0x28] sm:$0xff]
    %v1145 = vld [vmem:[#allocation8 + $0x30] sm:$0xff]
    %v1146 = vld [vmem:[#allocation8 + $0x38] sm:$0xff]
    %v1147 = vld [vmem:[#allocation9] sm:$0x1]
    %v1148 = vld [vmem:[%s6] sm:$0x1]
    %v1150 = vrot.slane %v1125, 7
    %vm1152 = vcmask 1040384
    %v1153 = vsel %vm1152, %v1109, %v1150
    %v1154 = vadd.f32 %v1153, 0.0
    %v1156 = vlaneseq
    %v1157 = vshrl.u32 %v1156, 7
    %v1158 = vsub.s32 0, %v1157
    %v1159 = vrot.slane %v1147, %v1158
    %v1161 = vadd.f32 %v1154, %v1159
    %v1162 = vxor.u32 %v1161, 2147483648
    %v1163 = vmul.f32 %v1162, 1.442695
    %v1164 = vpow.pop %v1163
    %v1165 = vadd.f32 %v1164, 1.0
    %v1166 = vrcp.pop %v1165
    %v1167 = vmul.f32 1.0, %v1166
    %v1168 = vtanh.pop %v1161
    %v1169 = vmul.f32 %v1167, 0.0
    %1171 = vrot.lane.b32.xlu0 %v1168, 64
    %v1172 = vpop.permute.xlu0 %1171
    %v1174 = vmul.f32 %v1167, %v1172
    %1176 = vrot.lane.b32.xlu0 %v1174, 32
    %v1177 = vpop.permute.xlu0 %1176
    %v1179 = vadd.f32 %v1169, %v1177
    %v1180 = vtanh.pop %v1179
    %1182 = vrot.lane.b32.xlu0 %v1180, 64
    %v1183 = vpop.permute.xlu0 %1182
    %v1185 = vmul.f32 %v1167, %v1183
    %1187 = vrot.lane.b32.xlu0 %v1185, 32
    %v1188 = vpop.permute.xlu0 %1187
    %vm1190 = vcmask 261120
    %v1191 = vsel %vm1190, %v1188, 0.0
    %v1192 = vpack.c.bf16 %v1191, %v1191
    %v1201 = vunpack.c.l.b16 %v1139
    %v1202 = vunpack.c.h.b16 %v1139
    %v1203 = vunpack.c.l.b16 %v1140
    %v1204 = vunpack.c.h.b16 %v1140
    %v1205 = vunpack.c.l.b16 %v1141
    %v1206 = vunpack.c.h.b16 %v1141
    %v1207 = vunpack.c.l.b16 %v1142
    %v1208 = vunpack.c.h.b16 %v1142
    %v1209 = vunpack.c.l.b16 %v1143
    %v1210 = vunpack.c.h.b16 %v1143
    %v1211 = vunpack.c.l.b16 %v1144
    %v1212 = vunpack.c.h.b16 %v1144
    %v1213 = vunpack.c.l.b16 %v1145
    %v1214 = vunpack.c.h.b16 %v1145
    %v1215 = vunpack.c.l.b16 %v1146
    %v1216 = vunpack.c.h.b16 %v1146
    %v1217 = vpack.c.b16 %v1203, %v1201
    %v1218 = vpack.c.b16 %v1204, %v1202
    %v1219 = vpack.c.b16 %v1207, %v1205
    %v1220 = vpack.c.b16 %v1208, %v1206
    %v1221 = vpack.c.b16 %v1211, %v1209
    %v1222 = vpack.c.b16 %v1212, %v1210
    %v1223 = vpack.c.b16 %v1215, %v1213
    %v1224 = vpack.c.b16 %v1216, %v1214
    %vm1233 = vcmask 523264
    %v1235 = vsel %vm1233, %v1192, 0
    %1237 = vmatprep.subr.bf16.mxu0 %v1218
    %1238 = vmatpush1.bf16.msra.mxu0 %v1217
    %1239 = vmatprep.subr.bf16.mxu0 %v1220
    %1240 = vmatpush1.bf16.msra.mxu0 %v1219
    %1241 = vmatprep.subr.bf16.mxu0 %v1222
    %1242 = vmatpush1.bf16.msra.mxu0 %v1221
    %1243 = vmatprep.subr.bf16.mxu0 %v1224
    %1244 = vmatpush1.bf16.msra.mxu0 %v1223
    %1245 = vmatprep.subr.bf16.mxu0 0
    %1246 = vmatpush1.bf16.msra.mxu0 0
    %1247 = vmatprep.subr.bf16.mxu0 0
    %1248 = vmatpush1.bf16.msra.mxu0 0
    %1249 = vmatprep.subr.bf16.mxu0 0
    %1250 = vmatpush1.bf16.msra.mxu0 0
    %1251 = vmatprep.subr.bf16.mxu0 0
    %1252 = vmatpush1.bf16.msra.mxu0 0
    %1253 = vmatprep.subr.bf16.mxu0 0
    %1254 = vmatpush1.bf16.msra.mxu0 0
    %1255 = vmatprep.subr.bf16.mxu0 0
    %1256 = vmatpush1.bf16.msra.mxu0 0
    %1257 = vmatprep.subr.bf16.mxu0 0
    %1258 = vmatpush1.bf16.msra.mxu0 0
    %1259 = vmatprep.subr.bf16.mxu0 0
    %1260 = vmatpush1.bf16.msra.mxu0 0
    %1261 = vmatprep.subr.bf16.mxu0 0
    %1262 = vmatpush1.bf16.msra.mxu0 0
    %1263 = vmatprep.subr.bf16.mxu0 0
    %1264 = vmatpush1.bf16.msra.mxu0 0
    %1265 = vmatprep.subr.bf16.mxu0 0
    %1266 = vmatpush1.bf16.msra.mxu0 0
    %1267 = vmatprep.subr.bf16.mxu0 0
    %1268 = vmatpush1.bf16.msra.mxu0 0
    %1269 = vmatprep.mubr.bf16.mxu0 0
    %1270 = vmatmul.mubr.bf16.gmra.mrb[0].mxu0 %v1235
    %v1271 = vpop.f32.mrb[0].mxu0
    %v1272 = vadd.f32 0.0, %v1271
    %v1273 = vpop.f32.mrb[0].mxu0
    %v1274 = vadd.f32 0.0, %v1273
    %v1275 = vpop.f32.mrb[0].mxu0
    %v1276 = vpop.f32.mrb[0].mxu0
    %1277 = vdwg.mxu0
    %v1279 = vlaneseq
    %v1280 = vshrl.u32 %v1279, 7
    %v1281 = vsub.s32 0, %v1280
    %v1282 = vrot.slane %v1148, %v1281
    %v1284 = vadd.f32 %v1274, %v1282
    %v1285 = vxor.u32 %v1284, 2147483648
    %v1286 = vmul.f32 %v1285, 1.442695
    %v1287 = vpow.pop %v1286
    %v1288 = vadd.f32 %v1287, 1.0
    %v1289 = vrcp.pop %v1288
    %v1290 = vmul.f32 1.0, %v1289
    %v1291 = vtanh.pop %v1284
    %v1292 = vmul.f32 %v1290, 0.0
    %1294 = vrot.lane.b32.xlu0 %v1291, 64
    %v1295 = vpop.permute.xlu0 %1294
    %v1297 = vmul.f32 %v1290, %v1295
    %1299 = vrot.lane.b32.xlu0 %v1297, 32
    %v1300 = vpop.permute.xlu0 %1299
    %v1302 = vadd.f32 %v1292, %v1300
    %v1303 = vtanh.pop %v1302
    %1305 = vrot.lane.b32.xlu0 %v1303, 64
    %v1306 = vpop.permute.xlu0 %1305
    %v1308 = vmul.f32 %v1290, %v1306
    %v1310 = vrot.slane %v1109, 1
    %v1312 = vsel %vm1152, %v1310, %v1125
    %v1313 = vadd.f32 %v1312, %v1272
    %v1314 = vadd.f32 %v1313, %v1159
    %v1315 = vxor.u32 %v1314, 2147483648
    %v1316 = vmul.f32 %v1315, 1.442695
    %v1317 = vpow.pop %v1316
    %v1318 = vadd.f32 %v1317, 1.0
    %v1319 = vrcp.pop %v1318
    %v1320 = vmul.f32 1.0, %v1319
    %v1321 = vtanh.pop %v1314
    %v1322 = vmul.f32 %v1320, %v1179
    %1324 = vrot.lane.b32.xlu0 %v1321, 64
    %v1325 = vpop.permute.xlu0 %1324
    %v1327 = vmul.f32 %v1320, %v1325
    %1329 = vrot.lane.b32.xlu0 %v1327, 32
    %v1330 = vpop.permute.xlu0 %1329
    %v1332 = vadd.f32 %v1322, %v1330
    %v1333 = vtanh.pop %v1332
    %1335 = vrot.lane.b32.xlu0 %v1333, 64
    %v1336 = vpop.permute.xlu0 %1335
    %v1338 = vmul.f32 %v1320, %v1336
    %1340 = vrot.lane.b32.xlu0 %v1338, 32
    %v1341 = vpop.permute.xlu0 %1340
    %1344 = vrot.lane.b32.xlu0 %v1308, 64
    %v1345 = vpop.permute.xlu0 %1344
    %v1347 = vsel %vm1190, %v1341, %v1345
    %v1348 = vpack.c.bf16 %v1347, %v1347
    %v1350 = vsel %vm1233, %v1348, 0
    %1352 = vmatprep.subr.bf16.mxu0 %v1218
    %1353 = vmatpush1.bf16.msra.mxu0 %v1217
    %1354 = vmatprep.subr.bf16.mxu0 %v1220
    %1355 = vmatpush1.bf16.msra.mxu0 %v1219
    %1356 = vmatprep.subr.bf16.mxu0 %v1222
    %1357 = vmatpush1.bf16.msra.mxu0 %v1221
    %1358 = vmatprep.subr.bf16.mxu0 %v1224
    %1359 = vmatpush1.bf16.msra.mxu0 %v1223
    %1360 = vmatprep.subr.bf16.mxu0 0
    %1361 = vmatpush1.bf16.msra.mxu0 0
    %1362 = vmatprep.subr.bf16.mxu0 0
    %1363 = vmatpush1.bf16.msra.mxu0 0
    %1364 = vmatprep.subr.bf16.mxu0 0
    %1365 = vmatpush1.bf16.msra.mxu0 0
    %1366 = vmatprep.subr.bf16.mxu0 0
    %1367 = vmatpush1.bf16.msra.mxu0 0
    %1368 = vmatprep.subr.bf16.mxu0 0
    %1369 = vmatpush1.bf16.msra.mxu0 0
    %1370 = vmatprep.subr.bf16.mxu0 0
    %1371 = vmatpush1.bf16.msra.mxu0 0
    %1372 = vmatprep.subr.bf16.mxu0 0
    %1373 = vmatpush1.bf16.msra.mxu0 0
    %1374 = vmatprep.subr.bf16.mxu0 0
    %1375 = vmatpush1.bf16.msra.mxu0 0
    %1376 = vmatprep.subr.bf16.mxu0 0
    %1377 = vmatpush1.bf16.msra.mxu0 0
    %1378 = vmatprep.subr.bf16.mxu0 0
    %1379 = vmatpush1.bf16.msra.mxu0 0
    %1380 = vmatprep.subr.bf16.mxu0 0
    %1381 = vmatpush1.bf16.msra.mxu0 0
    %1382 = vmatprep.subr.bf16.mxu0 0
    %1383 = vmatpush1.bf16.msra.mxu0 0
    %1384 = vmatprep.mubr.bf16.mxu0 0
    %1385 = vmatmul.mubr.bf16.gmra.mrb[0].mxu0 %v1350
    %v1386 = vpop.f32.mrb[0].mxu0
    %v1387 = vadd.f32 0.0, %v1386
    %v1388 = vpop.f32.mrb[0].mxu0
    %v1389 = vadd.f32 0.0, %v1388
    %v1390 = vpop.f32.mrb[0].mxu0
    %v1391 = vpop.f32.mrb[0].mxu0
    %1392 = vdwg.mxu0
    %v1393 = vadd.f32 %v1389, %v1282
    %v1394 = vxor.u32 %v1393, 2147483648
    %v1395 = vmul.f32 %v1394, 1.442695
    %v1396 = vpow.pop %v1395
    %v1397 = vadd.f32 %v1396, 1.0
    %v1398 = vrcp.pop %v1397
    %v1399 = vmul.f32 1.0, %v1398
    %v1400 = vtanh.pop %v1393
    %v1401 = vmul.f32 %v1399, %v1302
    %1403 = vrot.lane.b32.xlu0 %v1400, 64
    %v1404 = vpop.permute.xlu0 %1403
    %v1406 = vmul.f32 %v1399, %v1404
    %1408 = vrot.lane.b32.xlu0 %v1406, 32
    %v1409 = vpop.permute.xlu0 %1408
    %v1411 = vadd.f32 %v1401, %v1409
    %v1412 = vtanh.pop %v1411
    %1414 = vrot.lane.b32.xlu0 %v1412, 64
    %v1415 = vpop.permute.xlu0 %1414
    %v1417 = vmul.f32 %v1399, %v1415
    %v1418 = vrot.slane %v1109, 2
    %v1420 = vrot.slane %v1125, 1
    %v1422 = vsel %vm1152, %v1418, %v1420
    %v1423 = vadd.f32 %v1422, %v1387
    %v1424 = vadd.f32 %v1423, %v1159
    %v1425 = vxor.u32 %v1424, 2147483648
    %v1426 = vmul.f32 %v1425, 1.442695
    %v1427 = vpow.pop %v1426
    %v1428 = vadd.f32 %v1427, 1.0
    %v1429 = vrcp.pop %v1428
    %v1430 = vmul.f32 1.0, %v1429
    %v1431 = vtanh.pop %v1424
    %v1432 = vmul.f32 %v1430, %v1332
    %1434 = vrot.lane.b32.xlu0 %v1431, 64
    %v1435 = vpop.permute.xlu0 %1434
    %v1437 = vmul.f32 %v1430, %v1435
    %1439 = vrot.lane.b32.xlu0 %v1437, 32
    %v1440 = vpop.permute.xlu0 %1439
    %v1442 = vadd.f32 %v1432, %v1440
    %v1443 = vtanh.pop %v1442
    %1445 = vrot.lane.b32.xlu0 %v1443, 64
    %v1446 = vpop.permute.xlu0 %1445
    %v1448 = vmul.f32 %v1430, %v1446
    %1450 = vrot.lane.b32.xlu0 %v1448, 32
    %v1451 = vpop.permute.xlu0 %1450
    %1454 = vrot.lane.b32.xlu0 %v1417, 64
    %v1455 = vpop.permute.xlu0 %1454
    %v1457 = vsel %vm1190, %v1451, %v1455
    %v1458 = vpack.c.bf16 %v1457, %v1457
    %v1460 = vsel %vm1233, %v1458, 0
    %1462 = vmatprep.subr.bf16.mxu0 %v1218
    %1463 = vmatpush1.bf16.msra.mxu0 %v1217
    %1464 = vmatprep.subr.bf16.mxu0 %v1220
    %1465 = vmatpush1.bf16.msra.mxu0 %v1219
    %1466 = vmatprep.subr.bf16.mxu0 %v1222
    %1467 = vmatpush1.bf16.msra.mxu0 %v1221
    %1468 = vmatprep.subr.bf16.mxu0 %v1224
    %1469 = vmatpush1.bf16.msra.mxu0 %v1223
    %1470 = vmatprep.subr.bf16.mxu0 0
    %1471 = vmatpush1.bf16.msra.mxu0 0
    %1472 = vmatprep.subr.bf16.mxu0 0
    %1473 = vmatpush1.bf16.msra.mxu0 0
    %1474 = vmatprep.subr.bf16.mxu0 0
    %1475 = vmatpush1.bf16.msra.mxu0 0
    %1476 = vmatprep.subr.bf16.mxu0 0
    %1477 = vmatpush1.bf16.msra.mxu0 0
    %1478 = vmatprep.subr.bf16.mxu0 0
    %1479 = vmatpush1.bf16.msra.mxu0 0
    %1480 = vmatprep.subr.bf16.mxu0 0
    %1481 = vmatpush1.bf16.msra.mxu0 0
    %1482 = vmatprep.subr.bf16.mxu0 0
    %1483 = vmatpush1.bf16.msra.mxu0 0
    %1484 = vmatprep.subr.bf16.mxu0 0
    %1485 = vmatpush1.bf16.msra.mxu0 0
    %1486 = vmatprep.subr.bf16.mxu0 0
    %1487 = vmatpush1.bf16.msra.mxu0 0
    %1488 = vmatprep.subr.bf16.mxu0 0
    %1489 = vmatpush1.bf16.msra.mxu0 0
    %1490 = vmatprep.subr.bf16.mxu0 0
    %1491 = vmatpush1.bf16.msra.mxu0 0
    %1492 = vmatprep.subr.bf16.mxu0 0
    %1493 = vmatpush1.bf16.msra.mxu0 0
    %1494 = vmatprep.mubr.bf16.mxu0 0
    %1495 = vmatmul.mubr.bf16.gmra.mrb[0].mxu0 %v1460
    %v1496 = vpop.f32.mrb[0].mxu0
    %v1497 = vadd.f32 0.0, %v1496
    %v1498 = vpop.f32.mrb[0].mxu0
    %v1499 = vadd.f32 0.0, %v1498
    %v1500 = vpop.f32.mrb[0].mxu0
    %v1501 = vpop.f32.mrb[0].mxu0
    %1502 = vdwg.mxu0
    %v1503 = vadd.f32 %v1499, %v1282
    %v1504 = vxor.u32 %v1503, 2147483648
    %v1505 = vmul.f32 %v1504, 1.442695
    %v1506 = vpow.pop %v1505
    %v1507 = vadd.f32 %v1506, 1.0
    %v1508 = vrcp.pop %v1507
    %v1509 = vmul.f32 1.0, %v1508
    %v1510 = vtanh.pop %v1503
    %v1511 = vmul.f32 %v1509, %v1411
    %1513 = vrot.lane.b32.xlu0 %v1510, 64
    %v1514 = vpop.permute.xlu0 %1513
    %v1516 = vmul.f32 %v1509, %v1514
    %1518 = vrot.lane.b32.xlu0 %v1516, 32
    %v1519 = vpop.permute.xlu0 %1518
    %v1521 = vadd.f32 %v1511, %v1519
    %v1522 = vtanh.pop %v1521
    %1524 = vrot.lane.b32.xlu0 %v1522, 64
    %v1525 = vpop.permute.xlu0 %1524
    %v1527 = vmul.f32 %v1509, %v1525
    %v1528 = vrot.slane %v1109, 3
    %v1530 = vrot.slane %v1125, 2
    %v1532 = vsel %vm1152, %v1528, %v1530
    %v1533 = vadd.f32 %v1532, %v1497
    %v1534 = vadd.f32 %v1533, %v1159
    %v1535 = vxor.u32 %v1534, 2147483648
    %v1536 = vmul.f32 %v1535, 1.442695
    %v1537 = vpow.pop %v1536
    %v1538 = vadd.f32 %v1537, 1.0
    %v1539 = vrcp.pop %v1538
    %v1540 = vmul.f32 1.0, %v1539
    %v1541 = vtanh.pop %v1534
    %v1542 = vmul.f32 %v1540, %v1442
    %1544 = vrot.lane.b32.xlu0 %v1541, 64
    %v1545 = vpop.permute.xlu0 %1544
    %v1547 = vmul.f32 %v1540, %v1545
    %1549 = vrot.lane.b32.xlu0 %v1547, 32
    %v1550 = vpop.permute.xlu0 %1549
    %v1552 = vadd.f32 %v1542, %v1550
    %v1553 = vtanh.pop %v1552
    %1555 = vrot.lane.b32.xlu0 %v1553, 64
    %v1556 = vpop.permute.xlu0 %1555
    %v1558 = vmul.f32 %v1540, %v1556
    %1560 = vrot.lane.b32.xlu0 %v1558, 32
    %v1561 = vpop.permute.xlu0 %1560
    %1564 = vrot.lane.b32.xlu0 %v1527, 64
    %v1565 = vpop.permute.xlu0 %1564
    %v1567 = vsel %vm1190, %v1561, %v1565
    %v1568 = vpack.c.bf16 %v1567, %v1567
    %v1570 = vsel %vm1233, %v1568, 0
    %1572 = vmatprep.subr.bf16.mxu0 %v1218
    %1573 = vmatpush1.bf16.msra.mxu0 %v1217
    %1574 = vmatprep.subr.bf16.mxu0 %v1220
    %1575 = vmatpush1.bf16.msra.mxu0 %v1219
    %1576 = vmatprep.subr.bf16.mxu0 %v1222
    %1577 = vmatpush1.bf16.msra.mxu0 %v1221
    %1578 = vmatprep.subr.bf16.mxu0 %v1224
    %1579 = vmatpush1.bf16.msra.mxu0 %v1223
    %1580 = vmatprep.subr.bf16.mxu0 0
    %1581 = vmatpush1.bf16.msra.mxu0 0
    %1582 = vmatprep.subr.bf16.mxu0 0
    %1583 = vmatpush1.bf16.msra.mxu0 0
    %1584 = vmatprep.subr.bf16.mxu0 0
    %1585 = vmatpush1.bf16.msra.mxu0 0
    %1586 = vmatprep.subr.bf16.mxu0 0
    %1587 = vmatpush1.bf16.msra.mxu0 0
    %1588 = vmatprep.subr.bf16.mxu0 0
    %1589 = vmatpush1.bf16.msra.mxu0 0
    %1590 = vmatprep.subr.bf16.mxu0 0
    %1591 = vmatpush1.bf16.msra.mxu0 0
    %1592 = vmatprep.subr.bf16.mxu0 0
    %1593 = vmatpush1.bf16.msra.mxu0 0
    %1594 = vmatprep.subr.bf16.mxu0 0
    %1595 = vmatpush1.bf16.msra.mxu0 0
    %1596 = vmatprep.subr.bf16.mxu0 0
    %1597 = vmatpush1.bf16.msra.mxu0 0
    %1598 = vmatprep.subr.bf16.mxu0 0
    %1599 = vmatpush1.bf16.msra.mxu0 0
    %1600 = vmatprep.subr.bf16.mxu0 0
    %1601 = vmatpush1.bf16.msra.mxu0 0
    %1602 = vmatprep.subr.bf16.mxu0 0
    %1603 = vmatpush1.bf16.msra.mxu0 0
    %1604 = vmatprep.mubr.bf16.mxu0 0
    %1605 = vmatmul.mubr.bf16.gmra.mrb[0].mxu0 %v1570
    %v1606 = vpop.f32.mrb[0].mxu0
    %v1607 = vadd.f32 0.0, %v1606
    %v1608 = vpop.f32.mrb[0].mxu0
    %v1609 = vadd.f32 0.0, %v1608
    %v1610 = vpop.f32.mrb[0].mxu0
    %v1611 = vpop.f32.mrb[0].mxu0
    %1612 = vdwg.mxu0
    %v1613 = vadd.f32 %v1609, %v1282
    %v1614 = vxor.u32 %v1613, 2147483648
    %v1615 = vmul.f32 %v1614, 1.442695
    %v1616 = vpow.pop %v1615
    %v1617 = vadd.f32 %v1616, 1.0
    %v1618 = vrcp.pop %v1617
    %v1619 = vmul.f32 1.0, %v1618
    %v1620 = vtanh.pop %v1613
    %v1621 = vmul.f32 %v1619, %v1521
    %1623 = vrot.lane.b32.xlu0 %v1620, 64
    %v1624 = vpop.permute.xlu0 %1623
    %v1626 = vmul.f32 %v1619, %v1624
    %1628 = vrot.lane.b32.xlu0 %v1626, 32
    %v1629 = vpop.permute.xlu0 %1628
    %v1631 = vadd.f32 %v1621, %v1629
    %v1632 = vtanh.pop %v1631
    %1634 = vrot.lane.b32.xlu0 %v1632, 64
    %v1635 = vpop.permute.xlu0 %1634
    %v1637 = vmul.f32 %v1619, %v1635
    %v1638 = vrot.slane %v1109, 4
    %v1640 = vrot.slane %v1125, 3
    %v1642 = vsel %vm1152, %v1638, %v1640
    %v1643 = vadd.f32 %v1642, %v1607
    %v1644 = vadd.f32 %v1643, %v1159
    %v1645 = vxor.u32 %v1644, 2147483648
    %v1646 = vmul.f32 %v1645, 1.442695
    %v1647 = vpow.pop %v1646
    %v1648 = vadd.f32 %v1647, 1.0
    %v1649 = vrcp.pop %v1648
    %v1650 = vmul.f32 1.0, %v1649
    %v1651 = vtanh.pop %v1644
    %v1652 = vmul.f32 %v1650, %v1552
    %1654 = vrot.lane.b32.xlu0 %v1651, 64
    %v1655 = vpop.permute.xlu0 %1654
    %v1657 = vmul.f32 %v1650, %v1655
    %1659 = vrot.lane.b32.xlu0 %v1657, 32
    %v1660 = vpop.permute.xlu0 %1659
    %v1662 = vadd.f32 %v1652, %v1660
    %v1663 = vtanh.pop %v1662
    %1665 = vrot.lane.b32.xlu0 %v1663, 64
    %v1666 = vpop.permute.xlu0 %1665
    %v1668 = vmul.f32 %v1650, %v1666
    %1670 = vrot.lane.b32.xlu0 %v1668, 32
    %v1671 = vpop.permute.xlu0 %1670
    %1674 = vrot.lane.b32.xlu0 %v1637, 64
    %v1675 = vpop.permute.xlu0 %1674
    %v1677 = vsel %vm1190, %v1671, %v1675
    %v1678 = vpack.c.bf16 %v1677, %v1677
    %v1680 = vsel %vm1233, %v1678, 0
    %1682 = vmatprep.subr.bf16.mxu0 %v1218
    %1683 = vmatpush1.bf16.msra.mxu0 %v1217
    %1684 = vmatprep.subr.bf16.mxu0 %v1220
    %1685 = vmatpush1.bf16.msra.mxu0 %v1219
    %1686 = vmatprep.subr.bf16.mxu0 %v1222
    %1687 = vmatpush1.bf16.msra.mxu0 %v1221
    %1688 = vmatprep.subr.bf16.mxu0 %v1224
    %1689 = vmatpush1.bf16.msra.mxu0 %v1223
    %1690 = vmatprep.subr.bf16.mxu0 0
    %1691 = vmatpush1.bf16.msra.mxu0 0
    %1692 = vmatprep.subr.bf16.mxu0 0
    %1693 = vmatpush1.bf16.msra.mxu0 0
    %1694 = vmatprep.subr.bf16.mxu0 0
    %1695 = vmatpush1.bf16.msra.mxu0 0
    %1696 = vmatprep.subr.bf16.mxu0 0
    %1697 = vmatpush1.bf16.msra.mxu0 0
    %1698 = vmatprep.subr.bf16.mxu0 0
    %1699 = vmatpush1.bf16.msra.mxu0 0
    %1700 = vmatprep.subr.bf16.mxu0 0
    %1701 = vmatpush1.bf16.msra.mxu0 0
    %1702 = vmatprep.subr.bf16.mxu0 0
    %1703 = vmatpush1.bf16.msra.mxu0 0
    %1704 = vmatprep.subr.bf16.mxu0 0
    %1705 = vmatpush1.bf16.msra.mxu0 0
    %1706 = vmatprep.subr.bf16.mxu0 0
    %1707 = vmatpush1.bf16.msra.mxu0 0
    %1708 = vmatprep.subr.bf16.mxu0 0
    %1709 = vmatpush1.bf16.msra.mxu0 0
    %1710 = vmatprep.subr.bf16.mxu0 0
    %1711 = vmatpush1.bf16.msra.mxu0 0
    %1712 = vmatprep.subr.bf16.mxu0 0
    %1713 = vmatpush1.bf16.msra.mxu0 0
    %1714 = vmatprep.mubr.bf16.mxu0 0
    %1715 = vmatmul.mubr.bf16.gmra.mrb[0].mxu0 %v1680
    %v1716 = vpop.f32.mrb[0].mxu0
    %v1717 = vadd.f32 0.0, %v1716
    %v1718 = vpop.f32.mrb[0].mxu0
    %v1719 = vadd.f32 0.0, %v1718
    %v1720 = vpop.f32.mrb[0].mxu0
    %v1721 = vpop.f32.mrb[0].mxu0
    %1722 = vdwg.mxu0
    %v1723 = vadd.f32 %v1719, %v1282
    %v1724 = vxor.u32 %v1723, 2147483648
    %v1725 = vmul.f32 %v1724, 1.442695
    %v1726 = vpow.pop %v1725
    %v1727 = vadd.f32 %v1726, 1.0
    %v1728 = vrcp.pop %v1727
    %v1729 = vmul.f32 1.0, %v1728
    %v1730 = vtanh.pop %v1723
    %v1731 = vmul.f32 %v1729, %v1631
    %1733 = vrot.lane.b32.xlu0 %v1730, 64
    %v1734 = vpop.permute.xlu0 %1733
    %v1736 = vmul.f32 %v1729, %v1734
    %1738 = vrot.lane.b32.xlu0 %v1736, 32
    %v1739 = vpop.permute.xlu0 %1738
    %v1741 = vadd.f32 %v1731, %v1739
    %v1742 = vtanh.pop %v1741
    %1744 = vrot.lane.b32.xlu0 %v1742, 64
    %v1745 = vpop.permute.xlu0 %1744
    %v1747 = vmul.f32 %v1729, %v1745
    %v1748 = vrot.slane %v1109, 5
    %v1750 = vrot.slane %v1125, 4
    %v1752 = vsel %vm1152, %v1748, %v1750
    %v1753 = vadd.f32 %v1752, %v1717
    %v1754 = vadd.f32 %v1753, %v1159
    %v1755 = vxor.u32 %v1754, 2147483648
    %v1756 = vmul.f32 %v1755, 1.442695
    %v1757 = vpow.pop %v1756
    %v1758 = vadd.f32 %v1757, 1.0
    %v1759 = vrcp.pop %v1758
    %v1760 = vmul.f32 1.0, %v1759
    %v1761 = vtanh.pop %v1754
    %v1762 = vmul.f32 %v1760, %v1662
    %1764 = vrot.lane.b32.xlu0 %v1761, 64
    %v1765 = vpop.permute.xlu0 %1764
    %v1767 = vmul.f32 %v1760, %v1765
    %1769 = vrot.lane.b32.xlu0 %v1767, 32
    %v1770 = vpop.permute.xlu0 %1769
    %v1772 = vadd.f32 %v1762, %v1770
    %v1773 = vtanh.pop %v1772
    %1775 = vrot.lane.b32.xlu0 %v1773, 64
    %v1776 = vpop.permute.xlu0 %1775
    %v1778 = vmul.f32 %v1760, %v1776
    %1780 = vrot.lane.b32.xlu0 %v1778, 32
    %v1781 = vpop.permute.xlu0 %1780
    %1784 = vrot.lane.b32.xlu0 %v1747, 64
    %v1785 = vpop.permute.xlu0 %1784
    %v1787 = vsel %vm1190, %v1781, %v1785
    %v1788 = vpack.c.bf16 %v1787, %v1787
    %v1790 = vsel %vm1233, %v1788, 0
    %1792 = vmatprep.subr.bf16.mxu0 %v1218
    %1793 = vmatpush1.bf16.msra.mxu0 %v1217
    %1794 = vmatprep.subr.bf16.mxu0 %v1220
    %1795 = vmatpush1.bf16.msra.mxu0 %v1219
    %1796 = vmatprep.subr.bf16.mxu0 %v1222
    %1797 = vmatpush1.bf16.msra.mxu0 %v1221
    %1798 = vmatprep.subr.bf16.mxu0 %v1224
    %1799 = vmatpush1.bf16.msra.mxu0 %v1223
    %1800 = vmatprep.subr.bf16.mxu0 0
    %1801 = vmatpush1.bf16.msra.mxu0 0
    %1802 = vmatprep.subr.bf16.mxu0 0
    %1803 = vmatpush1.bf16.msra.mxu0 0
    %1804 = vmatprep.subr.bf16.mxu0 0
    %1805 = vmatpush1.bf16.msra.mxu0 0
    %1806 = vmatprep.subr.bf16.mxu0 0
    %1807 = vmatpush1.bf16.msra.mxu0 0
    %1808 = vmatprep.subr.bf16.mxu0 0
    %1809 = vmatpush1.bf16.msra.mxu0 0
    %1810 = vmatprep.subr.bf16.mxu0 0
    %1811 = vmatpush1.bf16.msra.mxu0 0
    %1812 = vmatprep.subr.bf16.mxu0 0
    %1813 = vmatpush1.bf16.msra.mxu0 0
    %1814 = vmatprep.subr.bf16.mxu0 0
    %1815 = vmatpush1.bf16.msra.mxu0 0
    %1816 = vmatprep.subr.bf16.mxu0 0
    %1817 = vmatpush1.bf16.msra.mxu0 0
    %1818 = vmatprep.subr.bf16.mxu0 0
    %1819 = vmatpush1.bf16.msra.mxu0 0
    %1820 = vmatprep.subr.bf16.mxu0 0
    %1821 = vmatpush1.bf16.msra.mxu0 0
    %1822 = vmatprep.subr.bf16.mxu0 0
    %1823 = vmatpush1.bf16.msra.mxu0 0
    %1824 = vmatprep.mubr.bf16.mxu0 0
    %1825 = vmatmul.mubr.bf16.gmra.mrb[0].mxu0 %v1790
    %v1826 = vpop.f32.mrb[0].mxu0
    %v1827 = vadd.f32 0.0, %v1826
    %v1828 = vpop.f32.mrb[0].mxu0
    %v1829 = vadd.f32 0.0, %v1828
    %v1830 = vpop.f32.mrb[0].mxu0
    %v1831 = vpop.f32.mrb[0].mxu0
    %1832 = vdwg.mxu0
    %v1833 = vadd.f32 %v1829, %v1282
    %v1834 = vxor.u32 %v1833, 2147483648
    %v1835 = vmul.f32 %v1834, 1.442695
    %v1836 = vpow.pop %v1835
    %v1837 = vadd.f32 %v1836, 1.0
    %v1838 = vrcp.pop %v1837
    %v1839 = vmul.f32 1.0, %v1838
    %v1840 = vtanh.pop %v1833
    %v1841 = vmul.f32 %v1839, %v1741
    %1843 = vrot.lane.b32.xlu0 %v1840, 64
    %v1844 = vpop.permute.xlu0 %1843
    %v1846 = vmul.f32 %v1839, %v1844
    %1848 = vrot.lane.b32.xlu0 %v1846, 32
    %v1849 = vpop.permute.xlu0 %1848
    %v1851 = vadd.f32 %v1841, %v1849
    %v1852 = vtanh.pop %v1851
    %1854 = vrot.lane.b32.xlu0 %v1852, 64
    %v1855 = vpop.permute.xlu0 %1854
    %v1857 = vmul.f32 %v1839, %v1855
    %v1858 = vrot.slane %v1109, 6
    %v1860 = vrot.slane %v1125, 5
    %v1862 = vsel %vm1152, %v1858, %v1860
    %v1863 = vadd.f32 %v1862, %v1827
    %v1864 = vadd.f32 %v1863, %v1159
    %v1865 = vxor.u32 %v1864, 2147483648
    %v1866 = vmul.f32 %v1865, 1.442695
    %v1867 = vpow.pop %v1866
    %v1868 = vadd.f32 %v1867, 1.0
    %v1869 = vrcp.pop %v1868
    %v1870 = vmul.f32 1.0, %v1869
    %v1871 = vtanh.pop %v1864
    %v1872 = vmul.f32 %v1870, %v1772
    %1874 = vrot.lane.b32.xlu0 %v1871, 64
    %v1875 = vpop.permute.xlu0 %1874
    %v1877 = vmul.f32 %v1870, %v1875
    %1879 = vrot.lane.b32.xlu0 %v1877, 32
    %v1880 = vpop.permute.xlu0 %1879
    %v1882 = vadd.f32 %v1872, %v1880
    %v1883 = vtanh.pop %v1882
    %1885 = vrot.lane.b32.xlu0 %v1883, 64
    %v1886 = vpop.permute.xlu0 %1885
    %v1888 = vmul.f32 %v1870, %v1886
    %1890 = vrot.lane.b32.xlu0 %v1888, 32
    %v1891 = vpop.permute.xlu0 %1890
    %1894 = vrot.lane.b32.xlu0 %v1857, 64
    %v1895 = vpop.permute.xlu0 %1894
    %v1897 = vsel %vm1190, %v1891, %v1895
    %v1898 = vpack.c.bf16 %v1897, %v1897
    %v1900 = vsel %vm1233, %v1898, 0
    %1902 = vmatprep.subr.bf16.mxu0 %v1218
    %1903 = vmatpush1.bf16.msra.mxu0 %v1217
    %1904 = vmatprep.subr.bf16.mxu0 %v1220
    %1905 = vmatpush1.bf16.msra.mxu0 %v1219
    %1906 = vmatprep.subr.bf16.mxu0 %v1222
    %1907 = vmatpush1.bf16.msra.mxu0 %v1221
    %1908 = vmatprep.subr.bf16.mxu0 %v1224
    %1909 = vmatpush1.bf16.msra.mxu0 %v1223
    %1910 = vmatprep.subr.bf16.mxu0 0
    %1911 = vmatpush1.bf16.msra.mxu0 0
    %1912 = vmatprep.subr.bf16.mxu0 0
    %1913 = vmatpush1.bf16.msra.mxu0 0
    %1914 = vmatprep.subr.bf16.mxu0 0
    %1915 = vmatpush1.bf16.msra.mxu0 0
    %1916 = vmatprep.subr.bf16.mxu0 0
    %1917 = vmatpush1.bf16.msra.mxu0 0
    %1918 = vmatprep.subr.bf16.mxu0 0
    %1919 = vmatpush1.bf16.msra.mxu0 0
    %1920 = vmatprep.subr.bf16.mxu0 0
    %1921 = vmatpush1.bf16.msra.mxu0 0
    %1922 = vmatprep.subr.bf16.mxu0 0
    %1923 = vmatpush1.bf16.msra.mxu0 0
    %1924 = vmatprep.subr.bf16.mxu0 0
    %1925 = vmatpush1.bf16.msra.mxu0 0
    %1926 = vmatprep.subr.bf16.mxu0 0
    %1927 = vmatpush1.bf16.msra.mxu0 0
    %1928 = vmatprep.subr.bf16.mxu0 0
    %1929 = vmatpush1.bf16.msra.mxu0 0
    %1930 = vmatprep.subr.bf16.mxu0 0
    %1931 = vmatpush1.bf16.msra.mxu0 0
    %1932 = vmatprep.subr.bf16.mxu0 0
    %1933 = vmatpush1.bf16.msra.mxu0 0
    %1934 = vmatprep.mubr.bf16.mxu0 0
    %1935 = vmatmul.mubr.bf16.gmra.mrb[0].mxu0 %v1900
    %v1936 = vpop.f32.mrb[0].mxu0
    %v1937 = vadd.f32 0.0, %v1936
    %v1938 = vpop.f32.mrb[0].mxu0
    %v1939 = vadd.f32 0.0, %v1938
    %v1940 = vpop.f32.mrb[0].mxu0
    %v1941 = vpop.f32.mrb[0].mxu0
    %1942 = vdwg.mxu0
    %v1943 = vadd.f32 %v1939, %v1282
    %v1944 = vxor.u32 %v1943, 2147483648
    %v1945 = vmul.f32 %v1944, 1.442695
    %v1946 = vpow.pop %v1945
    %v1947 = vadd.f32 %v1946, 1.0
    %v1948 = vrcp.pop %v1947
    %v1949 = vmul.f32 1.0, %v1948
    %v1950 = vtanh.pop %v1943
    %v1951 = vmul.f32 %v1949, %v1851
    %1953 = vrot.lane.b32.xlu0 %v1950, 64
    %v1954 = vpop.permute.xlu0 %1953
    %v1956 = vmul.f32 %v1949, %v1954
    %1958 = vrot.lane.b32.xlu0 %v1956, 32
    %v1959 = vpop.permute.xlu0 %1958
    %v1961 = vadd.f32 %v1951, %v1959
    %v1962 = vtanh.pop %v1961
    %1964 = vrot.lane.b32.xlu0 %v1962, 64
    %v1965 = vpop.permute.xlu0 %1964
    %v1967 = vmul.f32 %v1949, %v1965
    %v1968 = vrot.slane %v1109, 7
    %v1970 = vrot.slane %v1125, 6
    %v1972 = vsel %vm1152, %v1968, %v1970
    %v1973 = vadd.f32 %v1972, %v1937
    %v1974 = vadd.f32 %v1973, %v1159
    %v1975 = vxor.u32 %v1974, 2147483648
    %v1976 = vmul.f32 %v1975, 1.442695
    %v1977 = vpow.pop %v1976
    %v1978 = vadd.f32 %v1977, 1.0
    %v1979 = vrcp.pop %v1978
    %v1980 = vmul.f32 1.0, %v1979
    %v1981 = vtanh.pop %v1974
    %v1982 = vmul.f32 %v1980, %v1882
    %1984 = vrot.lane.b32.xlu0 %v1981, 64
    %v1985 = vpop.permute.xlu0 %1984
    %v1987 = vmul.f32 %v1980, %v1985
    %1989 = vrot.lane.b32.xlu0 %v1987, 32
    %v1990 = vpop.permute.xlu0 %1989
    %v1992 = vadd.f32 %v1982, %v1990
    %v1993 = vtanh.pop %v1992
    %1995 = vrot.lane.b32.xlu0 %v1993, 64
    %v1996 = vpop.permute.xlu0 %1995
    %v1998 = vmul.f32 %v1980, %v1996
    %2000 = vrot.lane.b32.xlu0 %v1998, 32
    %v2001 = vpop.permute.xlu0 %2000
    %2004 = vrot.lane.b32.xlu0 %v1967, 64
    %v2005 = vpop.permute.xlu0 %2004
    %v2007 = vsel %vm1190, %v2001, %v2005
    %v2008 = vpack.c.bf16 %v2007, %v2007
    %v2010 = vsel %vm1233, %v2008, 0
    %2012 = vmatprep.subr.bf16.mxu0 %v1218
    %2013 = vmatpush1.bf16.msra.mxu0 %v1217
    %2014 = vmatprep.subr.bf16.mxu0 %v1220
    %2015 = vmatpush1.bf16.msra.mxu0 %v1219
    %2016 = vmatprep.subr.bf16.mxu0 %v1222
    %2017 = vmatpush1.bf16.msra.mxu0 %v1221
    %2018 = vmatprep.subr.bf16.mxu0 %v1224
    %2019 = vmatpush1.bf16.msra.mxu0 %v1223
    %2020 = vmatprep.subr.bf16.mxu0 0
    %2021 = vmatpush1.bf16.msra.mxu0 0
    %2022 = vmatprep.subr.bf16.mxu0 0
    %2023 = vmatpush1.bf16.msra.mxu0 0
    %2024 = vmatprep.subr.bf16.mxu0 0
    %2025 = vmatpush1.bf16.msra.mxu0 0
    %2026 = vmatprep.subr.bf16.mxu0 0
    %2027 = vmatpush1.bf16.msra.mxu0 0
    %2028 = vmatprep.subr.bf16.mxu0 0
    %2029 = vmatpush1.bf16.msra.mxu0 0
    %2030 = vmatprep.subr.bf16.mxu0 0
    %2031 = vmatpush1.bf16.msra.mxu0 0
    %2032 = vmatprep.subr.bf16.mxu0 0
    %2033 = vmatpush1.bf16.msra.mxu0 0
    %2034 = vmatprep.subr.bf16.mxu0 0
    %2035 = vmatpush1.bf16.msra.mxu0 0
    %2036 = vmatprep.subr.bf16.mxu0 0
    %2037 = vmatpush1.bf16.msra.mxu0 0
    %2038 = vmatprep.subr.bf16.mxu0 0
    %2039 = vmatpush1.bf16.msra.mxu0 0
    %2040 = vmatprep.subr.bf16.mxu0 0
    %2041 = vmatpush1.bf16.msra.mxu0 0
    %2042 = vmatprep.subr.bf16.mxu0 0
    %2043 = vmatpush1.bf16.msra.mxu0 0
    %2044 = vmatprep.mubr.bf16.mxu0 0
    %2045 = vmatmul.mubr.bf16.gmra.mrb[0].mxu0 %v2010
    %v2046 = vpop.f32.mrb[0].mxu0
    %v2047 = vadd.f32 0.0, %v2046
    %v2048 = vpop.f32.mrb[0].mxu0
    %v2049 = vadd.f32 0.0, %v2048
    %v2050 = vpop.f32.mrb[0].mxu0
    %v2051 = vpop.f32.mrb[0].mxu0
    %2052 = vdwg.mxu0
    %v2053 = vadd.f32 %v2049, %v1282
    %v2054 = vxor.u32 %v2053, 2147483648
    %v2055 = vmul.f32 %v2054, 1.442695
    %v2056 = vpow.pop %v2055
    %v2057 = vadd.f32 %v2056, 1.0
    %v2058 = vrcp.pop %v2057
    %v2059 = vmul.f32 1.0, %v2058
    %v2060 = vtanh.pop %v2053
    %v2061 = vmul.f32 %v2059, %v1961
    %2063 = vrot.lane.b32.xlu0 %v2060, 64
    %v2064 = vpop.permute.xlu0 %2063
    %v2066 = vmul.f32 %v2059, %v2064
    %2068 = vrot.lane.b32.xlu0 %v2066, 32
    %v2069 = vpop.permute.xlu0 %2068
    %v2071 = vadd.f32 %v2061, %v2069
    %v2072 = vtanh.pop %v2071
    %2074 = vrot.lane.b32.xlu0 %v2072, 64
    %v2075 = vpop.permute.xlu0 %2074
    %v2077 = vmul.f32 %v2059, %v2075
    %v2079 = vrot.slane %v1128, 7
    %v2081 = vsel %vm1152, %v1112, %v2079
    %v2082 = vadd.f32 %v2081, %v2047
    %v2083 = vadd.f32 %v2082, %v1159
    %v2084 = vxor.u32 %v2083, 2147483648
    %v2085 = vmul.f32 %v2084, 1.442695
    %v2086 = vpow.pop %v2085
    %v2087 = vadd.f32 %v2086, 1.0
    %v2088 = vrcp.pop %v2087
    %v2089 = vmul.f32 1.0, %v2088
    %v2090 = vtanh.pop %v2083
    %v2091 = vmul.f32 %v2089, %v1992
    %2093 = vrot.lane.b32.xlu0 %v2090, 64
    %v2094 = vpop.permute.xlu0 %2093
    %v2096 = vmul.f32 %v2089, %v2094
    %2098 = vrot.lane.b32.xlu0 %v2096, 32
    %v2099 = vpop.permute.xlu0 %2098
    %v2101 = vadd.f32 %v2091, %v2099
    %v2102 = vtanh.pop %v2101
    %2104 = vrot.lane.b32.xlu0 %v2102, 64
    %v2105 = vpop.permute.xlu0 %2104
    %v2107 = vmul.f32 %v2089, %v2105
    %2109 = vrot.lane.b32.xlu0 %v2107, 32
    %v2110 = vpop.permute.xlu0 %2109
    %2113 = vrot.lane.b32.xlu0 %v2077, 64
    %v2114 = vpop.permute.xlu0 %2113
    %v2116 = vsel %vm1190, %v2110, %v2114
    %v2117 = vpack.c.bf16 %v2116, %v2116
    %v2119 = vsel %vm1233, %v2117, 0
    %2121 = vmatprep.subr.bf16.mxu0 %v1218
    %2122 = vmatpush1.bf16.msra.mxu0 %v1217
    %2123 = vmatprep.subr.bf16.mxu0 %v1220
    %2124 = vmatpush1.bf16.msra.mxu0 %v1219
    %2125 = vmatprep.subr.bf16.mxu0 %v1222
    %2126 = vmatpush1.bf16.msra.mxu0 %v1221
    %2127 = vmatprep.subr.bf16.mxu0 %v1224
    %2128 = vmatpush1.bf16.msra.mxu0 %v1223
    %2129 = vmatprep.subr.bf16.mxu0 0
    %2130 = vmatpush1.bf16.msra.mxu0 0
    %2131 = vmatprep.subr.bf16.mxu0 0
    %2132 = vmatpush1.bf16.msra.mxu0 0
    %2133 = vmatprep.subr.bf16.mxu0 0
    %2134 = vmatpush1.bf16.msra.mxu0 0
    %2135 = vmatprep.subr.bf16.mxu0 0
    %2136 = vmatpush1.bf16.msra.mxu0 0
    %2137 = vmatprep.subr.bf16.mxu0 0
    %2138 = vmatpush1.bf16.msra.mxu0 0
    %2139 = vmatprep.subr.bf16.mxu0 0
    %2140 = vmatpush1.bf16.msra.mxu0 0
    %2141 = vmatprep.subr.bf16.mxu0 0
    %2142 = vmatpush1.bf16.msra.mxu0 0
    %2143 = vmatprep.subr.bf16.mxu0 0
    %2144 = vmatpush1.bf16.msra.mxu0 0
    %2145 = vmatprep.subr.bf16.mxu0 0
    %2146 = vmatpush1.bf16.msra.mxu0 0
    %2147 = vmatprep.subr.bf16.mxu0 0
    %2148 = vmatpush1.bf16.msra.mxu0 0
    %2149 = vmatprep.subr.bf16.mxu0 0
    %2150 = vmatpush1.bf16.msra.mxu0 0
    %2151 = vmatprep.subr.bf16.mxu0 0
    %2152 = vmatpush1.bf16.msra.mxu0 0
    %2153 = vmatprep.mubr.bf16.mxu0 0
    %2154 = vmatmul.mubr.bf16.gmra.mrb[0].mxu0 %v2119
    %v2155 = vpop.f32.mrb[0].mxu0
    %v2156 = vadd.f32 0.0, %v2155
    %v2157 = vpop.f32.mrb[0].mxu0
    %v2158 = vadd.f32 0.0, %v2157
    %v2159 = vpop.f32.mrb[0].mxu0
    %v2160 = vpop.f32.mrb[0].mxu0
    %2161 = vdwg.mxu0
    %v2162 = vadd.f32 %v2158, %v1282
    %v2163 = vxor.u32 %v2162, 2147483648
    %v2164 = vmul.f32 %v2163, 1.442695
    %v2165 = vpow.pop %v2164
    %v2166 = vadd.f32 %v2165, 1.0
    %v2167 = vrcp.pop %v2166
    %v2168 = vmul.f32 1.0, %v2167
    %v2169 = vtanh.pop %v2162
    %v2170 = vmul.f32 %v2168, %v2071
    %2172 = vrot.lane.b32.xlu0 %v2169, 64
    %v2173 = vpop.permute.xlu0 %2172
    %v2175 = vmul.f32 %v2168, %v2173
    %2177 = vrot.lane.b32.xlu0 %v2175, 32
    %v2178 = vpop.permute.xlu0 %2177
    %v2180 = vadd.f32 %v2170, %v2178
    %v2181 = vtanh.pop %v2180
    %2183 = vrot.lane.b32.xlu0 %v2181, 64
    %v2184 = vpop.permute.xlu0 %2183
    %v2186 = vmul.f32 %v2168, %v2184
    %v2188 = vrot.slane %v1112, 1
    %v2190 = vsel %vm1152, %v2188, %v1128
    %v2191 = vadd.f32 %v2190, %v2156
    %v2192 = vadd.f32 %v2191, %v1159
    %v2193 = vxor.u32 %v2192, 2147483648
    %v2194 = vmul.f32 %v2193, 1.442695
    %v2195 = vpow.pop %v2194
    %v2196 = vadd.f32 %v2195, 1.0
    %v2197 = vrcp.pop %v2196
    %v2198 = vmul.f32 1.0, %v2197
    %v2199 = vtanh.pop %v2192
    %v2200 = vmul.f32 %v2198, %v2101
    %2202 = vrot.lane.b32.xlu0 %v2199, 64
    %v2203 = vpop.permute.xlu0 %2202
    %v2205 = vmul.f32 %v2198, %v2203
    %2207 = vrot.lane.b32.xlu0 %v2205, 32
    %v2208 = vpop.permute.xlu0 %2207
    %v2210 = vadd.f32 %v2200, %v2208
    %v2211 = vtanh.pop %v2210
    %2213 = vrot.lane.b32.xlu0 %v2211, 64
    %v2214 = vpop.permute.xlu0 %2213
    %v2216 = vmul.f32 %v2198, %v2214
    %2218 = vrot.lane.b32.xlu0 %v2216, 32
    %v2219 = vpop.permute.xlu0 %2218
    %2222 = vrot.lane.b32.xlu0 %v2186, 64
    %v2223 = vpop.permute.xlu0 %2222
    %v2225 = vsel %vm1190, %v2219, %v2223
    %v2226 = vpack.c.bf16 %v2225, %v2225
    %v2228 = vsel %vm1233, %v2226, 0
    %2230 = vmatprep.subr.bf16.mxu0 %v1218
    %2231 = vmatpush1.bf16.msra.mxu0 %v1217
    %2232 = vmatprep.subr.bf16.mxu0 %v1220
    %2233 = vmatpush1.bf16.msra.mxu0 %v1219
    %2234 = vmatprep.subr.bf16.mxu0 %v1222
    %2235 = vmatpush1.bf16.msra.mxu0 %v1221
    %2236 = vmatprep.subr.bf16.mxu0 %v1224
    %2237 = vmatpush1.bf16.msra.mxu0 %v1223
    %2238 = vmatprep.subr.bf16.mxu0 0
    %2239 = vmatpush1.bf16.msra.mxu0 0
    %2240 = vmatprep.subr.bf16.mxu0 0
    %2241 = vmatpush1.bf16.msra.mxu0 0
    %2242 = vmatprep.subr.bf16.mxu0 0
    %2243 = vmatpush1.bf16.msra.mxu0 0
    %2244 = vmatprep.subr.bf16.mxu0 0
    %2245 = vmatpush1.bf16.msra.mxu0 0
    %2246 = vmatprep.subr.bf16.mxu0 0
    %2247 = vmatpush1.bf16.msra.mxu0 0
    %2248 = vmatprep.subr.bf16.mxu0 0
    %2249 = vmatpush1.bf16.msra.mxu0 0
    %2250 = vmatprep.subr.bf16.mxu0 0
    %2251 = vmatpush1.bf16.msra.mxu0 0
    %2252 = vmatprep.subr.bf16.mxu0 0
    %2253 = vmatpush1.bf16.msra.mxu0 0
    %2254 = vmatprep.subr.bf16.mxu0 0
    %2255 = vmatpush1.bf16.msra.mxu0 0
    %2256 = vmatprep.subr.bf16.mxu0 0
    %2257 = vmatpush1.bf16.msra.mxu0 0
    %2258 = vmatprep.subr.bf16.mxu0 0
    %2259 = vmatpush1.bf16.msra.mxu0 0
    %2260 = vmatprep.subr.bf16.mxu0 0
    %2261 = vmatpush1.bf16.msra.mxu0 0
    %2262 = vmatprep.mubr.bf16.mxu0 0
    %2263 = vmatmul.mubr.bf16.gmra.mrb[0].mxu0 %v2228
    %v2264 = vpop.f32.mrb[0].mxu0
    %v2265 = vadd.f32 0.0, %v2264
    %v2266 = vpop.f32.mrb[0].mxu0
    %v2267 = vadd.f32 0.0, %v2266
    %v2268 = vpop.f32.mrb[0].mxu0
    %v2269 = vpop.f32.mrb[0].mxu0
    %2270 = vdwg.mxu0
    %v2271 = vadd.f32 %v2267, %v1282
    %v2272 = vxor.u32 %v2271, 2147483648
    %v2273 = vmul.f32 %v2272, 1.442695
    %v2274 = vpow.pop %v2273
    %v2275 = vadd.f32 %v2274, 1.0
    %v2276 = vrcp.pop %v2275
    %v2277 = vmul.f32 1.0, %v2276
    %v2278 = vtanh.pop %v2271
    %v2279 = vmul.f32 %v2277, %v2180
    %2281 = vrot.lane.b32.xlu0 %v2278, 64
    %v2282 = vpop.permute.xlu0 %2281
    %v2284 = vmul.f32 %v2277, %v2282
    %2286 = vrot.lane.b32.xlu0 %v2284, 32
    %v2287 = vpop.permute.xlu0 %2286
    %v2289 = vadd.f32 %v2279, %v2287
    %v2290 = vtanh.pop %v2289
    %2292 = vrot.lane.b32.xlu0 %v2290, 64
    %v2293 = vpop.permute.xlu0 %2292
    %v2295 = vmul.f32 %v2277, %v2293
    %v2296 = vrot.slane %v1112, 2
    %v2298 = vrot.slane %v1128, 1
    %v2300 = vsel %vm1152, %v2296, %v2298
    %v2301 = vadd.f32 %v2300, %v2265
    %v2302 = vadd.f32 %v2301, %v1159
    %v2303 = vxor.u32 %v2302, 2147483648
    %v2304 = vmul.f32 %v2303, 1.442695
    %v2305 = vpow.pop %v2304
    %v2306 = vadd.f32 %v2305, 1.0
    %v2307 = vrcp.pop %v2306
    %v2308 = vmul.f32 1.0, %v2307
    %v2309 = vtanh.pop %v2302
    %v2310 = vmul.f32 %v2308, %v2210
    %2312 = vrot.lane.b32.xlu0 %v2309, 64
    %v2313 = vpop.permute.xlu0 %2312
    %v2315 = vmul.f32 %v2308, %v2313
    %2317 = vrot.lane.b32.xlu0 %v2315, 32
    %v2318 = vpop.permute.xlu0 %2317
    %v2320 = vadd.f32 %v2310, %v2318
    %v2321 = vtanh.pop %v2320
    %2323 = vrot.lane.b32.xlu0 %v2321, 64
    %v2324 = vpop.permute.xlu0 %2323
    %v2326 = vmul.f32 %v2308, %v2324
    %2328 = vrot.lane.b32.xlu0 %v2326, 32
    %v2329 = vpop.permute.xlu0 %2328
    %2332 = vrot.lane.b32.xlu0 %v2295, 64
    %v2333 = vpop.permute.xlu0 %2332
    %v2335 = vsel %vm1190, %v2329, %v2333
    %v2336 = vpack.c.bf16 %v2335, %v2335
    %v2338 = vsel %vm1233, %v2336, 0
    %2340 = vmatprep.subr.bf16.mxu0 %v1218
    %2341 = vmatpush1.bf16.msra.mxu0 %v1217
    %2342 = vmatprep.subr.bf16.mxu0 %v1220
    %2343 = vmatpush1.bf16.msra.mxu0 %v1219
    %2344 = vmatprep.subr.bf16.mxu0 %v1222
    %2345 = vmatpush1.bf16.msra.mxu0 %v1221
    %2346 = vmatprep.subr.bf16.mxu0 %v1224
    %2347 = vmatpush1.bf16.msra.mxu0 %v1223
    %2348 = vmatprep.subr.bf16.mxu0 0
    %2349 = vmatpush1.bf16.msra.mxu0 0
    %2350 = vmatprep.subr.bf16.mxu0 0
    %2351 = vmatpush1.bf16.msra.mxu0 0
    %2352 = vmatprep.subr.bf16.mxu0 0
    %2353 = vmatpush1.bf16.msra.mxu0 0
    %2354 = vmatprep.subr.bf16.mxu0 0
    %2355 = vmatpush1.bf16.msra.mxu0 0
    %2356 = vmatprep.subr.bf16.mxu0 0
    %2357 = vmatpush1.bf16.msra.mxu0 0
    %2358 = vmatprep.subr.bf16.mxu0 0
    %2359 = vmatpush1.bf16.msra.mxu0 0
    %2360 = vmatprep.subr.bf16.mxu0 0
    %2361 = vmatpush1.bf16.msra.mxu0 0
    %2362 = vmatprep.subr.bf16.mxu0 0
    %2363 = vmatpush1.bf16.msra.mxu0 0
    %2364 = vmatprep.subr.bf16.mxu0 0
    %2365 = vmatpush1.bf16.msra.mxu0 0
    %2366 = vmatprep.subr.bf16.mxu0 0
    %2367 = vmatpush1.bf16.msra.mxu0 0
    %2368 = vmatprep.subr.bf16.mxu0 0
    %2369 = vmatpush1.bf16.msra.mxu0 0
    %2370 = vmatprep.subr.bf16.mxu0 0
    %2371 = vmatpush1.bf16.msra.mxu0 0
    %2372 = vmatprep.mubr.bf16.mxu0 0
    %2373 = vmatmul.mubr.bf16.gmra.mrb[0].mxu0 %v2338
    %v2374 = vpop.f32.mrb[0].mxu0
    %v2375 = vadd.f32 0.0, %v2374
    %v2376 = vpop.f32.mrb[0].mxu0
    %v2377 = vadd.f32 0.0, %v2376
    %v2378 = vpop.f32.mrb[0].mxu0
    %v2379 = vpop.f32.mrb[0].mxu0
    %2380 = vdwg.mxu0
    %v2381 = vadd.f32 %v2377, %v1282
    %v2382 = vxor.u32 %v2381, 2147483648
    %v2383 = vmul.f32 %v2382, 1.442695
    %v2384 = vpow.pop %v2383
    %v2385 = vadd.f32 %v2384, 1.0
    %v2386 = vrcp.pop %v2385
    %v2387 = vmul.f32 1.0, %v2386
    %v2388 = vtanh.pop %v2381
    %v2389 = vmul.f32 %v2387, %v2289
    %2391 = vrot.lane.b32.xlu0 %v2388, 64
    %v2392 = vpop.permute.xlu0 %2391
    %v2394 = vmul.f32 %v2387, %v2392
    %2396 = vrot.lane.b32.xlu0 %v2394, 32
    %v2397 = vpop.permute.xlu0 %2396
    %v2399 = vadd.f32 %v2389, %v2397
    %v2400 = vtanh.pop %v2399
    %2402 = vrot.lane.b32.xlu0 %v2400, 64
    %v2403 = vpop.permute.xlu0 %2402
    %v2405 = vmul.f32 %v2387, %v2403
    %v2406 = vrot.slane %v1112, 3
    %v2408 = vrot.slane %v1128, 2
    %v2410 = vsel %vm1152, %v2406, %v2408
    %v2411 = vadd.f32 %v2410, %v2375
    %v2412 = vadd.f32 %v2411, %v1159
    %v2413 = vxor.u32 %v2412, 2147483648
    %v2414 = vmul.f32 %v2413, 1.442695
    %v2415 = vpow.pop %v2414
    %v2416 = vadd.f32 %v2415, 1.0
    %v2417 = vrcp.pop %v2416
    %v2418 = vmul.f32 1.0, %v2417
    %v2419 = vtanh.pop %v2412
    %v2420 = vmul.f32 %v2418, %v2320
    %2422 = vrot.lane.b32.xlu0 %v2419, 64
    %v2423 = vpop.permute.xlu0 %2422
    %v2425 = vmul.f32 %v2418, %v2423
    %2427 = vrot.lane.b32.xlu0 %v2425, 32
    %v2428 = vpop.permute.xlu0 %2427
    %v2430 = vadd.f32 %v2420, %v2428
    %v2431 = vtanh.pop %v2430
    %2433 = vrot.lane.b32.xlu0 %v2431, 64
    %v2434 = vpop.permute.xlu0 %2433
    %v2436 = vmul.f32 %v2418, %v2434
    %2438 = vrot.lane.b32.xlu0 %v2436, 32
    %v2439 = vpop.permute.xlu0 %2438
    %2442 = vrot.lane.b32.xlu0 %v2405, 64
    %v2443 = vpop.permute.xlu0 %2442
    %v2445 = vsel %vm1190, %v2439, %v2443
    %v2446 = vpack.c.bf16 %v2445, %v2445
    %v2448 = vsel %vm1233, %v2446, 0
    %2450 = vmatprep.subr.bf16.mxu0 %v1218
    %2451 = vmatpush1.bf16.msra.mxu0 %v1217
    %2452 = vmatprep.subr.bf16.mxu0 %v1220
    %2453 = vmatpush1.bf16.msra.mxu0 %v1219
    %2454 = vmatprep.subr.bf16.mxu0 %v1222
    %2455 = vmatpush1.bf16.msra.mxu0 %v1221
    %2456 = vmatprep.subr.bf16.mxu0 %v1224
    %2457 = vmatpush1.bf16.msra.mxu0 %v1223
    %2458 = vmatprep.subr.bf16.mxu0 0
    %2459 = vmatpush1.bf16.msra.mxu0 0
    %2460 = vmatprep.subr.bf16.mxu0 0
    %2461 = vmatpush1.bf16.msra.mxu0 0
    %2462 = vmatprep.subr.bf16.mxu0 0
    %2463 = vmatpush1.bf16.msra.mxu0 0
    %2464 = vmatprep.subr.bf16.mxu0 0
    %2465 = vmatpush1.bf16.msra.mxu0 0
    %2466 = vmatprep.subr.bf16.mxu0 0
    %2467 = vmatpush1.bf16.msra.mxu0 0
    %2468 = vmatprep.subr.bf16.mxu0 0
    %2469 = vmatpush1.bf16.msra.mxu0 0
    %2470 = vmatprep.subr.bf16.mxu0 0
    %2471 = vmatpush1.bf16.msra.mxu0 0
    %2472 = vmatprep.subr.bf16.mxu0 0
    %2473 = vmatpush1.bf16.msra.mxu0 0
    %2474 = vmatprep.subr.bf16.mxu0 0
    %2475 = vmatpush1.bf16.msra.mxu0 0
    %2476 = vmatprep.subr.bf16.mxu0 0
    %2477 = vmatpush1.bf16.msra.mxu0 0
    %2478 = vmatprep.subr.bf16.mxu0 0
    %2479 = vmatpush1.bf16.msra.mxu0 0
    %2480 = vmatprep.subr.bf16.mxu0 0
    %2481 = vmatpush1.bf16.msra.mxu0 0
    %2482 = vmatprep.mubr.bf16.mxu0 0
    %2483 = vmatmul.mubr.bf16.gmra.mrb[0].mxu0 %v2448
    %v2484 = vpop.f32.mrb[0].mxu0
    %v2485 = vadd.f32 0.0, %v2484
    %v2486 = vpop.f32.mrb[0].mxu0
    %v2487 = vadd.f32 0.0, %v2486
    %v2488 = vpop.f32.mrb[0].mxu0
    %v2489 = vpop.f32.mrb[0].mxu0
    %2490 = vdwg.mxu0
    %v2491 = vadd.f32 %v2487, %v1282
    %v2492 = vxor.u32 %v2491, 2147483648
    %v2493 = vmul.f32 %v2492, 1.442695
    %v2494 = vpow.pop %v2493
    %v2495 = vadd.f32 %v2494, 1.0
    %v2496 = vrcp.pop %v2495
    %v2497 = vmul.f32 1.0, %v2496
    %v2498 = vtanh.pop %v2491
    %v2499 = vmul.f32 %v2497, %v2399
    %2501 = vrot.lane.b32.xlu0 %v2498, 64
    %v2502 = vpop.permute.xlu0 %2501
    %v2504 = vmul.f32 %v2497, %v2502
    %2506 = vrot.lane.b32.xlu0 %v2504, 32
    %v2507 = vpop.permute.xlu0 %2506
    %v2509 = vadd.f32 %v2499, %v2507
    %v2510 = vtanh.pop %v2509
    %2512 = vrot.lane.b32.xlu0 %v2510, 64
    %v2513 = vpop.permute.xlu0 %2512
    %v2515 = vmul.f32 %v2497, %v2513
    %v2516 = vrot.slane %v1112, 4
    %v2518 = vrot.slane %v1128, 3
    %v2520 = vsel %vm1152, %v2516, %v2518
    %v2521 = vadd.f32 %v2520, %v2485
    %v2522 = vadd.f32 %v2521, %v1159
    %v2523 = vxor.u32 %v2522, 2147483648
    %v2524 = vmul.f32 %v2523, 1.442695
    %v2525 = vpow.pop %v2524
    %v2526 = vadd.f32 %v2525, 1.0
    %v2527 = vrcp.pop %v2526
    %v2528 = vmul.f32 1.0, %v2527
    %v2529 = vtanh.pop %v2522
    %v2530 = vmul.f32 %v2528, %v2430
    %2532 = vrot.lane.b32.xlu0 %v2529, 64
    %v2533 = vpop.permute.xlu0 %2532
    %v2535 = vmul.f32 %v2528, %v2533
    %2537 = vrot.lane.b32.xlu0 %v2535, 32
    %v2538 = vpop.permute.xlu0 %2537
    %v2540 = vadd.f32 %v2530, %v2538
    %v2541 = vtanh.pop %v2540
    %2543 = vrot.lane.b32.xlu0 %v2541, 64
    %v2544 = vpop.permute.xlu0 %2543
    %v2546 = vmul.f32 %v2528, %v2544
    %2548 = vrot.lane.b32.xlu0 %v2546, 32
    %v2549 = vpop.permute.xlu0 %2548
    %2552 = vrot.lane.b32.xlu0 %v2515, 64
    %v2553 = vpop.permute.xlu0 %2552
    %v2555 = vsel %vm1190, %v2549, %v2553
    %v2556 = vpack.c.bf16 %v2555, %v2555
    %v2558 = vsel %vm1233, %v2556, 0
    %2560 = vmatprep.subr.bf16.mxu0 %v1218
    %2561 = vmatpush1.bf16.msra.mxu0 %v1217
    %2562 = vmatprep.subr.bf16.mxu0 %v1220
    %2563 = vmatpush1.bf16.msra.mxu0 %v1219
    %2564 = vmatprep.subr.bf16.mxu0 %v1222
    %2565 = vmatpush1.bf16.msra.mxu0 %v1221
    %2566 = vmatprep.subr.bf16.mxu0 %v1224
    %2567 = vmatpush1.bf16.msra.mxu0 %v1223
    %2568 = vmatprep.subr.bf16.mxu0 0
    %2569 = vmatpush1.bf16.msra.mxu0 0
    %2570 = vmatprep.subr.bf16.mxu0 0
    %2571 = vmatpush1.bf16.msra.mxu0 0
    %2572 = vmatprep.subr.bf16.mxu0 0
    %2573 = vmatpush1.bf16.msra.mxu0 0
    %2574 = vmatprep.subr.bf16.mxu0 0
    %2575 = vmatpush1.bf16.msra.mxu0 0
    %2576 = vmatprep.subr.bf16.mxu0 0
    %2577 = vmatpush1.bf16.msra.mxu0 0
    %2578 = vmatprep.subr.bf16.mxu0 0
    %2579 = vmatpush1.bf16.msra.mxu0 0
    %2580 = vmatprep.subr.bf16.mxu0 0
    %2581 = vmatpush1.bf16.msra.mxu0 0
    %2582 = vmatprep.subr.bf16.mxu0 0
    %2583 = vmatpush1.bf16.msra.mxu0 0
    %2584 = vmatprep.subr.bf16.mxu0 0
    %2585 = vmatpush1.bf16.msra.mxu0 0
    %2586 = vmatprep.subr.bf16.mxu0 0
    %2587 = vmatpush1.bf16.msra.mxu0 0
    %2588 = vmatprep.subr.bf16.mxu0 0
    %2589 = vmatpush1.bf16.msra.mxu0 0
    %2590 = vmatprep.subr.bf16.mxu0 0
    %2591 = vmatpush1.bf16.msra.mxu0 0
    %2592 = vmatprep.mubr.bf16.mxu0 0
    %2593 = vmatmul.mubr.bf16.gmra.mrb[0].mxu0 %v2558
    %v2594 = vpop.f32.mrb[0].mxu0
    %v2595 = vadd.f32 0.0, %v2594
    %v2596 = vpop.f32.mrb[0].mxu0
    %v2597 = vadd.f32 0.0, %v2596
    %v2598 = vpop.f32.mrb[0].mxu0
    %v2599 = vpop.f32.mrb[0].mxu0
    %2600 = vdwg.mxu0
    %v2601 = vadd.f32 %v2597, %v1282
    %v2602 = vxor.u32 %v2601, 2147483648
    %v2603 = vmul.f32 %v2602, 1.442695
    %v2604 = vpow.pop %v2603
    %v2605 = vadd.f32 %v2604, 1.0
    %v2606 = vrcp.pop %v2605
    %v2607 = vmul.f32 1.0, %v2606
    %v2608 = vtanh.pop %v2601
    %v2609 = vmul.f32 %v2607, %v2509
    %2611 = vrot.lane.b32.xlu0 %v2608, 64
    %v2612 = vpop.permute.xlu0 %2611
    %v2614 = vmul.f32 %v2607, %v2612
    %2616 = vrot.lane.b32.xlu0 %v2614, 32
    %v2617 = vpop.permute.xlu0 %2616
    %v2619 = vadd.f32 %v2609, %v2617
    %v2620 = vtanh.pop %v2619
    %2622 = vrot.lane.b32.xlu0 %v2620, 64
    %v2623 = vpop.permute.xlu0 %2622
    %v2625 = vmul.f32 %v2607, %v2623
    %v2626 = vrot.slane %v1112, 5
    %v2628 = vrot.slane %v1128, 4
    %v2630 = vsel %vm1152, %v2626, %v2628
    %v2631 = vadd.f32 %v2630, %v2595
    %v2632 = vadd.f32 %v2631, %v1159
    %v2633 = vxor.u32 %v2632, 2147483648
    %v2634 = vmul.f32 %v2633, 1.442695
    %v2635 = vpow.pop %v2634
    %v2636 = vadd.f32 %v2635, 1.0
    %v2637 = vrcp.pop %v2636
    %v2638 = vmul.f32 1.0, %v2637
    %v2639 = vtanh.pop %v2632
    %v2640 = vmul.f32 %v2638, %v2540
    %2642 = vrot.lane.b32.xlu0 %v2639, 64
    %v2643 = vpop.permute.xlu0 %2642
    %v2645 = vmul.f32 %v2638, %v2643
    %2647 = vrot.lane.b32.xlu0 %v2645, 32
    %v2648 = vpop.permute.xlu0 %2647
    %v2650 = vadd.f32 %v2640, %v2648
    %v2651 = vtanh.pop %v2650
    %2653 = vrot.lane.b32.xlu0 %v2651, 64
    %v2654 = vpop.permute.xlu0 %2653
    %v2656 = vmul.f32 %v2638, %v2654
    %2658 = vrot.lane.b32.xlu0 %v2656, 32
    %v2659 = vpop.permute.xlu0 %2658
    %2662 = vrot.lane.b32.xlu0 %v2625, 64
    %v2663 = vpop.permute.xlu0 %2662
    %v2665 = vsel %vm1190, %v2659, %v2663
    %v2666 = vpack.c.bf16 %v2665, %v2665
    %v2668 = vsel %vm1233, %v2666, 0
    %2670 = vmatprep.subr.bf16.mxu0 %v1218
    %2671 = vmatpush1.bf16.msra.mxu0 %v1217
    %2672 = vmatprep.subr.bf16.mxu0 %v1220
    %2673 = vmatpush1.bf16.msra.mxu0 %v1219
    %2674 = vmatprep.subr.bf16.mxu0 %v1222
    %2675 = vmatpush1.bf16.msra.mxu0 %v1221
    %2676 = vmatprep.subr.bf16.mxu0 %v1224
    %2677 = vmatpush1.bf16.msra.mxu0 %v1223
    %2678 = vmatprep.subr.bf16.mxu0 0
    %2679 = vmatpush1.bf16.msra.mxu0 0
    %2680 = vmatprep.subr.bf16.mxu0 0
    %2681 = vmatpush1.bf16.msra.mxu0 0
    %2682 = vmatprep.subr.bf16.mxu0 0
    %2683 = vmatpush1.bf16.msra.mxu0 0
    %2684 = vmatprep.subr.bf16.mxu0 0
    %2685 = vmatpush1.bf16.msra.mxu0 0
    %2686 = vmatprep.subr.bf16.mxu0 0
    %2687 = vmatpush1.bf16.msra.mxu0 0
    %2688 = vmatprep.subr.bf16.mxu0 0
    %2689 = vmatpush1.bf16.msra.mxu0 0
    %2690 = vmatprep.subr.bf16.mxu0 0
    %2691 = vmatpush1.bf16.msra.mxu0 0
    %2692 = vmatprep.subr.bf16.mxu0 0
    %2693 = vmatpush1.bf16.msra.mxu0 0
    %2694 = vmatprep.subr.bf16.mxu0 0
    %2695 = vmatpush1.bf16.msra.mxu0 0
    %2696 = vmatprep.subr.bf16.mxu0 0
    %2697 = vmatpush1.bf16.msra.mxu0 0
    %2698 = vmatprep.subr.bf16.mxu0 0
    %2699 = vmatpush1.bf16.msra.mxu0 0
    %2700 = vmatprep.subr.bf16.mxu0 0
    %2701 = vmatpush1.bf16.msra.mxu0 0
    %2702 = vmatprep.mubr.bf16.mxu0 0
    %2703 = vmatmul.mubr.bf16.gmra.mrb[0].mxu0 %v2668
    %v2704 = vpop.f32.mrb[0].mxu0
    %v2705 = vadd.f32 0.0, %v2704
    %v2706 = vpop.f32.mrb[0].mxu0
    %v2707 = vadd.f32 0.0, %v2706
    %v2708 = vpop.f32.mrb[0].mxu0
    %v2709 = vpop.f32.mrb[0].mxu0
    %2710 = vdwg.mxu0
    %v2711 = vadd.f32 %v2707, %v1282
    %v2712 = vxor.u32 %v2711, 2147483648
    %v2713 = vmul.f32 %v2712, 1.442695
    %v2714 = vpow.pop %v2713
    %v2715 = vadd.f32 %v2714, 1.0
    %v2716 = vrcp.pop %v2715
    %v2717 = vmul.f32 1.0, %v2716
    %v2718 = vtanh.pop %v2711
    %v2719 = vmul.f32 %v2717, %v2619
    %2721 = vrot.lane.b32.xlu0 %v2718, 64
    %v2722 = vpop.permute.xlu0 %2721
    %v2724 = vmul.f32 %v2717, %v2722
    %2726 = vrot.lane.b32.xlu0 %v2724, 32
    %v2727 = vpop.permute.xlu0 %2726
    %v2729 = vadd.f32 %v2719, %v2727
    %v2730 = vtanh.pop %v2729
    %2732 = vrot.lane.b32.xlu0 %v2730, 64
    %v2733 = vpop.permute.xlu0 %2732
    %v2735 = vmul.f32 %v2717, %v2733
    %v2736 = vrot.slane %v1112, 6
    %v2738 = vrot.slane %v1128, 5
    %v2740 = vsel %vm1152, %v2736, %v2738
    %v2741 = vadd.f32 %v2740, %v2705
    %v2742 = vadd.f32 %v2741, %v1159
    %v2743 = vxor.u32 %v2742, 2147483648
    %v2744 = vmul.f32 %v2743, 1.442695
    %v2745 = vpow.pop %v2744
    %v2746 = vadd.f32 %v2745, 1.0
    %v2747 = vrcp.pop %v2746
    %v2748 = vmul.f32 1.0, %v2747
    %v2749 = vtanh.pop %v2742
    %v2750 = vmul.f32 %v2748, %v2650
    %2752 = vrot.lane.b32.xlu0 %v2749, 64
    %v2753 = vpop.permute.xlu0 %2752
    %v2755 = vmul.f32 %v2748, %v2753
    %2757 = vrot.lane.b32.xlu0 %v2755, 32
    %v2758 = vpop.permute.xlu0 %2757
    %v2760 = vadd.f32 %v2750, %v2758
    %v2761 = vtanh.pop %v2760
    %2763 = vrot.lane.b32.xlu0 %v2761, 64
    %v2764 = vpop.permute.xlu0 %2763
    %v2766 = vmul.f32 %v2748, %v2764
    %2768 = vrot.lane.b32.xlu0 %v2766, 32
    %v2769 = vpop.permute.xlu0 %2768
    %2772 = vrot.lane.b32.xlu0 %v2735, 64
    %v2773 = vpop.permute.xlu0 %2772
    %v2775 = vsel %vm1190, %v2769, %v2773
    %v2776 = vpack.c.bf16 %v2775, %v2775
    %v2778 = vsel %vm1233, %v2776, 0
    %2780 = vmatprep.subr.bf16.mxu0 %v1218
    %2781 = vmatpush1.bf16.msra.mxu0 %v1217
    %2782 = vmatprep.subr.bf16.mxu0 %v1220
    %2783 = vmatpush1.bf16.msra.mxu0 %v1219
    %2784 = vmatprep.subr.bf16.mxu0 %v1222
    %2785 = vmatpush1.bf16.msra.mxu0 %v1221
    %2786 = vmatprep.subr.bf16.mxu0 %v1224
    %2787 = vmatpush1.bf16.msra.mxu0 %v1223
    %2788 = vmatprep.subr.bf16.mxu0 0
    %2789 = vmatpush1.bf16.msra.mxu0 0
    %2790 = vmatprep.subr.bf16.mxu0 0
    %2791 = vmatpush1.bf16.msra.mxu0 0
    %2792 = vmatprep.subr.bf16.mxu0 0
    %2793 = vmatpush1.bf16.msra.mxu0 0
    %2794 = vmatprep.subr.bf16.mxu0 0
    %2795 = vmatpush1.bf16.msra.mxu0 0
    %2796 = vmatprep.subr.bf16.mxu0 0
    %2797 = vmatpush1.bf16.msra.mxu0 0
    %2798 = vmatprep.subr.bf16.mxu0 0
    %2799 = vmatpush1.bf16.msra.mxu0 0
    %2800 = vmatprep.subr.bf16.mxu0 0
    %2801 = vmatpush1.bf16.msra.mxu0 0
    %2802 = vmatprep.subr.bf16.mxu0 0
    %2803 = vmatpush1.bf16.msra.mxu0 0
    %2804 = vmatprep.subr.bf16.mxu0 0
    %2805 = vmatpush1.bf16.msra.mxu0 0
    %2806 = vmatprep.subr.bf16.mxu0 0
    %2807 = vmatpush1.bf16.msra.mxu0 0
    %2808 = vmatprep.subr.bf16.mxu0 0
    %2809 = vmatpush1.bf16.msra.mxu0 0
    %2810 = vmatprep.subr.bf16.mxu0 0
    %2811 = vmatpush1.bf16.msra.mxu0 0
    %2812 = vmatprep.mubr.bf16.mxu0 0
    %2813 = vmatmul.mubr.bf16.gmra.mrb[0].mxu0 %v2778
    %v2814 = vpop.f32.mrb[0].mxu0
    %v2815 = vadd.f32 0.0, %v2814
    %v2816 = vpop.f32.mrb[0].mxu0
    %v2817 = vadd.f32 0.0, %v2816
    %v2818 = vpop.f32.mrb[0].mxu0
    %v2819 = vpop.f32.mrb[0].mxu0
    %2820 = vdwg.mxu0
    %v2821 = vadd.f32 %v2817, %v1282
    %v2822 = vxor.u32 %v2821, 2147483648
    %v2823 = vmul.f32 %v2822, 1.442695
    %v2824 = vpow.pop %v2823
    %v2825 = vadd.f32 %v2824, 1.0
    %v2826 = vrcp.pop %v2825
    %v2827 = vmul.f32 1.0, %v2826
    %v2828 = vtanh.pop %v2821
    %v2829 = vmul.f32 %v2827, %v2729
    %2831 = vrot.lane.b32.xlu0 %v2828, 64
    %v2832 = vpop.permute.xlu0 %2831
    %v2834 = vmul.f32 %v2827, %v2832
    %2836 = vrot.lane.b32.xlu0 %v2834, 32
    %v2837 = vpop.permute.xlu0 %2836
    %v2839 = vadd.f32 %v2829, %v2837
    %v2840 = vtanh.pop %v2839
    %2842 = vrot.lane.b32.xlu0 %v2840, 64
    %v2843 = vpop.permute.xlu0 %2842
    %v2845 = vmul.f32 %v2827, %v2843
    %v2846 = vrot.slane %v1112, 7
    %v2848 = vrot.slane %v1128, 6
    %v2850 = vsel %vm1152, %v2846, %v2848
    %v2851 = vadd.f32 %v2850, %v2815
    %v2852 = vadd.f32 %v2851, %v1159
    %v2853 = vxor.u32 %v2852, 2147483648
    %v2854 = vmul.f32 %v2853, 1.442695
    %v2855 = vpow.pop %v2854
    %v2856 = vadd.f32 %v2855, 1.0
    %v2857 = vrcp.pop %v2856
    %v2858 = vmul.f32 1.0, %v2857
    %v2859 = vtanh.pop %v2852
    %v2860 = vmul.f32 %v2858, %v2760
    %2862 = vrot.lane.b32.xlu0 %v2859, 64
    %v2863 = vpop.permute.xlu0 %2862
    %v2865 = vmul.f32 %v2858, %v2863
    %2867 = vrot.lane.b32.xlu0 %v2865, 32
    %v2868 = vpop.permute.xlu0 %2867
    %v2870 = vadd.f32 %v2860, %v2868
    %v2871 = vtanh.pop %v2870
    %2873 = vrot.lane.b32.xlu0 %v2871, 64
    %v2874 = vpop.permute.xlu0 %2873
    %v2876 = vmul.f32 %v2858, %v2874
    %2878 = vrot.lane.b32.xlu0 %v2876, 32
    %v2879 = vpop.permute.xlu0 %2878
    %2882 = vrot.lane.b32.xlu0 %v2845, 64
    %v2883 = vpop.permute.xlu0 %2882
    %v2885 = vsel %vm1190, %v2879, %v2883
    %v2886 = vpack.c.bf16 %v2885, %v2885
    %v2888 = vsel %vm1233, %v2886, 0
    %2890 = vmatprep.subr.bf16.mxu0 %v1218
    %2891 = vmatpush1.bf16.msra.mxu0 %v1217
    %2892 = vmatprep.subr.bf16.mxu0 %v1220
    %2893 = vmatpush1.bf16.msra.mxu0 %v1219
    %2894 = vmatprep.subr.bf16.mxu0 %v1222
    %2895 = vmatpush1.bf16.msra.mxu0 %v1221
    %2896 = vmatprep.subr.bf16.mxu0 %v1224
    %2897 = vmatpush1.bf16.msra.mxu0 %v1223
    %2898 = vmatprep.subr.bf16.mxu0 0
    %2899 = vmatpush1.bf16.msra.mxu0 0
    %2900 = vmatprep.subr.bf16.mxu0 0
    %2901 = vmatpush1.bf16.msra.mxu0 0
    %2902 = vmatprep.subr.bf16.mxu0 0
    %2903 = vmatpush1.bf16.msra.mxu0 0
    %2904 = vmatprep.subr.bf16.mxu0 0
    %2905 = vmatpush1.bf16.msra.mxu0 0
    %2906 = vmatprep.subr.bf16.mxu0 0
    %2907 = vmatpush1.bf16.msra.mxu0 0
    %2908 = vmatprep.subr.bf16.mxu0 0
    %2909 = vmatpush1.bf16.msra.mxu0 0
    %2910 = vmatprep.subr.bf16.mxu0 0
    %2911 = vmatpush1.bf16.msra.mxu0 0
    %2912 = vmatprep.subr.bf16.mxu0 0
    %2913 = vmatpush1.bf16.msra.mxu0 0
    %2914 = vmatprep.subr.bf16.mxu0 0
    %2915 = vmatpush1.bf16.msra.mxu0 0
    %2916 = vmatprep.subr.bf16.mxu0 0
    %2917 = vmatpush1.bf16.msra.mxu0 0
    %2918 = vmatprep.subr.bf16.mxu0 0
    %2919 = vmatpush1.bf16.msra.mxu0 0
    %2920 = vmatprep.subr.bf16.mxu0 0
    %2921 = vmatpush1.bf16.msra.mxu0 0
    %2922 = vmatprep.mubr.bf16.mxu0 0
    %2923 = vmatmul.mubr.bf16.gmra.mrb[0].mxu0 %v2888
    %v2924 = vpop.f32.mrb[0].mxu0
    %v2925 = vadd.f32 0.0, %v2924
    %v2926 = vpop.f32.mrb[0].mxu0
    %v2927 = vadd.f32 0.0, %v2926
    %v2928 = vpop.f32.mrb[0].mxu0
    %v2929 = vpop.f32.mrb[0].mxu0
    %2930 = vdwg.mxu0
    %v2931 = vadd.f32 %v2927, %v1282
    %v2932 = vxor.u32 %v2931, 2147483648
    %v2933 = vmul.f32 %v2932, 1.442695
    %v2934 = vpow.pop %v2933
    %v2935 = vadd.f32 %v2934, 1.0
    %v2936 = vrcp.pop %v2935
    %v2937 = vmul.f32 1.0, %v2936
    %v2938 = vtanh.pop %v2931
    %v2939 = vmul.f32 %v2937, %v2839
    %2941 = vrot.lane.b32.xlu0 %v2938, 64
    %v2942 = vpop.permute.xlu0 %2941
    %v2944 = vmul.f32 %v2937, %v2942
    %2946 = vrot.lane.b32.xlu0 %v2944, 32
    %v2947 = vpop.permute.xlu0 %2946
    %v2949 = vadd.f32 %v2939, %v2947
    %v2950 = vtanh.pop %v2949
    %2952 = vrot.lane.b32.xlu0 %v2950, 64
    %v2953 = vpop.permute.xlu0 %2952
    %v2955 = vmul.f32 %v2937, %v2953
    %v2957 = vrot.slane %v1133, 7
    %v2959 = vsel %vm1152, %v1117, %v2957
    %v2960 = vadd.f32 %v2959, %v2925
    %v2961 = vadd.f32 %v2960, %v1159
    %v2962 = vxor.u32 %v2961, 2147483648
    %v2963 = vmul.f32 %v2962, 1.442695
    %v2964 = vpow.pop %v2963
    %v2965 = vadd.f32 %v2964, 1.0
    %v2966 = vrcp.pop %v2965
    %v2967 = vmul.f32 1.0, %v2966
    %v2968 = vtanh.pop %v2961
    %v2969 = vmul.f32 %v2967, %v2870
    %2971 = vrot.lane.b32.xlu0 %v2968, 64
    %v2972 = vpop.permute.xlu0 %2971
    %v2974 = vmul.f32 %v2967, %v2972
    %2976 = vrot.lane.b32.xlu0 %v2974, 32
    %v2977 = vpop.permute.xlu0 %2976
    %v2979 = vadd.f32 %v2969, %v2977
    %v2980 = vtanh.pop %v2979
    %2982 = vrot.lane.b32.xlu0 %v2980, 64
    %v2983 = vpop.permute.xlu0 %2982
    %v2985 = vmul.f32 %v2967, %v2983
    %2987 = vrot.lane.b32.xlu0 %v2985, 32
    %v2988 = vpop.permute.xlu0 %2987
    %2991 = vrot.lane.b32.xlu0 %v2955, 64
    %v2992 = vpop.permute.xlu0 %2991
    %v2994 = vsel %vm1190, %v2988, %v2992
    %v2995 = vpack.c.bf16 %v2994, %v2994
    %v2997 = vsel %vm1233, %v2995, 0
    %2999 = vmatprep.subr.bf16.mxu0 %v1218
    %3000 = vmatpush1.bf16.msra.mxu0 %v1217
    %3001 = vmatprep.subr.bf16.mxu0 %v1220
    %3002 = vmatpush1.bf16.msra.mxu0 %v1219
    %3003 = vmatprep.subr.bf16.mxu0 %v1222
    %3004 = vmatpush1.bf16.msra.mxu0 %v1221
    %3005 = vmatprep.subr.bf16.mxu0 %v1224
    %3006 = vmatpush1.bf16.msra.mxu0 %v1223
    %3007 = vmatprep.subr.bf16.mxu0 0
    %3008 = vmatpush1.bf16.msra.mxu0 0
    %3009 = vmatprep.subr.bf16.mxu0 0
    %3010 = vmatpush1.bf16.msra.mxu0 0
    %3011 = vmatprep.subr.bf16.mxu0 0
    %3012 = vmatpush1.bf16.msra.mxu0 0
    %3013 = vmatprep.subr.bf16.mxu0 0
    %3014 = vmatpush1.bf16.msra.mxu0 0
    %3015 = vmatprep.subr.bf16.mxu0 0
    %3016 = vmatpush1.bf16.msra.mxu0 0
    %3017 = vmatprep.subr.bf16.mxu0 0
    %3018 = vmatpush1.bf16.msra.mxu0 0
    %3019 = vmatprep.subr.bf16.mxu0 0
    %3020 = vmatpush1.bf16.msra.mxu0 0
    %3021 = vmatprep.subr.bf16.mxu0 0
    %3022 = vmatpush1.bf16.msra.mxu0 0
    %3023 = vmatprep.subr.bf16.mxu0 0
    %3024 = vmatpush1.bf16.msra.mxu0 0
    %3025 = vmatprep.subr.bf16.mxu0 0
    %3026 = vmatpush1.bf16.msra.mxu0 0
    %3027 = vmatprep.subr.bf16.mxu0 0
    %3028 = vmatpush1.bf16.msra.mxu0 0
    %3029 = vmatprep.subr.bf16.mxu0 0
    %3030 = vmatpush1.bf16.msra.mxu0 0
    %3031 = vmatprep.mubr.bf16.mxu0 0
    %3032 = vmatmul.mubr.bf16.gmra.mrb[0].mxu0 %v2997
    %v3033 = vpop.f32.mrb[0].mxu0
    %v3034 = vadd.f32 0.0, %v3033
    %v3035 = vpop.f32.mrb[0].mxu0
    %v3036 = vadd.f32 0.0, %v3035
    %v3037 = vpop.f32.mrb[0].mxu0
    %v3038 = vpop.f32.mrb[0].mxu0
    %3039 = vdwg.mxu0
    %v3040 = vadd.f32 %v3036, %v1282
    %v3041 = vxor.u32 %v3040, 2147483648
    %v3042 = vmul.f32 %v3041, 1.442695
    %v3043 = vpow.pop %v3042
    %v3044 = vadd.f32 %v3043, 1.0
    %v3045 = vrcp.pop %v3044
    %v3046 = vmul.f32 1.0, %v3045
    %v3047 = vtanh.pop %v3040
    %v3048 = vmul.f32 %v3046, %v2949
    %3050 = vrot.lane.b32.xlu0 %v3047, 64
    %v3051 = vpop.permute.xlu0 %3050
    %v3053 = vmul.f32 %v3046, %v3051
    %3055 = vrot.lane.b32.xlu0 %v3053, 32
    %v3056 = vpop.permute.xlu0 %3055
    %v3058 = vadd.f32 %v3048, %v3056
    %v3059 = vtanh.pop %v3058
    %3061 = vrot.lane.b32.xlu0 %v3059, 64
    %v3062 = vpop.permute.xlu0 %3061
    %v3064 = vmul.f32 %v3046, %v3062
    %v3066 = vrot.slane %v1117, 1
    %v3068 = vsel %vm1152, %v3066, %v1133
    %v3069 = vadd.f32 %v3068, %v3034
    %v3070 = vadd.f32 %v3069, %v1159
    %v3071 = vxor.u32 %v3070, 2147483648
    %v3072 = vmul.f32 %v3071, 1.442695
    %v3073 = vpow.pop %v3072
    %v3074 = vadd.f32 %v3073, 1.0
    %v3075 = vrcp.pop %v3074
    %v3076 = vmul.f32 1.0, %v3075
    %v3077 = vtanh.pop %v3070
    %v3078 = vmul.f32 %v3076, %v2979
    %3080 = vrot.lane.b32.xlu0 %v3077, 64
    %v3081 = vpop.permute.xlu0 %3080
    %v3083 = vmul.f32 %v3076, %v3081
    %3085 = vrot.lane.b32.xlu0 %v3083, 32
    %v3086 = vpop.permute.xlu0 %3085
    %v3088 = vadd.f32 %v3078, %v3086
    %v3089 = vtanh.pop %v3088
    %3091 = vrot.lane.b32.xlu0 %v3089, 64
    %v3092 = vpop.permute.xlu0 %3091
    %v3094 = vmul.f32 %v3076, %v3092
    %3096 = vrot.lane.b32.xlu0 %v3094, 32
    %v3097 = vpop.permute.xlu0 %3096
    %3100 = vrot.lane.b32.xlu0 %v3064, 64
    %v3101 = vpop.permute.xlu0 %3100
    %v3103 = vsel %vm1190, %v3097, %v3101
    %v3104 = vpack.c.bf16 %v3103, %v3103
    %v3106 = vsel %vm1233, %v3104, 0
    %3108 = vmatprep.subr.bf16.mxu0 %v1218
    %3109 = vmatpush1.bf16.msra.mxu0 %v1217
    %3110 = vmatprep.subr.bf16.mxu0 %v1220
    %3111 = vmatpush1.bf16.msra.mxu0 %v1219
    %3112 = vmatprep.subr.bf16.mxu0 %v1222
    %3113 = vmatpush1.bf16.msra.mxu0 %v1221
    %3114 = vmatprep.subr.bf16.mxu0 %v1224
    %3115 = vmatpush1.bf16.msra.mxu0 %v1223
    %3116 = vmatprep.subr.bf16.mxu0 0
    %3117 = vmatpush1.bf16.msra.mxu0 0
    %3118 = vmatprep.subr.bf16.mxu0 0
    %3119 = vmatpush1.bf16.msra.mxu0 0
    %3120 = vmatprep.subr.bf16.mxu0 0
    %3121 = vmatpush1.bf16.msra.mxu0 0
    %3122 = vmatprep.subr.bf16.mxu0 0
    %3123 = vmatpush1.bf16.msra.mxu0 0
    %3124 = vmatprep.subr.bf16.mxu0 0
    %3125 = vmatpush1.bf16.msra.mxu0 0
    %3126 = vmatprep.subr.bf16.mxu0 0
    %3127 = vmatpush1.bf16.msra.mxu0 0
    %3128 = vmatprep.subr.bf16.mxu0 0
    %3129 = vmatpush1.bf16.msra.mxu0 0
    %3130 = vmatprep.subr.bf16.mxu0 0
    %3131 = vmatpush1.bf16.msra.mxu0 0
    %3132 = vmatprep.subr.bf16.mxu0 0
    %3133 = vmatpush1.bf16.msra.mxu0 0
    %3134 = vmatprep.subr.bf16.mxu0 0
    %3135 = vmatpush1.bf16.msra.mxu0 0
    %3136 = vmatprep.subr.bf16.mxu0 0
    %3137 = vmatpush1.bf16.msra.mxu0 0
    %3138 = vmatprep.subr.bf16.mxu0 0
    %3139 = vmatpush1.bf16.msra.mxu0 0
    %3140 = vmatprep.mubr.bf16.mxu0 0
    %3141 = vmatmul.mubr.bf16.gmra.mrb[0].mxu0 %v3106
    %v3142 = vpop.f32.mrb[0].mxu0
    %v3143 = vadd.f32 0.0, %v3142
    %v3144 = vpop.f32.mrb[0].mxu0
    %v3145 = vadd.f32 0.0, %v3144
    %v3146 = vpop.f32.mrb[0].mxu0
    %v3147 = vpop.f32.mrb[0].mxu0
    %3148 = vdwg.mxu0
    %v3149 = vadd.f32 %v3145, %v1282
    %v3150 = vxor.u32 %v3149, 2147483648
    %v3151 = vmul.f32 %v3150, 1.442695
    %v3152 = vpow.pop %v3151
    %v3153 = vadd.f32 %v3152, 1.0
    %v3154 = vrcp.pop %v3153
    %v3155 = vmul.f32 1.0, %v3154
    %v3156 = vtanh.pop %v3149
    %v3157 = vmul.f32 %v3155, %v3058
    %3159 = vrot.lane.b32.xlu0 %v3156, 64
    %v3160 = vpop.permute.xlu0 %3159
    %v3162 = vmul.f32 %v3155, %v3160
    %3164 = vrot.lane.b32.xlu0 %v3162, 32
    %v3165 = vpop.permute.xlu0 %3164
    %v3167 = vadd.f32 %v3157, %v3165
    %v3168 = vtanh.pop %v3167
    %3170 = vrot.lane.b32.xlu0 %v3168, 64
    %v3171 = vpop.permute.xlu0 %3170
    %v3173 = vmul.f32 %v3155, %v3171
    %v3174 = vrot.slane %v1117, 2
    %v3176 = vrot.slane %v1133, 1
    %v3178 = vsel %vm1152, %v3174, %v3176
    %v3179 = vadd.f32 %v3178, %v3143
    %v3180 = vadd.f32 %v3179, %v1159
    %v3181 = vxor.u32 %v3180, 2147483648
    %v3182 = vmul.f32 %v3181, 1.442695
    %v3183 = vpow.pop %v3182
    %v3184 = vadd.f32 %v3183, 1.0
    %v3185 = vrcp.pop %v3184
    %v3186 = vmul.f32 1.0, %v3185
    %v3187 = vtanh.pop %v3180
    %v3188 = vmul.f32 %v3186, %v3088
    %3190 = vrot.lane.b32.xlu0 %v3187, 64
    %v3191 = vpop.permute.xlu0 %3190
    %v3193 = vmul.f32 %v3186, %v3191
    %3195 = vrot.lane.b32.xlu0 %v3193, 32
    %v3196 = vpop.permute.xlu0 %3195
    %v3198 = vadd.f32 %v3188, %v3196
    %v3199 = vtanh.pop %v3198
    %3201 = vrot.lane.b32.xlu0 %v3199, 64
    %v3202 = vpop.permute.xlu0 %3201
    %v3204 = vmul.f32 %v3186, %v3202
    %3206 = vrot.lane.b32.xlu0 %v3204, 32
    %v3207 = vpop.permute.xlu0 %3206
    %3210 = vrot.lane.b32.xlu0 %v3173, 64
    %v3211 = vpop.permute.xlu0 %3210
    %v3213 = vsel %vm1190, %v3207, %v3211
    %v3214 = vpack.c.bf16 %v3213, %v3213
    %v3216 = vsel %vm1233, %v3214, 0
    %3218 = vmatprep.subr.bf16.mxu0 %v1218
    %3219 = vmatpush1.bf16.msra.mxu0 %v1217
    %3220 = vmatprep.subr.bf16.mxu0 %v1220
    %3221 = vmatpush1.bf16.msra.mxu0 %v1219
    %3222 = vmatprep.subr.bf16.mxu0 %v1222
    %3223 = vmatpush1.bf16.msra.mxu0 %v1221
    %3224 = vmatprep.subr.bf16.mxu0 %v1224
    %3225 = vmatpush1.bf16.msra.mxu0 %v1223
    %3226 = vmatprep.subr.bf16.mxu0 0
    %3227 = vmatpush1.bf16.msra.mxu0 0
    %3228 = vmatprep.subr.bf16.mxu0 0
    %3229 = vmatpush1.bf16.msra.mxu0 0
    %3230 = vmatprep.subr.bf16.mxu0 0
    %3231 = vmatpush1.bf16.msra.mxu0 0
    %3232 = vmatprep.subr.bf16.mxu0 0
    %3233 = vmatpush1.bf16.msra.mxu0 0
    %3234 = vmatprep.subr.bf16.mxu0 0
    %3235 = vmatpush1.bf16.msra.mxu0 0
    %3236 = vmatprep.subr.bf16.mxu0 0
    %3237 = vmatpush1.bf16.msra.mxu0 0
    %3238 = vmatprep.subr.bf16.mxu0 0
    %3239 = vmatpush1.bf16.msra.mxu0 0
    %3240 = vmatprep.subr.bf16.mxu0 0
    %3241 = vmatpush1.bf16.msra.mxu0 0
    %3242 = vmatprep.subr.bf16.mxu0 0
    %3243 = vmatpush1.bf16.msra.mxu0 0
    %3244 = vmatprep.subr.bf16.mxu0 0
    %3245 = vmatpush1.bf16.msra.mxu0 0
    %3246 = vmatprep.subr.bf16.mxu0 0
    %3247 = vmatpush1.bf16.msra.mxu0 0
    %3248 = vmatprep.subr.bf16.mxu0 0
    %3249 = vmatpush1.bf16.msra.mxu0 0
    %3250 = vmatprep.mubr.bf16.mxu0 0
    %3251 = vmatmul.mubr.bf16.gmra.mrb[0].mxu0 %v3216
    %v3252 = vpop.f32.mrb[0].mxu0
    %v3253 = vadd.f32 0.0, %v3252
    %v3254 = vpop.f32.mrb[0].mxu0
    %v3255 = vadd.f32 0.0, %v3254
    %v3256 = vpop.f32.mrb[0].mxu0
    %v3257 = vpop.f32.mrb[0].mxu0
    %3258 = vdwg.mxu0
    %v3259 = vadd.f32 %v3255, %v1282
    %v3260 = vxor.u32 %v3259, 2147483648
    %v3261 = vmul.f32 %v3260, 1.442695
    %v3262 = vpow.pop %v3261
    %v3263 = vadd.f32 %v3262, 1.0
    %v3264 = vrcp.pop %v3263
    %v3265 = vmul.f32 1.0, %v3264
    %v3266 = vtanh.pop %v3259
    %v3267 = vmul.f32 %v3265, %v3167
    %3269 = vrot.lane.b32.xlu0 %v3266, 64
    %v3270 = vpop.permute.xlu0 %3269
    %v3272 = vmul.f32 %v3265, %v3270
    %3274 = vrot.lane.b32.xlu0 %v3272, 32
    %v3275 = vpop.permute.xlu0 %3274
    %v3277 = vadd.f32 %v3267, %v3275
    %v3278 = vtanh.pop %v3277
    %3280 = vrot.lane.b32.xlu0 %v3278, 64
    %v3281 = vpop.permute.xlu0 %3280
    %v3283 = vmul.f32 %v3265, %v3281
    %v3284 = vrot.slane %v1117, 3
    %v3286 = vrot.slane %v1133, 2
    %v3288 = vsel %vm1152, %v3284, %v3286
    %v3289 = vadd.f32 %v3288, %v3253
    %v3290 = vadd.f32 %v3289, %v1159
    %v3291 = vxor.u32 %v3290, 2147483648
    %v3292 = vmul.f32 %v3291, 1.442695
    %v3293 = vpow.pop %v3292
    %v3294 = vadd.f32 %v3293, 1.0
    %v3295 = vrcp.pop %v3294
    %v3296 = vmul.f32 1.0, %v3295
    %v3297 = vtanh.pop %v3290
    %v3298 = vmul.f32 %v3296, %v3198
    %3300 = vrot.lane.b32.xlu0 %v3297, 64
    %v3301 = vpop.permute.xlu0 %3300
    %v3303 = vmul.f32 %v3296, %v3301
    %3305 = vrot.lane.b32.xlu0 %v3303, 32
    %v3306 = vpop.permute.xlu0 %3305
    %v3308 = vadd.f32 %v3298, %v3306
    %v3309 = vtanh.pop %v3308
    %3311 = vrot.lane.b32.xlu0 %v3309, 64
    %v3312 = vpop.permute.xlu0 %3311
    %v3314 = vmul.f32 %v3296, %v3312
    %3316 = vrot.lane.b32.xlu0 %v3314, 32
    %v3317 = vpop.permute.xlu0 %3316
    %3320 = vrot.lane.b32.xlu0 %v3283, 64
    %v3321 = vpop.permute.xlu0 %3320
    %v3323 = vsel %vm1190, %v3317, %v3321
    %v3324 = vpack.c.bf16 %v3323, %v3323
    %v3326 = vsel %vm1233, %v3324, 0
    %3328 = vmatprep.subr.bf16.mxu0 %v1218
    %3329 = vmatpush1.bf16.msra.mxu0 %v1217
    %3330 = vmatprep.subr.bf16.mxu0 %v1220
    %3331 = vmatpush1.bf16.msra.mxu0 %v1219
    %3332 = vmatprep.subr.bf16.mxu0 %v1222
    %3333 = vmatpush1.bf16.msra.mxu0 %v1221
    %3334 = vmatprep.subr.bf16.mxu0 %v1224
    %3335 = vmatpush1.bf16.msra.mxu0 %v1223
    %3336 = vmatprep.subr.bf16.mxu0 0
    %3337 = vmatpush1.bf16.msra.mxu0 0
    %3338 = vmatprep.subr.bf16.mxu0 0
    %3339 = vmatpush1.bf16.msra.mxu0 0
    %3340 = vmatprep.subr.bf16.mxu0 0
    %3341 = vmatpush1.bf16.msra.mxu0 0
    %3342 = vmatprep.subr.bf16.mxu0 0
    %3343 = vmatpush1.bf16.msra.mxu0 0
    %3344 = vmatprep.subr.bf16.mxu0 0
    %3345 = vmatpush1.bf16.msra.mxu0 0
    %3346 = vmatprep.subr.bf16.mxu0 0
    %3347 = vmatpush1.bf16.msra.mxu0 0
    %3348 = vmatprep.subr.bf16.mxu0 0
    %3349 = vmatpush1.bf16.msra.mxu0 0
    %3350 = vmatprep.subr.bf16.mxu0 0
    %3351 = vmatpush1.bf16.msra.mxu0 0
    %3352 = vmatprep.subr.bf16.mxu0 0
    %3353 = vmatpush1.bf16.msra.mxu0 0
    %3354 = vmatprep.subr.bf16.mxu0 0
    %3355 = vmatpush1.bf16.msra.mxu0 0
    %3356 = vmatprep.subr.bf16.mxu0 0
    %3357 = vmatpush1.bf16.msra.mxu0 0
    %3358 = vmatprep.subr.bf16.mxu0 0
    %3359 = vmatpush1.bf16.msra.mxu0 0
    %3360 = vmatprep.mubr.bf16.mxu0 0
    %3361 = vmatmul.mubr.bf16.gmra.mrb[0].mxu0 %v3326
    %v3362 = vpop.f32.mrb[0].mxu0
    %v3363 = vadd.f32 0.0, %v3362
    %v3364 = vpop.f32.mrb[0].mxu0
    %v3365 = vadd.f32 0.0, %v3364
    %v3366 = vpop.f32.mrb[0].mxu0
    %v3367 = vpop.f32.mrb[0].mxu0
    %3368 = vdwg.mxu0
    %v3369 = vadd.f32 %v3365, %v1282
    %v3370 = vxor.u32 %v3369, 2147483648
    %v3371 = vmul.f32 %v3370, 1.442695
    %v3372 = vpow.pop %v3371
    %v3373 = vadd.f32 %v3372, 1.0
    %v3374 = vrcp.pop %v3373
    %v3375 = vmul.f32 1.0, %v3374
    %v3376 = vtanh.pop %v3369
    %v3377 = vmul.f32 %v3375, %v3277
    %3379 = vrot.lane.b32.xlu0 %v3376, 64
    %v3380 = vpop.permute.xlu0 %3379
    %v3382 = vmul.f32 %v3375, %v3380
    %3384 = vrot.lane.b32.xlu0 %v3382, 32
    %v3385 = vpop.permute.xlu0 %3384
    %v3387 = vadd.f32 %v3377, %v3385
    %v3388 = vtanh.pop %v3387
    %3390 = vrot.lane.b32.xlu0 %v3388, 64
    %v3391 = vpop.permute.xlu0 %3390
    %v3393 = vmul.f32 %v3375, %v3391
    %v3394 = vrot.slane %v1117, 4
    %v3396 = vrot.slane %v1133, 3
    %v3398 = vsel %vm1152, %v3394, %v3396
    %v3399 = vadd.f32 %v3398, %v3363
    %v3400 = vadd.f32 %v3399, %v1159
    %v3401 = vxor.u32 %v3400, 2147483648
    %v3402 = vmul.f32 %v3401, 1.442695
    %v3403 = vpow.pop %v3402
    %v3404 = vadd.f32 %v3403, 1.0
    %v3405 = vrcp.pop %v3404
    %v3406 = vmul.f32 1.0, %v3405
    %v3407 = vtanh.pop %v3400
    %v3408 = vmul.f32 %v3406, %v3308
    %3410 = vrot.lane.b32.xlu0 %v3407, 64
    %v3411 = vpop.permute.xlu0 %3410
    %v3413 = vmul.f32 %v3406, %v3411
    %3415 = vrot.lane.b32.xlu0 %v3413, 32
    %v3416 = vpop.permute.xlu0 %3415
    %v3418 = vadd.f32 %v3408, %v3416
    %v3419 = vtanh.pop %v3418
    %3421 = vrot.lane.b32.xlu0 %v3419, 64
    %v3422 = vpop.permute.xlu0 %3421
    %v3424 = vmul.f32 %v3406, %v3422
    %3426 = vrot.lane.b32.xlu0 %v3424, 32
    %v3427 = vpop.permute.xlu0 %3426
    %3430 = vrot.lane.b32.xlu0 %v3393, 64
    %v3431 = vpop.permute.xlu0 %3430
    %v3433 = vsel %vm1190, %v3427, %v3431
    %v3434 = vpack.c.bf16 %v3433, %v3433
    %v3436 = vsel %vm1233, %v3434, 0
    %3438 = vmatprep.subr.bf16.mxu0 %v1218
    %3439 = vmatpush1.bf16.msra.mxu0 %v1217
    %3440 = vmatprep.subr.bf16.mxu0 %v1220
    %3441 = vmatpush1.bf16.msra.mxu0 %v1219
    %3442 = vmatprep.subr.bf16.mxu0 %v1222
    %3443 = vmatpush1.bf16.msra.mxu0 %v1221
    %3444 = vmatprep.subr.bf16.mxu0 %v1224
    %3445 = vmatpush1.bf16.msra.mxu0 %v1223
    %3446 = vmatprep.subr.bf16.mxu0 0
    %3447 = vmatpush1.bf16.msra.mxu0 0
    %3448 = vmatprep.subr.bf16.mxu0 0
    %3449 = vmatpush1.bf16.msra.mxu0 0
    %3450 = vmatprep.subr.bf16.mxu0 0
    %3451 = vmatpush1.bf16.msra.mxu0 0
    %3452 = vmatprep.subr.bf16.mxu0 0
    %3453 = vmatpush1.bf16.msra.mxu0 0
    %3454 = vmatprep.subr.bf16.mxu0 0
    %3455 = vmatpush1.bf16.msra.mxu0 0
    %3456 = vmatprep.subr.bf16.mxu0 0
    %3457 = vmatpush1.bf16.msra.mxu0 0
    %3458 = vmatprep.subr.bf16.mxu0 0
    %3459 = vmatpush1.bf16.msra.mxu0 0
    %3460 = vmatprep.subr.bf16.mxu0 0
    %3461 = vmatpush1.bf16.msra.mxu0 0
    %3462 = vmatprep.subr.bf16.mxu0 0
    %3463 = vmatpush1.bf16.msra.mxu0 0
    %3464 = vmatprep.subr.bf16.mxu0 0
    %3465 = vmatpush1.bf16.msra.mxu0 0
    %3466 = vmatprep.subr.bf16.mxu0 0
    %3467 = vmatpush1.bf16.msra.mxu0 0
    %3468 = vmatprep.subr.bf16.mxu0 0
    %3469 = vmatpush1.bf16.msra.mxu0 0
    %3470 = vmatprep.mubr.bf16.mxu0 0
    %3471 = vmatmul.mubr.bf16.gmra.mrb[0].mxu0 %v3436
    %v3472 = vpop.f32.mrb[0].mxu0
    %v3473 = vadd.f32 0.0, %v3472
    %v3474 = vpop.f32.mrb[0].mxu0
    %v3475 = vadd.f32 0.0, %v3474
    %v3476 = vpop.f32.mrb[0].mxu0
    %v3477 = vpop.f32.mrb[0].mxu0
    %3478 = vdwg.mxu0
    %v3479 = vadd.f32 %v3475, %v1282
    %v3480 = vxor.u32 %v3479, 2147483648
    %v3481 = vmul.f32 %v3480, 1.442695
    %v3482 = vpow.pop %v3481
    %v3483 = vadd.f32 %v3482, 1.0
    %v3484 = vrcp.pop %v3483
    %v3485 = vmul.f32 1.0, %v3484
    %v3486 = vtanh.pop %v3479
    %v3487 = vmul.f32 %v3485, %v3387
    %3489 = vrot.lane.b32.xlu0 %v3486, 64
    %v3490 = vpop.permute.xlu0 %3489
    %v3492 = vmul.f32 %v3485, %v3490
    %3494 = vrot.lane.b32.xlu0 %v3492, 32
    %v3495 = vpop.permute.xlu0 %3494
    %v3497 = vadd.f32 %v3487, %v3495
    %v3498 = vtanh.pop %v3497
    %3500 = vrot.lane.b32.xlu0 %v3498, 64
    %v3501 = vpop.permute.xlu0 %3500
    %v3503 = vmul.f32 %v3485, %v3501
    %v3504 = vrot.slane %v1117, 5
    %v3506 = vrot.slane %v1133, 4
    %v3508 = vsel %vm1152, %v3504, %v3506
    %v3509 = vadd.f32 %v3508, %v3473
    %v3510 = vadd.f32 %v3509, %v1159
    %v3511 = vxor.u32 %v3510, 2147483648
    %v3512 = vmul.f32 %v3511, 1.442695
    %v3513 = vpow.pop %v3512
    %v3514 = vadd.f32 %v3513, 1.0
    %v3515 = vrcp.pop %v3514
    %v3516 = vmul.f32 1.0, %v3515
    %v3517 = vtanh.pop %v3510
    %v3518 = vmul.f32 %v3516, %v3418
    %3520 = vrot.lane.b32.xlu0 %v3517, 64
    %v3521 = vpop.permute.xlu0 %3520
    %v3523 = vmul.f32 %v3516, %v3521
    %3525 = vrot.lane.b32.xlu0 %v3523, 32
    %v3526 = vpop.permute.xlu0 %3525
    %v3528 = vadd.f32 %v3518, %v3526
    %v3529 = vtanh.pop %v3528
    %3531 = vrot.lane.b32.xlu0 %v3529, 64
    %v3532 = vpop.permute.xlu0 %3531
    %v3534 = vmul.f32 %v3516, %v3532
    %3536 = vrot.lane.b32.xlu0 %v3534, 32
    %v3537 = vpop.permute.xlu0 %3536
    %3540 = vrot.lane.b32.xlu0 %v3503, 64
    %v3541 = vpop.permute.xlu0 %3540
    %v3543 = vsel %vm1190, %v3537, %v3541
    %v3544 = vpack.c.bf16 %v3543, %v3543
    %v3546 = vsel %vm1233, %v3544, 0
    %3548 = vmatprep.subr.bf16.mxu0 %v1218
    %3549 = vmatpush1.bf16.msra.mxu0 %v1217
    %3550 = vmatprep.subr.bf16.mxu0 %v1220
    %3551 = vmatpush1.bf16.msra.mxu0 %v1219
    %3552 = vmatprep.subr.bf16.mxu0 %v1222
    %3553 = vmatpush1.bf16.msra.mxu0 %v1221
    %3554 = vmatprep.subr.bf16.mxu0 %v1224
    %3555 = vmatpush1.bf16.msra.mxu0 %v1223
    %3556 = vmatprep.subr.bf16.mxu0 0
    %3557 = vmatpush1.bf16.msra.mxu0 0
    %3558 = vmatprep.subr.bf16.mxu0 0
    %3559 = vmatpush1.bf16.msra.mxu0 0
    %3560 = vmatprep.subr.bf16.mxu0 0
    %3561 = vmatpush1.bf16.msra.mxu0 0
    %3562 = vmatprep.subr.bf16.mxu0 0
    %3563 = vmatpush1.bf16.msra.mxu0 0
    %3564 = vmatprep.subr.bf16.mxu0 0
    %3565 = vmatpush1.bf16.msra.mxu0 0
    %3566 = vmatprep.subr.bf16.mxu0 0
    %3567 = vmatpush1.bf16.msra.mxu0 0
    %3568 = vmatprep.subr.bf16.mxu0 0
    %3569 = vmatpush1.bf16.msra.mxu0 0
    %3570 = vmatprep.subr.bf16.mxu0 0
    %3571 = vmatpush1.bf16.msra.mxu0 0
    %3572 = vmatprep.subr.bf16.mxu0 0
    %3573 = vmatpush1.bf16.msra.mxu0 0
    %3574 = vmatprep.subr.bf16.mxu0 0
    %3575 = vmatpush1.bf16.msra.mxu0 0
    %3576 = vmatprep.subr.bf16.mxu0 0
    %3577 = vmatpush1.bf16.msra.mxu0 0
    %3578 = vmatprep.subr.bf16.mxu0 0
    %3579 = vmatpush1.bf16.msra.mxu0 0
    %3580 = vmatprep.mubr.bf16.mxu0 0
    %3581 = vmatmul.mubr.bf16.gmra.mrb[0].mxu0 %v3546
    %v3582 = vpop.f32.mrb[0].mxu0
    %v3583 = vadd.f32 0.0, %v3582
    %v3584 = vpop.f32.mrb[0].mxu0
    %v3585 = vadd.f32 0.0, %v3584
    %v3586 = vpop.f32.mrb[0].mxu0
    %v3587 = vpop.f32.mrb[0].mxu0
    %3588 = vdwg.mxu0
    %v3589 = vadd.f32 %v3585, %v1282
    %v3590 = vxor.u32 %v3589, 2147483648
    %v3591 = vmul.f32 %v3590, 1.442695
    %v3592 = vpow.pop %v3591
    %v3593 = vadd.f32 %v3592, 1.0
    %v3594 = vrcp.pop %v3593
    %v3595 = vmul.f32 1.0, %v3594
    %v3596 = vtanh.pop %v3589
    %v3597 = vmul.f32 %v3595, %v3497
    %3599 = vrot.lane.b32.xlu0 %v3596, 64
    %v3600 = vpop.permute.xlu0 %3599
    %v3602 = vmul.f32 %v3595, %v3600
    %3604 = vrot.lane.b32.xlu0 %v3602, 32
    %v3605 = vpop.permute.xlu0 %3604
    %v3607 = vadd.f32 %v3597, %v3605
    %v3608 = vtanh.pop %v3607
    %3610 = vrot.lane.b32.xlu0 %v3608, 64
    %v3611 = vpop.permute.xlu0 %3610
    %v3613 = vmul.f32 %v3595, %v3611
    %v3614 = vrot.slane %v1117, 6
    %v3616 = vrot.slane %v1133, 5
    %v3618 = vsel %vm1152, %v3614, %v3616
    %v3619 = vadd.f32 %v3618, %v3583
    %v3620 = vadd.f32 %v3619, %v1159
    %v3621 = vxor.u32 %v3620, 2147483648
    %v3622 = vmul.f32 %v3621, 1.442695
    %v3623 = vpow.pop %v3622
    %v3624 = vadd.f32 %v3623, 1.0
    %v3625 = vrcp.pop %v3624
    %v3626 = vmul.f32 1.0, %v3625
    %v3627 = vtanh.pop %v3620
    %v3628 = vmul.f32 %v3626, %v3528
    %3630 = vrot.lane.b32.xlu0 %v3627, 64
    %v3631 = vpop.permute.xlu0 %3630
    %v3633 = vmul.f32 %v3626, %v3631
    %3635 = vrot.lane.b32.xlu0 %v3633, 32
    %v3636 = vpop.permute.xlu0 %3635
    %v3638 = vadd.f32 %v3628, %v3636
    %v3639 = vtanh.pop %v3638
    %3641 = vrot.lane.b32.xlu0 %v3639, 64
    %v3642 = vpop.permute.xlu0 %3641
    %v3644 = vmul.f32 %v3626, %v3642
    %3646 = vrot.lane.b32.xlu0 %v3644, 32
    %v3647 = vpop.permute.xlu0 %3646
    %3650 = vrot.lane.b32.xlu0 %v3613, 64
    %v3651 = vpop.permute.xlu0 %3650
    %v3653 = vsel %vm1190, %v3647, %v3651
    %v3654 = vpack.c.bf16 %v3653, %v3653
    %v3656 = vsel %vm1233, %v3654, 0
    %3658 = vmatprep.subr.bf16.mxu0 %v1218
    %3659 = vmatpush1.bf16.msra.mxu0 %v1217
    %3660 = vmatprep.subr.bf16.mxu0 %v1220
    %3661 = vmatpush1.bf16.msra.mxu0 %v1219
    %3662 = vmatprep.subr.bf16.mxu0 %v1222
    %3663 = vmatpush1.bf16.msra.mxu0 %v1221
    %3664 = vmatprep.subr.bf16.mxu0 %v1224
    %3665 = vmatpush1.bf16.msra.mxu0 %v1223
    %3666 = vmatprep.subr.bf16.mxu0 0
    %3667 = vmatpush1.bf16.msra.mxu0 0
    %3668 = vmatprep.subr.bf16.mxu0 0
    %3669 = vmatpush1.bf16.msra.mxu0 0
    %3670 = vmatprep.subr.bf16.mxu0 0
    %3671 = vmatpush1.bf16.msra.mxu0 0
    %3672 = vmatprep.subr.bf16.mxu0 0
    %3673 = vmatpush1.bf16.msra.mxu0 0
    %3674 = vmatprep.subr.bf16.mxu0 0
    %3675 = vmatpush1.bf16.msra.mxu0 0
    %3676 = vmatprep.subr.bf16.mxu0 0
    %3677 = vmatpush1.bf16.msra.mxu0 0
    %3678 = vmatprep.subr.bf16.mxu0 0
    %3679 = vmatpush1.bf16.msra.mxu0 0
    %3680 = vmatprep.subr.bf16.mxu0 0
    %3681 = vmatpush1.bf16.msra.mxu0 0
    %3682 = vmatprep.subr.bf16.mxu0 0
    %3683 = vmatpush1.bf16.msra.mxu0 0
    %3684 = vmatprep.subr.bf16.mxu0 0
    %3685 = vmatpush1.bf16.msra.mxu0 0
    %3686 = vmatprep.subr.bf16.mxu0 0
    %3687 = vmatpush1.bf16.msra.mxu0 0
    %3688 = vmatprep.subr.bf16.mxu0 0
    %3689 = vmatpush1.bf16.msra.mxu0 0
    %3690 = vmatprep.mubr.bf16.mxu0 0
    %3691 = vmatmul.mubr.bf16.gmra.mrb[0].mxu0 %v3656
    %v3692 = vpop.f32.mrb[0].mxu0
    %v3693 = vadd.f32 0.0, %v3692
    %v3694 = vpop.f32.mrb[0].mxu0
    %v3695 = vadd.f32 0.0, %v3694
    %v3696 = vpop.f32.mrb[0].mxu0
    %v3697 = vpop.f32.mrb[0].mxu0
    %3698 = vdwg.mxu0
    %v3699 = vadd.f32 %v3695, %v1282
    %v3700 = vxor.u32 %v3699, 2147483648
    %v3701 = vmul.f32 %v3700, 1.442695
    %v3702 = vpow.pop %v3701
    %v3703 = vadd.f32 %v3702, 1.0
    %v3704 = vrcp.pop %v3703
    %v3705 = vmul.f32 1.0, %v3704
    %v3706 = vtanh.pop %v3699
    %v3707 = vmul.f32 %v3705, %v3607
    %3709 = vrot.lane.b32.xlu0 %v3706, 64
    %v3710 = vpop.permute.xlu0 %3709
    %v3712 = vmul.f32 %v3705, %v3710
    %3714 = vrot.lane.b32.xlu0 %v3712, 32
    %v3715 = vpop.permute.xlu0 %3714
    %v3717 = vadd.f32 %v3707, %v3715
    %v3718 = vtanh.pop %v3717
    %3720 = vrot.lane.b32.xlu0 %v3718, 64
    %v3721 = vpop.permute.xlu0 %3720
    %v3723 = vmul.f32 %v3705, %v3721
    %v3724 = vrot.slane %v1117, 7
    %v3726 = vrot.slane %v1133, 6
    %v3728 = vsel %vm1152, %v3724, %v3726
    %v3729 = vadd.f32 %v3728, %v3693
    %v3730 = vadd.f32 %v3729, %v1159
    %v3731 = vxor.u32 %v3730, 2147483648
    %v3732 = vmul.f32 %v3731, 1.442695
    %v3733 = vpow.pop %v3732
    %v3734 = vadd.f32 %v3733, 1.0
    %v3735 = vrcp.pop %v3734
    %v3736 = vmul.f32 1.0, %v3735
    %v3737 = vtanh.pop %v3730
    %v3738 = vmul.f32 %v3736, %v3638
    %3740 = vrot.lane.b32.xlu0 %v3737, 64
    %v3741 = vpop.permute.xlu0 %3740
    %v3743 = vmul.f32 %v3736, %v3741
    %3745 = vrot.lane.b32.xlu0 %v3743, 32
    %v3746 = vpop.permute.xlu0 %3745
    %v3748 = vadd.f32 %v3738, %v3746
    %v3749 = vtanh.pop %v3748
    %3751 = vrot.lane.b32.xlu0 %v3749, 64
    %v3752 = vpop.permute.xlu0 %3751
    %v3754 = vmul.f32 %v3736, %v3752
    %3756 = vrot.lane.b32.xlu0 %v3754, 32
    %v3757 = vpop.permute.xlu0 %3756
    %3760 = vrot.lane.b32.xlu0 %v3723, 64
    %v3761 = vpop.permute.xlu0 %3760
    %v3763 = vsel %vm1190, %v3757, %v3761
    %v3764 = vpack.c.bf16 %v3763, %v3763
    %v3766 = vsel %vm1233, %v3764, 0
    %3768 = vmatprep.subr.bf16.mxu0 %v1218
    %3769 = vmatpush1.bf16.msra.mxu0 %v1217
    %3770 = vmatprep.subr.bf16.mxu0 %v1220
    %3771 = vmatpush1.bf16.msra.mxu0 %v1219
    %3772 = vmatprep.subr.bf16.mxu0 %v1222
    %3773 = vmatpush1.bf16.msra.mxu0 %v1221
    %3774 = vmatprep.subr.bf16.mxu0 %v1224
    %3775 = vmatpush1.bf16.msra.mxu0 %v1223
    %3776 = vmatprep.subr.bf16.mxu0 0
    %3777 = vmatpush1.bf16.msra.mxu0 0
    %3778 = vmatprep.subr.bf16.mxu0 0
    %3779 = vmatpush1.bf16.msra.mxu0 0
    %3780 = vmatprep.subr.bf16.mxu0 0
    %3781 = vmatpush1.bf16.msra.mxu0 0
    %3782 = vmatprep.subr.bf16.mxu0 0
    %3783 = vmatpush1.bf16.msra.mxu0 0
    %3784 = vmatprep.subr.bf16.mxu0 0
    %3785 = vmatpush1.bf16.msra.mxu0 0
    %3786 = vmatprep.subr.bf16.mxu0 0
    %3787 = vmatpush1.bf16.msra.mxu0 0
    %3788 = vmatprep.subr.bf16.mxu0 0
    %3789 = vmatpush1.bf16.msra.mxu0 0
    %3790 = vmatprep.subr.bf16.mxu0 0
    %3791 = vmatpush1.bf16.msra.mxu0 0
    %3792 = vmatprep.subr.bf16.mxu0 0
    %3793 = vmatpush1.bf16.msra.mxu0 0
    %3794 = vmatprep.subr.bf16.mxu0 0
    %3795 = vmatpush1.bf16.msra.mxu0 0
    %3796 = vmatprep.subr.bf16.mxu0 0
    %3797 = vmatpush1.bf16.msra.mxu0 0
    %3798 = vmatprep.subr.bf16.mxu0 0
    %3799 = vmatpush1.bf16.msra.mxu0 0
    %3800 = vmatprep.mubr.bf16.mxu0 0
    %3801 = vmatmul.mubr.bf16.gmra.mrb[0].mxu0 %v3766
    %v3802 = vpop.f32.mrb[0].mxu0
    %v3803 = vadd.f32 0.0, %v3802
    %v3804 = vpop.f32.mrb[0].mxu0
    %v3805 = vadd.f32 0.0, %v3804
    %v3806 = vpop.f32.mrb[0].mxu0
    %v3807 = vpop.f32.mrb[0].mxu0
    %3808 = vdwg.mxu0
    %v3809 = vadd.f32 %v3805, %v1282
    %v3810 = vxor.u32 %v3809, 2147483648
    %v3811 = vmul.f32 %v3810, 1.442695
    %v3812 = vpow.pop %v3811
    %v3813 = vadd.f32 %v3812, 1.0
    %v3814 = vrcp.pop %v3813
    %v3815 = vmul.f32 1.0, %v3814
    %v3816 = vtanh.pop %v3809
    %v3817 = vmul.f32 %v3815, %v3717
    %3819 = vrot.lane.b32.xlu0 %v3816, 64
    %v3820 = vpop.permute.xlu0 %3819
    %v3822 = vmul.f32 %v3815, %v3820
    %3824 = vrot.lane.b32.xlu0 %v3822, 32
    %v3825 = vpop.permute.xlu0 %3824
    %v3827 = vadd.f32 %v3817, %v3825
    %v3828 = vtanh.pop %v3827
    %3830 = vrot.lane.b32.xlu0 %v3828, 64
    %v3831 = vpop.permute.xlu0 %3830
    %v3833 = vmul.f32 %v3815, %v3831
    %v3835 = vrot.slane %v1136, 7
    %v3837 = vsel %vm1152, %v1120, %v3835
    %v3838 = vadd.f32 %v3837, %v3803
    %v3839 = vadd.f32 %v3838, %v1159
    %v3840 = vxor.u32 %v3839, 2147483648
    %v3841 = vmul.f32 %v3840, 1.442695
    %v3842 = vpow.pop %v3841
    %v3843 = vadd.f32 %v3842, 1.0
    %v3844 = vrcp.pop %v3843
    %v3845 = vmul.f32 1.0, %v3844
    %v3846 = vtanh.pop %v3839
    %v3847 = vmul.f32 %v3845, %v3748
    %3849 = vrot.lane.b32.xlu0 %v3846, 64
    %v3850 = vpop.permute.xlu0 %3849
    %v3852 = vmul.f32 %v3845, %v3850
    %3854 = vrot.lane.b32.xlu0 %v3852, 32
    %v3855 = vpop.permute.xlu0 %3854
    %v3857 = vadd.f32 %v3847, %v3855
    %v3858 = vtanh.pop %v3857
    %3860 = vrot.lane.b32.xlu0 %v3858, 64
    %v3861 = vpop.permute.xlu0 %3860
    %v3863 = vmul.f32 %v3845, %v3861
    %3865 = vrot.lane.b32.xlu0 %v3863, 32
    %v3866 = vpop.permute.xlu0 %3865
    %3869 = vrot.lane.b32.xlu0 %v3833, 64
    %v3870 = vpop.permute.xlu0 %3869
    %v3872 = vsel %vm1190, %v3866, %v3870
    %v3873 = vpack.c.bf16 %v3872, %v3872
    %v3875 = vsel %vm1233, %v3873, 0
    %3877 = vmatprep.subr.bf16.mxu0 %v1218
    %3878 = vmatpush1.bf16.msra.mxu0 %v1217
    %3879 = vmatprep.subr.bf16.mxu0 %v1220
    %3880 = vmatpush1.bf16.msra.mxu0 %v1219
    %3881 = vmatprep.subr.bf16.mxu0 %v1222
    %3882 = vmatpush1.bf16.msra.mxu0 %v1221
    %3883 = vmatprep.subr.bf16.mxu0 %v1224
    %3884 = vmatpush1.bf16.msra.mxu0 %v1223
    %3885 = vmatprep.subr.bf16.mxu0 0
    %3886 = vmatpush1.bf16.msra.mxu0 0
    %3887 = vmatprep.subr.bf16.mxu0 0
    %3888 = vmatpush1.bf16.msra.mxu0 0
    %3889 = vmatprep.subr.bf16.mxu0 0
    %3890 = vmatpush1.bf16.msra.mxu0 0
    %3891 = vmatprep.subr.bf16.mxu0 0
    %3892 = vmatpush1.bf16.msra.mxu0 0
    %3893 = vmatprep.subr.bf16.mxu0 0
    %3894 = vmatpush1.bf16.msra.mxu0 0
    %3895 = vmatprep.subr.bf16.mxu0 0
    %3896 = vmatpush1.bf16.msra.mxu0 0
    %3897 = vmatprep.subr.bf16.mxu0 0
    %3898 = vmatpush1.bf16.msra.mxu0 0
    %3899 = vmatprep.subr.bf16.mxu0 0
    %3900 = vmatpush1.bf16.msra.mxu0 0
    %3901 = vmatprep.subr.bf16.mxu0 0
    %3902 = vmatpush1.bf16.msra.mxu0 0
    %3903 = vmatprep.subr.bf16.mxu0 0
    %3904 = vmatpush1.bf16.msra.mxu0 0
    %3905 = vmatprep.subr.bf16.mxu0 0
    %3906 = vmatpush1.bf16.msra.mxu0 0
    %3907 = vmatprep.subr.bf16.mxu0 0
    %3908 = vmatpush1.bf16.msra.mxu0 0
    %3909 = vmatprep.mubr.bf16.mxu0 0
    %3910 = vmatmul.mubr.bf16.gmra.mrb[0].mxu0 %v3875
    %v3911 = vpop.f32.mrb[0].mxu0
    %v3912 = vadd.f32 0.0, %v3911
    %v3913 = vpop.f32.mrb[0].mxu0
    %v3914 = vadd.f32 0.0, %v3913
    %v3915 = vpop.f32.mrb[0].mxu0
    %v3916 = vpop.f32.mrb[0].mxu0
    %3917 = vdwg.mxu0
    %v3918 = vadd.f32 %v3914, %v1282
    %v3919 = vxor.u32 %v3918, 2147483648
    %v3920 = vmul.f32 %v3919, 1.442695
    %v3921 = vpow.pop %v3920
    %v3922 = vadd.f32 %v3921, 1.0
    %v3923 = vrcp.pop %v3922
    %v3924 = vmul.f32 1.0, %v3923
    %v3925 = vtanh.pop %v3918
    %v3926 = vmul.f32 %v3924, %v3827
    %3928 = vrot.lane.b32.xlu0 %v3925, 64
    %v3929 = vpop.permute.xlu0 %3928
    %v3931 = vmul.f32 %v3924, %v3929
    %3933 = vrot.lane.b32.xlu0 %v3931, 32
    %v3934 = vpop.permute.xlu0 %3933
    %v3936 = vadd.f32 %v3926, %v3934
    %v3937 = vtanh.pop %v3936
    %3939 = vrot.lane.b32.xlu0 %v3937, 64
    %v3940 = vpop.permute.xlu0 %3939
    %v3942 = vmul.f32 %v3924, %v3940
    %v3944 = vrot.slane %v1120, 1
    %v3946 = vsel %vm1152, %v3944, %v1136
    %v3947 = vadd.f32 %v3946, %v3912
    %v3948 = vadd.f32 %v3947, %v1159
    %v3949 = vxor.u32 %v3948, 2147483648
    %v3950 = vmul.f32 %v3949, 1.442695
    %v3951 = vpow.pop %v3950
    %v3952 = vadd.f32 %v3951, 1.0
    %v3953 = vrcp.pop %v3952
    %v3954 = vmul.f32 1.0, %v3953
    %v3955 = vtanh.pop %v3948
    %v3956 = vmul.f32 %v3954, %v3857
    %3958 = vrot.lane.b32.xlu0 %v3955, 64
    %v3959 = vpop.permute.xlu0 %3958
    %v3961 = vmul.f32 %v3954, %v3959
    %3963 = vrot.lane.b32.xlu0 %v3961, 32
    %v3964 = vpop.permute.xlu0 %3963
    %v3966 = vadd.f32 %v3956, %v3964
    %v3967 = vtanh.pop %v3966
    %3969 = vrot.lane.b32.xlu0 %v3967, 64
    %v3970 = vpop.permute.xlu0 %3969
    %v3972 = vmul.f32 %v3954, %v3970
    %3974 = vrot.lane.b32.xlu0 %v3972, 32
    %v3975 = vpop.permute.xlu0 %3974
    %3978 = vrot.lane.b32.xlu0 %v3942, 64
    %v3979 = vpop.permute.xlu0 %3978
    %v3981 = vsel %vm1190, %v3975, %v3979
    %v3982 = vpack.c.bf16 %v3981, %v3981
    %v3984 = vsel %vm1233, %v3982, 0
    %3986 = vmatprep.subr.bf16.mxu0 %v1218
    %3987 = vmatpush1.bf16.msra.mxu0 %v1217
    %3988 = vmatprep.subr.bf16.mxu0 %v1220
    %3989 = vmatpush1.bf16.msra.mxu0 %v1219
    %3990 = vmatprep.subr.bf16.mxu0 %v1222
    %3991 = vmatpush1.bf16.msra.mxu0 %v1221
    %3992 = vmatprep.subr.bf16.mxu0 %v1224
    %3993 = vmatpush1.bf16.msra.mxu0 %v1223
    %3994 = vmatprep.subr.bf16.mxu0 0
    %3995 = vmatpush1.bf16.msra.mxu0 0
    %3996 = vmatprep.subr.bf16.mxu0 0
    %3997 = vmatpush1.bf16.msra.mxu0 0
    %3998 = vmatprep.subr.bf16.mxu0 0
    %3999 = vmatpush1.bf16.msra.mxu0 0
    %4000 = vmatprep.subr.bf16.mxu0 0
    %4001 = vmatpush1.bf16.msra.mxu0 0
    %4002 = vmatprep.subr.bf16.mxu0 0
    %4003 = vmatpush1.bf16.msra.mxu0 0
    %4004 = vmatprep.subr.bf16.mxu0 0
    %4005 = vmatpush1.bf16.msra.mxu0 0
    %4006 = vmatprep.subr.bf16.mxu0 0
    %4007 = vmatpush1.bf16.msra.mxu0 0
    %4008 = vmatprep.subr.bf16.mxu0 0
    %4009 = vmatpush1.bf16.msra.mxu0 0
    %4010 = vmatprep.subr.bf16.mxu0 0
    %4011 = vmatpush1.bf16.msra.mxu0 0
    %4012 = vmatprep.subr.bf16.mxu0 0
    %4013 = vmatpush1.bf16.msra.mxu0 0
    %4014 = vmatprep.subr.bf16.mxu0 0
    %4015 = vmatpush1.bf16.msra.mxu0 0
    %4016 = vmatprep.subr.bf16.mxu0 0
    %4017 = vmatpush1.bf16.msra.mxu0 0
    %4018 = vmatprep.mubr.bf16.mxu0 0
    %4019 = vmatmul.mubr.bf16.gmra.mrb[0].mxu0 %v3984
    %v4020 = vpop.f32.mrb[0].mxu0
    %v4021 = vadd.f32 0.0, %v4020
    %v4022 = vpop.f32.mrb[0].mxu0
    %v4023 = vadd.f32 0.0, %v4022
    %v4024 = vpop.f32.mrb[0].mxu0
    %v4025 = vpop.f32.mrb[0].mxu0
    %4026 = vdwg.mxu0
    %v4027 = vadd.f32 %v4023, %v1282
    %v4028 = vxor.u32 %v4027, 2147483648
    %v4029 = vmul.f32 %v4028, 1.442695
    %v4030 = vpow.pop %v4029
    %v4031 = vadd.f32 %v4030, 1.0
    %v4032 = vrcp.pop %v4031
    %v4033 = vmul.f32 1.0, %v4032
    %v4034 = vtanh.pop %v4027
    %v4035 = vmul.f32 %v4033, %v3936
    %4037 = vrot.lane.b32.xlu0 %v4034, 64
    %v4038 = vpop.permute.xlu0 %4037
    %v4040 = vmul.f32 %v4033, %v4038
    %4042 = vrot.lane.b32.xlu0 %v4040, 32
    %v4043 = vpop.permute.xlu0 %4042
    %v4045 = vadd.f32 %v4035, %v4043
    %v4046 = vtanh.pop %v4045
    %4048 = vrot.lane.b32.xlu0 %v4046, 64
    %v4049 = vpop.permute.xlu0 %4048
    %v4051 = vmul.f32 %v4033, %v4049
    %v4052 = vrot.slane %v1120, 2
    %v4054 = vrot.slane %v1136, 1
    %v4056 = vsel %vm1152, %v4052, %v4054
    %v4057 = vadd.f32 %v4056, %v4021
    %v4058 = vadd.f32 %v4057, %v1159
    %v4059 = vxor.u32 %v4058, 2147483648
    %v4060 = vmul.f32 %v4059, 1.442695
    %v4061 = vpow.pop %v4060
    %v4062 = vadd.f32 %v4061, 1.0
    %v4063 = vrcp.pop %v4062
    %v4064 = vmul.f32 1.0, %v4063
    %v4065 = vtanh.pop %v4058
    %v4066 = vmul.f32 %v4064, %v3966
    %4068 = vrot.lane.b32.xlu0 %v4065, 64
    %v4069 = vpop.permute.xlu0 %4068
    %v4071 = vmul.f32 %v4064, %v4069
    %4073 = vrot.lane.b32.xlu0 %v4071, 32
    %v4074 = vpop.permute.xlu0 %4073
    %v4076 = vadd.f32 %v4066, %v4074
    %v4077 = vtanh.pop %v4076
    %4079 = vrot.lane.b32.xlu0 %v4077, 64
    %v4080 = vpop.permute.xlu0 %4079
    %v4082 = vmul.f32 %v4064, %v4080
    %4084 = vrot.lane.b32.xlu0 %v4082, 32
    %v4085 = vpop.permute.xlu0 %4084
    %4088 = vrot.lane.b32.xlu0 %v4051, 64
    %v4089 = vpop.permute.xlu0 %4088
    %v4091 = vsel %vm1190, %v4085, %v4089
    %v4092 = vpack.c.bf16 %v4091, %v4091
    %v4094 = vsel %vm1233, %v4092, 0
    %4096 = vmatprep.subr.bf16.mxu0 %v1218
    %4097 = vmatpush1.bf16.msra.mxu0 %v1217
    %4098 = vmatprep.subr.bf16.mxu0 %v1220
    %4099 = vmatpush1.bf16.msra.mxu0 %v1219
    %4100 = vmatprep.subr.bf16.mxu0 %v1222
    %4101 = vmatpush1.bf16.msra.mxu0 %v1221
    %4102 = vmatprep.subr.bf16.mxu0 %v1224
    %4103 = vmatpush1.bf16.msra.mxu0 %v1223
    %4104 = vmatprep.subr.bf16.mxu0 0
    %4105 = vmatpush1.bf16.msra.mxu0 0
    %4106 = vmatprep.subr.bf16.mxu0 0
    %4107 = vmatpush1.bf16.msra.mxu0 0
    %4108 = vmatprep.subr.bf16.mxu0 0
    %4109 = vmatpush1.bf16.msra.mxu0 0
    %4110 = vmatprep.subr.bf16.mxu0 0
    %4111 = vmatpush1.bf16.msra.mxu0 0
    %4112 = vmatprep.subr.bf16.mxu0 0
    %4113 = vmatpush1.bf16.msra.mxu0 0
    %4114 = vmatprep.subr.bf16.mxu0 0
    %4115 = vmatpush1.bf16.msra.mxu0 0
    %4116 = vmatprep.subr.bf16.mxu0 0
    %4117 = vmatpush1.bf16.msra.mxu0 0
    %4118 = vmatprep.subr.bf16.mxu0 0
    %4119 = vmatpush1.bf16.msra.mxu0 0
    %4120 = vmatprep.subr.bf16.mxu0 0
    %4121 = vmatpush1.bf16.msra.mxu0 0
    %4122 = vmatprep.subr.bf16.mxu0 0
    %4123 = vmatpush1.bf16.msra.mxu0 0
    %4124 = vmatprep.subr.bf16.mxu0 0
    %4125 = vmatpush1.bf16.msra.mxu0 0
    %4126 = vmatprep.subr.bf16.mxu0 0
    %4127 = vmatpush1.bf16.msra.mxu0 0
    %4128 = vmatprep.mubr.bf16.mxu0 0
    %4129 = vmatmul.mubr.bf16.gmra.mrb[0].mxu0 %v4094
    %v4130 = vpop.f32.mrb[0].mxu0
    %v4131 = vadd.f32 0.0, %v4130
    %v4132 = vpop.f32.mrb[0].mxu0
    %v4133 = vadd.f32 0.0, %v4132
    %v4134 = vpop.f32.mrb[0].mxu0
    %v4135 = vpop.f32.mrb[0].mxu0
    %4136 = vdwg.mxu0
    %v4137 = vadd.f32 %v4133, %v1282
    %v4138 = vxor.u32 %v4137, 2147483648
    %v4139 = vmul.f32 %v4138, 1.442695
    %v4140 = vpow.pop %v4139
    %v4141 = vadd.f32 %v4140, 1.0
    %v4142 = vrcp.pop %v4141
    %v4143 = vmul.f32 1.0, %v4142
    %v4144 = vtanh.pop %v4137
    %v4145 = vmul.f32 %v4143, %v4045
    %4147 = vrot.lane.b32.xlu0 %v4144, 64
    %v4148 = vpop.permute.xlu0 %4147
    %v4150 = vmul.f32 %v4143, %v4148
    %4152 = vrot.lane.b32.xlu0 %v4150, 32
    %v4153 = vpop.permute.xlu0 %4152
    %v4155 = vadd.f32 %v4145, %v4153
    %v4156 = vtanh.pop %v4155
    %4158 = vrot.lane.b32.xlu0 %v4156, 64
    %v4159 = vpop.permute.xlu0 %4158
    %v4161 = vmul.f32 %v4143, %v4159
    %v4162 = vrot.slane %v1120, 3
    %v4164 = vrot.slane %v1136, 2
    %v4166 = vsel %vm1152, %v4162, %v4164
    %v4167 = vadd.f32 %v4166, %v4131
    %v4168 = vadd.f32 %v4167, %v1159
    %v4169 = vxor.u32 %v4168, 2147483648
    %v4170 = vmul.f32 %v4169, 1.442695
    %v4171 = vpow.pop %v4170
    %v4172 = vadd.f32 %v4171, 1.0
    %v4173 = vrcp.pop %v4172
    %v4174 = vmul.f32 1.0, %v4173
    %v4175 = vtanh.pop %v4168
    %v4176 = vmul.f32 %v4174, %v4076
    %4178 = vrot.lane.b32.xlu0 %v4175, 64
    %v4179 = vpop.permute.xlu0 %4178
    %v4181 = vmul.f32 %v4174, %v4179
    %4183 = vrot.lane.b32.xlu0 %v4181, 32
    %v4184 = vpop.permute.xlu0 %4183
    %v4186 = vadd.f32 %v4176, %v4184
    %v4187 = vtanh.pop %v4186
    %4189 = vrot.lane.b32.xlu0 %v4187, 64
    %v4190 = vpop.permute.xlu0 %4189
    %v4192 = vmul.f32 %v4174, %v4190
    %4194 = vrot.lane.b32.xlu0 %v4192, 32
    %v4195 = vpop.permute.xlu0 %4194
    %4198 = vrot.lane.b32.xlu0 %v4161, 64
    %v4199 = vpop.permute.xlu0 %4198
    %v4201 = vsel %vm1190, %v4195, %v4199
    %v4202 = vpack.c.bf16 %v4201, %v4201
    %v4204 = vsel %vm1233, %v4202, 0
    %4206 = vmatprep.subr.bf16.mxu0 %v1218
    %4207 = vmatpush1.bf16.msra.mxu0 %v1217
    %4208 = vmatprep.subr.bf16.mxu0 %v1220
    %4209 = vmatpush1.bf16.msra.mxu0 %v1219
    %4210 = vmatprep.subr.bf16.mxu0 %v1222
    %4211 = vmatpush1.bf16.msra.mxu0 %v1221
    %4212 = vmatprep.subr.bf16.mxu0 %v1224
    %4213 = vmatpush1.bf16.msra.mxu0 %v1223
    %4214 = vmatprep.subr.bf16.mxu0 0
    %4215 = vmatpush1.bf16.msra.mxu0 0
    %4216 = vmatprep.subr.bf16.mxu0 0
    %4217 = vmatpush1.bf16.msra.mxu0 0
    %4218 = vmatprep.subr.bf16.mxu0 0
    %4219 = vmatpush1.bf16.msra.mxu0 0
    %4220 = vmatprep.subr.bf16.mxu0 0
    %4221 = vmatpush1.bf16.msra.mxu0 0
    %4222 = vmatprep.subr.bf16.mxu0 0
    %4223 = vmatpush1.bf16.msra.mxu0 0
    %4224 = vmatprep.subr.bf16.mxu0 0
    %4225 = vmatpush1.bf16.msra.mxu0 0
    %4226 = vmatprep.subr.bf16.mxu0 0
    %4227 = vmatpush1.bf16.msra.mxu0 0
    %4228 = vmatprep.subr.bf16.mxu0 0
    %4229 = vmatpush1.bf16.msra.mxu0 0
    %4230 = vmatprep.subr.bf16.mxu0 0
    %4231 = vmatpush1.bf16.msra.mxu0 0
    %4232 = vmatprep.subr.bf16.mxu0 0
    %4233 = vmatpush1.bf16.msra.mxu0 0
    %4234 = vmatprep.subr.bf16.mxu0 0
    %4235 = vmatpush1.bf16.msra.mxu0 0
    %4236 = vmatprep.subr.bf16.mxu0 0
    %4237 = vmatpush1.bf16.msra.mxu0 0
    %4238 = vmatprep.mubr.bf16.mxu0 0
    %4239 = vmatmul.mubr.bf16.gmra.mrb[0].mxu0 %v4204
    %v4240 = vpop.f32.mrb[0].mxu0
    %v4241 = vadd.f32 0.0, %v4240
    %v4242 = vpop.f32.mrb[0].mxu0
    %v4243 = vadd.f32 0.0, %v4242
    %v4244 = vpop.f32.mrb[0].mxu0
    %v4245 = vpop.f32.mrb[0].mxu0
    %4246 = vdwg.mxu0
    %v4247 = vadd.f32 %v4243, %v1282
    %v4248 = vxor.u32 %v4247, 2147483648
    %v4249 = vmul.f32 %v4248, 1.442695
    %v4250 = vpow.pop %v4249
    %v4251 = vadd.f32 %v4250, 1.0
    %v4252 = vrcp.pop %v4251
    %v4253 = vmul.f32 1.0, %v4252
    %v4254 = vtanh.pop %v4247
    %v4255 = vmul.f32 %v4253, %v4155
    %4257 = vrot.lane.b32.xlu0 %v4254, 64
    %v4258 = vpop.permute.xlu0 %4257
    %v4260 = vmul.f32 %v4253, %v4258
    %4262 = vrot.lane.b32.xlu0 %v4260, 32
    %v4263 = vpop.permute.xlu0 %4262
    %v4265 = vadd.f32 %v4255, %v4263
    %v4266 = vtanh.pop %v4265
    %4268 = vrot.lane.b32.xlu0 %v4266, 64
    %v4269 = vpop.permute.xlu0 %4268
    %v4271 = vmul.f32 %v4253, %v4269
    %v4272 = vrot.slane %v1120, 4
    %v4274 = vrot.slane %v1136, 3
    %v4276 = vsel %vm1152, %v4272, %v4274
    %v4277 = vadd.f32 %v4276, %v4241
    %v4278 = vadd.f32 %v4277, %v1159
    %v4279 = vxor.u32 %v4278, 2147483648
    %v4280 = vmul.f32 %v4279, 1.442695
    %v4281 = vpow.pop %v4280
    %v4282 = vadd.f32 %v4281, 1.0
    %v4283 = vrcp.pop %v4282
    %v4284 = vmul.f32 1.0, %v4283
    %v4285 = vtanh.pop %v4278
    %v4286 = vmul.f32 %v4284, %v4186
    %4288 = vrot.lane.b32.xlu0 %v4285, 64
    %v4289 = vpop.permute.xlu0 %4288
    %v4291 = vmul.f32 %v4284, %v4289
    %4293 = vrot.lane.b32.xlu0 %v4291, 32
    %v4294 = vpop.permute.xlu0 %4293
    %v4296 = vadd.f32 %v4286, %v4294
    %v4297 = vtanh.pop %v4296
    %4299 = vrot.lane.b32.xlu0 %v4297, 64
    %v4300 = vpop.permute.xlu0 %4299
    %v4302 = vmul.f32 %v4284, %v4300
    %4304 = vrot.lane.b32.xlu0 %v4302, 32
    %v4305 = vpop.permute.xlu0 %4304
    %4308 = vrot.lane.b32.xlu0 %v4271, 64
    %v4309 = vpop.permute.xlu0 %4308
    %v4311 = vsel %vm1190, %v4305, %v4309
    %v4312 = vpack.c.bf16 %v4311, %v4311
    %v4314 = vsel %vm1233, %v4312, 0
    %4316 = vmatprep.subr.bf16.mxu0 %v1218
    %4317 = vmatpush1.bf16.msra.mxu0 %v1217
    %4318 = vmatprep.subr.bf16.mxu0 %v1220
    %4319 = vmatpush1.bf16.msra.mxu0 %v1219
    %4320 = vmatprep.subr.bf16.mxu0 %v1222
    %4321 = vmatpush1.bf16.msra.mxu0 %v1221
    %4322 = vmatprep.subr.bf16.mxu0 %v1224
    %4323 = vmatpush1.bf16.msra.mxu0 %v1223
    %4324 = vmatprep.subr.bf16.mxu0 0
    %4325 = vmatpush1.bf16.msra.mxu0 0
    %4326 = vmatprep.subr.bf16.mxu0 0
    %4327 = vmatpush1.bf16.msra.mxu0 0
    %4328 = vmatprep.subr.bf16.mxu0 0
    %4329 = vmatpush1.bf16.msra.mxu0 0
    %4330 = vmatprep.subr.bf16.mxu0 0
    %4331 = vmatpush1.bf16.msra.mxu0 0
    %4332 = vmatprep.subr.bf16.mxu0 0
    %4333 = vmatpush1.bf16.msra.mxu0 0
    %4334 = vmatprep.subr.bf16.mxu0 0
    %4335 = vmatpush1.bf16.msra.mxu0 0
    %4336 = vmatprep.subr.bf16.mxu0 0
    %4337 = vmatpush1.bf16.msra.mxu0 0
    %4338 = vmatprep.subr.bf16.mxu0 0
    %4339 = vmatpush1.bf16.msra.mxu0 0
    %4340 = vmatprep.subr.bf16.mxu0 0
    %4341 = vmatpush1.bf16.msra.mxu0 0
    %4342 = vmatprep.subr.bf16.mxu0 0
    %4343 = vmatpush1.bf16.msra.mxu0 0
    %4344 = vmatprep.subr.bf16.mxu0 0
    %4345 = vmatpush1.bf16.msra.mxu0 0
    %4346 = vmatprep.subr.bf16.mxu0 0
    %4347 = vmatpush1.bf16.msra.mxu0 0
    %4348 = vmatprep.mubr.bf16.mxu0 0
    %4349 = vmatmul.mubr.bf16.gmra.mrb[0].mxu0 %v4314
    %v4350 = vpop.f32.mrb[0].mxu0
    %v4351 = vadd.f32 0.0, %v4350
    %v4352 = vpop.f32.mrb[0].mxu0
    %v4353 = vadd.f32 0.0, %v4352
    %v4354 = vpop.f32.mrb[0].mxu0
    %v4355 = vpop.f32.mrb[0].mxu0
    %4356 = vdwg.mxu0
    %v4357 = vadd.f32 %v4353, %v1282
    %v4358 = vxor.u32 %v4357, 2147483648
    %v4359 = vmul.f32 %v4358, 1.442695
    %v4360 = vpow.pop %v4359
    %v4361 = vadd.f32 %v4360, 1.0
    %v4362 = vrcp.pop %v4361
    %v4363 = vmul.f32 1.0, %v4362
    %v4364 = vtanh.pop %v4357
    %v4365 = vmul.f32 %v4363, %v4265
    %4367 = vrot.lane.b32.xlu0 %v4364, 64
    %v4368 = vpop.permute.xlu0 %4367
    %v4370 = vmul.f32 %v4363, %v4368
    %4372 = vrot.lane.b32.xlu0 %v4370, 32
    %v4373 = vpop.permute.xlu0 %4372
    %v4375 = vadd.f32 %v4365, %v4373
    %v4376 = vtanh.pop %v4375
    %4378 = vrot.lane.b32.xlu0 %v4376, 64
    %v4379 = vpop.permute.xlu0 %4378
    %v4381 = vmul.f32 %v4363, %v4379
    %v4382 = vrot.slane %v1120, 5
    %v4384 = vrot.slane %v1136, 4
    %v4386 = vsel %vm1152, %v4382, %v4384
    %v4387 = vadd.f32 %v4386, %v4351
    %v4388 = vadd.f32 %v4387, %v1159
    %v4389 = vxor.u32 %v4388, 2147483648
    %v4390 = vmul.f32 %v4389, 1.442695
    %v4391 = vpow.pop %v4390
    %v4392 = vadd.f32 %v4391, 1.0
    %v4393 = vrcp.pop %v4392
    %v4394 = vmul.f32 1.0, %v4393
    %v4395 = vtanh.pop %v4388
    %v4396 = vmul.f32 %v4394, %v4296
    %4398 = vrot.lane.b32.xlu0 %v4395, 64
    %v4399 = vpop.permute.xlu0 %4398
    %v4401 = vmul.f32 %v4394, %v4399
    %4403 = vrot.lane.b32.xlu0 %v4401, 32
    %v4404 = vpop.permute.xlu0 %4403
    %v4406 = vadd.f32 %v4396, %v4404
    %v4407 = vtanh.pop %v4406
    %4409 = vrot.lane.b32.xlu0 %v4407, 64
    %v4410 = vpop.permute.xlu0 %4409
    %v4412 = vmul.f32 %v4394, %v4410
    %4414 = vrot.lane.b32.xlu0 %v4412, 32
    %v4415 = vpop.permute.xlu0 %4414
    %4418 = vrot.lane.b32.xlu0 %v4381, 64
    %v4419 = vpop.permute.xlu0 %4418
    %v4421 = vsel %vm1190, %v4415, %v4419
    %v4422 = vpack.c.bf16 %v4421, %v4421
    %v4424 = vsel %vm1233, %v4422, 0
    %4426 = vmatprep.subr.bf16.mxu0 %v1218
    %4427 = vmatpush1.bf16.msra.mxu0 %v1217
    %4428 = vmatprep.subr.bf16.mxu0 %v1220
    %4429 = vmatpush1.bf16.msra.mxu0 %v1219
    %4430 = vmatprep.subr.bf16.mxu0 %v1222
    %4431 = vmatpush1.bf16.msra.mxu0 %v1221
    %4432 = vmatprep.subr.bf16.mxu0 %v1224
    %4433 = vmatpush1.bf16.msra.mxu0 %v1223
    %4434 = vmatprep.subr.bf16.mxu0 0
    %4435 = vmatpush1.bf16.msra.mxu0 0
    %4436 = vmatprep.subr.bf16.mxu0 0
    %4437 = vmatpush1.bf16.msra.mxu0 0
    %4438 = vmatprep.subr.bf16.mxu0 0
    %4439 = vmatpush1.bf16.msra.mxu0 0
    %4440 = vmatprep.subr.bf16.mxu0 0
    %4441 = vmatpush1.bf16.msra.mxu0 0
    %4442 = vmatprep.subr.bf16.mxu0 0
    %4443 = vmatpush1.bf16.msra.mxu0 0
    %4444 = vmatprep.subr.bf16.mxu0 0
    %4445 = vmatpush1.bf16.msra.mxu0 0
    %4446 = vmatprep.subr.bf16.mxu0 0
    %4447 = vmatpush1.bf16.msra.mxu0 0
    %4448 = vmatprep.subr.bf16.mxu0 0
    %4449 = vmatpush1.bf16.msra.mxu0 0
    %4450 = vmatprep.subr.bf16.mxu0 0
    %4451 = vmatpush1.bf16.msra.mxu0 0
    %4452 = vmatprep.subr.bf16.mxu0 0
    %4453 = vmatpush1.bf16.msra.mxu0 0
    %4454 = vmatprep.subr.bf16.mxu0 0
    %4455 = vmatpush1.bf16.msra.mxu0 0
    %4456 = vmatprep.subr.bf16.mxu0 0
    %4457 = vmatpush1.bf16.msra.mxu0 0
    %4458 = vmatprep.mubr.bf16.mxu0 0
    %4459 = vmatmul.mubr.bf16.gmra.mrb[0].mxu0 %v4424
    %v4460 = vpop.f32.mrb[0].mxu0
    %v4461 = vadd.f32 0.0, %v4460
    %v4462 = vpop.f32.mrb[0].mxu0
    %v4463 = vadd.f32 0.0, %v4462
    %v4464 = vpop.f32.mrb[0].mxu0
    %v4465 = vpop.f32.mrb[0].mxu0
    %4466 = vdwg.mxu0
    %v4467 = vadd.f32 %v4463, %v1282
    %v4468 = vxor.u32 %v4467, 2147483648
    %v4469 = vmul.f32 %v4468, 1.442695
    %v4470 = vpow.pop %v4469
    %v4471 = vadd.f32 %v4470, 1.0
    %v4472 = vrcp.pop %v4471
    %v4473 = vmul.f32 1.0, %v4472
    %v4474 = vtanh.pop %v4467
    %v4475 = vmul.f32 %v4473, %v4375
    %4477 = vrot.lane.b32.xlu0 %v4474, 64
    %v4478 = vpop.permute.xlu0 %4477
    %v4480 = vmul.f32 %v4473, %v4478
    %4482 = vrot.lane.b32.xlu0 %v4480, 32
    %v4483 = vpop.permute.xlu0 %4482
    %v4485 = vadd.f32 %v4475, %v4483
    %v4486 = vtanh.pop %v4485
    %4488 = vrot.lane.b32.xlu0 %v4486, 64
    %v4489 = vpop.permute.xlu0 %4488
    %v4491 = vmul.f32 %v4473, %v4489
    %v4492 = vrot.slane %v1120, 6
    %v4494 = vrot.slane %v1136, 5
    %v4496 = vsel %vm1152, %v4492, %v4494
    %v4497 = vadd.f32 %v4496, %v4461
    %v4498 = vadd.f32 %v4497, %v1159
    %v4499 = vxor.u32 %v4498, 2147483648
    %v4500 = vmul.f32 %v4499, 1.442695
    %v4501 = vpow.pop %v4500
    %v4502 = vadd.f32 %v4501, 1.0
    %v4503 = vrcp.pop %v4502
    %v4504 = vmul.f32 1.0, %v4503
    %v4505 = vtanh.pop %v4498
    %v4506 = vmul.f32 %v4504, %v4406
    %4508 = vrot.lane.b32.xlu0 %v4505, 64
    %v4509 = vpop.permute.xlu0 %4508
    %v4511 = vmul.f32 %v4504, %v4509
    %4513 = vrot.lane.b32.xlu0 %v4511, 32
    %v4514 = vpop.permute.xlu0 %4513
    %v4516 = vadd.f32 %v4506, %v4514
    %v4517 = vtanh.pop %v4516
    %4519 = vrot.lane.b32.xlu0 %v4517, 64
    %v4520 = vpop.permute.xlu0 %4519
    %v4522 = vmul.f32 %v4504, %v4520
    %4524 = vrot.lane.b32.xlu0 %v4522, 32
    %v4525 = vpop.permute.xlu0 %4524
    %4528 = vrot.lane.b32.xlu0 %v4491, 64
    %v4529 = vpop.permute.xlu0 %4528
    %v4531 = vsel %vm1190, %v4525, %v4529
    %v4532 = vpack.c.bf16 %v4531, %v4531
    %v4534 = vsel %vm1233, %v4532, 0
    %4536 = vmatprep.subr.bf16.mxu0 %v1218
    %4537 = vmatpush1.bf16.msra.mxu0 %v1217
    %4538 = vmatprep.subr.bf16.mxu0 %v1220
    %4539 = vmatpush1.bf16.msra.mxu0 %v1219
    %4540 = vmatprep.subr.bf16.mxu0 %v1222
    %4541 = vmatpush1.bf16.msra.mxu0 %v1221
    %4542 = vmatprep.subr.bf16.mxu0 %v1224
    %4543 = vmatpush1.bf16.msra.mxu0 %v1223
    %4544 = vmatprep.subr.bf16.mxu0 0
    %4545 = vmatpush1.bf16.msra.mxu0 0
    %4546 = vmatprep.subr.bf16.mxu0 0
    %4547 = vmatpush1.bf16.msra.mxu0 0
    %4548 = vmatprep.subr.bf16.mxu0 0
    %4549 = vmatpush1.bf16.msra.mxu0 0
    %4550 = vmatprep.subr.bf16.mxu0 0
    %4551 = vmatpush1.bf16.msra.mxu0 0
    %4552 = vmatprep.subr.bf16.mxu0 0
    %4553 = vmatpush1.bf16.msra.mxu0 0
    %4554 = vmatprep.subr.bf16.mxu0 0
    %4555 = vmatpush1.bf16.msra.mxu0 0
    %4556 = vmatprep.subr.bf16.mxu0 0
    %4557 = vmatpush1.bf16.msra.mxu0 0
    %4558 = vmatprep.subr.bf16.mxu0 0
    %4559 = vmatpush1.bf16.msra.mxu0 0
    %4560 = vmatprep.subr.bf16.mxu0 0
    %4561 = vmatpush1.bf16.msra.mxu0 0
    %4562 = vmatprep.subr.bf16.mxu0 0
    %4563 = vmatpush1.bf16.msra.mxu0 0
    %4564 = vmatprep.subr.bf16.mxu0 0
    %4565 = vmatpush1.bf16.msra.mxu0 0
    %4566 = vmatprep.subr.bf16.mxu0 0
    %4567 = vmatpush1.bf16.msra.mxu0 0
    %4568 = vmatprep.mubr.bf16.mxu0 0
    %4569 = vmatmul.mubr.bf16.gmra.mrb[0].mxu0 %v4534
    %v4570 = vpop.f32.mrb[0].mxu0
    %v4571 = vadd.f32 0.0, %v4570
    %v4572 = vpop.f32.mrb[0].mxu0
    %v4573 = vadd.f32 0.0, %v4572
    %v4574 = vpop.f32.mrb[0].mxu0
    %v4575 = vpop.f32.mrb[0].mxu0
    %4576 = vdwg.mxu0
    %v4577 = vadd.f32 %v4573, %v1282
    %v4578 = vxor.u32 %v4577, 2147483648
    %v4579 = vmul.f32 %v4578, 1.442695
    %v4580 = vpow.pop %v4579
    %v4581 = vadd.f32 %v4580, 1.0
    %v4582 = vrcp.pop %v4581
    %v4583 = vmul.f32 1.0, %v4582
    %v4584 = vtanh.pop %v4577
    %v4585 = vmul.f32 %v4583, %v4485
    %4587 = vrot.lane.b32.xlu0 %v4584, 64
    %v4588 = vpop.permute.xlu0 %4587
    %v4590 = vmul.f32 %v4583, %v4588
    %4592 = vrot.lane.b32.xlu0 %v4590, 32
    %v4593 = vpop.permute.xlu0 %4592
    %v4595 = vadd.f32 %v4585, %v4593
    %v4596 = vtanh.pop %v4595
    %4598 = vrot.lane.b32.xlu0 %v4596, 64
    %v4599 = vpop.permute.xlu0 %4598
    %v4601 = vmul.f32 %v4583, %v4599
    %v4602 = vrot.slane %v1120, 7
    %v4604 = vrot.slane %v1136, 6
    %v4606 = vsel %vm1152, %v4602, %v4604
    %v4607 = vadd.f32 %v4606, %v4571
    %v4608 = vadd.f32 %v4607, %v1159
    %v4609 = vxor.u32 %v4608, 2147483648
    %v4610 = vmul.f32 %v4609, 1.442695
    %v4611 = vpow.pop %v4610
    %v4612 = vadd.f32 %v4611, 1.0
    %v4613 = vrcp.pop %v4612
    %v4614 = vmul.f32 1.0, %v4613
    %v4615 = vtanh.pop %v4608
    %v4616 = vmul.f32 %v4614, %v4516
    %4618 = vrot.lane.b32.xlu0 %v4615, 64
    %v4619 = vpop.permute.xlu0 %4618
    %v4621 = vmul.f32 %v4614, %v4619
    %4623 = vrot.lane.b32.xlu0 %v4621, 32
    %v4624 = vpop.permute.xlu0 %4623
    %v4626 = vadd.f32 %v4616, %v4624
    %v4627 = vtanh.pop %v4626
    %4629 = vrot.lane.b32.xlu0 %v4627, 64
    %v4630 = vpop.permute.xlu0 %4629
    %v4632 = vmul.f32 %v4614, %v4630
    %4634 = vrot.lane.b32.xlu0 %v4632, 32
    %v4635 = vpop.permute.xlu0 %4634
    %4638 = vrot.lane.b32.xlu0 %v4601, 64
    %v4639 = vpop.permute.xlu0 %4638
    %v4641 = vsel %vm1190, %v4635, %v4639
    %v4642 = vpack.c.bf16 %v4641, %v4641
    %v4644 = vsel %vm1233, %v4642, 0
    %4646 = vmatprep.subr.bf16.mxu0 %v1218
    %4647 = vmatpush1.bf16.msra.mxu0 %v1217
    %4648 = vmatprep.subr.bf16.mxu0 %v1220
    %4649 = vmatpush1.bf16.msra.mxu0 %v1219
    %4650 = vmatprep.subr.bf16.mxu0 %v1222
    %4651 = vmatpush1.bf16.msra.mxu0 %v1221
    %4652 = vmatprep.subr.bf16.mxu0 %v1224
    %4653 = vmatpush1.bf16.msra.mxu0 %v1223
    %4654 = vmatprep.subr.bf16.mxu0 0
    %4655 = vmatpush1.bf16.msra.mxu0 0
    %4656 = vmatprep.subr.bf16.mxu0 0
    %4657 = vmatpush1.bf16.msra.mxu0 0
    %4658 = vmatprep.subr.bf16.mxu0 0
    %4659 = vmatpush1.bf16.msra.mxu0 0
    %4660 = vmatprep.subr.bf16.mxu0 0
    %4661 = vmatpush1.bf16.msra.mxu0 0
    %4662 = vmatprep.subr.bf16.mxu0 0
    %4663 = vmatpush1.bf16.msra.mxu0 0
    %4664 = vmatprep.subr.bf16.mxu0 0
    %4665 = vmatpush1.bf16.msra.mxu0 0
    %4666 = vmatprep.subr.bf16.mxu0 0
    %4667 = vmatpush1.bf16.msra.mxu0 0
    %4668 = vmatprep.subr.bf16.mxu0 0
    %4669 = vmatpush1.bf16.msra.mxu0 0
    %4670 = vmatprep.subr.bf16.mxu0 0
    %4671 = vmatpush1.bf16.msra.mxu0 0
    %4672 = vmatprep.subr.bf16.mxu0 0
    %4673 = vmatpush1.bf16.msra.mxu0 0
    %4674 = vmatprep.subr.bf16.mxu0 0
    %4675 = vmatpush1.bf16.msra.mxu0 0
    %4676 = vmatprep.subr.bf16.mxu0 0
    %4677 = vmatpush1.bf16.msra.mxu0 0
    %4678 = vmatprep.mubr.bf16.mxu0 0
    %4679 = vmatmul.mubr.bf16.gmra.mrb[0].mxu0 %v4644
    %v4680 = vpop.f32.mrb[0].mxu0
    %v4681 = vpop.f32.mrb[0].mxu0
    %v4682 = vadd.f32 0.0, %v4681
    %v4683 = vpop.f32.mrb[0].mxu0
    %v4684 = vpop.f32.mrb[0].mxu0
    %4685 = vdwg.mxu0
    %v4686 = vadd.f32 %v4682, %v1282
    %v4687 = vxor.u32 %v4686, 2147483648
    %v4688 = vmul.f32 %v4687, 1.442695
    %v4689 = vpow.pop %v4688
    %v4690 = vadd.f32 %v4689, 1.0
    %v4691 = vrcp.pop %v4690
    %v4692 = vmul.f32 1.0, %v4691
    %v4693 = vtanh.pop %v4686
    %v4694 = vmul.f32 %v4692, %v4595
    %4696 = vrot.lane.b32.xlu0 %v4693, 64
    %v4697 = vpop.permute.xlu0 %4696
    %v4699 = vmul.f32 %v4692, %v4697
    %4701 = vrot.lane.b32.xlu0 %v4699, 32
    %v4702 = vpop.permute.xlu0 %4701
    %v4704 = vadd.f32 %v4694, %v4702
    %v4705 = vtanh.pop %v4704
    %4707 = vrot.lane.b32.xlu0 %v4705, 64
    %v4708 = vpop.permute.xlu0 %4707
    %v4710 = vmul.f32 %v4692, %v4708
    %v4711 = vld [vmem:[#allocation11] sm:$0xff]
    %v4712 = vld [vmem:[#allocation11 + $0x8] sm:$0xff]
    %v4713 = vld [vmem:[#allocation11 + $0x10] sm:$0xff]
    %v4714 = vld [vmem:[#allocation11 + $0x18] sm:$0xff]
    %v4715 = vld [vmem:[%s8] sm:$0x1]
    %v4717 = vlaneseq
    %v4718 = vshrl.u32 %v4717, 7
    %v4719 = vsub.s32 0, %v4718
    %v4720 = vrot.slane %v4715, %v4719
    %4723 = vrot.lane.b32.xlu0 %v4710, 32
    %v4724 = vpop.permute.xlu0 %4723
    %v4725 = vsel %vm1190, %v4724, 0
    %4727 = vmatprep.subr.mxu0 0.0
    %4728 = vmatpush1.msra.mxu0 %v4711
    %4729 = vmatprep.subr.mxu0 0.0
    %4730 = vmatpush1.msra.mxu0 %v4712
    %4731 = vmatprep.subr.mxu0 0.0
    %4732 = vmatpush1.msra.mxu0 %v4713
    %4733 = vmatprep.subr.mxu0 0.0
    %4734 = vmatpush1.msra.mxu0 %v4714
    %4735 = vmatprep.subr.mxu0 0.0
    %4736 = vmatpush1.msra.mxu0 0.0
    %4737 = vmatprep.subr.mxu0 0.0
    %4738 = vmatpush1.msra.mxu0 0.0
    %4739 = vmatprep.subr.mxu0 0.0
    %4740 = vmatpush1.msra.mxu0 0.0
    %4741 = vmatprep.subr.mxu0 0.0
    %4742 = vmatpush1.msra.mxu0 0.0
    %4743 = vmatprep.subr.mxu0 0.0
    %4744 = vmatpush1.msra.mxu0 0.0
    %4745 = vmatprep.subr.mxu0 0.0
    %4746 = vmatpush1.msra.mxu0 0.0
    %4747 = vmatprep.subr.mxu0 0.0
    %4748 = vmatpush1.msra.mxu0 0.0
    %4749 = vmatprep.subr.mxu0 0.0
    %4750 = vmatpush1.msra.mxu0 0.0
    %4751 = vmatprep.subr.mxu0 0.0
    %4752 = vmatpush1.msra.mxu0 0.0
    %4753 = vmatprep.subr.mxu0 0.0
    %4754 = vmatpush1.msra.mxu0 0.0
    %4755 = vmatprep.subr.mxu0 0.0
    %4756 = vmatpush1.msra.mxu0 0.0
    %4757 = vmatprep.subr.mxu0 0.0
    %4758 = vmatpush1.msra.mxu0 0.0
    %4759 = vmatprep.subr.mxu0 0.0
    %4760 = vmatpush1.msra.mxu0 0.0
    %4761 = vmatprep.subr.mxu0 0.0
    %4762 = vmatpush1.msra.mxu0 0.0
    %4763 = vmatprep.subr.mxu0 0.0
    %4764 = vmatpush1.msra.mxu0 0.0
    %4765 = vmatprep.subr.mxu0 0.0
    %4766 = vmatpush1.msra.mxu0 0.0
    %4767 = vmatprep.subr.mxu0 0.0
    %4768 = vmatpush1.msra.mxu0 0.0
    %4769 = vmatprep.subr.mxu0 0.0
    %4770 = vmatpush1.msra.mxu0 0.0
    %4771 = vmatprep.subr.mxu0 0.0
    %4772 = vmatpush1.msra.mxu0 0.0
    %4773 = vmatprep.subr.mxu0 0.0
    %4774 = vmatpush1.msra.mxu0 0.0
    %4775 = vmatprep.subr.mxu0 0.0
    %4776 = vmatpush1.msra.mxu0 0.0
    %4777 = vmatprep.subr.mxu0 0.0
    %4778 = vmatpush1.msra.mxu0 0.0
    %4779 = vmatprep.subr.mxu0 0.0
    %4780 = vmatpush1.msra.mxu0 0.0
    %4781 = vmatprep.subr.mxu0 0.0
    %4782 = vmatpush1.msra.mxu0 0.0
    %4783 = vmatprep.subr.mxu0 0.0
    %4784 = vmatpush1.msra.mxu0 0.0
    %4785 = vmatprep.subr.mxu0 0.0
    %4786 = vmatpush1.msra.mxu0 0.0
    %4787 = vmatprep.subr.mxu0 0.0
    %4788 = vmatpush1.msra.mxu0 0.0
    %4789 = vmatprep.subr.mxu0 0.0
    %4790 = vmatpush1.msra.mxu0 0.0
    %4791 = vmatprep.mubr.f32.mxu0 0.0
    %4792 = vmatmul.mubr.f32.gmra.mrb[0].mxu0 %v4725
    %v4793 = vpop.f32.mrb[0].mxu0
    %v4794 = vadd.f32 %v4720, %v4793
    %v4795 = vpop.f32.mrb[0].mxu0
    %4796 = vdwg.mxu0
    %vm4797 = vcmask 238592
    %v4798 = vsel %vm4797, %v4794, -inf
    %4799 = vmax.xlane.f32.xlu0 %v4798
    %v4800 = vpop.xlane.xlu0 %4799
    %v4801 = vsub.f32 %v4794, %v4800
    %v4802 = vmul.f32 %v4801, 1.442695
    %v4803 = vpow.pop %v4802
    %v4804 = vsel %vm4797, %v4803, 0.0
    %4805 = vadd.xlane.f32.xlu0 %v4804
    %v4806 = vpop.xlane.xlu0 %4805
    %v4807 = vrcp.pop %v4806
    %v4808 = vmul.f32 %v4803, %v4807
    %4809 = vst.msk [vmem:[#allocation12] sm:$0x3] %vm4797, %v4808
    // Predicated region
    $region58: #{forward.1} parent=1 // pred_check
      _
    $region59: #{forward.1} parent=1 // pred_check_branch
      %4811 = sbr.rel (0) target = $region61
    $region60: #{forward.1} parent=1 // pred_region
      %s4813 = ssub.s32 32, 32
      %4814 = vsyncadd [#allocation5], %s4813
      %s4816 = sshll.u32 [#allocation12], 4
      %s4817 = int_to_ptr.vmem [resolvable:$true] %s4816
      %4819 = dma.vmem_to_hbm [thread:$0]  %s4817, 32, %s9, [#allocation5]
    $region61: #{forward.1} parent=1 // pred_fallthru
      _
    // Predicated region
    $region62: #{forward.1} parent=1 // pred_check
      _
    $region63: #{forward.1} parent=1 // pred_check_branch
      %4821 = sbr.rel (0) target = $region65
    $region64: #{forward.1} parent=1 // pred_region
      %4822 = dma.done [#allocation5], 32
    $region65: #{forward.1} parent=1 // pred_fallthru
      _
    %4823 = vsyncpa [#allocation4], 1
    %4824 = vsyncpa [#allocation7], 1
    %4825 = vsyncpa [#allocation10], 1
    %4826 = vsyncpa [#allocation5], 1

</llo_original>
